<compile_context>
chip_gen: v7x
topology: tpu7x:2x2x1
jax: 0.10.0
libtpu: 0.0.40
codegen_flags: <defaults>
</compile_context>

<pallas_src>
import functools
import math

import jax
import jax.numpy as jnp
import numpy as np
from jax.experimental import pallas as pl
from jax.experimental.pallas import tpu as pltpu

LN_EPS = 1e-12  # BertConfig default layer_norm_eps


# ----------------------------- small math helpers (trace-time) -----------------------------
def _gelu(x):
    # tanh-approximate GELU (EUP tanh + a few VALU ops); ~1e-3 from exact erf-GELU.
    c = 0.7978845608028654  # sqrt(2/pi)
    return 0.5 * x * (1.0 + jnp.tanh(c * (x + 0.044715 * (x * x * x))))


def _layernorm(x, gamma, beta):
    mean = jnp.mean(x, axis=-1, keepdims=True)
    var = jnp.mean((x - mean) ** 2, axis=-1, keepdims=True)
    return (x - mean) * jax.lax.rsqrt(var + LN_EPS) * gamma + beta


def _mm(x, w_ref):
    # MXU matmul: low-precision (bf16) inputs, f32 accumulation.
    w = w_ref[...]
    return jnp.dot(x.astype(w.dtype), w, preferred_element_type=jnp.float32)


def _material_encoder(targets_ref, shift, ew0, eb0, ew1, eb1, ew2, eb2):
    t = targets_ref[...]                                                    # (TB, F) f32
    valid = jnp.sum((t != 0.0).astype(jnp.float32), axis=-1, keepdims=True) > 0.0
    x = jnp.where(t == 0.0, shift, t)
    x = _gelu(_mm(x, ew0) + eb0[...])
    x = _gelu(_mm(x, ew1) + eb1[...])
    x = _gelu(_mm(x, ew2) + eb2[...])
    # NOTE: no eps in the L2 normalization, matching the PyTorch module exactly.
    x = x * jax.lax.rsqrt(jnp.sum(x * x, axis=-1, keepdims=True))
    return jnp.where(valid, x, 0.0)                                         # (TB, D)


# ------------------------------------- Pallas kernels ---------------------------------------
def _cond_kernel(shift_ref, idx_smem_ref, targets_ref, idx_ref,
                 ew0, eb0, ew1, eb1, ew2, eb2,
                 pw_ref, pwt_ref, pb_ref,
                 qw, qb, kw, kb, vw, vb,
                 aow, aob, ln1g, ln1b,
                 iw, ib, ow, ob, ln2g, ln2b,
                 out_ref, hidden_ref, *, num_heads):
    TB = targets_ref.shape[0]
    L = idx_ref.shape[1]
    M = L - 1
    D = ew0.shape[1]
    hd = D // num_heads
    row0 = pl.program_id(0) * TB

    targets_emb = _material_encoder(targets_ref, shift_ref[0, 0],
                                    ew0, eb0, ew1, eb1, ew2, eb2)           # (TB, D) f32

    # ---- build hidden states in VMEM scratch (no jnp.concatenate):
    #      slot 0 <- target embedding, slots 1..M <- gathered precursor embeddings.
    # Embedding lookup = scalar-indexed row loads from the resident (V, D) f32 table,
    # driven by SMEM indices; cost is O(TB*M*D) and independent of the vocab size V.
    for b in range(TB):
        hidden_ref[b, 0, :] = targets_emb[b, :]
        for m in range(M):
            iv = idx_smem_ref[row0 + b, 1 + m]
            keep = (iv >= 0).astype(jnp.float32)
            hidden_ref[b, 1 + m, :] = pw_ref[jnp.maximum(iv, 0), :] * keep

    hidden = hidden_ref[...]                                                # (TB, L, D) f32
    hidden2 = hidden.reshape(TB * L, D)
    # BERT-style mask: the raw 0/1 mask is *added* to the scaled scores (faithful to the
    # PyTorch module, which forwards the 0/1 mask unchanged).  Column 0 of idx_ext is 0 (valid).
    amask = (idx_ref[...] >= 0).astype(jnp.float32)                         # (TB, L)

    # ---- BertLayer: multi-head self attention ----
    q = _mm(hidden2, qw) + qb[...]
    k = _mm(hidden2, kw) + kb[...]
    v = _mm(hidden2, vw) + vb[...]
    q3 = q.reshape(TB, L, D)
    k3b = k.reshape(TB, L, D).astype(jnp.bfloat16)
    v3 = v.reshape(TB, L, D)

    # Heads selected via 0/1 lane masks -> operands stay full-D wide, no sub-128-lane slices
    # or lane-axis concat; per-head contexts accumulate directly into full-width ctx.
    lane = jax.lax.broadcasted_iota(jnp.int32, (1, 1, D), 2)
    scale = 1.0 / math.sqrt(hd)
    ctx = jnp.zeros((TB, L, D), jnp.float32)
    for h in range(num_heads):
        mh = ((lane >= h * hd) & (lane < (h + 1) * hd)).astype(jnp.float32)
        qh = (q3 * mh).astype(jnp.bfloat16)
        vh = (v3 * mh).astype(jnp.bfloat16)
        s = jnp.einsum('bqd,bkd->bqk', qh, k3b,
                       preferred_element_type=jnp.float32) * scale
        s = s + amask[:, None, :]
        s = s - jnp.max(s, axis=-1, keepdims=True)
        p = jnp.exp(s)
        probs = p * pl.reciprocal(jnp.sum(p, axis=-1, keepdims=True), approx=True)
        ctx = ctx + jnp.einsum('bqk,bkd->bqd', probs.astype(jnp.bfloat16), vh,
                               preferred_element_type=jnp.float32)
    ctx2 = ctx.reshape(TB * L, D)

    attn_out = _mm(ctx2, aow) + aob[...]
    attn_out = _layernorm(attn_out + hidden2, ln1g[...], ln1b[...])

    # ---- BertLayer: FFN ----
    inter = _gelu(_mm(attn_out, iw) + ib[...])
    layer_out = _mm(inter, ow) + ob[...]
    layer_out = _layernorm(layer_out + attn_out, ln2g[...], ln2b[...])

    reactions_emb = layer_out.reshape(TB, L, D)[:, 0, :]                    # (TB, D)

    # ---- precursor_layer (pre-transposed weight, lane-dense output) + clip + sigmoid ----
    logits = _mm(reactions_emb, pwt_ref) + pb_ref[...]                      # (TB, Vp)
    out_ref[...] = jax.nn.sigmoid(jnp.clip(logits, -10.0, 10.0))


def _uncond_kernel(shift_ref, targets_ref,
                   ew0, eb0, ew1, eb1, ew2, eb2,
                   pwt_ref, pb_ref, out_ref):
    emb = _material_encoder(targets_ref, shift_ref[0, 0],
                            ew0, eb0, ew1, eb1, ew2, eb2)
    logits = _mm(emb, pwt_ref) + pb_ref[...]
    out_ref[...] = jax.nn.sigmoid(jnp.clip(logits, -10.0, 10.0))


# ------------------------------------- wrapper ---------------------------------------------
def precursor_predict(params, targets, prec_idx=None, *, num_heads=2, batch_tile=8):
    """Forward pass.  Weights stay VMEM-resident across the batch grid; the per-step
    targets / index / output tiles are double-buffered by the Pallas pipeline.
    For production sizes use batch_tile >= 128 (multiple of 8)."""
    B, F = targets.shape
    D = params['enc_w0'].shape[1]
    V = params['prec_w'].shape[0]
    assert D % num_heads == 0

    TB = batch_tile
    Bp = ((B + TB - 1) // TB) * TB              # pad batch to the tile size
    Vp = ((V + 127) // 128) * 128               # lane-dense (multiple-of-128) output

    if Bp != B:
        targets = jnp.pad(targets, ((0, Bp - B), (0, 0)))

    # Logits projection pre-transposed to (D, Vp): no in-kernel transpose, bf16 MXU inputs.
    pwt = jnp.zeros((D, Vp), jnp.bfloat16).at[:, :V].set(
        params['prec_w'].T.astype(jnp.bfloat16))
    pb = jnp.zeros((1, Vp), jnp.float32).at[:, :V].set(params['prec_b'])

    bf = lambda w: w.astype(jnp.bfloat16)
    enc_inputs = [bf(params['enc_w0']), params['enc_b0'],
                  bf(params['enc_w1']), params['enc_b1'],
                  bf(params['enc_w2']), params['enc_b2']]

    def wspec(arr):   # whole-array weight block, constant index map -> stays VMEM-resident
        return pl.BlockSpec(arr.shape, lambda i: (0, 0))

    smem_spec = pl.BlockSpec(memory_space=pltpu.MemorySpace.SMEM)
    grid = (Bp // TB,)
    scratch_shapes = ()

    if prec_idx is None:
        # unconditional path: no index array, no attention weights are DMA'd at all.
        kernel = _uncond_kernel
        inputs = [params['shift'], targets] + enc_inputs + [pwt, pb]
        in_specs = ([smem_spec, pl.BlockSpec((TB, F), lambda i: (i, 0))]
                    + [wspec(a) for a in enc_inputs] + [wspec(pwt), wspec(pb)])
    else:
        M = prec_idx.shape[1]
        L = M + 1
        # extended index row: col 0 is a dummy always-valid slot for the target embedding,
        # so the attention mask is a single (>= 0) compare -- no in-kernel concatenation.
        idx_ext = jnp.concatenate(
            [jnp.zeros((B, 1), jnp.int32), prec_idx.astype(jnp.int32)], axis=1)
        if Bp != B:
            pad = jnp.full((Bp - B, L), -1, jnp.int32).at[:, 0].set(0)
            idx_ext = jnp.concatenate([idx_ext, pad], axis=0)

        attn_inputs = [bf(params['q_w']), params['q_b'],
                       bf(params['k_w']), params['k_b'],
                       bf(params['v_w']), params['v_b'],
                       bf(params['attn_out_w']), params['attn_out_b'],
                       params['ln1_g'], params['ln1_b'],
                       bf(params['inter_w']), params['inter_b'],
                       bf(params['out_w']), params['out_b'],
                       params['ln2_g'], params['ln2_b']]
        inputs = ([params['shift'], idx_ext, targets, idx_ext]
                  + enc_inputs + [params['prec_w'], pwt, pb] + attn_inputs)
        in_specs = ([smem_spec,                                      # shift (scalar)
                     smem_spec,                                      # idx_ext -> SMEM (gather indices)
                     pl.BlockSpec((TB, F), lambda i: (i, 0)),        # targets tile
                     pl.BlockSpec((TB, L), lambda i: (i, 0))]        # idx_ext tile (vector mask)
                    + [wspec(a) for a in enc_inputs]
                    + [wspec(params['prec_w']), wspec(pwt), wspec(pb)]
                    + [wspec(a) for a in attn_inputs])
        kernel = functools.partial(_cond_kernel, num_heads=num_heads)
        scratch_shapes = [pltpu.VMEM((TB, L, D), jnp.float32)]

    out = pl.pallas_call(
        kernel,
        out_shape=jax.ShapeDtypeStruct((Bp, Vp), jnp.float32),
        grid=grid,
        in_specs=in_specs,
        out_specs=pl.BlockSpec((TB, Vp), lambda i: (i, 0)),
        scratch_shapes=scratch_shapes,
        compiler_params=pltpu.CompilerParams(
            dimension_semantics=("parallel",)),   # shard batch tiles across v7x's 2 TCs
    )(*inputs)
    return out[:B, :V]


# --------------------------------- deterministic init --------------------------------------
def init_params(key, *, vocab_size, num_reserved_ids=10, mat_feature_len=83,
                ele_dim=32, num_enc_layers=3):
    V = vocab_size - num_reserved_ids
    keys = iter(jax.random.split(key, 64))

    def lin(fan_in, fan_out):
        w = 0.1 * jax.random.normal(next(keys), (fan_in, fan_out), jnp.float32)
        b = 0.05 * jax.random.normal(next(keys), (1, fan_out), jnp.float32)
        return w, b

    params = {'shift': jnp.full((1, 1), -0.5, jnp.float32)}
    dims = [mat_feature_len] + [ele_dim] * num_enc_layers
    for i in range(num_enc_layers):
        params[f'enc_w{i}'], params[f'enc_b{i}'] = lin(dims[i], dims[i + 1])
    # precursor_layer kept in torch layout: weight (V, ele_dim), bias (1, V)
    params['prec_w'] = 0.1 * jax.random.normal(next(keys), (V, ele_dim), jnp.float32)
    params['prec_b'] = 0.05 * jax.random.normal(next(keys), (1, V), jnp.float32)
    for name in ('q', 'k', 'v', 'attn_out', 'inter', 'out'):
        params[f'{name}_w'], params[f'{name}_b'] = lin(ele_dim, ele_dim)
    for name in ('ln1', 'ln2'):
        params[f'{name}_g'] = 1.0 + 0.05 * jax.random.normal(next(keys), (1, ele_dim), jnp.float32)
        params[f'{name}_b'] = 0.05 * jax.random.normal(next(keys), (1, ele_dim), jnp.float32)
    return params


# ---------------------------------- pure-JAX reference -------------------------------------
def reference_forward(params, targets, prec_idx):
    def gelu(x):
        return 0.5 * x * (1.0 + jax.scipy.special.erf(x / jnp.sqrt(2.0)))

    shift = params['shift'][0, 0]
    x = jnp.where(targets == 0.0, shift, targets)
    for i in range(3):
        x = gelu(x @ params[f'enc_w{i}'] + params[f'enc_b{i}'])
    x = x * jax.lax.rsqrt(jnp.sum(x * x, axis=-1, keepdims=True))
    valid = jnp.any(targets != 0.0, axis=-1, keepdims=True)
    targets_emb = jnp.where(valid, x, 0.0)

    if prec_idx is None:
        reactions_emb = targets_emb
    else:
        B, M = prec_idx.shape
        D = targets_emb.shape[-1]
        L = M + 1
        pmask = prec_idx >= 0
        idx0 = jnp.where(pmask, prec_idx, 0)
        prec_emb = jnp.where(pmask[..., None], params['prec_w'][idx0], 0.0)
        hidden = jnp.concatenate([targets_emb[:, None, :], prec_emb], axis=1)
        amask = jnp.concatenate(
            [jnp.ones((B, 1), jnp.float32), pmask.astype(jnp.float32)], axis=1)
        H, d = 2, D // 2

        def proj(h3, w, b):
            return (h3.reshape(B * L, D) @ w + b).reshape(B, L, H, d).transpose(0, 2, 1, 3)

        q = proj(hidden, params['q_w'], params['q_b'])
        k = proj(hidden, params['k_w'], params['k_b'])
        v = proj(hidden, params['v_w'], params['v_b'])
        scores = jnp.einsum('bhqd,bhkd->bhqk', q, k) / math.sqrt(d)
        scores = scores + amask[:, None, None, :]
        probs = jax.nn.softmax(scores, axis=-1)
        ctx = jnp.einsum('bhqk,bhkd->bhqd', probs, v).transpose(0, 2, 1, 3).reshape(B * L, D)
        attn_out = ctx @ params['attn_out_w'] + params['attn_out_b']
        attn_out = _layernorm(attn_out + hidden.reshape(B * L, D),
                              params['ln1_g'], params['ln1_b'])
        inter = gelu(attn_out @ params['inter_w'] + params['inter_b'])
        out = inter @ params['out_w'] + params['out_b']
        out = _layernorm(out + attn_out, params['ln2_g'], params['ln2_b'])
        reactions_emb = out.reshape(B, L, D)[:, 0, :]

    logits = reactions_emb @ params['prec_w'].T + params['prec_b']
    return jax.nn.sigmoid(jnp.clip(logits, -10.0, 10.0))


# --------------------------------------- main ----------------------------------------------
if __name__ == "__main__":
    key = jax.random.PRNGKey(0)
    k_par, k_t, k_sp, k_idx = jax.random.split(key, 4)

    vocab_size, num_reserved = 138, 10            # -> 128 precursor classes (lane aligned)
    B, F, M = 16, 83, 5                           # batch, mat_feature_len, precursor slots (L=6)

    params = init_params(k_par, vocab_size=vocab_size, mat_feature_len=F)

    targets = jax.random.normal(k_t, (B, F), jnp.float32)
    targets = targets * (jax.random.uniform(k_sp, (B, F)) > 0.4).astype(jnp.float32)
    targets = targets.at[2].set(0.0)              # one all-zero row (masked out by MaterialEncoder)

    prec_idx = jax.random.randint(k_idx, (B, M), -1, vocab_size - num_reserved).astype(jnp.int32)
    prec_idx = prec_idx.at[0, 3:].set(-1)         # padded precursor slots
    prec_idx = prec_idx.at[5, :].set(-1)          # a row with no conditional precursors at all

    # conditional path (Transformer layer over [target ; precursors]); grid = (B/TB,) = (2,)
    y = jax.block_until_ready(
        precursor_predict(params, targets, prec_idx, num_heads=2, batch_tile=8))
    y_ref = reference_forward(params, targets, prec_idx)
    np.testing.assert_allclose(np.asarray(y), np.asarray(y_ref), atol=2e-2, rtol=0)
    assert y.shape == (B, vocab_size - num_reserved)

    # unconditional path
    y0 = jax.block_until_ready(
        precursor_predict(params, targets, None, num_heads=2, batch_tile=8))
    y0_ref = reference_forward(params, targets, None)
    np.testing.assert_allclose(np.asarray(y0), np.asarray(y0_ref), atol=2e-2, rtol=0)

    print("KERNEL_OK")
</pallas_src>

<mosaic_0001>
module attributes {stable_mosaic.version = 11 : i64} {
  func.func @_cond_kernel(%arg0: i32, %arg1: memref<1x1xf32, #tpu.memory_space<smem>>, %arg2: memref<16x6xi32, #tpu.memory_space<smem>>, %arg3: memref<8x83xf32, #tpu.memory_space<vmem>>, %arg4: memref<8x6xi32, #tpu.memory_space<vmem>>, %arg5: memref<83x32xbf16, #tpu.memory_space<vmem>>, %arg6: memref<1x32xf32, #tpu.memory_space<vmem>>, %arg7: memref<32x32xbf16, #tpu.memory_space<vmem>>, %arg8: memref<1x32xf32, #tpu.memory_space<vmem>>, %arg9: memref<32x32xbf16, #tpu.memory_space<vmem>>, %arg10: memref<1x32xf32, #tpu.memory_space<vmem>>, %arg11: memref<128x32xf32, #tpu.memory_space<vmem>>, %arg12: memref<32x128xbf16, #tpu.memory_space<vmem>>, %arg13: memref<1x128xf32, #tpu.memory_space<vmem>>, %arg14: memref<32x32xbf16, #tpu.memory_space<vmem>>, %arg15: memref<1x32xf32, #tpu.memory_space<vmem>>, %arg16: memref<32x32xbf16, #tpu.memory_space<vmem>>, %arg17: memref<1x32xf32, #tpu.memory_space<vmem>>, %arg18: memref<32x32xbf16, #tpu.memory_space<vmem>>, %arg19: memref<1x32xf32, #tpu.memory_space<vmem>>, %arg20: memref<32x32xbf16, #tpu.memory_space<vmem>>, %arg21: memref<1x32xf32, #tpu.memory_space<vmem>>, %arg22: memref<1x32xf32, #tpu.memory_space<vmem>>, %arg23: memref<1x32xf32, #tpu.memory_space<vmem>>, %arg24: memref<32x32xbf16, #tpu.memory_space<vmem>>, %arg25: memref<1x32xf32, #tpu.memory_space<vmem>>, %arg26: memref<32x32xbf16, #tpu.memory_space<vmem>>, %arg27: memref<1x32xf32, #tpu.memory_space<vmem>>, %arg28: memref<1x32xf32, #tpu.memory_space<vmem>>, %arg29: memref<1x32xf32, #tpu.memory_space<vmem>>, %arg30: memref<8x128xf32, #tpu.memory_space<vmem>>, %arg31: memref<8x6x32xf32, #tpu.memory_space<vmem>>) attributes {dimension_semantics = [#tpu.dimension_semantics<parallel>], iteration_bounds = array<i64: 2>, scalar_prefetch = 0 : i64, scratch_operands = 1 : i64, tpu.core_type = #tpu.core_type<tc>, window_params = [{transform_indices = @transform_0, window_bounds = array<i64: 1, 1>}, {transform_indices = @transform_1, window_bounds = array<i64: 16, 6>}, {transform_indices = @transform_2, window_bounds = array<i64: 8, 83>}, {transform_indices = @transform_3, window_bounds = array<i64: 8, 6>}, {pipeline_mode = #tpu.pipeline_mode<synchronous>, transform_indices = @transform_4, window_bounds = array<i64: 83, 32>}, {pipeline_mode = #tpu.pipeline_mode<synchronous>, transform_indices = @transform_5, window_bounds = array<i64: 1, 32>}, {pipeline_mode = #tpu.pipeline_mode<synchronous>, transform_indices = @transform_6, window_bounds = array<i64: 32, 32>}, {pipeline_mode = #tpu.pipeline_mode<synchronous>, transform_indices = @transform_7, window_bounds = array<i64: 1, 32>}, {pipeline_mode = #tpu.pipeline_mode<synchronous>, transform_indices = @transform_8, window_bounds = array<i64: 32, 32>}, {pipeline_mode = #tpu.pipeline_mode<synchronous>, transform_indices = @transform_9, window_bounds = array<i64: 1, 32>}, {pipeline_mode = #tpu.pipeline_mode<synchronous>, transform_indices = @transform_10, window_bounds = array<i64: 128, 32>}, {pipeline_mode = #tpu.pipeline_mode<synchronous>, transform_indices = @transform_11, window_bounds = array<i64: 32, 128>}, {pipeline_mode = #tpu.pipeline_mode<synchronous>, transform_indices = @transform_12, window_bounds = array<i64: 1, 128>}, {pipeline_mode = #tpu.pipeline_mode<synchronous>, transform_indices = @transform_13, window_bounds = array<i64: 32, 32>}, {pipeline_mode = #tpu.pipeline_mode<synchronous>, transform_indices = @transform_14, window_bounds = array<i64: 1, 32>}, {pipeline_mode = #tpu.pipeline_mode<synchronous>, transform_indices = @transform_15, window_bounds = array<i64: 32, 32>}, {pipeline_mode = #tpu.pipeline_mode<synchronous>, transform_indices = @transform_16, window_bounds = array<i64: 1, 32>}, {pipeline_mode = #tpu.pipeline_mode<synchronous>, transform_indices = @transform_17, window_bounds = array<i64: 32, 32>}, {pipeline_mode = #tpu.pipeline_mode<synchronous>, transform_indices = @transform_18, window_bounds = array<i64: 1, 32>}, {pipeline_mode = #tpu.pipeline_mode<synchronous>, transform_indices = @transform_19, window_bounds = array<i64: 32, 32>}, {pipeline_mode = #tpu.pipeline_mode<synchronous>, transform_indices = @transform_20, window_bounds = array<i64: 1, 32>}, {pipeline_mode = #tpu.pipeline_mode<synchronous>, transform_indices = @transform_21, window_bounds = array<i64: 1, 32>}, {pipeline_mode = #tpu.pipeline_mode<synchronous>, transform_indices = @transform_22, window_bounds = array<i64: 1, 32>}, {pipeline_mode = #tpu.pipeline_mode<synchronous>, transform_indices = @transform_23, window_bounds = array<i64: 32, 32>}, {pipeline_mode = #tpu.pipeline_mode<synchronous>, transform_indices = @transform_24, window_bounds = array<i64: 1, 32>}, {pipeline_mode = #tpu.pipeline_mode<synchronous>, transform_indices = @transform_25, window_bounds = array<i64: 32, 32>}, {pipeline_mode = #tpu.pipeline_mode<synchronous>, transform_indices = @transform_26, window_bounds = array<i64: 1, 32>}, {pipeline_mode = #tpu.pipeline_mode<synchronous>, transform_indices = @transform_27, window_bounds = array<i64: 1, 32>}, {pipeline_mode = #tpu.pipeline_mode<synchronous>, transform_indices = @transform_28, window_bounds = array<i64: 1, 32>}, {transform_indices = @transform_29, window_bounds = array<i64: 8, 128>}]} {
    %c8_i32 = arith.constant 8 : i32
    %0 = arith.muli %arg0, %c8_i32 : i32
    %c0 = arith.constant 0 : index
    %c0_0 = arith.constant 0 : index
    %1 = memref.load %arg1[%c0, %c0_0] : memref<1x1xf32, #tpu.memory_space<smem>>
    %c0_1 = arith.constant 0 : index
    %c0_2 = arith.constant 0 : index
    %2 = vector.load %arg3[%c0_1, %c0_2] : memref<8x83xf32, #tpu.memory_space<vmem>>, vector<8x83xf32>
    %cst = arith.constant 0.000000e+00 : f32
    %3 = vector.broadcast %cst : f32 to vector<8x83xf32>
    %4 = arith.cmpf one, %2, %3 : vector<8x83xf32>
    %5 = arith.extui %4 : vector<8x83xi1> to vector<8x83xi32>
    %6 = arith.sitofp %5 : vector<8x83xi32> to vector<8x83xf32>
    %cst_3 = arith.constant dense<0.000000e+00> : vector<8xf32>
    %7 = vector.multi_reduction <add>, %6, %cst_3 [1] : vector<8x83xf32> to vector<8xf32>
    %8 = vector.shape_cast %7 : vector<8xf32> to vector<8x1xf32>
    %cst_4 = arith.constant 0.000000e+00 : f32
    %9 = vector.broadcast %cst_4 : f32 to vector<8x1xf32>
    %10 = arith.cmpf ogt, %8, %9 : vector<8x1xf32>
    %cst_5 = arith.constant 0.000000e+00 : f32
    %11 = vector.broadcast %cst_5 : f32 to vector<8x83xf32>
    %12 = arith.cmpf oeq, %2, %11 : vector<8x83xf32>
    %13 = vector.broadcast %1 : f32 to vector<8x83xf32>
    %14 = arith.select %12, %13, %2 : vector<8x83xi1>, vector<8x83xf32>
    %c0_6 = arith.constant 0 : index
    %c0_7 = arith.constant 0 : index
    %15 = vector.load %arg5[%c0_6, %c0_7] : memref<83x32xbf16, #tpu.memory_space<vmem>>, vector<83x32xbf16>
    %16 = arith.truncf %14 : vector<8x83xf32> to vector<8x83xbf16>
    %cst_8 = arith.constant dense<0.000000e+00> : vector<8x32xf32>
    %17 = tpu.matmul %16, %15, %cst_8 {dimension_numbers = #tpu.dot_dimension_numbers<[1], [0], [0], [1], [0, 0, 1, 1], [], []>} : vector<8x83xbf16>, vector<83x32xbf16>, vector<8x32xf32> -> vector<8x32xf32>
    %c0_9 = arith.constant 0 : index
    %c0_10 = arith.constant 0 : index
    %18 = vector.load %arg6[%c0_9, %c0_10] : memref<1x32xf32, #tpu.memory_space<vmem>>, vector<1x32xf32>
    %19 = vector.broadcast %18 : vector<1x32xf32> to vector<8x32xf32>
    %20 = arith.addf %17, %19 : vector<8x32xf32>
    %cst_11 = arith.constant 5.000000e-01 : f32
    %21 = vector.broadcast %cst_11 : f32 to vector<8x32xf32>
    %22 = arith.mulf %21, %20 : vector<8x32xf32>
    %23 = arith.mulf %20, %20 : vector<8x32xf32>
    %24 = arith.mulf %23, %20 : vector<8x32xf32>
    %cst_12 = arith.constant 4.471500e-02 : f32
    %25 = vector.broadcast %cst_12 : f32 to vector<8x32xf32>
    %26 = arith.mulf %25, %24 : vector<8x32xf32>
    %27 = arith.addf %20, %26 : vector<8x32xf32>
    %cst_13 = arith.constant 0.797884583 : f32
    %28 = vector.broadcast %cst_13 : f32 to vector<8x32xf32>
    %29 = arith.mulf %28, %27 : vector<8x32xf32>
    %30 = math.tanh %29 : vector<8x32xf32>
    %cst_14 = arith.constant 1.000000e+00 : f32
    %31 = vector.broadcast %cst_14 : f32 to vector<8x32xf32>
    %32 = arith.addf %31, %30 : vector<8x32xf32>
    %33 = arith.mulf %22, %32 : vector<8x32xf32>
    %c0_15 = arith.constant 0 : index
    %c0_16 = arith.constant 0 : index
    %34 = vector.load %arg7[%c0_15, %c0_16] : memref<32x32xbf16, #tpu.memory_space<vmem>>, vector<32x32xbf16>
    %35 = arith.truncf %33 : vector<8x32xf32> to vector<8x32xbf16>
    %cst_17 = arith.constant dense<0.000000e+00> : vector<8x32xf32>
    %36 = tpu.matmul %35, %34, %cst_17 {dimension_numbers = #tpu.dot_dimension_numbers<[1], [0], [0], [1], [0, 0, 1, 1], [], []>} : vector<8x32xbf16>, vector<32x32xbf16>, vector<8x32xf32> -> vector<8x32xf32>
    %c0_18 = arith.constant 0 : index
    %c0_19 = arith.constant 0 : index
    %37 = vector.load %arg8[%c0_18, %c0_19] : memref<1x32xf32, #tpu.memory_space<vmem>>, vector<1x32xf32>
    %38 = vector.broadcast %37 : vector<1x32xf32> to vector<8x32xf32>
    %39 = arith.addf %36, %38 : vector<8x32xf32>
    %cst_20 = arith.constant 5.000000e-01 : f32
    %40 = vector.broadcast %cst_20 : f32 to vector<8x32xf32>
    %41 = arith.mulf %40, %39 : vector<8x32xf32>
    %42 = arith.mulf %39, %39 : vector<8x32xf32>
    %43 = arith.mulf %42, %39 : vector<8x32xf32>
    %cst_21 = arith.constant 4.471500e-02 : f32
    %44 = vector.broadcast %cst_21 : f32 to vector<8x32xf32>
    %45 = arith.mulf %44, %43 : vector<8x32xf32>
    %46 = arith.addf %39, %45 : vector<8x32xf32>
    %cst_22 = arith.constant 0.797884583 : f32
    %47 = vector.broadcast %cst_22 : f32 to vector<8x32xf32>
    %48 = arith.mulf %47, %46 : vector<8x32xf32>
    %49 = math.tanh %48 : vector<8x32xf32>
    %cst_23 = arith.constant 1.000000e+00 : f32
    %50 = vector.broadcast %cst_23 : f32 to vector<8x32xf32>
    %51 = arith.addf %50, %49 : vector<8x32xf32>
    %52 = arith.mulf %41, %51 : vector<8x32xf32>
    %c0_24 = arith.constant 0 : index
    %c0_25 = arith.constant 0 : index
    %53 = vector.load %arg9[%c0_24, %c0_25] : memref<32x32xbf16, #tpu.memory_space<vmem>>, vector<32x32xbf16>
    %54 = arith.truncf %52 : vector<8x32xf32> to vector<8x32xbf16>
    %cst_26 = arith.constant dense<0.000000e+00> : vector<8x32xf32>
    %55 = tpu.matmul %54, %53, %cst_26 {dimension_numbers = #tpu.dot_dimension_numbers<[1], [0], [0], [1], [0, 0, 1, 1], [], []>} : vector<8x32xbf16>, vector<32x32xbf16>, vector<8x32xf32> -> vector<8x32xf32>
    %c0_27 = arith.constant 0 : index
    %c0_28 = arith.constant 0 : index
    %56 = vector.load %arg10[%c0_27, %c0_28] : memref<1x32xf32, #tpu.memory_space<vmem>>, vector<1x32xf32>
    %57 = vector.broadcast %56 : vector<1x32xf32> to vector<8x32xf32>
    %58 = arith.addf %55, %57 : vector<8x32xf32>
    %cst_29 = arith.constant 5.000000e-01 : f32
    %59 = vector.broadcast %cst_29 : f32 to vector<8x32xf32>
    %60 = arith.mulf %59, %58 : vector<8x32xf32>
    %61 = arith.mulf %58, %58 : vector<8x32xf32>
    %62 = arith.mulf %61, %58 : vector<8x32xf32>
    %cst_30 = arith.constant 4.471500e-02 : f32
    %63 = vector.broadcast %cst_30 : f32 to vector<8x32xf32>
    %64 = arith.mulf %63, %62 : vector<8x32xf32>
    %65 = arith.addf %58, %64 : vector<8x32xf32>
    %cst_31 = arith.constant 0.797884583 : f32
    %66 = vector.broadcast %cst_31 : f32 to vector<8x32xf32>
    %67 = arith.mulf %66, %65 : vector<8x32xf32>
    %68 = math.tanh %67 : vector<8x32xf32>
    %cst_32 = arith.constant 1.000000e+00 : f32
    %69 = vector.broadcast %cst_32 : f32 to vector<8x32xf32>
    %70 = arith.addf %69, %68 : vector<8x32xf32>
    %71 = arith.mulf %60, %70 : vector<8x32xf32>
    %72 = arith.mulf %71, %71 : vector<8x32xf32>
    %cst_33 = arith.constant dense<0.000000e+00> : vector<8xf32>
    %73 = vector.multi_reduction <add>, %72, %cst_33 [1] : vector<8x32xf32> to vector<8xf32>
    %74 = vector.shape_cast %73 : vector<8xf32> to vector<8x1xf32>
    %75 = math.rsqrt %74 : vector<8x1xf32>
    %76 = vector.broadcast %75 : vector<8x1xf32> to vector<8x32xf32>
    %77 = arith.mulf %71, %76 : vector<8x32xf32>
    %cst_34 = arith.constant 0.000000e+00 : f32
    %78 = vector.shape_cast %10 : vector<8x1xi1> to vector<8x1xi1>
    %79 = vector.broadcast %78 : vector<8x1xi1> to vector<8x32xi1>
    %80 = vector.broadcast %cst_34 : f32 to vector<8x32xf32>
    %81 = arith.select %79, %77, %80 : vector<8x32xi1>, vector<8x32xf32>
    %82 = vector.extract_strided_slice %81 {offsets = [0, 0], sizes = [1, 32], strides = [1, 1]} : vector<8x32xf32> to vector<1x32xf32>
    %83 = vector.shape_cast %82 : vector<1x32xf32> to vector<32xf32>
    %c0_35 = arith.constant 0 : index
    %c0_36 = arith.constant 0 : index
    %c0_37 = arith.constant 0 : index
    %84 = vector.load %arg31[%c0_35, %c0_36, %c0_37] : memref<8x6x32xf32, #tpu.memory_space<vmem>>, vector<1x1x32xf32>
    %85 = vector.shape_cast %84 : vector<1x1x32xf32> to vector<32xf32>
    %86 = vector.shape_cast %83 : vector<32xf32> to vector<1x1x32xf32>
    tpu.vector_store %arg31[%c0_35, %c0_36, %c0_37], %86 {strides = array<i32>} : memref<8x6x32xf32, #tpu.memory_space<vmem>>, vector<1x1x32xf32>,
    %c0_i32 = arith.constant 0 : i32
    %87 = arith.addi %0, %c0_i32 : i32
    %88 = arith.index_cast %87 : i32 to index
    %c1 = arith.constant 1 : index
    %89 = memref.load %arg2[%88, %c1] : memref<16x6xi32, #tpu.memory_space<smem>>
    %c0_i32_38 = arith.constant 0 : i32
    %90 = arith.cmpi sge, %89, %c0_i32_38 : i32
    %91 = arith.extui %90 : i1 to i32
    %92 = arith.sitofp %91 : i32 to f32
    %c0_i32_39 = arith.constant 0 : i32
    %93 = arith.maxsi %89, %c0_i32_39 : i32
    %94 = arith.index_cast %93 : i32 to index
    %c0_40 = arith.constant 0 : index
    %95 = vector.load %arg11[%94, %c0_40] : memref<128x32xf32, #tpu.memory_space<vmem>>, vector<1x32xf32>
    %96 = vector.shape_cast %95 : vector<1x32xf32> to vector<32xf32>
    %97 = vector.broadcast %92 : f32 to vector<32xf32>
    %98 = arith.mulf %96, %97 : vector<32xf32>
    %c0_41 = arith.constant 0 : index
    %c1_42 = arith.constant 1 : index
    %c0_43 = arith.constant 0 : index
    %99 = vector.load %arg31[%c0_41, %c1_42, %c0_43] : memref<8x6x32xf32, #tpu.memory_space<vmem>>, vector<1x1x32xf32>
    %100 = vector.shape_cast %99 : vector<1x1x32xf32> to vector<32xf32>
    %101 = vector.shape_cast %98 : vector<32xf32> to vector<1x1x32xf32>
    tpu.vector_store %arg31[%c0_41, %c1_42, %c0_43], %101 {strides = array<i32>} : memref<8x6x32xf32, #tpu.memory_space<vmem>>, vector<1x1x32xf32>,
    %c0_i32_44 = arith.constant 0 : i32
    %102 = arith.addi %0, %c0_i32_44 : i32
    %103 = arith.index_cast %102 : i32 to index
    %c2 = arith.constant 2 : index
    %104 = memref.load %arg2[%103, %c2] : memref<16x6xi32, #tpu.memory_space<smem>>
    %c0_i32_45 = arith.constant 0 : i32
    %105 = arith.cmpi sge, %104, %c0_i32_45 : i32
    %106 = arith.extui %105 : i1 to i32
    %107 = arith.sitofp %106 : i32 to f32
    %c0_i32_46 = arith.constant 0 : i32
    %108 = arith.maxsi %104, %c0_i32_46 : i32
    %109 = arith.index_cast %108 : i32 to index
    %c0_47 = arith.constant 0 : index
    %110 = vector.load %arg11[%109, %c0_47] : memref<128x32xf32, #tpu.memory_space<vmem>>, vector<1x32xf32>
    %111 = vector.shape_cast %110 : vector<1x32xf32> to vector<32xf32>
    %112 = vector.broadcast %107 : f32 to vector<32xf32>
    %113 = arith.mulf %111, %112 : vector<32xf32>
    %c0_48 = arith.constant 0 : index
    %c2_49 = arith.constant 2 : index
    %c0_50 = arith.constant 0 : index
    %114 = vector.load %arg31[%c0_48, %c2_49, %c0_50] : memref<8x6x32xf32, #tpu.memory_space<vmem>>, vector<1x1x32xf32>
    %115 = vector.shape_cast %114 : vector<1x1x32xf32> to vector<32xf32>
    %116 = vector.shape_cast %113 : vector<32xf32> to vector<1x1x32xf32>
    tpu.vector_store %arg31[%c0_48, %c2_49, %c0_50], %116 {strides = array<i32>} : memref<8x6x32xf32, #tpu.memory_space<vmem>>, vector<1x1x32xf32>,
    %c0_i32_51 = arith.constant 0 : i32
    %117 = arith.addi %0, %c0_i32_51 : i32
    %118 = arith.index_cast %117 : i32 to index
    %c3 = arith.constant 3 : index
    %119 = memref.load %arg2[%118, %c3] : memref<16x6xi32, #tpu.memory_space<smem>>
    %c0_i32_52 = arith.constant 0 : i32
    %120 = arith.cmpi sge, %119, %c0_i32_52 : i32
    %121 = arith.extui %120 : i1 to i32
    %122 = arith.sitofp %121 : i32 to f32
    %c0_i32_53 = arith.constant 0 : i32
    %123 = arith.maxsi %119, %c0_i32_53 : i32
    %124 = arith.index_cast %123 : i32 to index
    %c0_54 = arith.constant 0 : index
    %125 = vector.load %arg11[%124, %c0_54] : memref<128x32xf32, #tpu.memory_space<vmem>>, vector<1x32xf32>
    %126 = vector.shape_cast %125 : vector<1x32xf32> to vector<32xf32>
    %127 = vector.broadcast %122 : f32 to vector<32xf32>
    %128 = arith.mulf %126, %127 : vector<32xf32>
    %c0_55 = arith.constant 0 : index
    %c3_56 = arith.constant 3 : index
    %c0_57 = arith.constant 0 : index
    %129 = vector.load %arg31[%c0_55, %c3_56, %c0_57] : memref<8x6x32xf32, #tpu.memory_space<vmem>>, vector<1x1x32xf32>
    %130 = vector.shape_cast %129 : vector<1x1x32xf32> to vector<32xf32>
    %131 = vector.shape_cast %128 : vector<32xf32> to vector<1x1x32xf32>
    tpu.vector_store %arg31[%c0_55, %c3_56, %c0_57], %131 {strides = array<i32>} : memref<8x6x32xf32, #tpu.memory_space<vmem>>, vector<1x1x32xf32>,
    %c0_i32_58 = arith.constant 0 : i32
    %132 = arith.addi %0, %c0_i32_58 : i32
    %133 = arith.index_cast %132 : i32 to index
    %c4 = arith.constant 4 : index
    %134 = memref.load %arg2[%133, %c4] : memref<16x6xi32, #tpu.memory_space<smem>>
    %c0_i32_59 = arith.constant 0 : i32
    %135 = arith.cmpi sge, %134, %c0_i32_59 : i32
    %136 = arith.extui %135 : i1 to i32
    %137 = arith.sitofp %136 : i32 to f32
    %c0_i32_60 = arith.constant 0 : i32
    %138 = arith.maxsi %134, %c0_i32_60 : i32
    %139 = arith.index_cast %138 : i32 to index
    %c0_61 = arith.constant 0 : index
    %140 = vector.load %arg11[%139, %c0_61] : memref<128x32xf32, #tpu.memory_space<vmem>>, vector<1x32xf32>
    %141 = vector.shape_cast %140 : vector<1x32xf32> to vector<32xf32>
    %142 = vector.broadcast %137 : f32 to vector<32xf32>
    %143 = arith.mulf %141, %142 : vector<32xf32>
    %c0_62 = arith.constant 0 : index
    %c4_63 = arith.constant 4 : index
    %c0_64 = arith.constant 0 : index
    %144 = vector.load %arg31[%c0_62, %c4_63, %c0_64] : memref<8x6x32xf32, #tpu.memory_space<vmem>>, vector<1x1x32xf32>
    %145 = vector.shape_cast %144 : vector<1x1x32xf32> to vector<32xf32>
    %146 = vector.shape_cast %143 : vector<32xf32> to vector<1x1x32xf32>
    tpu.vector_store %arg31[%c0_62, %c4_63, %c0_64], %146 {strides = array<i32>} : memref<8x6x32xf32, #tpu.memory_space<vmem>>, vector<1x1x32xf32>,
    %c0_i32_65 = arith.constant 0 : i32
    %147 = arith.addi %0, %c0_i32_65 : i32
    %148 = arith.index_cast %147 : i32 to index
    %c5 = arith.constant 5 : index
    %149 = memref.load %arg2[%148, %c5] : memref<16x6xi32, #tpu.memory_space<smem>>
    %c0_i32_66 = arith.constant 0 : i32
    %150 = arith.cmpi sge, %149, %c0_i32_66 : i32
    %151 = arith.extui %150 : i1 to i32
    %152 = arith.sitofp %151 : i32 to f32
    %c0_i32_67 = arith.constant 0 : i32
    %153 = arith.maxsi %149, %c0_i32_67 : i32
    %154 = arith.index_cast %153 : i32 to index
    %c0_68 = arith.constant 0 : index
    %155 = vector.load %arg11[%154, %c0_68] : memref<128x32xf32, #tpu.memory_space<vmem>>, vector<1x32xf32>
    %156 = vector.shape_cast %155 : vector<1x32xf32> to vector<32xf32>
    %157 = vector.broadcast %152 : f32 to vector<32xf32>
    %158 = arith.mulf %156, %157 : vector<32xf32>
    %c0_69 = arith.constant 0 : index
    %c5_70 = arith.constant 5 : index
    %c0_71 = arith.constant 0 : index
    %159 = vector.load %arg31[%c0_69, %c5_70, %c0_71] : memref<8x6x32xf32, #tpu.memory_space<vmem>>, vector<1x1x32xf32>
    %160 = vector.shape_cast %159 : vector<1x1x32xf32> to vector<32xf32>
    %161 = vector.shape_cast %158 : vector<32xf32> to vector<1x1x32xf32>
    tpu.vector_store %arg31[%c0_69, %c5_70, %c0_71], %161 {strides = array<i32>} : memref<8x6x32xf32, #tpu.memory_space<vmem>>, vector<1x1x32xf32>,
    %162 = vector.extract_strided_slice %81 {offsets = [1, 0], sizes = [1, 32], strides = [1, 1]} : vector<8x32xf32> to vector<1x32xf32>
    %163 = vector.shape_cast %162 : vector<1x32xf32> to vector<32xf32>
    %c1_72 = arith.constant 1 : index
    %c0_73 = arith.constant 0 : index
    %c0_74 = arith.constant 0 : index
    %164 = vector.load %arg31[%c1_72, %c0_73, %c0_74] : memref<8x6x32xf32, #tpu.memory_space<vmem>>, vector<1x1x32xf32>
    %165 = vector.shape_cast %164 : vector<1x1x32xf32> to vector<32xf32>
    %166 = vector.shape_cast %163 : vector<32xf32> to vector<1x1x32xf32>
    tpu.vector_store %arg31[%c1_72, %c0_73, %c0_74], %166 {strides = array<i32>} : memref<8x6x32xf32, #tpu.memory_space<vmem>>, vector<1x1x32xf32>,
    %c1_i32 = arith.constant 1 : i32
    %167 = arith.addi %0, %c1_i32 : i32
    %168 = arith.index_cast %167 : i32 to index
    %c1_75 = arith.constant 1 : index
    %169 = memref.load %arg2[%168, %c1_75] : memref<16x6xi32, #tpu.memory_space<smem>>
    %c0_i32_76 = arith.constant 0 : i32
    %170 = arith.cmpi sge, %169, %c0_i32_76 : i32
    %171 = arith.extui %170 : i1 to i32
    %172 = arith.sitofp %171 : i32 to f32
    %c0_i32_77 = arith.constant 0 : i32
    %173 = arith.maxsi %169, %c0_i32_77 : i32
    %174 = arith.index_cast %173 : i32 to index
    %c0_78 = arith.constant 0 : index
    %175 = vector.load %arg11[%174, %c0_78] : memref<128x32xf32, #tpu.memory_space<vmem>>, vector<1x32xf32>
    %176 = vector.shape_cast %175 : vector<1x32xf32> to vector<32xf32>
    %177 = vector.broadcast %172 : f32 to vector<32xf32>
    %178 = arith.mulf %176, %177 : vector<32xf32>
    %c1_79 = arith.constant 1 : index
    %c1_80 = arith.constant 1 : index
    %c0_81 = arith.constant 0 : index
    %179 = vector.load %arg31[%c1_79, %c1_80, %c0_81] : memref<8x6x32xf32, #tpu.memory_space<vmem>>, vector<1x1x32xf32>
    %180 = vector.shape_cast %179 : vector<1x1x32xf32> to vector<32xf32>
    %181 = vector.shape_cast %178 : vector<32xf32> to vector<1x1x32xf32>
    tpu.vector_store %arg31[%c1_79, %c1_80, %c0_81], %181 {strides = array<i32>} : memref<8x6x32xf32, #tpu.memory_space<vmem>>, vector<1x1x32xf32>,
    %c1_i32_82 = arith.constant 1 : i32
    %182 = arith.addi %0, %c1_i32_82 : i32
    %183 = arith.index_cast %182 : i32 to index
    %c2_83 = arith.constant 2 : index
    %184 = memref.load %arg2[%183, %c2_83] : memref<16x6xi32, #tpu.memory_space<smem>>
    %c0_i32_84 = arith.constant 0 : i32
    %185 = arith.cmpi sge, %184, %c0_i32_84 : i32
    %186 = arith.extui %185 : i1 to i32
    %187 = arith.sitofp %186 : i32 to f32
    %c0_i32_85 = arith.constant 0 : i32
    %188 = arith.maxsi %184, %c0_i32_85 : i32
    %189 = arith.index_cast %188 : i32 to index
    %c0_86 = arith.constant 0 : index
    %190 = vector.load %arg11[%189, %c0_86] : memref<128x32xf32, #tpu.memory_space<vmem>>, vector<1x32xf32>
    %191 = vector.shape_cast %190 : vector<1x32xf32> to vector<32xf32>
    %192 = vector.broadcast %187 : f32 to vector<32xf32>
    %193 = arith.mulf %191, %192 : vector<32xf32>
    %c1_87 = arith.constant 1 : index
    %c2_88 = arith.constant 2 : index
    %c0_89 = arith.constant 0 : index
    %194 = vector.load %arg31[%c1_87, %c2_88, %c0_89] : memref<8x6x32xf32, #tpu.memory_space<vmem>>, vector<1x1x32xf32>
    %195 = vector.shape_cast %194 : vector<1x1x32xf32> to vector<32xf32>
    %196 = vector.shape_cast %193 : vector<32xf32> to vector<1x1x32xf32>
    tpu.vector_store %arg31[%c1_87, %c2_88, %c0_89], %196 {strides = array<i32>} : memref<8x6x32xf32, #tpu.memory_space<vmem>>, vector<1x1x32xf32>,
    %c1_i32_90 = arith.constant 1 : i32
    %197 = arith.addi %0, %c1_i32_90 : i32
    %198 = arith.index_cast %197 : i32 to index
    %c3_91 = arith.constant 3 : index
    %199 = memref.load %arg2[%198, %c3_91] : memref<16x6xi32, #tpu.memory_space<smem>>
    %c0_i32_92 = arith.constant 0 : i32
    %200 = arith.cmpi sge, %199, %c0_i32_92 : i32
    %201 = arith.extui %200 : i1 to i32
    %202 = arith.sitofp %201 : i32 to f32
    %c0_i32_93 = arith.constant 0 : i32
    %203 = arith.maxsi %199, %c0_i32_93 : i32
    %204 = arith.index_cast %203 : i32 to index
    %c0_94 = arith.constant 0 : index
    %205 = vector.load %arg11[%204, %c0_94] : memref<128x32xf32, #tpu.memory_space<vmem>>, vector<1x32xf32>
    %206 = vector.shape_cast %205 : vector<1x32xf32> to vector<32xf32>
    %207 = vector.broadcast %202 : f32 to vector<32xf32>
    %208 = arith.mulf %206, %207 : vector<32xf32>
    %c1_95 = arith.constant 1 : index
    %c3_96 = arith.constant 3 : index
    %c0_97 = arith.constant 0 : index
    %209 = vector.load %arg31[%c1_95, %c3_96, %c0_97] : memref<8x6x32xf32, #tpu.memory_space<vmem>>, vector<1x1x32xf32>
    %210 = vector.shape_cast %209 : vector<1x1x32xf32> to vector<32xf32>
    %211 = vector.shape_cast %208 : vector<32xf32> to vector<1x1x32xf32>
    tpu.vector_store %arg31[%c1_95, %c3_96, %c0_97], %211 {strides = array<i32>} : memref<8x6x32xf32, #tpu.memory_space<vmem>>, vector<1x1x32xf32>,
    %c1_i32_98 = arith.constant 1 : i32
    %212 = arith.addi %0, %c1_i32_98 : i32
    %213 = arith.index_cast %212 : i32 to index
    %c4_99 = arith.constant 4 : index
    %214 = memref.load %arg2[%213, %c4_99] : memref<16x6xi32, #tpu.memory_space<smem>>
    %c0_i32_100 = arith.constant 0 : i32
    %215 = arith.cmpi sge, %214, %c0_i32_100 : i32
    %216 = arith.extui %215 : i1 to i32
    %217 = arith.sitofp %216 : i32 to f32
    %c0_i32_101 = arith.constant 0 : i32
    %218 = arith.maxsi %214, %c0_i32_101 : i32
    %219 = arith.index_cast %218 : i32 to index
    %c0_102 = arith.constant 0 : index
    %220 = vector.load %arg11[%219, %c0_102] : memref<128x32xf32, #tpu.memory_space<vmem>>, vector<1x32xf32>
    %221 = vector.shape_cast %220 : vector<1x32xf32> to vector<32xf32>
    %222 = vector.broadcast %217 : f32 to vector<32xf32>
    %223 = arith.mulf %221, %222 : vector<32xf32>
    %c1_103 = arith.constant 1 : index
    %c4_104 = arith.constant 4 : index
    %c0_105 = arith.constant 0 : index
    %224 = vector.load %arg31[%c1_103, %c4_104, %c0_105] : memref<8x6x32xf32, #tpu.memory_space<vmem>>, vector<1x1x32xf32>
    %225 = vector.shape_cast %224 : vector<1x1x32xf32> to vector<32xf32>
    %226 = vector.shape_cast %223 : vector<32xf32> to vector<1x1x32xf32>
    tpu.vector_store %arg31[%c1_103, %c4_104, %c0_105], %226 {strides = array<i32>} : memref<8x6x32xf32, #tpu.memory_space<vmem>>, vector<1x1x32xf32>,
    %c1_i32_106 = arith.constant 1 : i32
    %227 = arith.addi %0, %c1_i32_106 : i32
    %228 = arith.index_cast %227 : i32 to index
    %c5_107 = arith.constant 5 : index
    %229 = memref.load %arg2[%228, %c5_107] : memref<16x6xi32, #tpu.memory_space<smem>>
    %c0_i32_108 = arith.constant 0 : i32
    %230 = arith.cmpi sge, %229, %c0_i32_108 : i32
    %231 = arith.extui %230 : i1 to i32
    %232 = arith.sitofp %231 : i32 to f32
    %c0_i32_109 = arith.constant 0 : i32
    %233 = arith.maxsi %229, %c0_i32_109 : i32
    %234 = arith.index_cast %233 : i32 to index
    %c0_110 = arith.constant 0 : index
    %235 = vector.load %arg11[%234, %c0_110] : memref<128x32xf32, #tpu.memory_space<vmem>>, vector<1x32xf32>
    %236 = vector.shape_cast %235 : vector<1x32xf32> to vector<32xf32>
    %237 = vector.broadcast %232 : f32 to vector<32xf32>
    %238 = arith.mulf %236, %237 : vector<32xf32>
    %c1_111 = arith.constant 1 : index
    %c5_112 = arith.constant 5 : index
    %c0_113 = arith.constant 0 : index
    %239 = vector.load %arg31[%c1_111, %c5_112, %c0_113] : memref<8x6x32xf32, #tpu.memory_space<vmem>>, vector<1x1x32xf32>
    %240 = vector.shape_cast %239 : vector<1x1x32xf32> to vector<32xf32>
    %241 = vector.shape_cast %238 : vector<32xf32> to vector<1x1x32xf32>
    tpu.vector_store %arg31[%c1_111, %c5_112, %c0_113], %241 {strides = array<i32>} : memref<8x6x32xf32, #tpu.memory_space<vmem>>, vector<1x1x32xf32>,
    %242 = vector.extract_strided_slice %81 {offsets = [2, 0], sizes = [1, 32], strides = [1, 1]} : vector<8x32xf32> to vector<1x32xf32>
    %243 = vector.shape_cast %242 : vector<1x32xf32> to vector<32xf32>
    %c2_114 = arith.constant 2 : index
    %c0_115 = arith.constant 0 : index
    %c0_116 = arith.constant 0 : index
    %244 = vector.load %arg31[%c2_114, %c0_115, %c0_116] : memref<8x6x32xf32, #tpu.memory_space<vmem>>, vector<1x1x32xf32>
    %245 = vector.shape_cast %244 : vector<1x1x32xf32> to vector<32xf32>
    %246 = vector.shape_cast %243 : vector<32xf32> to vector<1x1x32xf32>
    tpu.vector_store %arg31[%c2_114, %c0_115, %c0_116], %246 {strides = array<i32>} : memref<8x6x32xf32, #tpu.memory_space<vmem>>, vector<1x1x32xf32>,
    %c2_i32 = arith.constant 2 : i32
    %247 = arith.addi %0, %c2_i32 : i32
    %248 = arith.index_cast %247 : i32 to index
    %c1_117 = arith.constant 1 : index
    %249 = memref.load %arg2[%248, %c1_117] : memref<16x6xi32, #tpu.memory_space<smem>>
    %c0_i32_118 = arith.constant 0 : i32
    %250 = arith.cmpi sge, %249, %c0_i32_118 : i32
    %251 = arith.extui %250 : i1 to i32
    %252 = arith.sitofp %251 : i32 to f32
    %c0_i32_119 = arith.constant 0 : i32
    %253 = arith.maxsi %249, %c0_i32_119 : i32
    %254 = arith.index_cast %253 : i32 to index
    %c0_120 = arith.constant 0 : index
    %255 = vector.load %arg11[%254, %c0_120] : memref<128x32xf32, #tpu.memory_space<vmem>>, vector<1x32xf32>
    %256 = vector.shape_cast %255 : vector<1x32xf32> to vector<32xf32>
    %257 = vector.broadcast %252 : f32 to vector<32xf32>
    %258 = arith.mulf %256, %257 : vector<32xf32>
    %c2_121 = arith.constant 2 : index
    %c1_122 = arith.constant 1 : index
    %c0_123 = arith.constant 0 : index
    %259 = vector.load %arg31[%c2_121, %c1_122, %c0_123] : memref<8x6x32xf32, #tpu.memory_space<vmem>>, vector<1x1x32xf32>
    %260 = vector.shape_cast %259 : vector<1x1x32xf32> to vector<32xf32>
    %261 = vector.shape_cast %258 : vector<32xf32> to vector<1x1x32xf32>
    tpu.vector_store %arg31[%c2_121, %c1_122, %c0_123], %261 {strides = array<i32>} : memref<8x6x32xf32, #tpu.memory_space<vmem>>, vector<1x1x32xf32>,
    %c2_i32_124 = arith.constant 2 : i32
    %262 = arith.addi %0, %c2_i32_124 : i32
    %263 = arith.index_cast %262 : i32 to index
    %c2_125 = arith.constant 2 : index
    %264 = memref.load %arg2[%263, %c2_125] : memref<16x6xi32, #tpu.memory_space<smem>>
    %c0_i32_126 = arith.constant 0 : i32
    %265 = arith.cmpi sge, %264, %c0_i32_126 : i32
    %266 = arith.extui %265 : i1 to i32
    %267 = arith.sitofp %266 : i32 to f32
    %c0_i32_127 = arith.constant 0 : i32
    %268 = arith.maxsi %264, %c0_i32_127 : i32
    %269 = arith.index_cast %268 : i32 to index
    %c0_128 = arith.constant 0 : index
    %270 = vector.load %arg11[%269, %c0_128] : memref<128x32xf32, #tpu.memory_space<vmem>>, vector<1x32xf32>
    %271 = vector.shape_cast %270 : vector<1x32xf32> to vector<32xf32>
    %272 = vector.broadcast %267 : f32 to vector<32xf32>
    %273 = arith.mulf %271, %272 : vector<32xf32>
    %c2_129 = arith.constant 2 : index
    %c2_130 = arith.constant 2 : index
    %c0_131 = arith.constant 0 : index
    %274 = vector.load %arg31[%c2_129, %c2_130, %c0_131] : memref<8x6x32xf32, #tpu.memory_space<vmem>>, vector<1x1x32xf32>
    %275 = vector.shape_cast %274 : vector<1x1x32xf32> to vector<32xf32>
    %276 = vector.shape_cast %273 : vector<32xf32> to vector<1x1x32xf32>
    tpu.vector_store %arg31[%c2_129, %c2_130, %c0_131], %276 {strides = array<i32>} : memref<8x6x32xf32, #tpu.memory_space<vmem>>, vector<1x1x32xf32>,
    %c2_i32_132 = arith.constant 2 : i32
    %277 = arith.addi %0, %c2_i32_132 : i32
    %278 = arith.index_cast %277 : i32 to index
    %c3_133 = arith.constant 3 : index
    %279 = memref.load %arg2[%278, %c3_133] : memref<16x6xi32, #tpu.memory_space<smem>>
    %c0_i32_134 = arith.constant 0 : i32
    %280 = arith.cmpi sge, %279, %c0_i32_134 : i32
    %281 = arith.extui %280 : i1 to i32
    %282 = arith.sitofp %281 : i32 to f32
    %c0_i32_135 = arith.constant 0 : i32
    %283 = arith.maxsi %279, %c0_i32_135 : i32
    %284 = arith.index_cast %283 : i32 to index
    %c0_136 = arith.constant 0 : index
    %285 = vector.load %arg11[%284, %c0_136] : memref<128x32xf32, #tpu.memory_space<vmem>>, vector<1x32xf32>
    %286 = vector.shape_cast %285 : vector<1x32xf32> to vector<32xf32>
    %287 = vector.broadcast %282 : f32 to vector<32xf32>
    %288 = arith.mulf %286, %287 : vector<32xf32>
    %c2_137 = arith.constant 2 : index
    %c3_138 = arith.constant 3 : index
    %c0_139 = arith.constant 0 : index
    %289 = vector.load %arg31[%c2_137, %c3_138, %c0_139] : memref<8x6x32xf32, #tpu.memory_space<vmem>>, vector<1x1x32xf32>
    %290 = vector.shape_cast %289 : vector<1x1x32xf32> to vector<32xf32>
    %291 = vector.shape_cast %288 : vector<32xf32> to vector<1x1x32xf32>
    tpu.vector_store %arg31[%c2_137, %c3_138, %c0_139], %291 {strides = array<i32>} : memref<8x6x32xf32, #tpu.memory_space<vmem>>, vector<1x1x32xf32>,
    %c2_i32_140 = arith.constant 2 : i32
    %292 = arith.addi %0, %c2_i32_140 : i32
    %293 = arith.index_cast %292 : i32 to index
    %c4_141 = arith.constant 4 : index
    %294 = memref.load %arg2[%293, %c4_141] : memref<16x6xi32, #tpu.memory_space<smem>>
    %c0_i32_142 = arith.constant 0 : i32
    %295 = arith.cmpi sge, %294, %c0_i32_142 : i32
    %296 = arith.extui %295 : i1 to i32
    %297 = arith.sitofp %296 : i32 to f32
    %c0_i32_143 = arith.constant 0 : i32
    %298 = arith.maxsi %294, %c0_i32_143 : i32
    %299 = arith.index_cast %298 : i32 to index
    %c0_144 = arith.constant 0 : index
    %300 = vector.load %arg11[%299, %c0_144] : memref<128x32xf32, #tpu.memory_space<vmem>>, vector<1x32xf32>
    %301 = vector.shape_cast %300 : vector<1x32xf32> to vector<32xf32>
    %302 = vector.broadcast %297 : f32 to vector<32xf32>
    %303 = arith.mulf %301, %302 : vector<32xf32>
    %c2_145 = arith.constant 2 : index
    %c4_146 = arith.constant 4 : index
    %c0_147 = arith.constant 0 : index
    %304 = vector.load %arg31[%c2_145, %c4_146, %c0_147] : memref<8x6x32xf32, #tpu.memory_space<vmem>>, vector<1x1x32xf32>
    %305 = vector.shape_cast %304 : vector<1x1x32xf32> to vector<32xf32>
    %306 = vector.shape_cast %303 : vector<32xf32> to vector<1x1x32xf32>
    tpu.vector_store %arg31[%c2_145, %c4_146, %c0_147], %306 {strides = array<i32>} : memref<8x6x32xf32, #tpu.memory_space<vmem>>, vector<1x1x32xf32>,
    %c2_i32_148 = arith.constant 2 : i32
    %307 = arith.addi %0, %c2_i32_148 : i32
    %308 = arith.index_cast %307 : i32 to index
    %c5_149 = arith.constant 5 : index
    %309 = memref.load %arg2[%308, %c5_149] : memref<16x6xi32, #tpu.memory_space<smem>>
    %c0_i32_150 = arith.constant 0 : i32
    %310 = arith.cmpi sge, %309, %c0_i32_150 : i32
    %311 = arith.extui %310 : i1 to i32
    %312 = arith.sitofp %311 : i32 to f32
    %c0_i32_151 = arith.constant 0 : i32
    %313 = arith.maxsi %309, %c0_i32_151 : i32
    %314 = arith.index_cast %313 : i32 to index
    %c0_152 = arith.constant 0 : index
    %315 = vector.load %arg11[%314, %c0_152] : memref<128x32xf32, #tpu.memory_space<vmem>>, vector<1x32xf32>
    %316 = vector.shape_cast %315 : vector<1x32xf32> to vector<32xf32>
    %317 = vector.broadcast %312 : f32 to vector<32xf32>
    %318 = arith.mulf %316, %317 : vector<32xf32>
    %c2_153 = arith.constant 2 : index
    %c5_154 = arith.constant 5 : index
    %c0_155 = arith.constant 0 : index
    %319 = vector.load %arg31[%c2_153, %c5_154, %c0_155] : memref<8x6x32xf32, #tpu.memory_space<vmem>>, vector<1x1x32xf32>
    %320 = vector.shape_cast %319 : vector<1x1x32xf32> to vector<32xf32>
    %321 = vector.shape_cast %318 : vector<32xf32> to vector<1x1x32xf32>
    tpu.vector_store %arg31[%c2_153, %c5_154, %c0_155], %321 {strides = array<i32>} : memref<8x6x32xf32, #tpu.memory_space<vmem>>, vector<1x1x32xf32>,
    %322 = vector.extract_strided_slice %81 {offsets = [3, 0], sizes = [1, 32], strides = [1, 1]} : vector<8x32xf32> to vector<1x32xf32>
    %323 = vector.shape_cast %322 : vector<1x32xf32> to vector<32xf32>
    %c3_156 = arith.constant 3 : index
    %c0_157 = arith.constant 0 : index
    %c0_158 = arith.constant 0 : index
    %324 = vector.load %arg31[%c3_156, %c0_157, %c0_158] : memref<8x6x32xf32, #tpu.memory_space<vmem>>, vector<1x1x32xf32>
    %325 = vector.shape_cast %324 : vector<1x1x32xf32> to vector<32xf32>
    %326 = vector.shape_cast %323 : vector<32xf32> to vector<1x1x32xf32>
    tpu.vector_store %arg31[%c3_156, %c0_157, %c0_158], %326 {strides = array<i32>} : memref<8x6x32xf32, #tpu.memory_space<vmem>>, vector<1x1x32xf32>,
    %c3_i32 = arith.constant 3 : i32
    %327 = arith.addi %0, %c3_i32 : i32
    %328 = arith.index_cast %327 : i32 to index
    %c1_159 = arith.constant 1 : index
    %329 = memref.load %arg2[%328, %c1_159] : memref<16x6xi32, #tpu.memory_space<smem>>
    %c0_i32_160 = arith.constant 0 : i32
    %330 = arith.cmpi sge, %329, %c0_i32_160 : i32
    %331 = arith.extui %330 : i1 to i32
    %332 = arith.sitofp %331 : i32 to f32
    %c0_i32_161 = arith.constant 0 : i32
    %333 = arith.maxsi %329, %c0_i32_161 : i32
    %334 = arith.index_cast %333 : i32 to index
    %c0_162 = arith.constant 0 : index
    %335 = vector.load %arg11[%334, %c0_162] : memref<128x32xf32, #tpu.memory_space<vmem>>, vector<1x32xf32>
    %336 = vector.shape_cast %335 : vector<1x32xf32> to vector<32xf32>
    %337 = vector.broadcast %332 : f32 to vector<32xf32>
    %338 = arith.mulf %336, %337 : vector<32xf32>
    %c3_163 = arith.constant 3 : index
    %c1_164 = arith.constant 1 : index
    %c0_165 = arith.constant 0 : index
    %339 = vector.load %arg31[%c3_163, %c1_164, %c0_165] : memref<8x6x32xf32, #tpu.memory_space<vmem>>, vector<1x1x32xf32>
    %340 = vector.shape_cast %339 : vector<1x1x32xf32> to vector<32xf32>
    %341 = vector.shape_cast %338 : vector<32xf32> to vector<1x1x32xf32>
    tpu.vector_store %arg31[%c3_163, %c1_164, %c0_165], %341 {strides = array<i32>} : memref<8x6x32xf32, #tpu.memory_space<vmem>>, vector<1x1x32xf32>,
    %c3_i32_166 = arith.constant 3 : i32
    %342 = arith.addi %0, %c3_i32_166 : i32
    %343 = arith.index_cast %342 : i32 to index
    %c2_167 = arith.constant 2 : index
    %344 = memref.load %arg2[%343, %c2_167] : memref<16x6xi32, #tpu.memory_space<smem>>
    %c0_i32_168 = arith.constant 0 : i32
    %345 = arith.cmpi sge, %344, %c0_i32_168 : i32
    %346 = arith.extui %345 : i1 to i32
    %347 = arith.sitofp %346 : i32 to f32
    %c0_i32_169 = arith.constant 0 : i32
    %348 = arith.maxsi %344, %c0_i32_169 : i32
    %349 = arith.index_cast %348 : i32 to index
    %c0_170 = arith.constant 0 : index
    %350 = vector.load %arg11[%349, %c0_170] : memref<128x32xf32, #tpu.memory_space<vmem>>, vector<1x32xf32>
    %351 = vector.shape_cast %350 : vector<1x32xf32> to vector<32xf32>
    %352 = vector.broadcast %347 : f32 to vector<32xf32>
    %353 = arith.mulf %351, %352 : vector<32xf32>
    %c3_171 = arith.constant 3 : index
    %c2_172 = arith.constant 2 : index
    %c0_173 = arith.constant 0 : index
    %354 = vector.load %arg31[%c3_171, %c2_172, %c0_173] : memref<8x6x32xf32, #tpu.memory_space<vmem>>, vector<1x1x32xf32>
    %355 = vector.shape_cast %354 : vector<1x1x32xf32> to vector<32xf32>
    %356 = vector.shape_cast %353 : vector<32xf32> to vector<1x1x32xf32>
    tpu.vector_store %arg31[%c3_171, %c2_172, %c0_173], %356 {strides = array<i32>} : memref<8x6x32xf32, #tpu.memory_space<vmem>>, vector<1x1x32xf32>,
    %c3_i32_174 = arith.constant 3 : i32
    %357 = arith.addi %0, %c3_i32_174 : i32
    %358 = arith.index_cast %357 : i32 to index
    %c3_175 = arith.constant 3 : index
    %359 = memref.load %arg2[%358, %c3_175] : memref<16x6xi32, #tpu.memory_space<smem>>
    %c0_i32_176 = arith.constant 0 : i32
    %360 = arith.cmpi sge, %359, %c0_i32_176 : i32
    %361 = arith.extui %360 : i1 to i32
    %362 = arith.sitofp %361 : i32 to f32
    %c0_i32_177 = arith.constant 0 : i32
    %363 = arith.maxsi %359, %c0_i32_177 : i32
    %364 = arith.index_cast %363 : i32 to index
    %c0_178 = arith.constant 0 : index
    %365 = vector.load %arg11[%364, %c0_178] : memref<128x32xf32, #tpu.memory_space<vmem>>, vector<1x32xf32>
    %366 = vector.shape_cast %365 : vector<1x32xf32> to vector<32xf32>
    %367 = vector.broadcast %362 : f32 to vector<32xf32>
    %368 = arith.mulf %366, %367 : vector<32xf32>
    %c3_179 = arith.constant 3 : index
    %c3_180 = arith.constant 3 : index
    %c0_181 = arith.constant 0 : index
    %369 = vector.load %arg31[%c3_179, %c3_180, %c0_181] : memref<8x6x32xf32, #tpu.memory_space<vmem>>, vector<1x1x32xf32>
    %370 = vector.shape_cast %369 : vector<1x1x32xf32> to vector<32xf32>
    %371 = vector.shape_cast %368 : vector<32xf32> to vector<1x1x32xf32>
    tpu.vector_store %arg31[%c3_179, %c3_180, %c0_181], %371 {strides = array<i32>} : memref<8x6x32xf32, #tpu.memory_space<vmem>>, vector<1x1x32xf32>,
    %c3_i32_182 = arith.constant 3 : i32
    %372 = arith.addi %0, %c3_i32_182 : i32
    %373 = arith.index_cast %372 : i32 to index
    %c4_183 = arith.constant 4 : index
    %374 = memref.load %arg2[%373, %c4_183] : memref<16x6xi32, #tpu.memory_space<smem>>
    %c0_i32_184 = arith.constant 0 : i32
    %375 = arith.cmpi sge, %374, %c0_i32_184 : i32
    %376 = arith.extui %375 : i1 to i32
    %377 = arith.sitofp %376 : i32 to f32
    %c0_i32_185 = arith.constant 0 : i32
    %378 = arith.maxsi %374, %c0_i32_185 : i32
    %379 = arith.index_cast %378 : i32 to index
    %c0_186 = arith.constant 0 : index
    %380 = vector.load %arg11[%379, %c0_186] : memref<128x32xf32, #tpu.memory_space<vmem>>, vector<1x32xf32>
    %381 = vector.shape_cast %380 : vector<1x32xf32> to vector<32xf32>
    %382 = vector.broadcast %377 : f32 to vector<32xf32>
    %383 = arith.mulf %381, %382 : vector<32xf32>
    %c3_187 = arith.constant 3 : index
    %c4_188 = arith.constant 4 : index
    %c0_189 = arith.constant 0 : index
    %384 = vector.load %arg31[%c3_187, %c4_188, %c0_189] : memref<8x6x32xf32, #tpu.memory_space<vmem>>, vector<1x1x32xf32>
    %385 = vector.shape_cast %384 : vector<1x1x32xf32> to vector<32xf32>
    %386 = vector.shape_cast %383 : vector<32xf32> to vector<1x1x32xf32>
    tpu.vector_store %arg31[%c3_187, %c4_188, %c0_189], %386 {strides = array<i32>} : memref<8x6x32xf32, #tpu.memory_space<vmem>>, vector<1x1x32xf32>,
    %c3_i32_190 = arith.constant 3 : i32
    %387 = arith.addi %0, %c3_i32_190 : i32
    %388 = arith.index_cast %387 : i32 to index
    %c5_191 = arith.constant 5 : index
    %389 = memref.load %arg2[%388, %c5_191] : memref<16x6xi32, #tpu.memory_space<smem>>
    %c0_i32_192 = arith.constant 0 : i32
    %390 = arith.cmpi sge, %389, %c0_i32_192 : i32
    %391 = arith.extui %390 : i1 to i32
    %392 = arith.sitofp %391 : i32 to f32
    %c0_i32_193 = arith.constant 0 : i32
    %393 = arith.maxsi %389, %c0_i32_193 : i32
    %394 = arith.index_cast %393 : i32 to index
    %c0_194 = arith.constant 0 : index
    %395 = vector.load %arg11[%394, %c0_194] : memref<128x32xf32, #tpu.memory_space<vmem>>, vector<1x32xf32>
    %396 = vector.shape_cast %395 : vector<1x32xf32> to vector<32xf32>
    %397 = vector.broadcast %392 : f32 to vector<32xf32>
    %398 = arith.mulf %396, %397 : vector<32xf32>
    %c3_195 = arith.constant 3 : index
    %c5_196 = arith.constant 5 : index
    %c0_197 = arith.constant 0 : index
    %399 = vector.load %arg31[%c3_195, %c5_196, %c0_197] : memref<8x6x32xf32, #tpu.memory_space<vmem>>, vector<1x1x32xf32>
    %400 = vector.shape_cast %399 : vector<1x1x32xf32> to vector<32xf32>
    %401 = vector.shape_cast %398 : vector<32xf32> to vector<1x1x32xf32>
    tpu.vector_store %arg31[%c3_195, %c5_196, %c0_197], %401 {strides = array<i32>} : memref<8x6x32xf32, #tpu.memory_space<vmem>>, vector<1x1x32xf32>,
    %402 = vector.extract_strided_slice %81 {offsets = [4, 0], sizes = [1, 32], strides = [1, 1]} : vector<8x32xf32> to vector<1x32xf32>
    %403 = vector.shape_cast %402 : vector<1x32xf32> to vector<32xf32>
    %c4_198 = arith.constant 4 : index
    %c0_199 = arith.constant 0 : index
    %c0_200 = arith.constant 0 : index
    %404 = vector.load %arg31[%c4_198, %c0_199, %c0_200] : memref<8x6x32xf32, #tpu.memory_space<vmem>>, vector<1x1x32xf32>
    %405 = vector.shape_cast %404 : vector<1x1x32xf32> to vector<32xf32>
    %406 = vector.shape_cast %403 : vector<32xf32> to vector<1x1x32xf32>
    tpu.vector_store %arg31[%c4_198, %c0_199, %c0_200], %406 {strides = array<i32>} : memref<8x6x32xf32, #tpu.memory_space<vmem>>, vector<1x1x32xf32>,
    %c4_i32 = arith.constant 4 : i32
    %407 = arith.addi %0, %c4_i32 : i32
    %408 = arith.index_cast %407 : i32 to index
    %c1_201 = arith.constant 1 : index
    %409 = memref.load %arg2[%408, %c1_201] : memref<16x6xi32, #tpu.memory_space<smem>>
    %c0_i32_202 = arith.constant 0 : i32
    %410 = arith.cmpi sge, %409, %c0_i32_202 : i32
    %411 = arith.extui %410 : i1 to i32
    %412 = arith.sitofp %411 : i32 to f32
    %c0_i32_203 = arith.constant 0 : i32
    %413 = arith.maxsi %409, %c0_i32_203 : i32
    %414 = arith.index_cast %413 : i32 to index
    %c0_204 = arith.constant 0 : index
    %415 = vector.load %arg11[%414, %c0_204] : memref<128x32xf32, #tpu.memory_space<vmem>>, vector<1x32xf32>
    %416 = vector.shape_cast %415 : vector<1x32xf32> to vector<32xf32>
    %417 = vector.broadcast %412 : f32 to vector<32xf32>
    %418 = arith.mulf %416, %417 : vector<32xf32>
    %c4_205 = arith.constant 4 : index
    %c1_206 = arith.constant 1 : index
    %c0_207 = arith.constant 0 : index
    %419 = vector.load %arg31[%c4_205, %c1_206, %c0_207] : memref<8x6x32xf32, #tpu.memory_space<vmem>>, vector<1x1x32xf32>
    %420 = vector.shape_cast %419 : vector<1x1x32xf32> to vector<32xf32>
    %421 = vector.shape_cast %418 : vector<32xf32> to vector<1x1x32xf32>
    tpu.vector_store %arg31[%c4_205, %c1_206, %c0_207], %421 {strides = array<i32>} : memref<8x6x32xf32, #tpu.memory_space<vmem>>, vector<1x1x32xf32>,
    %c4_i32_208 = arith.constant 4 : i32
    %422 = arith.addi %0, %c4_i32_208 : i32
    %423 = arith.index_cast %422 : i32 to index
    %c2_209 = arith.constant 2 : index
    %424 = memref.load %arg2[%423, %c2_209] : memref<16x6xi32, #tpu.memory_space<smem>>
    %c0_i32_210 = arith.constant 0 : i32
    %425 = arith.cmpi sge, %424, %c0_i32_210 : i32
    %426 = arith.extui %425 : i1 to i32
    %427 = arith.sitofp %426 : i32 to f32
    %c0_i32_211 = arith.constant 0 : i32
    %428 = arith.maxsi %424, %c0_i32_211 : i32
    %429 = arith.index_cast %428 : i32 to index
    %c0_212 = arith.constant 0 : index
    %430 = vector.load %arg11[%429, %c0_212] : memref<128x32xf32, #tpu.memory_space<vmem>>, vector<1x32xf32>
    %431 = vector.shape_cast %430 : vector<1x32xf32> to vector<32xf32>
    %432 = vector.broadcast %427 : f32 to vector<32xf32>
    %433 = arith.mulf %431, %432 : vector<32xf32>
    %c4_213 = arith.constant 4 : index
    %c2_214 = arith.constant 2 : index
    %c0_215 = arith.constant 0 : index
    %434 = vector.load %arg31[%c4_213, %c2_214, %c0_215] : memref<8x6x32xf32, #tpu.memory_space<vmem>>, vector<1x1x32xf32>
    %435 = vector.shape_cast %434 : vector<1x1x32xf32> to vector<32xf32>
    %436 = vector.shape_cast %433 : vector<32xf32> to vector<1x1x32xf32>
    tpu.vector_store %arg31[%c4_213, %c2_214, %c0_215], %436 {strides = array<i32>} : memref<8x6x32xf32, #tpu.memory_space<vmem>>, vector<1x1x32xf32>,
    %c4_i32_216 = arith.constant 4 : i32
    %437 = arith.addi %0, %c4_i32_216 : i32
    %438 = arith.index_cast %437 : i32 to index
    %c3_217 = arith.constant 3 : index
    %439 = memref.load %arg2[%438, %c3_217] : memref<16x6xi32, #tpu.memory_space<smem>>
    %c0_i32_218 = arith.constant 0 : i32
    %440 = arith.cmpi sge, %439, %c0_i32_218 : i32
    %441 = arith.extui %440 : i1 to i32
    %442 = arith.sitofp %441 : i32 to f32
    %c0_i32_219 = arith.constant 0 : i32
    %443 = arith.maxsi %439, %c0_i32_219 : i32
    %444 = arith.index_cast %443 : i32 to index
    %c0_220 = arith.constant 0 : index
    %445 = vector.load %arg11[%444, %c0_220] : memref<128x32xf32, #tpu.memory_space<vmem>>, vector<1x32xf32>
    %446 = vector.shape_cast %445 : vector<1x32xf32> to vector<32xf32>
    %447 = vector.broadcast %442 : f32 to vector<32xf32>
    %448 = arith.mulf %446, %447 : vector<32xf32>
    %c4_221 = arith.constant 4 : index
    %c3_222 = arith.constant 3 : index
    %c0_223 = arith.constant 0 : index
    %449 = vector.load %arg31[%c4_221, %c3_222, %c0_223] : memref<8x6x32xf32, #tpu.memory_space<vmem>>, vector<1x1x32xf32>
    %450 = vector.shape_cast %449 : vector<1x1x32xf32> to vector<32xf32>
    %451 = vector.shape_cast %448 : vector<32xf32> to vector<1x1x32xf32>
    tpu.vector_store %arg31[%c4_221, %c3_222, %c0_223], %451 {strides = array<i32>} : memref<8x6x32xf32, #tpu.memory_space<vmem>>, vector<1x1x32xf32>,
    %c4_i32_224 = arith.constant 4 : i32
    %452 = arith.addi %0, %c4_i32_224 : i32
    %453 = arith.index_cast %452 : i32 to index
    %c4_225 = arith.constant 4 : index
    %454 = memref.load %arg2[%453, %c4_225] : memref<16x6xi32, #tpu.memory_space<smem>>
    %c0_i32_226 = arith.constant 0 : i32
    %455 = arith.cmpi sge, %454, %c0_i32_226 : i32
    %456 = arith.extui %455 : i1 to i32
    %457 = arith.sitofp %456 : i32 to f32
    %c0_i32_227 = arith.constant 0 : i32
    %458 = arith.maxsi %454, %c0_i32_227 : i32
    %459 = arith.index_cast %458 : i32 to index
    %c0_228 = arith.constant 0 : index
    %460 = vector.load %arg11[%459, %c0_228] : memref<128x32xf32, #tpu.memory_space<vmem>>, vector<1x32xf32>
    %461 = vector.shape_cast %460 : vector<1x32xf32> to vector<32xf32>
    %462 = vector.broadcast %457 : f32 to vector<32xf32>
    %463 = arith.mulf %461, %462 : vector<32xf32>
    %c4_229 = arith.constant 4 : index
    %c4_230 = arith.constant 4 : index
    %c0_231 = arith.constant 0 : index
    %464 = vector.load %arg31[%c4_229, %c4_230, %c0_231] : memref<8x6x32xf32, #tpu.memory_space<vmem>>, vector<1x1x32xf32>
    %465 = vector.shape_cast %464 : vector<1x1x32xf32> to vector<32xf32>
    %466 = vector.shape_cast %463 : vector<32xf32> to vector<1x1x32xf32>
    tpu.vector_store %arg31[%c4_229, %c4_230, %c0_231], %466 {strides = array<i32>} : memref<8x6x32xf32, #tpu.memory_space<vmem>>, vector<1x1x32xf32>,
    %c4_i32_232 = arith.constant 4 : i32
    %467 = arith.addi %0, %c4_i32_232 : i32
    %468 = arith.index_cast %467 : i32 to index
    %c5_233 = arith.constant 5 : index
    %469 = memref.load %arg2[%468, %c5_233] : memref<16x6xi32, #tpu.memory_space<smem>>
    %c0_i32_234 = arith.constant 0 : i32
    %470 = arith.cmpi sge, %469, %c0_i32_234 : i32
    %471 = arith.extui %470 : i1 to i32
    %472 = arith.sitofp %471 : i32 to f32
    %c0_i32_235 = arith.constant 0 : i32
    %473 = arith.maxsi %469, %c0_i32_235 : i32
    %474 = arith.index_cast %473 : i32 to index
    %c0_236 = arith.constant 0 : index
    %475 = vector.load %arg11[%474, %c0_236] : memref<128x32xf32, #tpu.memory_space<vmem>>, vector<1x32xf32>
    %476 = vector.shape_cast %475 : vector<1x32xf32> to vector<32xf32>
    %477 = vector.broadcast %472 : f32 to vector<32xf32>
    %478 = arith.mulf %476, %477 : vector<32xf32>
    %c4_237 = arith.constant 4 : index
    %c5_238 = arith.constant 5 : index
    %c0_239 = arith.constant 0 : index
    %479 = vector.load %arg31[%c4_237, %c5_238, %c0_239] : memref<8x6x32xf32, #tpu.memory_space<vmem>>, vector<1x1x32xf32>
    %480 = vector.shape_cast %479 : vector<1x1x32xf32> to vector<32xf32>
    %481 = vector.shape_cast %478 : vector<32xf32> to vector<1x1x32xf32>
    tpu.vector_store %arg31[%c4_237, %c5_238, %c0_239], %481 {strides = array<i32>} : memref<8x6x32xf32, #tpu.memory_space<vmem>>, vector<1x1x32xf32>,
    %482 = vector.extract_strided_slice %81 {offsets = [5, 0], sizes = [1, 32], strides = [1, 1]} : vector<8x32xf32> to vector<1x32xf32>
    %483 = vector.shape_cast %482 : vector<1x32xf32> to vector<32xf32>
    %c5_240 = arith.constant 5 : index
    %c0_241 = arith.constant 0 : index
    %c0_242 = arith.constant 0 : index
    %484 = vector.load %arg31[%c5_240, %c0_241, %c0_242] : memref<8x6x32xf32, #tpu.memory_space<vmem>>, vector<1x1x32xf32>
    %485 = vector.shape_cast %484 : vector<1x1x32xf32> to vector<32xf32>
    %486 = vector.shape_cast %483 : vector<32xf32> to vector<1x1x32xf32>
    tpu.vector_store %arg31[%c5_240, %c0_241, %c0_242], %486 {strides = array<i32>} : memref<8x6x32xf32, #tpu.memory_space<vmem>>, vector<1x1x32xf32>,
    %c5_i32 = arith.constant 5 : i32
    %487 = arith.addi %0, %c5_i32 : i32
    %488 = arith.index_cast %487 : i32 to index
    %c1_243 = arith.constant 1 : index
    %489 = memref.load %arg2[%488, %c1_243] : memref<16x6xi32, #tpu.memory_space<smem>>
    %c0_i32_244 = arith.constant 0 : i32
    %490 = arith.cmpi sge, %489, %c0_i32_244 : i32
    %491 = arith.extui %490 : i1 to i32
    %492 = arith.sitofp %491 : i32 to f32
    %c0_i32_245 = arith.constant 0 : i32
    %493 = arith.maxsi %489, %c0_i32_245 : i32
    %494 = arith.index_cast %493 : i32 to index
    %c0_246 = arith.constant 0 : index
    %495 = vector.load %arg11[%494, %c0_246] : memref<128x32xf32, #tpu.memory_space<vmem>>, vector<1x32xf32>
    %496 = vector.shape_cast %495 : vector<1x32xf32> to vector<32xf32>
    %497 = vector.broadcast %492 : f32 to vector<32xf32>
    %498 = arith.mulf %496, %497 : vector<32xf32>
    %c5_247 = arith.constant 5 : index
    %c1_248 = arith.constant 1 : index
    %c0_249 = arith.constant 0 : index
    %499 = vector.load %arg31[%c5_247, %c1_248, %c0_249] : memref<8x6x32xf32, #tpu.memory_space<vmem>>, vector<1x1x32xf32>
    %500 = vector.shape_cast %499 : vector<1x1x32xf32> to vector<32xf32>
    %501 = vector.shape_cast %498 : vector<32xf32> to vector<1x1x32xf32>
    tpu.vector_store %arg31[%c5_247, %c1_248, %c0_249], %501 {strides = array<i32>} : memref<8x6x32xf32, #tpu.memory_space<vmem>>, vector<1x1x32xf32>,
    %c5_i32_250 = arith.constant 5 : i32
    %502 = arith.addi %0, %c5_i32_250 : i32
    %503 = arith.index_cast %502 : i32 to index
    %c2_251 = arith.constant 2 : index
    %504 = memref.load %arg2[%503, %c2_251] : memref<16x6xi32, #tpu.memory_space<smem>>
    %c0_i32_252 = arith.constant 0 : i32
    %505 = arith.cmpi sge, %504, %c0_i32_252 : i32
    %506 = arith.extui %505 : i1 to i32
    %507 = arith.sitofp %506 : i32 to f32
    %c0_i32_253 = arith.constant 0 : i32
    %508 = arith.maxsi %504, %c0_i32_253 : i32
    %509 = arith.index_cast %508 : i32 to index
    %c0_254 = arith.constant 0 : index
    %510 = vector.load %arg11[%509, %c0_254] : memref<128x32xf32, #tpu.memory_space<vmem>>, vector<1x32xf32>
    %511 = vector.shape_cast %510 : vector<1x32xf32> to vector<32xf32>
    %512 = vector.broadcast %507 : f32 to vector<32xf32>
    %513 = arith.mulf %511, %512 : vector<32xf32>
    %c5_255 = arith.constant 5 : index
    %c2_256 = arith.constant 2 : index
    %c0_257 = arith.constant 0 : index
    %514 = vector.load %arg31[%c5_255, %c2_256, %c0_257] : memref<8x6x32xf32, #tpu.memory_space<vmem>>, vector<1x1x32xf32>
    %515 = vector.shape_cast %514 : vector<1x1x32xf32> to vector<32xf32>
    %516 = vector.shape_cast %513 : vector<32xf32> to vector<1x1x32xf32>
    tpu.vector_store %arg31[%c5_255, %c2_256, %c0_257], %516 {strides = array<i32>} : memref<8x6x32xf32, #tpu.memory_space<vmem>>, vector<1x1x32xf32>,
    %c5_i32_258 = arith.constant 5 : i32
    %517 = arith.addi %0, %c5_i32_258 : i32
    %518 = arith.index_cast %517 : i32 to index
    %c3_259 = arith.constant 3 : index
    %519 = memref.load %arg2[%518, %c3_259] : memref<16x6xi32, #tpu.memory_space<smem>>
    %c0_i32_260 = arith.constant 0 : i32
    %520 = arith.cmpi sge, %519, %c0_i32_260 : i32
    %521 = arith.extui %520 : i1 to i32
    %522 = arith.sitofp %521 : i32 to f32
    %c0_i32_261 = arith.constant 0 : i32
    %523 = arith.maxsi %519, %c0_i32_261 : i32
    %524 = arith.index_cast %523 : i32 to index
    %c0_262 = arith.constant 0 : index
    %525 = vector.load %arg11[%524, %c0_262] : memref<128x32xf32, #tpu.memory_space<vmem>>, vector<1x32xf32>
    %526 = vector.shape_cast %525 : vector<1x32xf32> to vector<32xf32>
    %527 = vector.broadcast %522 : f32 to vector<32xf32>
    %528 = arith.mulf %526, %527 : vector<32xf32>
    %c5_263 = arith.constant 5 : index
    %c3_264 = arith.constant 3 : index
    %c0_265 = arith.constant 0 : index
    %529 = vector.load %arg31[%c5_263, %c3_264, %c0_265] : memref<8x6x32xf32, #tpu.memory_space<vmem>>, vector<1x1x32xf32>
    %530 = vector.shape_cast %529 : vector<1x1x32xf32> to vector<32xf32>
    %531 = vector.shape_cast %528 : vector<32xf32> to vector<1x1x32xf32>
    tpu.vector_store %arg31[%c5_263, %c3_264, %c0_265], %531 {strides = array<i32>} : memref<8x6x32xf32, #tpu.memory_space<vmem>>, vector<1x1x32xf32>,
    %c5_i32_266 = arith.constant 5 : i32
    %532 = arith.addi %0, %c5_i32_266 : i32
    %533 = arith.index_cast %532 : i32 to index
    %c4_267 = arith.constant 4 : index
    %534 = memref.load %arg2[%533, %c4_267] : memref<16x6xi32, #tpu.memory_space<smem>>
    %c0_i32_268 = arith.constant 0 : i32
    %535 = arith.cmpi sge, %534, %c0_i32_268 : i32
    %536 = arith.extui %535 : i1 to i32
    %537 = arith.sitofp %536 : i32 to f32
    %c0_i32_269 = arith.constant 0 : i32
    %538 = arith.maxsi %534, %c0_i32_269 : i32
    %539 = arith.index_cast %538 : i32 to index
    %c0_270 = arith.constant 0 : index
    %540 = vector.load %arg11[%539, %c0_270] : memref<128x32xf32, #tpu.memory_space<vmem>>, vector<1x32xf32>
    %541 = vector.shape_cast %540 : vector<1x32xf32> to vector<32xf32>
    %542 = vector.broadcast %537 : f32 to vector<32xf32>
    %543 = arith.mulf %541, %542 : vector<32xf32>
    %c5_271 = arith.constant 5 : index
    %c4_272 = arith.constant 4 : index
    %c0_273 = arith.constant 0 : index
    %544 = vector.load %arg31[%c5_271, %c4_272, %c0_273] : memref<8x6x32xf32, #tpu.memory_space<vmem>>, vector<1x1x32xf32>
    %545 = vector.shape_cast %544 : vector<1x1x32xf32> to vector<32xf32>
    %546 = vector.shape_cast %543 : vector<32xf32> to vector<1x1x32xf32>
    tpu.vector_store %arg31[%c5_271, %c4_272, %c0_273], %546 {strides = array<i32>} : memref<8x6x32xf32, #tpu.memory_space<vmem>>, vector<1x1x32xf32>,
    %c5_i32_274 = arith.constant 5 : i32
    %547 = arith.addi %0, %c5_i32_274 : i32
    %548 = arith.index_cast %547 : i32 to index
    %c5_275 = arith.constant 5 : index
    %549 = memref.load %arg2[%548, %c5_275] : memref<16x6xi32, #tpu.memory_space<smem>>
    %c0_i32_276 = arith.constant 0 : i32
    %550 = arith.cmpi sge, %549, %c0_i32_276 : i32
    %551 = arith.extui %550 : i1 to i32
    %552 = arith.sitofp %551 : i32 to f32
    %c0_i32_277 = arith.constant 0 : i32
    %553 = arith.maxsi %549, %c0_i32_277 : i32
    %554 = arith.index_cast %553 : i32 to index
    %c0_278 = arith.constant 0 : index
    %555 = vector.load %arg11[%554, %c0_278] : memref<128x32xf32, #tpu.memory_space<vmem>>, vector<1x32xf32>
    %556 = vector.shape_cast %555 : vector<1x32xf32> to vector<32xf32>
    %557 = vector.broadcast %552 : f32 to vector<32xf32>
    %558 = arith.mulf %556, %557 : vector<32xf32>
    %c5_279 = arith.constant 5 : index
    %c5_280 = arith.constant 5 : index
    %c0_281 = arith.constant 0 : index
    %559 = vector.load %arg31[%c5_279, %c5_280, %c0_281] : memref<8x6x32xf32, #tpu.memory_space<vmem>>, vector<1x1x32xf32>
    %560 = vector.shape_cast %559 : vector<1x1x32xf32> to vector<32xf32>
    %561 = vector.shape_cast %558 : vector<32xf32> to vector<1x1x32xf32>
    tpu.vector_store %arg31[%c5_279, %c5_280, %c0_281], %561 {strides = array<i32>} : memref<8x6x32xf32, #tpu.memory_space<vmem>>, vector<1x1x32xf32>,
    %562 = vector.extract_strided_slice %81 {offsets = [6, 0], sizes = [1, 32], strides = [1, 1]} : vector<8x32xf32> to vector<1x32xf32>
    %563 = vector.shape_cast %562 : vector<1x32xf32> to vector<32xf32>
    %c6 = arith.constant 6 : index
    %c0_282 = arith.constant 0 : index
    %c0_283 = arith.constant 0 : index
    %564 = vector.load %arg31[%c6, %c0_282, %c0_283] : memref<8x6x32xf32, #tpu.memory_space<vmem>>, vector<1x1x32xf32>
    %565 = vector.shape_cast %564 : vector<1x1x32xf32> to vector<32xf32>
    %566 = vector.shape_cast %563 : vector<32xf32> to vector<1x1x32xf32>
    tpu.vector_store %arg31[%c6, %c0_282, %c0_283], %566 {strides = array<i32>} : memref<8x6x32xf32, #tpu.memory_space<vmem>>, vector<1x1x32xf32>,
    %c6_i32 = arith.constant 6 : i32
    %567 = arith.addi %0, %c6_i32 : i32
    %568 = arith.index_cast %567 : i32 to index
    %c1_284 = arith.constant 1 : index
    %569 = memref.load %arg2[%568, %c1_284] : memref<16x6xi32, #tpu.memory_space<smem>>
    %c0_i32_285 = arith.constant 0 : i32
    %570 = arith.cmpi sge, %569, %c0_i32_285 : i32
    %571 = arith.extui %570 : i1 to i32
    %572 = arith.sitofp %571 : i32 to f32
    %c0_i32_286 = arith.constant 0 : i32
    %573 = arith.maxsi %569, %c0_i32_286 : i32
    %574 = arith.index_cast %573 : i32 to index
    %c0_287 = arith.constant 0 : index
    %575 = vector.load %arg11[%574, %c0_287] : memref<128x32xf32, #tpu.memory_space<vmem>>, vector<1x32xf32>
    %576 = vector.shape_cast %575 : vector<1x32xf32> to vector<32xf32>
    %577 = vector.broadcast %572 : f32 to vector<32xf32>
    %578 = arith.mulf %576, %577 : vector<32xf32>
    %c6_288 = arith.constant 6 : index
    %c1_289 = arith.constant 1 : index
    %c0_290 = arith.constant 0 : index
    %579 = vector.load %arg31[%c6_288, %c1_289, %c0_290] : memref<8x6x32xf32, #tpu.memory_space<vmem>>, vector<1x1x32xf32>
    %580 = vector.shape_cast %579 : vector<1x1x32xf32> to vector<32xf32>
    %581 = vector.shape_cast %578 : vector<32xf32> to vector<1x1x32xf32>
    tpu.vector_store %arg31[%c6_288, %c1_289, %c0_290], %581 {strides = array<i32>} : memref<8x6x32xf32, #tpu.memory_space<vmem>>, vector<1x1x32xf32>,
    %c6_i32_291 = arith.constant 6 : i32
    %582 = arith.addi %0, %c6_i32_291 : i32
    %583 = arith.index_cast %582 : i32 to index
    %c2_292 = arith.constant 2 : index
    %584 = memref.load %arg2[%583, %c2_292] : memref<16x6xi32, #tpu.memory_space<smem>>
    %c0_i32_293 = arith.constant 0 : i32
    %585 = arith.cmpi sge, %584, %c0_i32_293 : i32
    %586 = arith.extui %585 : i1 to i32
    %587 = arith.sitofp %586 : i32 to f32
    %c0_i32_294 = arith.constant 0 : i32
    %588 = arith.maxsi %584, %c0_i32_294 : i32
    %589 = arith.index_cast %588 : i32 to index
    %c0_295 = arith.constant 0 : index
    %590 = vector.load %arg11[%589, %c0_295] : memref<128x32xf32, #tpu.memory_space<vmem>>, vector<1x32xf32>
    %591 = vector.shape_cast %590 : vector<1x32xf32> to vector<32xf32>
    %592 = vector.broadcast %587 : f32 to vector<32xf32>
    %593 = arith.mulf %591, %592 : vector<32xf32>
    %c6_296 = arith.constant 6 : index
    %c2_297 = arith.constant 2 : index
    %c0_298 = arith.constant 0 : index
    %594 = vector.load %arg31[%c6_296, %c2_297, %c0_298] : memref<8x6x32xf32, #tpu.memory_space<vmem>>, vector<1x1x32xf32>
    %595 = vector.shape_cast %594 : vector<1x1x32xf32> to vector<32xf32>
    %596 = vector.shape_cast %593 : vector<32xf32> to vector<1x1x32xf32>
    tpu.vector_store %arg31[%c6_296, %c2_297, %c0_298], %596 {strides = array<i32>} : memref<8x6x32xf32, #tpu.memory_space<vmem>>, vector<1x1x32xf32>,
    %c6_i32_299 = arith.constant 6 : i32
    %597 = arith.addi %0, %c6_i32_299 : i32
    %598 = arith.index_cast %597 : i32 to index
    %c3_300 = arith.constant 3 : index
    %599 = memref.load %arg2[%598, %c3_300] : memref<16x6xi32, #tpu.memory_space<smem>>
    %c0_i32_301 = arith.constant 0 : i32
    %600 = arith.cmpi sge, %599, %c0_i32_301 : i32
    %601 = arith.extui %600 : i1 to i32
    %602 = arith.sitofp %601 : i32 to f32
    %c0_i32_302 = arith.constant 0 : i32
    %603 = arith.maxsi %599, %c0_i32_302 : i32
    %604 = arith.index_cast %603 : i32 to index
    %c0_303 = arith.constant 0 : index
    %605 = vector.load %arg11[%604, %c0_303] : memref<128x32xf32, #tpu.memory_space<vmem>>, vector<1x32xf32>
    %606 = vector.shape_cast %605 : vector<1x32xf32> to vector<32xf32>
    %607 = vector.broadcast %602 : f32 to vector<32xf32>
    %608 = arith.mulf %606, %607 : vector<32xf32>
    %c6_304 = arith.constant 6 : index
    %c3_305 = arith.constant 3 : index
    %c0_306 = arith.constant 0 : index
    %609 = vector.load %arg31[%c6_304, %c3_305, %c0_306] : memref<8x6x32xf32, #tpu.memory_space<vmem>>, vector<1x1x32xf32>
    %610 = vector.shape_cast %609 : vector<1x1x32xf32> to vector<32xf32>
    %611 = vector.shape_cast %608 : vector<32xf32> to vector<1x1x32xf32>
    tpu.vector_store %arg31[%c6_304, %c3_305, %c0_306], %611 {strides = array<i32>} : memref<8x6x32xf32, #tpu.memory_space<vmem>>, vector<1x1x32xf32>,
    %c6_i32_307 = arith.constant 6 : i32
    %612 = arith.addi %0, %c6_i32_307 : i32
    %613 = arith.index_cast %612 : i32 to index
    %c4_308 = arith.constant 4 : index
    %614 = memref.load %arg2[%613, %c4_308] : memref<16x6xi32, #tpu.memory_space<smem>>
    %c0_i32_309 = arith.constant 0 : i32
    %615 = arith.cmpi sge, %614, %c0_i32_309 : i32
    %616 = arith.extui %615 : i1 to i32
    %617 = arith.sitofp %616 : i32 to f32
    %c0_i32_310 = arith.constant 0 : i32
    %618 = arith.maxsi %614, %c0_i32_310 : i32
    %619 = arith.index_cast %618 : i32 to index
    %c0_311 = arith.constant 0 : index
    %620 = vector.load %arg11[%619, %c0_311] : memref<128x32xf32, #tpu.memory_space<vmem>>, vector<1x32xf32>
    %621 = vector.shape_cast %620 : vector<1x32xf32> to vector<32xf32>
    %622 = vector.broadcast %617 : f32 to vector<32xf32>
    %623 = arith.mulf %621, %622 : vector<32xf32>
    %c6_312 = arith.constant 6 : index
    %c4_313 = arith.constant 4 : index
    %c0_314 = arith.constant 0 : index
    %624 = vector.load %arg31[%c6_312, %c4_313, %c0_314] : memref<8x6x32xf32, #tpu.memory_space<vmem>>, vector<1x1x32xf32>
    %625 = vector.shape_cast %624 : vector<1x1x32xf32> to vector<32xf32>
    %626 = vector.shape_cast %623 : vector<32xf32> to vector<1x1x32xf32>
    tpu.vector_store %arg31[%c6_312, %c4_313, %c0_314], %626 {strides = array<i32>} : memref<8x6x32xf32, #tpu.memory_space<vmem>>, vector<1x1x32xf32>,
    %c6_i32_315 = arith.constant 6 : i32
    %627 = arith.addi %0, %c6_i32_315 : i32
    %628 = arith.index_cast %627 : i32 to index
    %c5_316 = arith.constant 5 : index
    %629 = memref.load %arg2[%628, %c5_316] : memref<16x6xi32, #tpu.memory_space<smem>>
    %c0_i32_317 = arith.constant 0 : i32
    %630 = arith.cmpi sge, %629, %c0_i32_317 : i32
    %631 = arith.extui %630 : i1 to i32
    %632 = arith.sitofp %631 : i32 to f32
    %c0_i32_318 = arith.constant 0 : i32
    %633 = arith.maxsi %629, %c0_i32_318 : i32
    %634 = arith.index_cast %633 : i32 to index
    %c0_319 = arith.constant 0 : index
    %635 = vector.load %arg11[%634, %c0_319] : memref<128x32xf32, #tpu.memory_space<vmem>>, vector<1x32xf32>
    %636 = vector.shape_cast %635 : vector<1x32xf32> to vector<32xf32>
    %637 = vector.broadcast %632 : f32 to vector<32xf32>
    %638 = arith.mulf %636, %637 : vector<32xf32>
    %c6_320 = arith.constant 6 : index
    %c5_321 = arith.constant 5 : index
    %c0_322 = arith.constant 0 : index
    %639 = vector.load %arg31[%c6_320, %c5_321, %c0_322] : memref<8x6x32xf32, #tpu.memory_space<vmem>>, vector<1x1x32xf32>
    %640 = vector.shape_cast %639 : vector<1x1x32xf32> to vector<32xf32>
    %641 = vector.shape_cast %638 : vector<32xf32> to vector<1x1x32xf32>
    tpu.vector_store %arg31[%c6_320, %c5_321, %c0_322], %641 {strides = array<i32>} : memref<8x6x32xf32, #tpu.memory_space<vmem>>, vector<1x1x32xf32>,
    %642 = vector.extract_strided_slice %81 {offsets = [7, 0], sizes = [1, 32], strides = [1, 1]} : vector<8x32xf32> to vector<1x32xf32>
    %643 = vector.shape_cast %642 : vector<1x32xf32> to vector<32xf32>
    %c7 = arith.constant 7 : index
    %c0_323 = arith.constant 0 : index
    %c0_324 = arith.constant 0 : index
    %644 = vector.load %arg31[%c7, %c0_323, %c0_324] : memref<8x6x32xf32, #tpu.memory_space<vmem>>, vector<1x1x32xf32>
    %645 = vector.shape_cast %644 : vector<1x1x32xf32> to vector<32xf32>
    %646 = vector.shape_cast %643 : vector<32xf32> to vector<1x1x32xf32>
    tpu.vector_store %arg31[%c7, %c0_323, %c0_324], %646 {strides = array<i32>} : memref<8x6x32xf32, #tpu.memory_space<vmem>>, vector<1x1x32xf32>,
    %c7_i32 = arith.constant 7 : i32
    %647 = arith.addi %0, %c7_i32 : i32
    %648 = arith.index_cast %647 : i32 to index
    %c1_325 = arith.constant 1 : index
    %649 = memref.load %arg2[%648, %c1_325] : memref<16x6xi32, #tpu.memory_space<smem>>
    %c0_i32_326 = arith.constant 0 : i32
    %650 = arith.cmpi sge, %649, %c0_i32_326 : i32
    %651 = arith.extui %650 : i1 to i32
    %652 = arith.sitofp %651 : i32 to f32
    %c0_i32_327 = arith.constant 0 : i32
    %653 = arith.maxsi %649, %c0_i32_327 : i32
    %654 = arith.index_cast %653 : i32 to index
    %c0_328 = arith.constant 0 : index
    %655 = vector.load %arg11[%654, %c0_328] : memref<128x32xf32, #tpu.memory_space<vmem>>, vector<1x32xf32>
    %656 = vector.shape_cast %655 : vector<1x32xf32> to vector<32xf32>
    %657 = vector.broadcast %652 : f32 to vector<32xf32>
    %658 = arith.mulf %656, %657 : vector<32xf32>
    %c7_329 = arith.constant 7 : index
    %c1_330 = arith.constant 1 : index
    %c0_331 = arith.constant 0 : index
    %659 = vector.load %arg31[%c7_329, %c1_330, %c0_331] : memref<8x6x32xf32, #tpu.memory_space<vmem>>, vector<1x1x32xf32>
    %660 = vector.shape_cast %659 : vector<1x1x32xf32> to vector<32xf32>
    %661 = vector.shape_cast %658 : vector<32xf32> to vector<1x1x32xf32>
    tpu.vector_store %arg31[%c7_329, %c1_330, %c0_331], %661 {strides = array<i32>} : memref<8x6x32xf32, #tpu.memory_space<vmem>>, vector<1x1x32xf32>,
    %c7_i32_332 = arith.constant 7 : i32
    %662 = arith.addi %0, %c7_i32_332 : i32
    %663 = arith.index_cast %662 : i32 to index
    %c2_333 = arith.constant 2 : index
    %664 = memref.load %arg2[%663, %c2_333] : memref<16x6xi32, #tpu.memory_space<smem>>
    %c0_i32_334 = arith.constant 0 : i32
    %665 = arith.cmpi sge, %664, %c0_i32_334 : i32
    %666 = arith.extui %665 : i1 to i32
    %667 = arith.sitofp %666 : i32 to f32
    %c0_i32_335 = arith.constant 0 : i32
    %668 = arith.maxsi %664, %c0_i32_335 : i32
    %669 = arith.index_cast %668 : i32 to index
    %c0_336 = arith.constant 0 : index
    %670 = vector.load %arg11[%669, %c0_336] : memref<128x32xf32, #tpu.memory_space<vmem>>, vector<1x32xf32>
    %671 = vector.shape_cast %670 : vector<1x32xf32> to vector<32xf32>
    %672 = vector.broadcast %667 : f32 to vector<32xf32>
    %673 = arith.mulf %671, %672 : vector<32xf32>
    %c7_337 = arith.constant 7 : index
    %c2_338 = arith.constant 2 : index
    %c0_339 = arith.constant 0 : index
    %674 = vector.load %arg31[%c7_337, %c2_338, %c0_339] : memref<8x6x32xf32, #tpu.memory_space<vmem>>, vector<1x1x32xf32>
    %675 = vector.shape_cast %674 : vector<1x1x32xf32> to vector<32xf32>
    %676 = vector.shape_cast %673 : vector<32xf32> to vector<1x1x32xf32>
    tpu.vector_store %arg31[%c7_337, %c2_338, %c0_339], %676 {strides = array<i32>} : memref<8x6x32xf32, #tpu.memory_space<vmem>>, vector<1x1x32xf32>,
    %c7_i32_340 = arith.constant 7 : i32
    %677 = arith.addi %0, %c7_i32_340 : i32
    %678 = arith.index_cast %677 : i32 to index
    %c3_341 = arith.constant 3 : index
    %679 = memref.load %arg2[%678, %c3_341] : memref<16x6xi32, #tpu.memory_space<smem>>
    %c0_i32_342 = arith.constant 0 : i32
    %680 = arith.cmpi sge, %679, %c0_i32_342 : i32
    %681 = arith.extui %680 : i1 to i32
    %682 = arith.sitofp %681 : i32 to f32
    %c0_i32_343 = arith.constant 0 : i32
    %683 = arith.maxsi %679, %c0_i32_343 : i32
    %684 = arith.index_cast %683 : i32 to index
    %c0_344 = arith.constant 0 : index
    %685 = vector.load %arg11[%684, %c0_344] : memref<128x32xf32, #tpu.memory_space<vmem>>, vector<1x32xf32>
    %686 = vector.shape_cast %685 : vector<1x32xf32> to vector<32xf32>
    %687 = vector.broadcast %682 : f32 to vector<32xf32>
    %688 = arith.mulf %686, %687 : vector<32xf32>
    %c7_345 = arith.constant 7 : index
    %c3_346 = arith.constant 3 : index
    %c0_347 = arith.constant 0 : index
    %689 = vector.load %arg31[%c7_345, %c3_346, %c0_347] : memref<8x6x32xf32, #tpu.memory_space<vmem>>, vector<1x1x32xf32>
    %690 = vector.shape_cast %689 : vector<1x1x32xf32> to vector<32xf32>
    %691 = vector.shape_cast %688 : vector<32xf32> to vector<1x1x32xf32>
    tpu.vector_store %arg31[%c7_345, %c3_346, %c0_347], %691 {strides = array<i32>} : memref<8x6x32xf32, #tpu.memory_space<vmem>>, vector<1x1x32xf32>,
    %c7_i32_348 = arith.constant 7 : i32
    %692 = arith.addi %0, %c7_i32_348 : i32
    %693 = arith.index_cast %692 : i32 to index
    %c4_349 = arith.constant 4 : index
    %694 = memref.load %arg2[%693, %c4_349] : memref<16x6xi32, #tpu.memory_space<smem>>
    %c0_i32_350 = arith.constant 0 : i32
    %695 = arith.cmpi sge, %694, %c0_i32_350 : i32
    %696 = arith.extui %695 : i1 to i32
    %697 = arith.sitofp %696 : i32 to f32
    %c0_i32_351 = arith.constant 0 : i32
    %698 = arith.maxsi %694, %c0_i32_351 : i32
    %699 = arith.index_cast %698 : i32 to index
    %c0_352 = arith.constant 0 : index
    %700 = vector.load %arg11[%699, %c0_352] : memref<128x32xf32, #tpu.memory_space<vmem>>, vector<1x32xf32>
    %701 = vector.shape_cast %700 : vector<1x32xf32> to vector<32xf32>
    %702 = vector.broadcast %697 : f32 to vector<32xf32>
    %703 = arith.mulf %701, %702 : vector<32xf32>
    %c7_353 = arith.constant 7 : index
    %c4_354 = arith.constant 4 : index
    %c0_355 = arith.constant 0 : index
    %704 = vector.load %arg31[%c7_353, %c4_354, %c0_355] : memref<8x6x32xf32, #tpu.memory_space<vmem>>, vector<1x1x32xf32>
    %705 = vector.shape_cast %704 : vector<1x1x32xf32> to vector<32xf32>
    %706 = vector.shape_cast %703 : vector<32xf32> to vector<1x1x32xf32>
    tpu.vector_store %arg31[%c7_353, %c4_354, %c0_355], %706 {strides = array<i32>} : memref<8x6x32xf32, #tpu.memory_space<vmem>>, vector<1x1x32xf32>,
    %c7_i32_356 = arith.constant 7 : i32
    %707 = arith.addi %0, %c7_i32_356 : i32
    %708 = arith.index_cast %707 : i32 to index
    %c5_357 = arith.constant 5 : index
    %709 = memref.load %arg2[%708, %c5_357] : memref<16x6xi32, #tpu.memory_space<smem>>
    %c0_i32_358 = arith.constant 0 : i32
    %710 = arith.cmpi sge, %709, %c0_i32_358 : i32
    %711 = arith.extui %710 : i1 to i32
    %712 = arith.sitofp %711 : i32 to f32
    %c0_i32_359 = arith.constant 0 : i32
    %713 = arith.maxsi %709, %c0_i32_359 : i32
    %714 = arith.index_cast %713 : i32 to index
    %c0_360 = arith.constant 0 : index
    %715 = vector.load %arg11[%714, %c0_360] : memref<128x32xf32, #tpu.memory_space<vmem>>, vector<1x32xf32>
    %716 = vector.shape_cast %715 : vector<1x32xf32> to vector<32xf32>
    %717 = vector.broadcast %712 : f32 to vector<32xf32>
    %718 = arith.mulf %716, %717 : vector<32xf32>
    %c7_361 = arith.constant 7 : index
    %c5_362 = arith.constant 5 : index
    %c0_363 = arith.constant 0 : index
    %719 = vector.load %arg31[%c7_361, %c5_362, %c0_363] : memref<8x6x32xf32, #tpu.memory_space<vmem>>, vector<1x1x32xf32>
    %720 = vector.shape_cast %719 : vector<1x1x32xf32> to vector<32xf32>
    %721 = vector.shape_cast %718 : vector<32xf32> to vector<1x1x32xf32>
    tpu.vector_store %arg31[%c7_361, %c5_362, %c0_363], %721 {strides = array<i32>} : memref<8x6x32xf32, #tpu.memory_space<vmem>>, vector<1x1x32xf32>,
    %c0_364 = arith.constant 0 : index
    %c0_365 = arith.constant 0 : index
    %c0_366 = arith.constant 0 : index
    %722 = vector.load %arg31[%c0_364, %c0_365, %c0_366] : memref<8x6x32xf32, #tpu.memory_space<vmem>>, vector<8x6x32xf32>
    %723 = vector.shape_cast %722 : vector<8x6x32xf32> to vector<48x32xf32>
    %c0_367 = arith.constant 0 : index
    %c0_368 = arith.constant 0 : index
    %724 = vector.load %arg4[%c0_367, %c0_368] : memref<8x6xi32, #tpu.memory_space<vmem>>, vector<8x6xi32>
    %c0_i32_369 = arith.constant 0 : i32
    %725 = vector.broadcast %c0_i32_369 : i32 to vector<8x6xi32>
    %726 = arith.cmpi sge, %724, %725 : vector<8x6xi32>
    %727 = arith.extui %726 : vector<8x6xi1> to vector<8x6xi32>
    %728 = arith.sitofp %727 : vector<8x6xi32> to vector<8x6xf32>
    %c0_370 = arith.constant 0 : index
    %c0_371 = arith.constant 0 : index
    %729 = vector.load %arg14[%c0_370, %c0_371] : memref<32x32xbf16, #tpu.memory_space<vmem>>, vector<32x32xbf16>
    %730 = arith.truncf %723 : vector<48x32xf32> to vector<48x32xbf16>
    %cst_372 = arith.constant dense<0.000000e+00> : vector<48x32xf32>
    %731 = tpu.matmul %730, %729, %cst_372 {dimension_numbers = #tpu.dot_dimension_numbers<[1], [0], [0], [1], [0, 0, 1, 1], [], []>} : vector<48x32xbf16>, vector<32x32xbf16>, vector<48x32xf32> -> vector<48x32xf32>
    %c0_373 = arith.constant 0 : index
    %c0_374 = arith.constant 0 : index
    %732 = vector.load %arg15[%c0_373, %c0_374] : memref<1x32xf32, #tpu.memory_space<vmem>>, vector<1x32xf32>
    %733 = vector.broadcast %732 : vector<1x32xf32> to vector<48x32xf32>
    %734 = arith.addf %731, %733 : vector<48x32xf32>
    %c0_375 = arith.constant 0 : index
    %c0_376 = arith.constant 0 : index
    %735 = vector.load %arg16[%c0_375, %c0_376] : memref<32x32xbf16, #tpu.memory_space<vmem>>, vector<32x32xbf16>
    %736 = arith.truncf %723 : vector<48x32xf32> to vector<48x32xbf16>
    %cst_377 = arith.constant dense<0.000000e+00> : vector<48x32xf32>
    %737 = tpu.matmul %736, %735, %cst_377 {dimension_numbers = #tpu.dot_dimension_numbers<[1], [0], [0], [1], [0, 0, 1, 1], [], []>} : vector<48x32xbf16>, vector<32x32xbf16>, vector<48x32xf32> -> vector<48x32xf32>
    %c0_378 = arith.constant 0 : index
    %c0_379 = arith.constant 0 : index
    %738 = vector.load %arg17[%c0_378, %c0_379] : memref<1x32xf32, #tpu.memory_space<vmem>>, vector<1x32xf32>
    %739 = vector.broadcast %738 : vector<1x32xf32> to vector<48x32xf32>
    %740 = arith.addf %737, %739 : vector<48x32xf32>
    %c0_380 = arith.constant 0 : index
    %c0_381 = arith.constant 0 : index
    %741 = vector.load %arg18[%c0_380, %c0_381] : memref<32x32xbf16, #tpu.memory_space<vmem>>, vector<32x32xbf16>
    %742 = arith.truncf %723 : vector<48x32xf32> to vector<48x32xbf16>
    %cst_382 = arith.constant dense<0.000000e+00> : vector<48x32xf32>
    %743 = tpu.matmul %742, %741, %cst_382 {dimension_numbers = #tpu.dot_dimension_numbers<[1], [0], [0], [1], [0, 0, 1, 1], [], []>} : vector<48x32xbf16>, vector<32x32xbf16>, vector<48x32xf32> -> vector<48x32xf32>
    %c0_383 = arith.constant 0 : index
    %c0_384 = arith.constant 0 : index
    %744 = vector.load %arg19[%c0_383, %c0_384] : memref<1x32xf32, #tpu.memory_space<vmem>>, vector<1x32xf32>
    %745 = vector.broadcast %744 : vector<1x32xf32> to vector<48x32xf32>
    %746 = arith.addf %743, %745 : vector<48x32xf32>
    %747 = vector.shape_cast %734 : vector<48x32xf32> to vector<8x6x32xf32>
    %748 = vector.shape_cast %740 : vector<48x32xf32> to vector<8x6x32xf32>
    %749 = arith.truncf %748 : vector<8x6x32xf32> to vector<8x6x32xbf16>
    %750 = vector.shape_cast %746 : vector<48x32xf32> to vector<8x6x32xf32>
    %751 = tpu.iota {dimensions = array<i32: 2>} : vector<1x1x32xi32>
    %cst_385 = arith.constant 0.000000e+00 : f32
    %752 = vector.broadcast %cst_385 : f32 to vector<8x6x32xf32>
    %c0_i32_386 = arith.constant 0 : i32
    %753 = vector.broadcast %c0_i32_386 : i32 to vector<1x1x32xi32>
    %754 = arith.cmpi sge, %751, %753 : vector<1x1x32xi32>
    %c16_i32 = arith.constant 16 : i32
    %755 = vector.broadcast %c16_i32 : i32 to vector<1x1x32xi32>
    %756 = arith.cmpi slt, %751, %755 : vector<1x1x32xi32>
    %757 = arith.andi %754, %756 : vector<1x1x32xi1>
    %758 = arith.extui %757 : vector<1x1x32xi1> to vector<1x1x32xi32>
    %759 = arith.sitofp %758 : vector<1x1x32xi32> to vector<1x1x32xf32>
    %760 = vector.broadcast %759 : vector<1x1x32xf32> to vector<8x6x32xf32>
    %761 = arith.mulf %747, %760 : vector<8x6x32xf32>
    %762 = arith.truncf %761 : vector<8x6x32xf32> to vector<8x6x32xbf16>
    %763 = vector.broadcast %759 : vector<1x1x32xf32> to vector<8x6x32xf32>
    %764 = arith.mulf %750, %763 : vector<8x6x32xf32>
    %765 = arith.truncf %764 : vector<8x6x32xf32> to vector<8x6x32xbf16>
    "tpu.trace_start"() <{level = 10 : i32, message = "bqd,bkd->bqk"}> : () -> ()
    %cst_387 = arith.constant dense<0.000000e+00> : vector<8x6x6xf32>
    %766 = tpu.matmul %762, %749, %cst_387 {dimension_numbers = #tpu.dot_dimension_numbers<[2], [2], [1], [1], [0, 0, 0, 1, 1, 1], [0], [0]>} : vector<8x6x32xbf16>, vector<8x6x32xbf16>, vector<8x6x6xf32> -> vector<8x6x6xf32>
    "tpu.trace_stop"() : () -> ()
    %cst_388 = arith.constant 2.500000e-01 : f32
    %767 = vector.broadcast %cst_388 : f32 to vector<8x6x6xf32>
    %768 = arith.mulf %766, %767 : vector<8x6x6xf32>
    %769 = vector.shape_cast %728 : vector<8x6xf32> to vector<8x1x6xf32>
    %770 = vector.broadcast %769 : vector<8x1x6xf32> to vector<8x6x6xf32>
    %771 = arith.addf %768, %770 : vector<8x6x6xf32>
    %cst_389 = arith.constant dense<0xFF800000> : vector<8x6xf32>
    %772 = vector.multi_reduction <maximumf>, %771, %cst_389 [2] : vector<8x6x6xf32> to vector<8x6xf32>
    %773 = vector.shape_cast %772 : vector<8x6xf32> to vector<8x6x1xf32>
    %774 = vector.broadcast %773 : vector<8x6x1xf32> to vector<8x6x6xf32>
    %775 = arith.subf %771, %774 : vector<8x6x6xf32>
    %776 = math.exp %775 : vector<8x6x6xf32>
    %cst_390 = arith.constant dense<0.000000e+00> : vector<8x6xf32>
    %777 = vector.multi_reduction <add>, %776, %cst_390 [2] : vector<8x6x6xf32> to vector<8x6xf32>
    %778 = vector.shape_cast %777 : vector<8x6xf32> to vector<8x6x1xf32>
    %779 = tpu.reciprocal %778 {approx = true} : vector<8x6x1xf32> -> vector<8x6x1xf32>
    %780 = vector.broadcast %779 : vector<8x6x1xf32> to vector<8x6x6xf32>
    %781 = arith.mulf %776, %780 : vector<8x6x6xf32>
    %782 = arith.truncf %781 : vector<8x6x6xf32> to vector<8x6x6xbf16>
    "tpu.trace_start"() <{level = 10 : i32, message = "bqk,bkd->bqd"}> : () -> ()
    %cst_391 = arith.constant dense<0.000000e+00> : vector<8x6x32xf32>
    %783 = tpu.matmul %782, %765, %cst_391 {dimension_numbers = #tpu.dot_dimension_numbers<[2], [1], [1], [2], [0, 0, 0, 1, 1, 2], [0], [0]>} : vector<8x6x6xbf16>, vector<8x6x32xbf16>, vector<8x6x32xf32> -> vector<8x6x32xf32>
    "tpu.trace_stop"() : () -> ()
    %784 = arith.addf %752, %783 : vector<8x6x32xf32>
    %c16_i32_392 = arith.constant 16 : i32
    %785 = vector.broadcast %c16_i32_392 : i32 to vector<1x1x32xi32>
    %786 = arith.cmpi sge, %751, %785 : vector<1x1x32xi32>
    %c32_i32 = arith.constant 32 : i32
    %787 = vector.broadcast %c32_i32 : i32 to vector<1x1x32xi32>
    %788 = arith.cmpi slt, %751, %787 : vector<1x1x32xi32>
    %789 = arith.andi %786, %788 : vector<1x1x32xi1>
    %790 = arith.extui %789 : vector<1x1x32xi1> to vector<1x1x32xi32>
    %791 = arith.sitofp %790 : vector<1x1x32xi32> to vector<1x1x32xf32>
    %792 = vector.broadcast %791 : vector<1x1x32xf32> to vector<8x6x32xf32>
    %793 = arith.mulf %747, %792 : vector<8x6x32xf32>
    %794 = arith.truncf %793 : vector<8x6x32xf32> to vector<8x6x32xbf16>
    %795 = vector.broadcast %791 : vector<1x1x32xf32> to vector<8x6x32xf32>
    %796 = arith.mulf %750, %795 : vector<8x6x32xf32>
    %797 = arith.truncf %796 : vector<8x6x32xf32> to vector<8x6x32xbf16>
    "tpu.trace_start"() <{level = 10 : i32, message = "bqd,bkd->bqk"}> : () -> ()
    %cst_393 = arith.constant dense<0.000000e+00> : vector<8x6x6xf32>
    %798 = tpu.matmul %794, %749, %cst_393 {dimension_numbers = #tpu.dot_dimension_numbers<[2], [2], [1], [1], [0, 0, 0, 1, 1, 1], [0], [0]>} : vector<8x6x32xbf16>, vector<8x6x32xbf16>, vector<8x6x6xf32> -> vector<8x6x6xf32>
    "tpu.trace_stop"() : () -> ()
    %cst_394 = arith.constant 2.500000e-01 : f32
    %799 = vector.broadcast %cst_394 : f32 to vector<8x6x6xf32>
    %800 = arith.mulf %798, %799 : vector<8x6x6xf32>
    %801 = vector.shape_cast %728 : vector<8x6xf32> to vector<8x1x6xf32>
    %802 = vector.broadcast %801 : vector<8x1x6xf32> to vector<8x6x6xf32>
    %803 = arith.addf %800, %802 : vector<8x6x6xf32>
    %cst_395 = arith.constant dense<0xFF800000> : vector<8x6xf32>
    %804 = vector.multi_reduction <maximumf>, %803, %cst_395 [2] : vector<8x6x6xf32> to vector<8x6xf32>
    %805 = vector.shape_cast %804 : vector<8x6xf32> to vector<8x6x1xf32>
    %806 = vector.broadcast %805 : vector<8x6x1xf32> to vector<8x6x6xf32>
    %807 = arith.subf %803, %806 : vector<8x6x6xf32>
    %808 = math.exp %807 : vector<8x6x6xf32>
    %cst_396 = arith.constant dense<0.000000e+00> : vector<8x6xf32>
    %809 = vector.multi_reduction <add>, %808, %cst_396 [2] : vector<8x6x6xf32> to vector<8x6xf32>
    %810 = vector.shape_cast %809 : vector<8x6xf32> to vector<8x6x1xf32>
    %811 = tpu.reciprocal %810 {approx = true} : vector<8x6x1xf32> -> vector<8x6x1xf32>
    %812 = vector.broadcast %811 : vector<8x6x1xf32> to vector<8x6x6xf32>
    %813 = arith.mulf %808, %812 : vector<8x6x6xf32>
    %814 = arith.truncf %813 : vector<8x6x6xf32> to vector<8x6x6xbf16>
    "tpu.trace_start"() <{level = 10 : i32, message = "bqk,bkd->bqd"}> : () -> ()
    %cst_397 = arith.constant dense<0.000000e+00> : vector<8x6x32xf32>
    %815 = tpu.matmul %814, %797, %cst_397 {dimension_numbers = #tpu.dot_dimension_numbers<[2], [1], [1], [2], [0, 0, 0, 1, 1, 2], [0], [0]>} : vector<8x6x6xbf16>, vector<8x6x32xbf16>, vector<8x6x32xf32> -> vector<8x6x32xf32>
    "tpu.trace_stop"() : () -> ()
    %816 = arith.addf %784, %815 : vector<8x6x32xf32>
    %817 = vector.shape_cast %816 : vector<8x6x32xf32> to vector<48x32xf32>
    %c0_398 = arith.constant 0 : index
    %c0_399 = arith.constant 0 : index
    %818 = vector.load %arg20[%c0_398, %c0_399] : memref<32x32xbf16, #tpu.memory_space<vmem>>, vector<32x32xbf16>
    %819 = arith.truncf %817 : vector<48x32xf32> to vector<48x32xbf16>
    %cst_400 = arith.constant dense<0.000000e+00> : vector<48x32xf32>
    %820 = tpu.matmul %819, %818, %cst_400 {dimension_numbers = #tpu.dot_dimension_numbers<[1], [0], [0], [1], [0, 0, 1, 1], [], []>} : vector<48x32xbf16>, vector<32x32xbf16>, vector<48x32xf32> -> vector<48x32xf32>
    %c0_401 = arith.constant 0 : index
    %c0_402 = arith.constant 0 : index
    %821 = vector.load %arg21[%c0_401, %c0_402] : memref<1x32xf32, #tpu.memory_space<vmem>>, vector<1x32xf32>
    %822 = vector.broadcast %821 : vector<1x32xf32> to vector<48x32xf32>
    %823 = arith.addf %820, %822 : vector<48x32xf32>
    %824 = arith.addf %823, %723 : vector<48x32xf32>
    %c0_403 = arith.constant 0 : index
    %c0_404 = arith.constant 0 : index
    %825 = vector.load %arg22[%c0_403, %c0_404] : memref<1x32xf32, #tpu.memory_space<vmem>>, vector<1x32xf32>
    %c0_405 = arith.constant 0 : index
    %c0_406 = arith.constant 0 : index
    %826 = vector.load %arg23[%c0_405, %c0_406] : memref<1x32xf32, #tpu.memory_space<vmem>>, vector<1x32xf32>
    %cst_407 = arith.constant dense<0.000000e+00> : vector<48xf32>
    %827 = vector.multi_reduction <add>, %824, %cst_407 [1] : vector<48x32xf32> to vector<48xf32>
    %828 = vector.shape_cast %827 : vector<48xf32> to vector<48x1xf32>
    %cst_408 = arith.constant 3.200000e+01 : f32
    %829 = vector.broadcast %cst_408 : f32 to vector<48x1xf32>
    %830 = arith.divf %828, %829 : vector<48x1xf32>
    %831 = vector.broadcast %830 : vector<48x1xf32> to vector<48x32xf32>
    %832 = arith.subf %824, %831 : vector<48x32xf32>
    %833 = arith.mulf %832, %832 : vector<48x32xf32>
    %cst_409 = arith.constant dense<0.000000e+00> : vector<48xf32>
    %834 = vector.multi_reduction <add>, %833, %cst_409 [1] : vector<48x32xf32> to vector<48xf32>
    %835 = vector.shape_cast %834 : vector<48xf32> to vector<48x1xf32>
    %cst_410 = arith.constant 3.200000e+01 : f32
    %836 = vector.broadcast %cst_410 : f32 to vector<48x1xf32>
    %837 = arith.divf %835, %836 : vector<48x1xf32>
    %838 = vector.broadcast %830 : vector<48x1xf32> to vector<48x32xf32>
    %839 = arith.subf %824, %838 : vector<48x32xf32>
    %cst_411 = arith.constant 9.99999996E-13 : f32
    %840 = vector.broadcast %cst_411 : f32 to vector<48x1xf32>
    %841 = arith.addf %837, %840 : vector<48x1xf32>
    %842 = math.rsqrt %841 : vector<48x1xf32>
    %843 = vector.broadcast %842 : vector<48x1xf32> to vector<48x32xf32>
    %844 = arith.mulf %839, %843 : vector<48x32xf32>
    %845 = vector.broadcast %825 : vector<1x32xf32> to vector<48x32xf32>
    %846 = arith.mulf %844, %845 : vector<48x32xf32>
    %847 = vector.broadcast %826 : vector<1x32xf32> to vector<48x32xf32>
    %848 = arith.addf %846, %847 : vector<48x32xf32>
    %c0_412 = arith.constant 0 : index
    %c0_413 = arith.constant 0 : index
    %849 = vector.load %arg24[%c0_412, %c0_413] : memref<32x32xbf16, #tpu.memory_space<vmem>>, vector<32x32xbf16>
    %850 = arith.truncf %848 : vector<48x32xf32> to vector<48x32xbf16>
    %cst_414 = arith.constant dense<0.000000e+00> : vector<48x32xf32>
    %851 = tpu.matmul %850, %849, %cst_414 {dimension_numbers = #tpu.dot_dimension_numbers<[1], [0], [0], [1], [0, 0, 1, 1], [], []>} : vector<48x32xbf16>, vector<32x32xbf16>, vector<48x32xf32> -> vector<48x32xf32>
    %c0_415 = arith.constant 0 : index
    %c0_416 = arith.constant 0 : index
    %852 = vector.load %arg25[%c0_415, %c0_416] : memref<1x32xf32, #tpu.memory_space<vmem>>, vector<1x32xf32>
    %853 = vector.broadcast %852 : vector<1x32xf32> to vector<48x32xf32>
    %854 = arith.addf %851, %853 : vector<48x32xf32>
    %cst_417 = arith.constant 5.000000e-01 : f32
    %855 = vector.broadcast %cst_417 : f32 to vector<48x32xf32>
    %856 = arith.mulf %855, %854 : vector<48x32xf32>
    %857 = arith.mulf %854, %854 : vector<48x32xf32>
    %858 = arith.mulf %857, %854 : vector<48x32xf32>
    %cst_418 = arith.constant 4.471500e-02 : f32
    %859 = vector.broadcast %cst_418 : f32 to vector<48x32xf32>
    %860 = arith.mulf %859, %858 : vector<48x32xf32>
    %861 = arith.addf %854, %860 : vector<48x32xf32>
    %cst_419 = arith.constant 0.797884583 : f32
    %862 = vector.broadcast %cst_419 : f32 to vector<48x32xf32>
    %863 = arith.mulf %862, %861 : vector<48x32xf32>
    %864 = math.tanh %863 : vector<48x32xf32>
    %cst_420 = arith.constant 1.000000e+00 : f32
    %865 = vector.broadcast %cst_420 : f32 to vector<48x32xf32>
    %866 = arith.addf %865, %864 : vector<48x32xf32>
    %867 = arith.mulf %856, %866 : vector<48x32xf32>
    %c0_421 = arith.constant 0 : index
    %c0_422 = arith.constant 0 : index
    %868 = vector.load %arg26[%c0_421, %c0_422] : memref<32x32xbf16, #tpu.memory_space<vmem>>, vector<32x32xbf16>
    %869 = arith.truncf %867 : vector<48x32xf32> to vector<48x32xbf16>
    %cst_423 = arith.constant dense<0.000000e+00> : vector<48x32xf32>
    %870 = tpu.matmul %869, %868, %cst_423 {dimension_numbers = #tpu.dot_dimension_numbers<[1], [0], [0], [1], [0, 0, 1, 1], [], []>} : vector<48x32xbf16>, vector<32x32xbf16>, vector<48x32xf32> -> vector<48x32xf32>
    %c0_424 = arith.constant 0 : index
    %c0_425 = arith.constant 0 : index
    %871 = vector.load %arg27[%c0_424, %c0_425] : memref<1x32xf32, #tpu.memory_space<vmem>>, vector<1x32xf32>
    %872 = vector.broadcast %871 : vector<1x32xf32> to vector<48x32xf32>
    %873 = arith.addf %870, %872 : vector<48x32xf32>
    %874 = arith.addf %873, %848 : vector<48x32xf32>
    %c0_426 = arith.constant 0 : index
    %c0_427 = arith.constant 0 : index
    %875 = vector.load %arg28[%c0_426, %c0_427] : memref<1x32xf32, #tpu.memory_space<vmem>>, vector<1x32xf32>
    %c0_428 = arith.constant 0 : index
    %c0_429 = arith.constant 0 : index
    %876 = vector.load %arg29[%c0_428, %c0_429] : memref<1x32xf32, #tpu.memory_space<vmem>>, vector<1x32xf32>
    %cst_430 = arith.constant dense<0.000000e+00> : vector<48xf32>
    %877 = vector.multi_reduction <add>, %874, %cst_430 [1] : vector<48x32xf32> to vector<48xf32>
    %878 = vector.shape_cast %877 : vector<48xf32> to vector<48x1xf32>
    %cst_431 = arith.constant 3.200000e+01 : f32
    %879 = vector.broadcast %cst_431 : f32 to vector<48x1xf32>
    %880 = arith.divf %878, %879 : vector<48x1xf32>
    %881 = vector.broadcast %880 : vector<48x1xf32> to vector<48x32xf32>
    %882 = arith.subf %874, %881 : vector<48x32xf32>
    %883 = arith.mulf %882, %882 : vector<48x32xf32>
    %cst_432 = arith.constant dense<0.000000e+00> : vector<48xf32>
    %884 = vector.multi_reduction <add>, %883, %cst_432 [1] : vector<48x32xf32> to vector<48xf32>
    %885 = vector.shape_cast %884 : vector<48xf32> to vector<48x1xf32>
    %cst_433 = arith.constant 3.200000e+01 : f32
    %886 = vector.broadcast %cst_433 : f32 to vector<48x1xf32>
    %887 = arith.divf %885, %886 : vector<48x1xf32>
    %888 = vector.broadcast %880 : vector<48x1xf32> to vector<48x32xf32>
    %889 = arith.subf %874, %888 : vector<48x32xf32>
    %cst_434 = arith.constant 9.99999996E-13 : f32
    %890 = vector.broadcast %cst_434 : f32 to vector<48x1xf32>
    %891 = arith.addf %887, %890 : vector<48x1xf32>
    %892 = math.rsqrt %891 : vector<48x1xf32>
    %893 = vector.broadcast %892 : vector<48x1xf32> to vector<48x32xf32>
    %894 = arith.mulf %889, %893 : vector<48x32xf32>
    %895 = vector.broadcast %875 : vector<1x32xf32> to vector<48x32xf32>
    %896 = arith.mulf %894, %895 : vector<48x32xf32>
    %897 = vector.broadcast %876 : vector<1x32xf32> to vector<48x32xf32>
    %898 = arith.addf %896, %897 : vector<48x32xf32>
    %899 = vector.shape_cast %898 : vector<48x32xf32> to vector<8x6x32xf32>
    %900 = vector.extract_strided_slice %899 {offsets = [0, 0, 0], sizes = [8, 1, 32], strides = [1, 1, 1]} : vector<8x6x32xf32> to vector<8x1x32xf32>
    %901 = vector.shape_cast %900 : vector<8x1x32xf32> to vector<8x32xf32>
    %c0_435 = arith.constant 0 : index
    %c0_436 = arith.constant 0 : index
    %902 = vector.load %arg12[%c0_435, %c0_436] : memref<32x128xbf16, #tpu.memory_space<vmem>>, vector<32x128xbf16>
    %903 = arith.truncf %901 : vector<8x32xf32> to vector<8x32xbf16>
    %cst_437 = arith.constant dense<0.000000e+00> : vector<8x128xf32>
    %904 = tpu.matmul %903, %902, %cst_437 {dimension_numbers = #tpu.dot_dimension_numbers<[1], [0], [0], [1], [0, 0, 1, 1], [], []>} : vector<8x32xbf16>, vector<32x128xbf16>, vector<8x128xf32> -> vector<8x128xf32>
    %c0_438 = arith.constant 0 : index
    %c0_439 = arith.constant 0 : index
    %905 = vector.load %arg13[%c0_438, %c0_439] : memref<1x128xf32, #tpu.memory_space<vmem>>, vector<1x128xf32>
    %906 = vector.broadcast %905 : vector<1x128xf32> to vector<8x128xf32>
    %907 = arith.addf %904, %906 : vector<8x128xf32>
    %cst_440 = arith.constant -1.000000e+01 : f32
    %cst_441 = arith.constant 1.000000e+01 : f32
    %908 = vector.broadcast %cst_440 : f32 to vector<8x128xf32>
    %909 = arith.maximumf %908, %907 : vector<8x128xf32>
    %910 = vector.broadcast %cst_441 : f32 to vector<8x128xf32>
    %911 = arith.minimumf %910, %909 : vector<8x128xf32>
    %912 = arith.negf %911 : vector<8x128xf32>
    %913 = math.exp %912 : vector<8x128xf32>
    %cst_442 = arith.constant 1.000000e+00 : f32
    %914 = vector.broadcast %cst_442 : f32 to vector<8x128xf32>
    %915 = arith.addf %914, %913 : vector<8x128xf32>
    %916 = arith.divf %914, %915 : vector<8x128xf32>
    %c0_443 = arith.constant 0 : index
    %c0_444 = arith.constant 0 : index
    %917 = vector.load %arg30[%c0_443, %c0_444] : memref<8x128xf32, #tpu.memory_space<vmem>>, vector<8x128xf32>
    tpu.vector_store %arg30[%c0_443, %c0_444], %916 {strides = array<i32>} : memref<8x128xf32, #tpu.memory_space<vmem>>, vector<8x128xf32>,
    return
  }
  func.func @transform_0(%arg0: i32) -> (i32, i32) {
    %c0_i32 = arith.constant 0 : i32
    %c0_i32_0 = arith.constant 0 : i32
    %c0_i32_1 = arith.constant 0 : i32
    return %c0_i32, %c0_i32_0 : i32, i32
  }
  func.func @transform_1(%arg0: i32) -> (i32, i32) {
    %c0_i32 = arith.constant 0 : i32
    %c0_i32_0 = arith.constant 0 : i32
    %c0_i32_1 = arith.constant 0 : i32
    return %c0_i32, %c0_i32_0 : i32, i32
  }
  func.func @transform_2(%arg0: i32) -> (i32, i32) {
    %c0_i32 = arith.constant 0 : i32
    %c0_i32_0 = arith.constant 0 : i32
    return %arg0, %c0_i32 : i32, i32
  }
  func.func @transform_3(%arg0: i32) -> (i32, i32) {
    %c0_i32 = arith.constant 0 : i32
    %c0_i32_0 = arith.constant 0 : i32
    return %arg0, %c0_i32 : i32, i32
  }
  func.func @transform_4(%arg0: i32) -> (i32, i32) {
    %c0_i32 = arith.constant 0 : i32
    %c0_i32_0 = arith.constant 0 : i32
    %c0_i32_1 = arith.constant 0 : i32
    return %c0_i32, %c0_i32_0 : i32, i32
  }
  func.func @transform_5(%arg0: i32) -> (i32, i32) {
    %c0_i32 = arith.constant 0 : i32
    %c0_i32_0 = arith.constant 0 : i32
    %c0_i32_1 = arith.constant 0 : i32
    return %c0_i32, %c0_i32_0 : i32, i32
  }
  func.func @transform_6(%arg0: i32) -> (i32, i32) {
    %c0_i32 = arith.constant 0 : i32
    %c0_i32_0 = arith.constant 0 : i32
    %c0_i32_1 = arith.constant 0 : i32
    return %c0_i32, %c0_i32_0 : i32, i32
  }
  func.func @transform_7(%arg0: i32) -> (i32, i32) {
    %c0_i32 = arith.constant 0 : i32
    %c0_i32_0 = arith.constant 0 : i32
    %c0_i32_1 = arith.constant 0 : i32
    return %c0_i32, %c0_i32_0 : i32, i32
  }
  func.func @transform_8(%arg0: i32) -> (i32, i32) {
    %c0_i32 = arith.constant 0 : i32
    %c0_i32_0 = arith.constant 0 : i32
    %c0_i32_1 = arith.constant 0 : i32
    return %c0_i32, %c0_i32_0 : i32, i32
  }
  func.func @transform_9(%arg0: i32) -> (i32, i32) {
    %c0_i32 = arith.constant 0 : i32
    %c0_i32_0 = arith.constant 0 : i32
    %c0_i32_1 = arith.constant 0 : i32
    return %c0_i32, %c0_i32_0 : i32, i32
  }
  func.func @transform_10(%arg0: i32) -> (i32, i32) {
    %c0_i32 = arith.constant 0 : i32
    %c0_i32_0 = arith.constant 0 : i32
    %c0_i32_1 = arith.constant 0 : i32
    return %c0_i32, %c0_i32_0 : i32, i32
  }
  func.func @transform_11(%arg0: i32) -> (i32, i32) {
    %c0_i32 = arith.constant 0 : i32
    %c0_i32_0 = arith.constant 0 : i32
    %c0_i32_1 = arith.constant 0 : i32
    return %c0_i32, %c0_i32_0 : i32, i32
  }
  func.func @transform_12(%arg0: i32) -> (i32, i32) {
    %c0_i32 = arith.constant 0 : i32
    %c0_i32_0 = arith.constant 0 : i32
    %c0_i32_1 = arith.constant 0 : i32
    return %c0_i32, %c0_i32_0 : i32, i32
  }
  func.func @transform_13(%arg0: i32) -> (i32, i32) {
    %c0_i32 = arith.constant 0 : i32
    %c0_i32_0 = arith.constant 0 : i32
    %c0_i32_1 = arith.constant 0 : i32
    return %c0_i32, %c0_i32_0 : i32, i32
  }
  func.func @transform_14(%arg0: i32) -> (i32, i32) {
    %c0_i32 = arith.constant 0 : i32
    %c0_i32_0 = arith.constant 0 : i32
    %c0_i32_1 = arith.constant 0 : i32
    return %c0_i32, %c0_i32_0 : i32, i32
  }
  func.func @transform_15(%arg0: i32) -> (i32, i32) {
    %c0_i32 = arith.constant 0 : i32
    %c0_i32_0 = arith.constant 0 : i32
    %c0_i32_1 = arith.constant 0 : i32
    return %c0_i32, %c0_i32_0 : i32, i32
  }
  func.func @transform_16(%arg0: i32) -> (i32, i32) {
    %c0_i32 = arith.constant 0 : i32
    %c0_i32_0 = arith.constant 0 : i32
    %c0_i32_1 = arith.constant 0 : i32
    return %c0_i32, %c0_i32_0 : i32, i32
  }
  func.func @transform_17(%arg0: i32) -> (i32, i32) {
    %c0_i32 = arith.constant 0 : i32
    %c0_i32_0 = arith.constant 0 : i32
    %c0_i32_1 = arith.constant 0 : i32
    return %c0_i32, %c0_i32_0 : i32, i32
  }
  func.func @transform_18(%arg0: i32) -> (i32, i32) {
    %c0_i32 = arith.constant 0 : i32
    %c0_i32_0 = arith.constant 0 : i32
    %c0_i32_1 = arith.constant 0 : i32
    return %c0_i32, %c0_i32_0 : i32, i32
  }
  func.func @transform_19(%arg0: i32) -> (i32, i32) {
    %c0_i32 = arith.constant 0 : i32
    %c0_i32_0 = arith.constant 0 : i32
    %c0_i32_1 = arith.constant 0 : i32
    return %c0_i32, %c0_i32_0 : i32, i32
  }
  func.func @transform_20(%arg0: i32) -> (i32, i32) {
    %c0_i32 = arith.constant 0 : i32
    %c0_i32_0 = arith.constant 0 : i32
    %c0_i32_1 = arith.constant 0 : i32
    return %c0_i32, %c0_i32_0 : i32, i32
  }
  func.func @transform_21(%arg0: i32) -> (i32, i32) {
    %c0_i32 = arith.constant 0 : i32
    %c0_i32_0 = arith.constant 0 : i32
    %c0_i32_1 = arith.constant 0 : i32
    return %c0_i32, %c0_i32_0 : i32, i32
  }
  func.func @transform_22(%arg0: i32) -> (i32, i32) {
    %c0_i32 = arith.constant 0 : i32
    %c0_i32_0 = arith.constant 0 : i32
    %c0_i32_1 = arith.constant 0 : i32
    return %c0_i32, %c0_i32_0 : i32, i32
  }
  func.func @transform_23(%arg0: i32) -> (i32, i32) {
    %c0_i32 = arith.constant 0 : i32
    %c0_i32_0 = arith.constant 0 : i32
    %c0_i32_1 = arith.constant 0 : i32
    return %c0_i32, %c0_i32_0 : i32, i32
  }
  func.func @transform_24(%arg0: i32) -> (i32, i32) {
    %c0_i32 = arith.constant 0 : i32
    %c0_i32_0 = arith.constant 0 : i32
    %c0_i32_1 = arith.constant 0 : i32
    return %c0_i32, %c0_i32_0 : i32, i32
  }
  func.func @transform_25(%arg0: i32) -> (i32, i32) {
    %c0_i32 = arith.constant 0 : i32
    %c0_i32_0 = arith.constant 0 : i32
    %c0_i32_1 = arith.constant 0 : i32
    return %c0_i32, %c0_i32_0 : i32, i32
  }
  func.func @transform_26(%arg0: i32) -> (i32, i32) {
    %c0_i32 = arith.constant 0 : i32
    %c0_i32_0 = arith.constant 0 : i32
    %c0_i32_1 = arith.constant 0 : i32
    return %c0_i32, %c0_i32_0 : i32, i32
  }
  func.func @transform_27(%arg0: i32) -> (i32, i32) {
    %c0_i32 = arith.constant 0 : i32
    %c0_i32_0 = arith.constant 0 : i32
    %c0_i32_1 = arith.constant 0 : i32
    return %c0_i32, %c0_i32_0 : i32, i32
  }
  func.func @transform_28(%arg0: i32) -> (i32, i32) {
    %c0_i32 = arith.constant 0 : i32
    %c0_i32_0 = arith.constant 0 : i32
    %c0_i32_1 = arith.constant 0 : i32
    return %c0_i32, %c0_i32_0 : i32, i32
  }
  func.func @transform_29(%arg0: i32) -> (i32, i32) {
    %c0_i32 = arith.constant 0 : i32
    %c0_i32_0 = arith.constant 0 : i32
    return %arg0, %c0_i32 : i32, i32
  }
}

</mosaic_0001>

<llo_original>
// kernel: tpu_custom_call.1
$region0: #{tpu_custom_call.1}
  #allocation0 [shape = 'u32[]', space=smem, size = 0x4, offset = 0x4, fixed_abs, tag = 'smem constant byte address 0x4 - core index']
  #allocation1 [shape = 'u32[144,128]{1,0:T(1,128)}', space=vmem, size = 0x12000, scoped, tag = 'internal scratch']
  #allocation2 [shape = 'f32[8,6,32]{2,1,0:T(8,128)}', space=vmem, size = 0x8000, scoped, tag = 'scratch operand']
  #allocation3 [shape = 'f32[1,1]{1,0:T(1,128)S(6)}', space=smem, size = 0x200, scoped, tag = 'scoped memory for tpu_custom_call.1']
  %s0 = inlined_call_operand.smem [shape: u32[30], index: -1, kind: input, shape index: {}]
  %s1 = sld [smem:[%s0]]
  %s2 = scalar_lea.smem %s0, 1
  %s3 = sld [smem:[%s2]]
  %s4 = scalar_lea.smem %s0, 2
  %s5 = sld [smem:[%s4]]
  %s6 = scalar_lea.smem %s0, 3
  %s7 = sld [smem:[%s6]]
  %s8 = scalar_lea.smem %s0, 4
  %s9 = sld [smem:[%s8]]
  %s10 = scalar_lea.smem %s0, 5
  %s11 = sld [smem:[%s10]]
  %s12 = scalar_lea.smem %s0, 6
  %s13 = sld [smem:[%s12]]
  %s14 = scalar_lea.smem %s0, 7
  %s15 = sld [smem:[%s14]]
  %s16 = scalar_lea.smem %s0, 8
  %s17 = sld [smem:[%s16]]
  %s18 = scalar_lea.smem %s0, 9
  %s19 = sld [smem:[%s18]]
  %s20 = scalar_lea.smem %s0, 10
  %s21 = sld [smem:[%s20]]
  %s22 = scalar_lea.smem %s0, 11
  %s23 = sld [smem:[%s22]]
  %s24 = scalar_lea.smem %s0, 12
  %s25 = sld [smem:[%s24]]
  %s26 = scalar_lea.smem %s0, 13
  %s27 = sld [smem:[%s26]]
  %s28 = scalar_lea.smem %s0, 14
  %s29 = sld [smem:[%s28]]
  %s30 = scalar_lea.smem %s0, 15
  %s31 = sld [smem:[%s30]]
  %s32 = scalar_lea.smem %s0, 16
  %s33 = sld [smem:[%s32]]
  %s34 = scalar_lea.smem %s0, 17
  %s35 = sld [smem:[%s34]]
  %s36 = scalar_lea.smem %s0, 18
  %s37 = sld [smem:[%s36]]
  %s38 = scalar_lea.smem %s0, 19
  %s39 = sld [smem:[%s38]]
  %s40 = scalar_lea.smem %s0, 20
  %s41 = sld [smem:[%s40]]
  %s42 = scalar_lea.smem %s0, 21
  %s43 = sld [smem:[%s42]]
  %s44 = scalar_lea.smem %s0, 22
  %s45 = sld [smem:[%s44]]
  %s46 = scalar_lea.smem %s0, 23
  %s47 = sld [smem:[%s46]]
  %s48 = scalar_lea.smem %s0, 24
  %s49 = sld [smem:[%s48]]
  %s50 = scalar_lea.smem %s0, 25
  %s51 = sld [smem:[%s50]]
  %s52 = scalar_lea.smem %s0, 26
  %s53 = sld [smem:[%s52]]
  %s54 = scalar_lea.smem %s0, 27
  %s55 = sld [smem:[%s54]]
  %s56 = scalar_lea.smem %s0, 28
  %s57 = sld [smem:[%s56]]
  %s58 = scalar_lea.smem %s0, 29
  %s59 = sld [smem:[%s58]]
  %s60 = sld [smem:[#allocation0]]
  $region153: #{tpu_custom_call.1} parent=0
    _
  %s62 = ssub.s32 1, %s60
  %s63 = scalar_select 0, %s62, %s60
  %64 = sst [smem:[#allocation3]] %s1
  $region1: #{tpu_custom_call.1} parent=0
    #allocation4 [shape = 'u8[8192]{0}', space=smem, size = 0x2000, scoped, tag = 'input window, operand 1, single buffered']
    #allocation5 [shape = 's32[2]{0}', space=sflag, size = 0x8, scoped, tag = 'scoped memory for tpu_custom_call.1']
    #allocation6 [shape = 's32[2]{0}', space=sflag, size = 0x8, scoped, tag = 'scoped memory for tpu_custom_call.1']
    #allocation7 [shape = 'u8[8192]{0}', space=vmem, size = 0x2000, scoped, tag = 'output window, operand 0']
    %65 = vsyncpa [#allocation6], 0
    %66 = vsyncpa [#allocation5], 0
    %s67 = scalar_lea.sflag [#allocation5], 1
    %68 = vsyncpa %s67, 0
    loop: start=0, step=1, limit=4
    $region2: #{tpu_custom_call.1} parent=1 // loop_pre_header
      _
    $region3: #{tpu_custom_call.1} parent=1 // loop_header
      %s70 = sphi 0, %s74
      %p71 = scmp.ge.s32.totalorder %s70, 4
      %s78 = sphi 0, %s78
      %s80 = sphi 0, %s78
      %s81 = sphi 0, %s80
      %s95 = sphi 0, %s81
      %s99 = sphi 0, %s99
      %s101 = sphi 0, %s99
      %s102 = sphi 0, %s101
      %s116 = sphi 0, %s102
      %s122 = sphi 0, %s124
      %s125 = sphi 0, %s122
      %s126 = sphi 0, %s125
      %s142 = sphi 0, %s126
      %s148 = sphi 0, %s150
      %s151 = sphi 0, %s148
      %s152 = sphi 0, %s151
      %s168 = sphi 0, %s152
      %s172 = sphi 0, %s172
      %s174 = sphi 0, %s172
      %s175 = sphi 0, %s174
      %s189 = sphi 0, %s175
      %s193 = sphi 0, %s193
      %s195 = sphi 0, %s193
      %s196 = sphi 0, %s195
      %s210 = sphi 0, %s196
      %s214 = sphi 0, %s214
      %s216 = sphi 0, %s214
      %s217 = sphi 0, %s216
      %s231 = sphi 0, %s217
      %s235 = sphi 0, %s235
      %s237 = sphi 0, %s235
      %s238 = sphi 0, %s237
      %s252 = sphi 0, %s238
      %s256 = sphi 0, %s256
      %s258 = sphi 0, %s256
      %s259 = sphi 0, %s258
      %s273 = sphi 0, %s259
      %s277 = sphi 0, %s277
      %s279 = sphi 0, %s277
      %s280 = sphi 0, %s279
      %s294 = sphi 0, %s280
      %s298 = sphi 0, %s298
      %s300 = sphi 0, %s298
      %s301 = sphi 0, %s300
      %s315 = sphi 0, %s301
      %s319 = sphi 0, %s319
      %s321 = sphi 0, %s319
      %s322 = sphi 0, %s321
      %s336 = sphi 0, %s322
      %s340 = sphi 0, %s340
      %s342 = sphi 0, %s340
      %s343 = sphi 0, %s342
      %s357 = sphi 0, %s343
      %s361 = sphi 0, %s361
      %s363 = sphi 0, %s361
      %s364 = sphi 0, %s363
      %s378 = sphi 0, %s364
      %s382 = sphi 0, %s382
      %s384 = sphi 0, %s382
      %s385 = sphi 0, %s384
      %s399 = sphi 0, %s385
      %s403 = sphi 0, %s403
      %s405 = sphi 0, %s403
      %s406 = sphi 0, %s405
      %s420 = sphi 0, %s406
      %s424 = sphi 0, %s424
      %s426 = sphi 0, %s424
      %s427 = sphi 0, %s426
      %s441 = sphi 0, %s427
      %s445 = sphi 0, %s445
      %s447 = sphi 0, %s445
      %s448 = sphi 0, %s447
      %s462 = sphi 0, %s448
      %s466 = sphi 0, %s466
      %s468 = sphi 0, %s466
      %s469 = sphi 0, %s468
      %s483 = sphi 0, %s469
      %s487 = sphi 0, %s487
      %s489 = sphi 0, %s487
      %s490 = sphi 0, %s489
      %s504 = sphi 0, %s490
      %s508 = sphi 0, %s508
      %s510 = sphi 0, %s508
      %s511 = sphi 0, %s510
      %s525 = sphi 0, %s511
      %s529 = sphi 0, %s529
      %s531 = sphi 0, %s529
      %s532 = sphi 0, %s531
      %s546 = sphi 0, %s532
      %s550 = sphi 0, %s550
      %s552 = sphi 0, %s550
      %s553 = sphi 0, %s552
      %s567 = sphi 0, %s553
      %s571 = sphi 0, %s571
      %s573 = sphi 0, %s571
      %s574 = sphi 0, %s573
      %s588 = sphi 0, %s574
      %s592 = sphi 0, %s592
      %s594 = sphi 0, %s592
      %s595 = sphi 0, %s594
      %s609 = sphi 0, %s595
      %s613 = sphi 0, %s613
      %s615 = sphi 0, %s613
      %s616 = sphi 0, %s615
      %s630 = sphi 0, %s616
      %s634 = sphi 0, %s634
      %s636 = sphi 0, %s634
      %s637 = sphi 0, %s636
      %s651 = sphi 0, %s637
      %s655 = sphi 0, %s655
      %s657 = sphi 0, %s655
      %s658 = sphi 0, %s657
      %s672 = sphi 0, %s658
      %s676 = sphi 0, %s676
      %s678 = sphi 0, %s676
      %s679 = sphi 0, %s678
      %s693 = sphi 0, %s679
      %s699 = sphi 0, %s701
      %s702 = sphi 0, %s699
      %s703 = sphi 0, %s702
      %s719 = sphi 0, %s703
    $region4: #{tpu_custom_call.1} parent=1 // loop_header_branch
      %73 = sbr.rel (%p71) target = $region8
    $region5: #{tpu_custom_call.1} parent=1 // loop_body
      %s75 = ssub.s32 %s70, 1
      %s76 = ssub.s32 %s70, 2
      %s77 = sadd.s32 %s70, 1
      %s79 = sadd.s32 %s78, 1
      %p82 = scmp.eq.s32.totalorder %s70, 1
      %p83 = scmp.ne.s32.totalorder %s78, %s80
      %p84 = scmp.eq.s32.totalorder %s70, 0
      %p85 = por %p83, %p84
      %p86 = scmp.ne.s32.totalorder %s78, %s80
      %p87 = scmp.eq.s32.totalorder %s75, 1
      %p88 = por %p86, %p87
      %p89 = scmp.ne.s32.totalorder %s80, %s81
      %p90 = scmp.eq.s32.totalorder %s75, 0
      %p91 = por %p89, %p90
      %p92 = scmp.ne.s32.totalorder %s80, %s81
      %p93 = scmp.eq.s32.totalorder %s76, 1
      %p94 = por %p92, %p93
      %p96 = scmp.ne.s32.totalorder %s81, %s95
      %p97 = scmp.eq.s32.totalorder %s76, 0
      %p98 = por %p96, %p97
      %s100 = sadd.s32 %s99, 1
      %p103 = scmp.eq.s32.totalorder %s70, 1
      %p104 = scmp.ne.s32.totalorder %s99, %s101
      %p105 = scmp.eq.s32.totalorder %s70, 0
      %p106 = por %p104, %p105
      %p107 = scmp.ne.s32.totalorder %s99, %s101
      %p108 = scmp.eq.s32.totalorder %s75, 1
      %p109 = por %p107, %p108
      %p110 = scmp.ne.s32.totalorder %s101, %s102
      %p111 = scmp.eq.s32.totalorder %s75, 0
      %p112 = por %p110, %p111
      %p113 = scmp.ne.s32.totalorder %s101, %s102
      %p114 = scmp.eq.s32.totalorder %s76, 1
      %p115 = por %p113, %p114
      %p117 = scmp.ne.s32.totalorder %s102, %s116
      %p118 = scmp.eq.s32.totalorder %s76, 0
      %p119 = por %p117, %p118
      %s120 = ssub.s32 %s70, %s77
      %p121 = scmp.eq.s32.totalorder %s120, 0
      %s123 = sadd.s32 %s122, 1
      %s124 = scalar_select %p121, %s122, %s123
      %p127 = pneg %p121
      %p128 = scmp.eq.s32.totalorder %s70, 1
      %p129 = por %p127, %p128
      %p130 = scmp.ne.s32.totalorder %s122, %s125
      %p131 = scmp.eq.s32.totalorder %s70, 0
      %p132 = por %p130, %p131
      %p133 = scmp.ne.s32.totalorder %s122, %s125
      %p134 = scmp.eq.s32.totalorder %s75, 1
      %p135 = por %p133, %p134
      %p136 = scmp.ne.s32.totalorder %s125, %s126
      %p137 = scmp.eq.s32.totalorder %s75, 0
      %p138 = por %p136, %p137
      %p139 = scmp.ne.s32.totalorder %s125, %s126
      %p140 = scmp.eq.s32.totalorder %s76, 1
      %p141 = por %p139, %p140
      %p143 = scmp.ne.s32.totalorder %s126, %s142
      %p144 = scmp.eq.s32.totalorder %s76, 0
      %p145 = por %p143, %p144
      %s146 = ssub.s32 %s70, %s77
      %p147 = scmp.eq.s32.totalorder %s146, 0
      %s149 = sadd.s32 %s148, 1
      %s150 = scalar_select %p147, %s148, %s149
      %p153 = pneg %p147
      %p154 = scmp.eq.s32.totalorder %s70, 1
      %p155 = por %p153, %p154
      %p156 = scmp.ne.s32.totalorder %s148, %s151
      %p157 = scmp.eq.s32.totalorder %s70, 0
      %p158 = por %p156, %p157
      %p159 = scmp.ne.s32.totalorder %s148, %s151
      %p160 = scmp.eq.s32.totalorder %s75, 1
      %p161 = por %p159, %p160
      %p162 = scmp.ne.s32.totalorder %s151, %s152
      %p163 = scmp.eq.s32.totalorder %s75, 0
      %p164 = por %p162, %p163
      %p165 = scmp.ne.s32.totalorder %s151, %s152
      %p166 = scmp.eq.s32.totalorder %s76, 1
      %p167 = por %p165, %p166
      %p169 = scmp.ne.s32.totalorder %s152, %s168
      %p170 = scmp.eq.s32.totalorder %s76, 0
      %p171 = por %p169, %p170
      %s173 = sadd.s32 %s172, 1
      %p176 = scmp.eq.s32.totalorder %s70, 1
      %p177 = scmp.ne.s32.totalorder %s172, %s174
      %p178 = scmp.eq.s32.totalorder %s70, 0
      %p179 = por %p177, %p178
      %p180 = scmp.ne.s32.totalorder %s172, %s174
      %p181 = scmp.eq.s32.totalorder %s75, 1
      %p182 = por %p180, %p181
      %p183 = scmp.ne.s32.totalorder %s174, %s175
      %p184 = scmp.eq.s32.totalorder %s75, 0
      %p185 = por %p183, %p184
      %p186 = scmp.ne.s32.totalorder %s174, %s175
      %p187 = scmp.eq.s32.totalorder %s76, 1
      %p188 = por %p186, %p187
      %p190 = scmp.ne.s32.totalorder %s175, %s189
      %p191 = scmp.eq.s32.totalorder %s76, 0
      %p192 = por %p190, %p191
      %s194 = sadd.s32 %s193, 1
      %p197 = scmp.eq.s32.totalorder %s70, 1
      %p198 = scmp.ne.s32.totalorder %s193, %s195
      %p199 = scmp.eq.s32.totalorder %s70, 0
      %p200 = por %p198, %p199
      %p201 = scmp.ne.s32.totalorder %s193, %s195
      %p202 = scmp.eq.s32.totalorder %s75, 1
      %p203 = por %p201, %p202
      %p204 = scmp.ne.s32.totalorder %s195, %s196
      %p205 = scmp.eq.s32.totalorder %s75, 0
      %p206 = por %p204, %p205
      %p207 = scmp.ne.s32.totalorder %s195, %s196
      %p208 = scmp.eq.s32.totalorder %s76, 1
      %p209 = por %p207, %p208
      %p211 = scmp.ne.s32.totalorder %s196, %s210
      %p212 = scmp.eq.s32.totalorder %s76, 0
      %p213 = por %p211, %p212
      %s215 = sadd.s32 %s214, 1
      %p218 = scmp.eq.s32.totalorder %s70, 1
      %p219 = scmp.ne.s32.totalorder %s214, %s216
      %p220 = scmp.eq.s32.totalorder %s70, 0
      %p221 = por %p219, %p220
      %p222 = scmp.ne.s32.totalorder %s214, %s216
      %p223 = scmp.eq.s32.totalorder %s75, 1
      %p224 = por %p222, %p223
      %p225 = scmp.ne.s32.totalorder %s216, %s217
      %p226 = scmp.eq.s32.totalorder %s75, 0
      %p227 = por %p225, %p226
      %p228 = scmp.ne.s32.totalorder %s216, %s217
      %p229 = scmp.eq.s32.totalorder %s76, 1
      %p230 = por %p228, %p229
      %p232 = scmp.ne.s32.totalorder %s217, %s231
      %p233 = scmp.eq.s32.totalorder %s76, 0
      %p234 = por %p232, %p233
      %s236 = sadd.s32 %s235, 1
      %p239 = scmp.eq.s32.totalorder %s70, 1
      %p240 = scmp.ne.s32.totalorder %s235, %s237
      %p241 = scmp.eq.s32.totalorder %s70, 0
      %p242 = por %p240, %p241
      %p243 = scmp.ne.s32.totalorder %s235, %s237
      %p244 = scmp.eq.s32.totalorder %s75, 1
      %p245 = por %p243, %p244
      %p246 = scmp.ne.s32.totalorder %s237, %s238
      %p247 = scmp.eq.s32.totalorder %s75, 0
      %p248 = por %p246, %p247
      %p249 = scmp.ne.s32.totalorder %s237, %s238
      %p250 = scmp.eq.s32.totalorder %s76, 1
      %p251 = por %p249, %p250
      %p253 = scmp.ne.s32.totalorder %s238, %s252
      %p254 = scmp.eq.s32.totalorder %s76, 0
      %p255 = por %p253, %p254
      %s257 = sadd.s32 %s256, 1
      %p260 = scmp.eq.s32.totalorder %s70, 1
      %p261 = scmp.ne.s32.totalorder %s256, %s258
      %p262 = scmp.eq.s32.totalorder %s70, 0
      %p263 = por %p261, %p262
      %p264 = scmp.ne.s32.totalorder %s256, %s258
      %p265 = scmp.eq.s32.totalorder %s75, 1
      %p266 = por %p264, %p265
      %p267 = scmp.ne.s32.totalorder %s258, %s259
      %p268 = scmp.eq.s32.totalorder %s75, 0
      %p269 = por %p267, %p268
      %p270 = scmp.ne.s32.totalorder %s258, %s259
      %p271 = scmp.eq.s32.totalorder %s76, 1
      %p272 = por %p270, %p271
      %p274 = scmp.ne.s32.totalorder %s259, %s273
      %p275 = scmp.eq.s32.totalorder %s76, 0
      %p276 = por %p274, %p275
      %s278 = sadd.s32 %s277, 1
      %p281 = scmp.eq.s32.totalorder %s70, 1
      %p282 = scmp.ne.s32.totalorder %s277, %s279
      %p283 = scmp.eq.s32.totalorder %s70, 0
      %p284 = por %p282, %p283
      %p285 = scmp.ne.s32.totalorder %s277, %s279
      %p286 = scmp.eq.s32.totalorder %s75, 1
      %p287 = por %p285, %p286
      %p288 = scmp.ne.s32.totalorder %s279, %s280
      %p289 = scmp.eq.s32.totalorder %s75, 0
      %p290 = por %p288, %p289
      %p291 = scmp.ne.s32.totalorder %s279, %s280
      %p292 = scmp.eq.s32.totalorder %s76, 1
      %p293 = por %p291, %p292
      %p295 = scmp.ne.s32.totalorder %s280, %s294
      %p296 = scmp.eq.s32.totalorder %s76, 0
      %p297 = por %p295, %p296
      %s299 = sadd.s32 %s298, 1
      %p302 = scmp.eq.s32.totalorder %s70, 1
      %p303 = scmp.ne.s32.totalorder %s298, %s300
      %p304 = scmp.eq.s32.totalorder %s70, 0
      %p305 = por %p303, %p304
      %p306 = scmp.ne.s32.totalorder %s298, %s300
      %p307 = scmp.eq.s32.totalorder %s75, 1
      %p308 = por %p306, %p307
      %p309 = scmp.ne.s32.totalorder %s300, %s301
      %p310 = scmp.eq.s32.totalorder %s75, 0
      %p311 = por %p309, %p310
      %p312 = scmp.ne.s32.totalorder %s300, %s301
      %p313 = scmp.eq.s32.totalorder %s76, 1
      %p314 = por %p312, %p313
      %p316 = scmp.ne.s32.totalorder %s301, %s315
      %p317 = scmp.eq.s32.totalorder %s76, 0
      %p318 = por %p316, %p317
      %s320 = sadd.s32 %s319, 1
      %p323 = scmp.eq.s32.totalorder %s70, 1
      %p324 = scmp.ne.s32.totalorder %s319, %s321
      %p325 = scmp.eq.s32.totalorder %s70, 0
      %p326 = por %p324, %p325
      %p327 = scmp.ne.s32.totalorder %s319, %s321
      %p328 = scmp.eq.s32.totalorder %s75, 1
      %p329 = por %p327, %p328
      %p330 = scmp.ne.s32.totalorder %s321, %s322
      %p331 = scmp.eq.s32.totalorder %s75, 0
      %p332 = por %p330, %p331
      %p333 = scmp.ne.s32.totalorder %s321, %s322
      %p334 = scmp.eq.s32.totalorder %s76, 1
      %p335 = por %p333, %p334
      %p337 = scmp.ne.s32.totalorder %s322, %s336
      %p338 = scmp.eq.s32.totalorder %s76, 0
      %p339 = por %p337, %p338
      %s341 = sadd.s32 %s340, 1
      %p344 = scmp.eq.s32.totalorder %s70, 1
      %p345 = scmp.ne.s32.totalorder %s340, %s342
      %p346 = scmp.eq.s32.totalorder %s70, 0
      %p347 = por %p345, %p346
      %p348 = scmp.ne.s32.totalorder %s340, %s342
      %p349 = scmp.eq.s32.totalorder %s75, 1
      %p350 = por %p348, %p349
      %p351 = scmp.ne.s32.totalorder %s342, %s343
      %p352 = scmp.eq.s32.totalorder %s75, 0
      %p353 = por %p351, %p352
      %p354 = scmp.ne.s32.totalorder %s342, %s343
      %p355 = scmp.eq.s32.totalorder %s76, 1
      %p356 = por %p354, %p355
      %p358 = scmp.ne.s32.totalorder %s343, %s357
      %p359 = scmp.eq.s32.totalorder %s76, 0
      %p360 = por %p358, %p359
      %s362 = sadd.s32 %s361, 1
      %p365 = scmp.eq.s32.totalorder %s70, 1
      %p366 = scmp.ne.s32.totalorder %s361, %s363
      %p367 = scmp.eq.s32.totalorder %s70, 0
      %p368 = por %p366, %p367
      %p369 = scmp.ne.s32.totalorder %s361, %s363
      %p370 = scmp.eq.s32.totalorder %s75, 1
      %p371 = por %p369, %p370
      %p372 = scmp.ne.s32.totalorder %s363, %s364
      %p373 = scmp.eq.s32.totalorder %s75, 0
      %p374 = por %p372, %p373
      %p375 = scmp.ne.s32.totalorder %s363, %s364
      %p376 = scmp.eq.s32.totalorder %s76, 1
      %p377 = por %p375, %p376
      %p379 = scmp.ne.s32.totalorder %s364, %s378
      %p380 = scmp.eq.s32.totalorder %s76, 0
      %p381 = por %p379, %p380
      %s383 = sadd.s32 %s382, 1
      %p386 = scmp.eq.s32.totalorder %s70, 1
      %p387 = scmp.ne.s32.totalorder %s382, %s384
      %p388 = scmp.eq.s32.totalorder %s70, 0
      %p389 = por %p387, %p388
      %p390 = scmp.ne.s32.totalorder %s382, %s384
      %p391 = scmp.eq.s32.totalorder %s75, 1
      %p392 = por %p390, %p391
      %p393 = scmp.ne.s32.totalorder %s384, %s385
      %p394 = scmp.eq.s32.totalorder %s75, 0
      %p395 = por %p393, %p394
      %p396 = scmp.ne.s32.totalorder %s384, %s385
      %p397 = scmp.eq.s32.totalorder %s76, 1
      %p398 = por %p396, %p397
      %p400 = scmp.ne.s32.totalorder %s385, %s399
      %p401 = scmp.eq.s32.totalorder %s76, 0
      %p402 = por %p400, %p401
      %s404 = sadd.s32 %s403, 1
      %p407 = scmp.eq.s32.totalorder %s70, 1
      %p408 = scmp.ne.s32.totalorder %s403, %s405
      %p409 = scmp.eq.s32.totalorder %s70, 0
      %p410 = por %p408, %p409
      %p411 = scmp.ne.s32.totalorder %s403, %s405
      %p412 = scmp.eq.s32.totalorder %s75, 1
      %p413 = por %p411, %p412
      %p414 = scmp.ne.s32.totalorder %s405, %s406
      %p415 = scmp.eq.s32.totalorder %s75, 0
      %p416 = por %p414, %p415
      %p417 = scmp.ne.s32.totalorder %s405, %s406
      %p418 = scmp.eq.s32.totalorder %s76, 1
      %p419 = por %p417, %p418
      %p421 = scmp.ne.s32.totalorder %s406, %s420
      %p422 = scmp.eq.s32.totalorder %s76, 0
      %p423 = por %p421, %p422
      %s425 = sadd.s32 %s424, 1
      %p428 = scmp.eq.s32.totalorder %s70, 1
      %p429 = scmp.ne.s32.totalorder %s424, %s426
      %p430 = scmp.eq.s32.totalorder %s70, 0
      %p431 = por %p429, %p430
      %p432 = scmp.ne.s32.totalorder %s424, %s426
      %p433 = scmp.eq.s32.totalorder %s75, 1
      %p434 = por %p432, %p433
      %p435 = scmp.ne.s32.totalorder %s426, %s427
      %p436 = scmp.eq.s32.totalorder %s75, 0
      %p437 = por %p435, %p436
      %p438 = scmp.ne.s32.totalorder %s426, %s427
      %p439 = scmp.eq.s32.totalorder %s76, 1
      %p440 = por %p438, %p439
      %p442 = scmp.ne.s32.totalorder %s427, %s441
      %p443 = scmp.eq.s32.totalorder %s76, 0
      %p444 = por %p442, %p443
      %s446 = sadd.s32 %s445, 1
      %p449 = scmp.eq.s32.totalorder %s70, 1
      %p450 = scmp.ne.s32.totalorder %s445, %s447
      %p451 = scmp.eq.s32.totalorder %s70, 0
      %p452 = por %p450, %p451
      %p453 = scmp.ne.s32.totalorder %s445, %s447
      %p454 = scmp.eq.s32.totalorder %s75, 1
      %p455 = por %p453, %p454
      %p456 = scmp.ne.s32.totalorder %s447, %s448
      %p457 = scmp.eq.s32.totalorder %s75, 0
      %p458 = por %p456, %p457
      %p459 = scmp.ne.s32.totalorder %s447, %s448
      %p460 = scmp.eq.s32.totalorder %s76, 1
      %p461 = por %p459, %p460
      %p463 = scmp.ne.s32.totalorder %s448, %s462
      %p464 = scmp.eq.s32.totalorder %s76, 0
      %p465 = por %p463, %p464
      %s467 = sadd.s32 %s466, 1
      %p470 = scmp.eq.s32.totalorder %s70, 1
      %p471 = scmp.ne.s32.totalorder %s466, %s468
      %p472 = scmp.eq.s32.totalorder %s70, 0
      %p473 = por %p471, %p472
      %p474 = scmp.ne.s32.totalorder %s466, %s468
      %p475 = scmp.eq.s32.totalorder %s75, 1
      %p476 = por %p474, %p475
      %p477 = scmp.ne.s32.totalorder %s468, %s469
      %p478 = scmp.eq.s32.totalorder %s75, 0
      %p479 = por %p477, %p478
      %p480 = scmp.ne.s32.totalorder %s468, %s469
      %p481 = scmp.eq.s32.totalorder %s76, 1
      %p482 = por %p480, %p481
      %p484 = scmp.ne.s32.totalorder %s469, %s483
      %p485 = scmp.eq.s32.totalorder %s76, 0
      %p486 = por %p484, %p485
      %s488 = sadd.s32 %s487, 1
      %p491 = scmp.eq.s32.totalorder %s70, 1
      %p492 = scmp.ne.s32.totalorder %s487, %s489
      %p493 = scmp.eq.s32.totalorder %s70, 0
      %p494 = por %p492, %p493
      %p495 = scmp.ne.s32.totalorder %s487, %s489
      %p496 = scmp.eq.s32.totalorder %s75, 1
      %p497 = por %p495, %p496
      %p498 = scmp.ne.s32.totalorder %s489, %s490
      %p499 = scmp.eq.s32.totalorder %s75, 0
      %p500 = por %p498, %p499
      %p501 = scmp.ne.s32.totalorder %s489, %s490
      %p502 = scmp.eq.s32.totalorder %s76, 1
      %p503 = por %p501, %p502
      %p505 = scmp.ne.s32.totalorder %s490, %s504
      %p506 = scmp.eq.s32.totalorder %s76, 0
      %p507 = por %p505, %p506
      %s509 = sadd.s32 %s508, 1
      %p512 = scmp.eq.s32.totalorder %s70, 1
      %p513 = scmp.ne.s32.totalorder %s508, %s510
      %p514 = scmp.eq.s32.totalorder %s70, 0
      %p515 = por %p513, %p514
      %p516 = scmp.ne.s32.totalorder %s508, %s510
      %p517 = scmp.eq.s32.totalorder %s75, 1
      %p518 = por %p516, %p517
      %p519 = scmp.ne.s32.totalorder %s510, %s511
      %p520 = scmp.eq.s32.totalorder %s75, 0
      %p521 = por %p519, %p520
      %p522 = scmp.ne.s32.totalorder %s510, %s511
      %p523 = scmp.eq.s32.totalorder %s76, 1
      %p524 = por %p522, %p523
      %p526 = scmp.ne.s32.totalorder %s511, %s525
      %p527 = scmp.eq.s32.totalorder %s76, 0
      %p528 = por %p526, %p527
      %s530 = sadd.s32 %s529, 1
      %p533 = scmp.eq.s32.totalorder %s70, 1
      %p534 = scmp.ne.s32.totalorder %s529, %s531
      %p535 = scmp.eq.s32.totalorder %s70, 0
      %p536 = por %p534, %p535
      %p537 = scmp.ne.s32.totalorder %s529, %s531
      %p538 = scmp.eq.s32.totalorder %s75, 1
      %p539 = por %p537, %p538
      %p540 = scmp.ne.s32.totalorder %s531, %s532
      %p541 = scmp.eq.s32.totalorder %s75, 0
      %p542 = por %p540, %p541
      %p543 = scmp.ne.s32.totalorder %s531, %s532
      %p544 = scmp.eq.s32.totalorder %s76, 1
      %p545 = por %p543, %p544
      %p547 = scmp.ne.s32.totalorder %s532, %s546
      %p548 = scmp.eq.s32.totalorder %s76, 0
      %p549 = por %p547, %p548
      %s551 = sadd.s32 %s550, 1
      %p554 = scmp.eq.s32.totalorder %s70, 1
      %p555 = scmp.ne.s32.totalorder %s550, %s552
      %p556 = scmp.eq.s32.totalorder %s70, 0
      %p557 = por %p555, %p556
      %p558 = scmp.ne.s32.totalorder %s550, %s552
      %p559 = scmp.eq.s32.totalorder %s75, 1
      %p560 = por %p558, %p559
      %p561 = scmp.ne.s32.totalorder %s552, %s553
      %p562 = scmp.eq.s32.totalorder %s75, 0
      %p563 = por %p561, %p562
      %p564 = scmp.ne.s32.totalorder %s552, %s553
      %p565 = scmp.eq.s32.totalorder %s76, 1
      %p566 = por %p564, %p565
      %p568 = scmp.ne.s32.totalorder %s553, %s567
      %p569 = scmp.eq.s32.totalorder %s76, 0
      %p570 = por %p568, %p569
      %s572 = sadd.s32 %s571, 1
      %p575 = scmp.eq.s32.totalorder %s70, 1
      %p576 = scmp.ne.s32.totalorder %s571, %s573
      %p577 = scmp.eq.s32.totalorder %s70, 0
      %p578 = por %p576, %p577
      %p579 = scmp.ne.s32.totalorder %s571, %s573
      %p580 = scmp.eq.s32.totalorder %s75, 1
      %p581 = por %p579, %p580
      %p582 = scmp.ne.s32.totalorder %s573, %s574
      %p583 = scmp.eq.s32.totalorder %s75, 0
      %p584 = por %p582, %p583
      %p585 = scmp.ne.s32.totalorder %s573, %s574
      %p586 = scmp.eq.s32.totalorder %s76, 1
      %p587 = por %p585, %p586
      %p589 = scmp.ne.s32.totalorder %s574, %s588
      %p590 = scmp.eq.s32.totalorder %s76, 0
      %p591 = por %p589, %p590
      %s593 = sadd.s32 %s592, 1
      %p596 = scmp.eq.s32.totalorder %s70, 1
      %p597 = scmp.ne.s32.totalorder %s592, %s594
      %p598 = scmp.eq.s32.totalorder %s70, 0
      %p599 = por %p597, %p598
      %p600 = scmp.ne.s32.totalorder %s592, %s594
      %p601 = scmp.eq.s32.totalorder %s75, 1
      %p602 = por %p600, %p601
      %p603 = scmp.ne.s32.totalorder %s594, %s595
      %p604 = scmp.eq.s32.totalorder %s75, 0
      %p605 = por %p603, %p604
      %p606 = scmp.ne.s32.totalorder %s594, %s595
      %p607 = scmp.eq.s32.totalorder %s76, 1
      %p608 = por %p606, %p607
      %p610 = scmp.ne.s32.totalorder %s595, %s609
      %p611 = scmp.eq.s32.totalorder %s76, 0
      %p612 = por %p610, %p611
      %s614 = sadd.s32 %s613, 1
      %p617 = scmp.eq.s32.totalorder %s70, 1
      %p618 = scmp.ne.s32.totalorder %s613, %s615
      %p619 = scmp.eq.s32.totalorder %s70, 0
      %p620 = por %p618, %p619
      %p621 = scmp.ne.s32.totalorder %s613, %s615
      %p622 = scmp.eq.s32.totalorder %s75, 1
      %p623 = por %p621, %p622
      %p624 = scmp.ne.s32.totalorder %s615, %s616
      %p625 = scmp.eq.s32.totalorder %s75, 0
      %p626 = por %p624, %p625
      %p627 = scmp.ne.s32.totalorder %s615, %s616
      %p628 = scmp.eq.s32.totalorder %s76, 1
      %p629 = por %p627, %p628
      %p631 = scmp.ne.s32.totalorder %s616, %s630
      %p632 = scmp.eq.s32.totalorder %s76, 0
      %p633 = por %p631, %p632
      %s635 = sadd.s32 %s634, 1
      %p638 = scmp.eq.s32.totalorder %s70, 1
      %p639 = scmp.ne.s32.totalorder %s634, %s636
      %p640 = scmp.eq.s32.totalorder %s70, 0
      %p641 = por %p639, %p640
      %p642 = scmp.ne.s32.totalorder %s634, %s636
      %p643 = scmp.eq.s32.totalorder %s75, 1
      %p644 = por %p642, %p643
      %p645 = scmp.ne.s32.totalorder %s636, %s637
      %p646 = scmp.eq.s32.totalorder %s75, 0
      %p647 = por %p645, %p646
      %p648 = scmp.ne.s32.totalorder %s636, %s637
      %p649 = scmp.eq.s32.totalorder %s76, 1
      %p650 = por %p648, %p649
      %p652 = scmp.ne.s32.totalorder %s637, %s651
      %p653 = scmp.eq.s32.totalorder %s76, 0
      %p654 = por %p652, %p653
      %s656 = sadd.s32 %s655, 1
      %p659 = scmp.eq.s32.totalorder %s70, 1
      %p660 = scmp.ne.s32.totalorder %s655, %s657
      %p661 = scmp.eq.s32.totalorder %s70, 0
      %p662 = por %p660, %p661
      %p663 = scmp.ne.s32.totalorder %s655, %s657
      %p664 = scmp.eq.s32.totalorder %s75, 1
      %p665 = por %p663, %p664
      %p666 = scmp.ne.s32.totalorder %s657, %s658
      %p667 = scmp.eq.s32.totalorder %s75, 0
      %p668 = por %p666, %p667
      %p669 = scmp.ne.s32.totalorder %s657, %s658
      %p670 = scmp.eq.s32.totalorder %s76, 1
      %p671 = por %p669, %p670
      %p673 = scmp.ne.s32.totalorder %s658, %s672
      %p674 = scmp.eq.s32.totalorder %s76, 0
      %p675 = por %p673, %p674
      %s677 = sadd.s32 %s676, 1
      %p680 = scmp.eq.s32.totalorder %s70, 1
      %p681 = scmp.ne.s32.totalorder %s676, %s678
      %p682 = scmp.eq.s32.totalorder %s70, 0
      %p683 = por %p681, %p682
      %p684 = scmp.ne.s32.totalorder %s676, %s678
      %p685 = scmp.eq.s32.totalorder %s75, 1
      %p686 = por %p684, %p685
      %p687 = scmp.ne.s32.totalorder %s678, %s679
      %p688 = scmp.eq.s32.totalorder %s75, 0
      %p689 = por %p687, %p688
      %p690 = scmp.ne.s32.totalorder %s678, %s679
      %p691 = scmp.eq.s32.totalorder %s76, 1
      %p692 = por %p690, %p691
      %p694 = scmp.ne.s32.totalorder %s679, %s693
      %p695 = scmp.eq.s32.totalorder %s76, 0
      %p696 = por %p694, %p695
      %s697 = ssub.s32 %s70, %s77
      %p698 = scmp.eq.s32.totalorder %s697, 0
      %s700 = sadd.s32 %s699, 1
      %s701 = scalar_select %p698, %s699, %s700
      %p704 = pneg %p698
      %p705 = scmp.eq.s32.totalorder %s70, 1
      %p706 = por %p704, %p705
      %p707 = scmp.ne.s32.totalorder %s699, %s702
      %p708 = scmp.eq.s32.totalorder %s70, 0
      %p709 = por %p707, %p708
      %p710 = scmp.ne.s32.totalorder %s699, %s702
      %p711 = scmp.eq.s32.totalorder %s75, 1
      %p712 = por %p710, %p711
      %p713 = scmp.ne.s32.totalorder %s702, %s703
      %p714 = scmp.eq.s32.totalorder %s75, 0
      %p715 = por %p713, %p714
      %p716 = scmp.ne.s32.totalorder %s702, %s703
      %p717 = scmp.eq.s32.totalorder %s76, 1
      %p718 = por %p716, %p717
      %p720 = scmp.ne.s32.totalorder %s703, %s719
      %p721 = scmp.eq.s32.totalorder %s76, 0
      %p722 = por %p720, %p721
      %p723 = scmp.le.s32.totalorder 1, %s70
      %p724 = scmp.lt.s32.totalorder %s70, 3
      %p725 = pnand %p723, %p724
      %p726 = pneg %p725
      // Predicated region
      $region9: #{tpu_custom_call.1} parent=5 // pred_check
        _
      $region10: #{tpu_custom_call.1} parent=5 // pred_check_branch
        %728 = sbr.rel (%p725) target = $region12
      $region11: #{tpu_custom_call.1} parent=5 // pred_region
        %s729 = ssub.s32 %s70, 1
        // Predicated region
        $region13: #{tpu_custom_call.1} parent=11 // pred_check
          %p730 = pneg %p91
        $region14: #{tpu_custom_call.1} parent=11 // pred_check_branch
          %732 = sbr.rel (%p730) target = $region16
        $region15: #{tpu_custom_call.1} parent=11 // pred_region
          _
        $region16: #{tpu_custom_call.1} parent=11 // pred_fallthru
          _
        // Predicated region
        $region17: #{tpu_custom_call.1} parent=11 // pred_check
          %p733 = pneg %p112
        $region18: #{tpu_custom_call.1} parent=11 // pred_check_branch
          %735 = sbr.rel (%p733) target = $region20
        $region19: #{tpu_custom_call.1} parent=11 // pred_region
          %s737 = ssub.s32 256, 256
          %738 = vsyncadd [#allocation6], %s737
          %s739 = sshll.u32 %s3, 4
          %s740 = int_to_ptr.vmem [resolvable:$true] %s739
          %745 = dma.vmem_to_smem %s740, 256, [#allocation4], [#allocation6], 128, 128, 8
        $region20: #{tpu_custom_call.1} parent=11 // pred_fallthru
          _
        // Predicated region
        $region21: #{tpu_custom_call.1} parent=11 // pred_check
          %p746 = pneg %p185
        $region22: #{tpu_custom_call.1} parent=11 // pred_check_branch
          %748 = sbr.rel (%p746) target = $region24
        $region23: #{tpu_custom_call.1} parent=11 // pred_region
          _
        $region24: #{tpu_custom_call.1} parent=11 // pred_fallthru
          _
        // Predicated region
        $region25: #{tpu_custom_call.1} parent=11 // pred_check
          %p749 = pneg %p206
        $region26: #{tpu_custom_call.1} parent=11 // pred_check_branch
          %751 = sbr.rel (%p749) target = $region28
        $region27: #{tpu_custom_call.1} parent=11 // pred_region
          _
        $region28: #{tpu_custom_call.1} parent=11 // pred_fallthru
          _
        // Predicated region
        $region29: #{tpu_custom_call.1} parent=11 // pred_check
          %p752 = pneg %p227
        $region30: #{tpu_custom_call.1} parent=11 // pred_check_branch
          %754 = sbr.rel (%p752) target = $region32
        $region31: #{tpu_custom_call.1} parent=11 // pred_region
          _
        $region32: #{tpu_custom_call.1} parent=11 // pred_fallthru
          _
        // Predicated region
        $region33: #{tpu_custom_call.1} parent=11 // pred_check
          %p755 = pneg %p248
        $region34: #{tpu_custom_call.1} parent=11 // pred_check_branch
          %757 = sbr.rel (%p755) target = $region36
        $region35: #{tpu_custom_call.1} parent=11 // pred_region
          _
        $region36: #{tpu_custom_call.1} parent=11 // pred_fallthru
          _
        // Predicated region
        $region37: #{tpu_custom_call.1} parent=11 // pred_check
          %p758 = pneg %p269
        $region38: #{tpu_custom_call.1} parent=11 // pred_check_branch
          %760 = sbr.rel (%p758) target = $region40
        $region39: #{tpu_custom_call.1} parent=11 // pred_region
          _
        $region40: #{tpu_custom_call.1} parent=11 // pred_fallthru
          _
        // Predicated region
        $region41: #{tpu_custom_call.1} parent=11 // pred_check
          %p761 = pneg %p290
        $region42: #{tpu_custom_call.1} parent=11 // pred_check_branch
          %763 = sbr.rel (%p761) target = $region44
        $region43: #{tpu_custom_call.1} parent=11 // pred_region
          _
        $region44: #{tpu_custom_call.1} parent=11 // pred_fallthru
          _
        // Predicated region
        $region45: #{tpu_custom_call.1} parent=11 // pred_check
          %p764 = pneg %p311
        $region46: #{tpu_custom_call.1} parent=11 // pred_check_branch
          %766 = sbr.rel (%p764) target = $region48
        $region47: #{tpu_custom_call.1} parent=11 // pred_region
          _
        $region48: #{tpu_custom_call.1} parent=11 // pred_fallthru
          _
        // Predicated region
        $region49: #{tpu_custom_call.1} parent=11 // pred_check
          %p767 = pneg %p332
        $region50: #{tpu_custom_call.1} parent=11 // pred_check_branch
          %769 = sbr.rel (%p767) target = $region52
        $region51: #{tpu_custom_call.1} parent=11 // pred_region
          _
        $region52: #{tpu_custom_call.1} parent=11 // pred_fallthru
          _
        // Predicated region
        $region53: #{tpu_custom_call.1} parent=11 // pred_check
          %p770 = pneg %p353
        $region54: #{tpu_custom_call.1} parent=11 // pred_check_branch
          %772 = sbr.rel (%p770) target = $region56
        $region55: #{tpu_custom_call.1} parent=11 // pred_region
          _
        $region56: #{tpu_custom_call.1} parent=11 // pred_fallthru
          _
        // Predicated region
        $region57: #{tpu_custom_call.1} parent=11 // pred_check
          %p773 = pneg %p374
        $region58: #{tpu_custom_call.1} parent=11 // pred_check_branch
          %775 = sbr.rel (%p773) target = $region60
        $region59: #{tpu_custom_call.1} parent=11 // pred_region
          _
        $region60: #{tpu_custom_call.1} parent=11 // pred_fallthru
          _
        // Predicated region
        $region61: #{tpu_custom_call.1} parent=11 // pred_check
          %p776 = pneg %p395
        $region62: #{tpu_custom_call.1} parent=11 // pred_check_branch
          %778 = sbr.rel (%p776) target = $region64
        $region63: #{tpu_custom_call.1} parent=11 // pred_region
          _
        $region64: #{tpu_custom_call.1} parent=11 // pred_fallthru
          _
        // Predicated region
        $region65: #{tpu_custom_call.1} parent=11 // pred_check
          %p779 = pneg %p416
        $region66: #{tpu_custom_call.1} parent=11 // pred_check_branch
          %781 = sbr.rel (%p779) target = $region68
        $region67: #{tpu_custom_call.1} parent=11 // pred_region
          _
        $region68: #{tpu_custom_call.1} parent=11 // pred_fallthru
          _
        // Predicated region
        $region69: #{tpu_custom_call.1} parent=11 // pred_check
          %p782 = pneg %p437
        $region70: #{tpu_custom_call.1} parent=11 // pred_check_branch
          %784 = sbr.rel (%p782) target = $region72
        $region71: #{tpu_custom_call.1} parent=11 // pred_region
          _
        $region72: #{tpu_custom_call.1} parent=11 // pred_fallthru
          _
        // Predicated region
        $region73: #{tpu_custom_call.1} parent=11 // pred_check
          %p785 = pneg %p458
        $region74: #{tpu_custom_call.1} parent=11 // pred_check_branch
          %787 = sbr.rel (%p785) target = $region76
        $region75: #{tpu_custom_call.1} parent=11 // pred_region
          _
        $region76: #{tpu_custom_call.1} parent=11 // pred_fallthru
          _
        // Predicated region
        $region77: #{tpu_custom_call.1} parent=11 // pred_check
          %p788 = pneg %p479
        $region78: #{tpu_custom_call.1} parent=11 // pred_check_branch
          %790 = sbr.rel (%p788) target = $region80
        $region79: #{tpu_custom_call.1} parent=11 // pred_region
          _
        $region80: #{tpu_custom_call.1} parent=11 // pred_fallthru
          _
        // Predicated region
        $region81: #{tpu_custom_call.1} parent=11 // pred_check
          %p791 = pneg %p500
        $region82: #{tpu_custom_call.1} parent=11 // pred_check_branch
          %793 = sbr.rel (%p791) target = $region84
        $region83: #{tpu_custom_call.1} parent=11 // pred_region
          _
        $region84: #{tpu_custom_call.1} parent=11 // pred_fallthru
          _
        // Predicated region
        $region85: #{tpu_custom_call.1} parent=11 // pred_check
          %p794 = pneg %p521
        $region86: #{tpu_custom_call.1} parent=11 // pred_check_branch
          %796 = sbr.rel (%p794) target = $region88
        $region87: #{tpu_custom_call.1} parent=11 // pred_region
          _
        $region88: #{tpu_custom_call.1} parent=11 // pred_fallthru
          _
        // Predicated region
        $region89: #{tpu_custom_call.1} parent=11 // pred_check
          %p797 = pneg %p542
        $region90: #{tpu_custom_call.1} parent=11 // pred_check_branch
          %799 = sbr.rel (%p797) target = $region92
        $region91: #{tpu_custom_call.1} parent=11 // pred_region
          _
        $region92: #{tpu_custom_call.1} parent=11 // pred_fallthru
          _
        // Predicated region
        $region93: #{tpu_custom_call.1} parent=11 // pred_check
          %p800 = pneg %p563
        $region94: #{tpu_custom_call.1} parent=11 // pred_check_branch
          %802 = sbr.rel (%p800) target = $region96
        $region95: #{tpu_custom_call.1} parent=11 // pred_region
          _
        $region96: #{tpu_custom_call.1} parent=11 // pred_fallthru
          _
        // Predicated region
        $region97: #{tpu_custom_call.1} parent=11 // pred_check
          %p803 = pneg %p584
        $region98: #{tpu_custom_call.1} parent=11 // pred_check_branch
          %805 = sbr.rel (%p803) target = $region100
        $region99: #{tpu_custom_call.1} parent=11 // pred_region
          _
        $region100: #{tpu_custom_call.1} parent=11 // pred_fallthru
          _
        // Predicated region
        $region101: #{tpu_custom_call.1} parent=11 // pred_check
          %p806 = pneg %p605
        $region102: #{tpu_custom_call.1} parent=11 // pred_check_branch
          %808 = sbr.rel (%p806) target = $region104
        $region103: #{tpu_custom_call.1} parent=11 // pred_region
          _
        $region104: #{tpu_custom_call.1} parent=11 // pred_fallthru
          _
        // Predicated region
        $region105: #{tpu_custom_call.1} parent=11 // pred_check
          %p809 = pneg %p626
        $region106: #{tpu_custom_call.1} parent=11 // pred_check_branch
          %811 = sbr.rel (%p809) target = $region108
        $region107: #{tpu_custom_call.1} parent=11 // pred_region
          _
        $region108: #{tpu_custom_call.1} parent=11 // pred_fallthru
          _
        // Predicated region
        $region109: #{tpu_custom_call.1} parent=11 // pred_check
          %p812 = pneg %p647
        $region110: #{tpu_custom_call.1} parent=11 // pred_check_branch
          %814 = sbr.rel (%p812) target = $region112
        $region111: #{tpu_custom_call.1} parent=11 // pred_region
          _
        $region112: #{tpu_custom_call.1} parent=11 // pred_fallthru
          _
        // Predicated region
        $region113: #{tpu_custom_call.1} parent=11 // pred_check
          %p815 = pneg %p668
        $region114: #{tpu_custom_call.1} parent=11 // pred_check_branch
          %817 = sbr.rel (%p815) target = $region116
        $region115: #{tpu_custom_call.1} parent=11 // pred_region
          _
        $region116: #{tpu_custom_call.1} parent=11 // pred_fallthru
          _
        // Predicated region
        $region117: #{tpu_custom_call.1} parent=11 // pred_check
          %p818 = pneg %p689
        $region118: #{tpu_custom_call.1} parent=11 // pred_check_branch
          %820 = sbr.rel (%p818) target = $region120
        $region119: #{tpu_custom_call.1} parent=11 // pred_region
          _
        $region120: #{tpu_custom_call.1} parent=11 // pred_fallthru
          _
      $region12: #{tpu_custom_call.1} parent=5 // pred_fallthru
        _
      %p821 = scmp.lt.s32.totalorder %s70, 2
      // Predicated region
      $region121: #{tpu_custom_call.1} parent=5 // pred_check
        %p822 = pneg %p821
      $region122: #{tpu_custom_call.1} parent=5 // pred_check_branch
        %824 = sbr.rel (%p822) target = $region124
      $region123: #{tpu_custom_call.1} parent=5 // pred_region
        // Predicated region
        $region125: #{tpu_custom_call.1} parent=123 // pred_check
          %p825 = pneg %p132
        $region126: #{tpu_custom_call.1} parent=123 // pred_check_branch
          %827 = sbr.rel (%p825) target = $region128
        $region127: #{tpu_custom_call.1} parent=123 // pred_region
          %p828 = scmp.lt.s32.totalorder %s70, 1
          %s829 = scalar_select %p828, %s70, 1
          %s830 = smul.addr %s829, 8
          %s831 = scalar_lea.vmem %s5, %s830
        $region128: #{tpu_custom_call.1} parent=123 // pred_fallthru
          _
        // Predicated region
        $region129: #{tpu_custom_call.1} parent=123 // pred_check
          %p832 = pneg %p158
        $region130: #{tpu_custom_call.1} parent=123 // pred_check_branch
          %834 = sbr.rel (%p832) target = $region132
        $region131: #{tpu_custom_call.1} parent=123 // pred_region
          %p835 = scmp.lt.s32.totalorder %s70, 1
          %s836 = scalar_select %p835, %s70, 1
          %s837 = smul.addr %s836, 8
          %s838 = scalar_lea.vmem %s7, %s837
        $region132: #{tpu_custom_call.1} parent=123 // pred_fallthru
          _
      $region124: #{tpu_custom_call.1} parent=5 // pred_fallthru
        _
      %p839 = scmp.le.s32.totalorder 1, %s70
      %p840 = scmp.lt.s32.totalorder %s70, 3
      %p841 = pnand %p839, %p840
      %p842 = pneg %p841
      // Predicated region
      $region133: #{tpu_custom_call.1} parent=5 // pred_check
        _
      $region134: #{tpu_custom_call.1} parent=5 // pred_check_branch
        %844 = sbr.rel (%p841) target = $region136
      $region135: #{tpu_custom_call.1} parent=5 // pred_region
        %s845 = ssub.s32 %s70, 1
        // Predicated region
        $region137: #{tpu_custom_call.1} parent=135 // pred_check
          %p846 = pneg %p112
        $region138: #{tpu_custom_call.1} parent=135 // pred_check_branch
          %848 = sbr.rel (%p846) target = $region140
        $region139: #{tpu_custom_call.1} parent=135 // pred_region
          %849 = dma.done [#allocation6], 256
        $region140: #{tpu_custom_call.1} parent=135 // pred_fallthru
          _
        %850 = sfence
        %p851 = pneg %p91
        %p852 = pneg %p88
        %p853 = pneg %p112
        %p854 = pneg %p109
        %p855 = scmp.lt.s32.totalorder %s75, 1
        %s856 = scalar_select %p855, %s75, 1
        %s857 = smul.addr %s856, 8
        %s858 = scalar_lea.vmem %s5, %s857
        %p859 = pneg %p138
        %p860 = pneg %p135
        %p861 = scmp.lt.s32.totalorder %s75, 1
        %s862 = scalar_select %p861, %s75, 1
        %s863 = smul.addr %s862, 8
        %s864 = scalar_lea.vmem %s7, %s863
        %p865 = pneg %p164
        %p866 = pneg %p161
        %p867 = pneg %p185
        %p868 = pneg %p182
        %p869 = pneg %p206
        %p870 = pneg %p203
        %p871 = pneg %p227
        %p872 = pneg %p224
        %p873 = pneg %p248
        %p874 = pneg %p245
        %p875 = pneg %p269
        %p876 = pneg %p266
        %p877 = pneg %p290
        %p878 = pneg %p287
        %p879 = pneg %p311
        %p880 = pneg %p308
        %p881 = pneg %p332
        %p882 = pneg %p329
        %p883 = pneg %p353
        %p884 = pneg %p350
        %p885 = pneg %p374
        %p886 = pneg %p371
        %p887 = pneg %p395
        %p888 = pneg %p392
        %p889 = pneg %p416
        %p890 = pneg %p413
        %p891 = pneg %p437
        %p892 = pneg %p434
        %p893 = pneg %p458
        %p894 = pneg %p455
        %p895 = pneg %p479
        %p896 = pneg %p476
        %p897 = pneg %p500
        %p898 = pneg %p497
        %p899 = pneg %p521
        %p900 = pneg %p518
        %p901 = pneg %p542
        %p902 = pneg %p539
        %p903 = pneg %p563
        %p904 = pneg %p560
        %p905 = pneg %p584
        %p906 = pneg %p581
        %p907 = pneg %p605
        %p908 = pneg %p602
        %p909 = pneg %p626
        %p910 = pneg %p623
        %p911 = pneg %p647
        %p912 = pneg %p644
        %p913 = pneg %p668
        %p914 = pneg %p665
        %p915 = pneg %p689
        %p916 = pneg %p686
        %p917 = pneg %p715
        %p918 = pneg %p712
        %s919 = sand.u32 %s702, 1
        %s920 = scalar_lea.sflag [#allocation5], %s919
        %s921 = sand.u32 %s702, 1
        %s922 = smul.addr %s921, 8
        %s923 = scalar_lea.vmem [#allocation7], %s922
        %p924 = scmp.lt.s32.totalorder %s75, 1
        %s925 = scalar_select %p924, %s75, 1
        %s926 = smul.addr %s925, 8
        %s927 = scalar_lea.vmem %s5, %s926
        %p928 = scmp.lt.s32.totalorder %s75, 1
        %s929 = scalar_select %p928, %s75, 1
        %s930 = smul.addr %s929, 8
        %s931 = scalar_lea.vmem %s7, %s930
        %s933 = smul.u32 %s75, 8
        %s934 = sld [smem:[#allocation3]]
        %v935 = vld [vmem:[%s927] sm:$0xff]
        %vm936 = vcmp.ne.f32.partialorder %v935, 0.0
        %v937 = vsel %vm936, 1, 0
        %v938 = vcvt.s32.f32 %v937
        %vm939 = vcmask 678912
        %v940 = vsel %vm939, %v938, 0.0
        %941 = vadd.xlane.f32.xlu0 %v940
        %v942 = vpop.xlane.xlu0 %941
        %vm943 = vcmp.gt.f32.partialorder %v942, 0.0
        %vm944 = vcmp.eq.f32.partialorder %v935, 0.0
        %v945 = vstv %s934
        %v946 = vsel %vm944, %v945, %v935
        %v947 = vld [vmem:[%s9] sm:$0xf]
        %v948 = vld [vmem:[%s9 + $0x4] sm:$0xf]
        %v949 = vld [vmem:[%s9 + $0x8] sm:$0xf]
        %v950 = vld [vmem:[%s9 + $0xc] sm:$0xf]
        %v951 = vld [vmem:[%s9 + $0x10] sm:$0xf]
        %v952 = vld [vmem:[%s9 + $0x14] sm:$0xf]
        %v953 = vld [vmem:[%s9 + $0x18] sm:$0xf]
        %v954 = vld [vmem:[%s9 + $0x1c] sm:$0xf]
        %v955 = vld [vmem:[%s9 + $0x20] sm:$0xf]
        %v956 = vld [vmem:[%s9 + $0x24] sm:$0xf]
        %v957 = vld [vmem:[%s9 + $0x28] sm:$0x3]
        %v958 = vpack.c.bf16 %v946, %v946
        %v959 = vld [vmem:[%s11] sm:$0x1]
        %v961 = vlaneseq
        %v962 = vshrl.u32 %v961, 7
        %v963 = vsub.s32 0, %v962
        %v964 = vrot.slane %v959, %v963
        %v977 = vunpack.c.l.b16 %v947
        %v978 = vunpack.c.l.b16 %v948
        %v979 = vunpack.c.l.b16 %v949
        %v980 = vunpack.c.l.b16 %v950
        %v981 = vunpack.c.l.b16 %v951
        %v982 = vunpack.c.l.b16 %v952
        %v983 = vunpack.c.l.b16 %v953
        %v984 = vunpack.c.l.b16 %v954
        %v985 = vunpack.c.l.b16 %v955
        %v986 = vunpack.c.l.b16 %v956
        %v987 = vunpack.c.l.b16 %v957
        %v988 = vpack.c.b16 %v978, %v977
        %v989 = vpack.c.b16 %v980, %v979
        %v990 = vpack.c.b16 %v982, %v981
        %v991 = vpack.c.b16 %v984, %v983
        %v992 = vpack.c.b16 %v986, %v985
        %v993 = vpack.c.b16 %v987, %v987
        %v1000 = vsel %vm939, %v958, 0
        %vm1002 = vcmask 1040384
        %vm1003 = vcmask 1041408
        %v1004 = vsel %vm1002, 4294967295, 65535
        %v1005 = vsel %vm1003, %v1004, 0
        %v1007 = vand.u32 %v993, %v1005
        %1009 = vmatprep.subr.bf16.mxu0 0
        %1010 = vmatpush1.bf16.msra.mxu0 %v988
        %1011 = vmatprep.subr.bf16.mxu0 0
        %1012 = vmatpush1.bf16.msra.mxu0 %v989
        %1013 = vmatprep.subr.bf16.mxu0 0
        %1014 = vmatpush1.bf16.msra.mxu0 %v990
        %1015 = vmatprep.subr.bf16.mxu0 0
        %1016 = vmatpush1.bf16.msra.mxu0 %v991
        %1017 = vmatprep.subr.bf16.mxu0 0
        %1018 = vmatpush1.bf16.msra.mxu0 %v992
        %1019 = vmatprep.subr.bf16.mxu0 0
        %1020 = vmatpush1.bf16.msra.mxu0 %v1007
        %1021 = vmatprep.subr.bf16.mxu0 0
        %1022 = vmatpush1.bf16.msra.mxu0 0
        %1023 = vmatprep.subr.bf16.mxu0 0
        %1024 = vmatpush1.bf16.msra.mxu0 0
        %1025 = vmatprep.subr.bf16.mxu0 0
        %1026 = vmatpush1.bf16.msra.mxu0 0
        %1027 = vmatprep.subr.bf16.mxu0 0
        %1028 = vmatpush1.bf16.msra.mxu0 0
        %1029 = vmatprep.subr.bf16.mxu0 0
        %1030 = vmatpush1.bf16.msra.mxu0 0
        %1031 = vmatprep.subr.bf16.mxu0 0
        %1032 = vmatpush1.bf16.msra.mxu0 0
        %1033 = vmatprep.subr.bf16.mxu0 0
        %1034 = vmatpush1.bf16.msra.mxu0 0
        %1035 = vmatprep.subr.bf16.mxu0 0
        %1036 = vmatpush1.bf16.msra.mxu0 0
        %1037 = vmatprep.subr.bf16.mxu0 0
        %1038 = vmatpush1.bf16.msra.mxu0 0
        %1039 = vmatprep.subr.bf16.mxu0 0
        %1040 = vmatpush1.bf16.msra.mxu0 0
        %1041 = vmatprep.mubr.bf16.mxu0 0
        %1042 = vmatmul.mubr.bf16.gmra.mrb[0].mxu0 %v1000
        %v1043 = vpop.f32.mrb[0].mxu0
        %v1044 = vadd.f32 %v964, %v1043
        %v1045 = vpop.f32.mrb[0].mxu0
        %v1046 = vpop.f32.mrb[0].mxu0
        %v1047 = vpop.f32.mrb[0].mxu0
        %1048 = vdwg.mxu0
        %v1049 = vmul.f32 %v1044, 0.5
        %v1050 = vmul.f32 %v1044, %v1044
        %v1051 = vmul.f32 %v1050, %v1044
        %v1052 = vmul.f32 %v1051, 0.044715
        %v1053 = vadd.f32 %v1044, %v1052
        %v1054 = vmul.f32 %v1053, 0.7978846
        %v1055 = vtanh.pop %v1054
        %v1056 = vadd.f32 %v1055, 1.0
        %v1057 = vmul.f32 %v1049, %v1056
        %v1058 = vld [vmem:[%s13] sm:$0xf]
        %v1059 = vld [vmem:[%s13 + $0x4] sm:$0xf]
        %v1060 = vld [vmem:[%s13 + $0x8] sm:$0xf]
        %v1061 = vld [vmem:[%s13 + $0xc] sm:$0xf]
        %v1062 = vpack.c.bf16 %v1057, %v1057
        %v1063 = vld [vmem:[%s15] sm:$0x1]
        %v1065 = vlaneseq
        %v1066 = vshrl.u32 %v1065, 7
        %v1067 = vsub.s32 0, %v1066
        %v1068 = vrot.slane %v1063, %v1067
        %v1074 = vunpack.c.l.b16 %v1058
        %v1075 = vunpack.c.l.b16 %v1059
        %v1076 = vunpack.c.l.b16 %v1060
        %v1077 = vunpack.c.l.b16 %v1061
        %v1078 = vpack.c.b16 %v1075, %v1074
        %v1079 = vpack.c.b16 %v1077, %v1076
        %vm1082 = vcmask 261120
        %v1084 = vsel %vm1082, %v1062, 0
        %1086 = vmatprep.subr.bf16.mxu0 0
        %1087 = vmatpush1.bf16.msra.mxu0 %v1078
        %1088 = vmatprep.subr.bf16.mxu0 0
        %1089 = vmatpush1.bf16.msra.mxu0 %v1079
        %1090 = vmatprep.subr.bf16.mxu0 0
        %1091 = vmatpush1.bf16.msra.mxu0 0
        %1092 = vmatprep.subr.bf16.mxu0 0
        %1093 = vmatpush1.bf16.msra.mxu0 0
        %1094 = vmatprep.subr.bf16.mxu0 0
        %1095 = vmatpush1.bf16.msra.mxu0 0
        %1096 = vmatprep.subr.bf16.mxu0 0
        %1097 = vmatpush1.bf16.msra.mxu0 0
        %1098 = vmatprep.subr.bf16.mxu0 0
        %1099 = vmatpush1.bf16.msra.mxu0 0
        %1100 = vmatprep.subr.bf16.mxu0 0
        %1101 = vmatpush1.bf16.msra.mxu0 0
        %1102 = vmatprep.subr.bf16.mxu0 0
        %1103 = vmatpush1.bf16.msra.mxu0 0
        %1104 = vmatprep.subr.bf16.mxu0 0
        %1105 = vmatpush1.bf16.msra.mxu0 0
        %1106 = vmatprep.subr.bf16.mxu0 0
        %1107 = vmatpush1.bf16.msra.mxu0 0
        %1108 = vmatprep.subr.bf16.mxu0 0
        %1109 = vmatpush1.bf16.msra.mxu0 0
        %1110 = vmatprep.subr.bf16.mxu0 0
        %1111 = vmatpush1.bf16.msra.mxu0 0
        %1112 = vmatprep.subr.bf16.mxu0 0
        %1113 = vmatpush1.bf16.msra.mxu0 0
        %1114 = vmatprep.subr.bf16.mxu0 0
        %1115 = vmatpush1.bf16.msra.mxu0 0
        %1116 = vmatprep.subr.bf16.mxu0 0
        %1117 = vmatpush1.bf16.msra.mxu0 0
        %1118 = vmatprep.mubr.bf16.mxu0 0
        %1119 = vmatmul.mubr.bf16.gmra.mrb[0].mxu0 %v1084
        %v1120 = vpop.f32.mrb[0].mxu0
        %v1121 = vadd.f32 %v1068, %v1120
        %v1122 = vpop.f32.mrb[0].mxu0
        %v1123 = vpop.f32.mrb[0].mxu0
        %v1124 = vpop.f32.mrb[0].mxu0
        %1125 = vdwg.mxu0
        %v1126 = vmul.f32 %v1121, 0.5
        %v1127 = vmul.f32 %v1121, %v1121
        %v1128 = vmul.f32 %v1127, %v1121
        %v1129 = vmul.f32 %v1128, 0.044715
        %v1130 = vadd.f32 %v1121, %v1129
        %v1131 = vmul.f32 %v1130, 0.7978846
        %v1132 = vtanh.pop %v1131
        %v1133 = vadd.f32 %v1132, 1.0
        %v1134 = vmul.f32 %v1126, %v1133
        %v1135 = vld [vmem:[%s17] sm:$0xf]
        %v1136 = vld [vmem:[%s17 + $0x4] sm:$0xf]
        %v1137 = vld [vmem:[%s17 + $0x8] sm:$0xf]
        %v1138 = vld [vmem:[%s17 + $0xc] sm:$0xf]
        %v1139 = vpack.c.bf16 %v1134, %v1134
        %v1140 = vld [vmem:[%s19] sm:$0x1]
        %v1142 = vlaneseq
        %v1143 = vshrl.u32 %v1142, 7
        %v1144 = vsub.s32 0, %v1143
        %v1145 = vrot.slane %v1140, %v1144
        %v1151 = vunpack.c.l.b16 %v1135
        %v1152 = vunpack.c.l.b16 %v1136
        %v1153 = vunpack.c.l.b16 %v1137
        %v1154 = vunpack.c.l.b16 %v1138
        %v1155 = vpack.c.b16 %v1152, %v1151
        %v1156 = vpack.c.b16 %v1154, %v1153
        %v1160 = vsel %vm1082, %v1139, 0
        %1162 = vmatprep.subr.bf16.mxu0 0
        %1163 = vmatpush1.bf16.msra.mxu0 %v1155
        %1164 = vmatprep.subr.bf16.mxu0 0
        %1165 = vmatpush1.bf16.msra.mxu0 %v1156
        %1166 = vmatprep.subr.bf16.mxu0 0
        %1167 = vmatpush1.bf16.msra.mxu0 0
        %1168 = vmatprep.subr.bf16.mxu0 0
        %1169 = vmatpush1.bf16.msra.mxu0 0
        %1170 = vmatprep.subr.bf16.mxu0 0
        %1171 = vmatpush1.bf16.msra.mxu0 0
        %1172 = vmatprep.subr.bf16.mxu0 0
        %1173 = vmatpush1.bf16.msra.mxu0 0
        %1174 = vmatprep.subr.bf16.mxu0 0
        %1175 = vmatpush1.bf16.msra.mxu0 0
        %1176 = vmatprep.subr.bf16.mxu0 0
        %1177 = vmatpush1.bf16.msra.mxu0 0
        %1178 = vmatprep.subr.bf16.mxu0 0
        %1179 = vmatpush1.bf16.msra.mxu0 0
        %1180 = vmatprep.subr.bf16.mxu0 0
        %1181 = vmatpush1.bf16.msra.mxu0 0
        %1182 = vmatprep.subr.bf16.mxu0 0
        %1183 = vmatpush1.bf16.msra.mxu0 0
        %1184 = vmatprep.subr.bf16.mxu0 0
        %1185 = vmatpush1.bf16.msra.mxu0 0
        %1186 = vmatprep.subr.bf16.mxu0 0
        %1187 = vmatpush1.bf16.msra.mxu0 0
        %1188 = vmatprep.subr.bf16.mxu0 0
        %1189 = vmatpush1.bf16.msra.mxu0 0
        %1190 = vmatprep.subr.bf16.mxu0 0
        %1191 = vmatpush1.bf16.msra.mxu0 0
        %1192 = vmatprep.subr.bf16.mxu0 0
        %1193 = vmatpush1.bf16.msra.mxu0 0
        %1194 = vmatprep.mubr.bf16.mxu0 0
        %1195 = vmatmul.mubr.bf16.gmra.mrb[0].mxu0 %v1160
        %v1196 = vpop.f32.mrb[0].mxu0
        %v1197 = vadd.f32 %v1145, %v1196
        %v1198 = vpop.f32.mrb[0].mxu0
        %v1199 = vpop.f32.mrb[0].mxu0
        %v1200 = vpop.f32.mrb[0].mxu0
        %1201 = vdwg.mxu0
        %v1202 = vmul.f32 %v1197, 0.5
        %v1203 = vmul.f32 %v1197, %v1197
        %v1204 = vmul.f32 %v1203, %v1197
        %v1205 = vmul.f32 %v1204, 0.044715
        %v1206 = vadd.f32 %v1197, %v1205
        %v1207 = vmul.f32 %v1206, 0.7978846
        %v1208 = vtanh.pop %v1207
        %v1209 = vadd.f32 %v1208, 1.0
        %v1210 = vmul.f32 %v1202, %v1209
        %v1211 = vmul.f32 %v1210, %v1210
        %v1212 = vsel %vm1082, %v1211, 0.0
        %1213 = vadd.xlane.f32.xlu0 %v1212
        %v1214 = vpop.xlane.xlu0 %1213
        %v1215 = vrsqrt.pop %v1214
        %v1216 = vmul.f32 %v1210, %v1215
        %v1217 = vsel %vm943, 1, 0
        %vm1218 = vcmp.eq.s32.totalorder %v1217, 1
        %v1219 = vsel %vm1218, %v1216, 0.0
        %vm1220 = vcmask 253952
        %1221 = vst.msk [vmem:[#allocation2] sm:$0x1] %vm1220, %v1219
        %s1222 = smul.u32 %s933, 128
        %s1223 = sadd.s32 %s1222, 1
        %s1224 = sld [smem:[#allocation4 + %s1223]]
        %p1225 = scmp.ge.s32.totalorder %s1224, 0
        %s1226 = scalar_select %p1225, 1, 0
        %s1227 = scvt.s32.f32 %s1226
        %p1228 = scmp.gt.s32.totalorder %s1224, 0
        %s1229 = scalar_select %p1228, %s1224, 0
        %s1230 = scalar_lea.vmem %s21, %s1229
        %v1231 = vld [vmem:[%s1230] sm:$0x1]
        %v1232 = vstv %s1227
        %v1233 = vmul.f32 %v1231, %v1232
        %1234 = vst.msk [vmem:[#allocation2 + $0x1] sm:$0x1] %vm1220, %v1233
        %s1235 = sadd.s32 %s1222, 2
        %s1236 = sld [smem:[#allocation4 + %s1235]]
        %p1237 = scmp.ge.s32.totalorder %s1236, 0
        %s1238 = scalar_select %p1237, 1, 0
        %s1239 = scvt.s32.f32 %s1238
        %p1240 = scmp.gt.s32.totalorder %s1236, 0
        %s1241 = scalar_select %p1240, %s1236, 0
        %s1242 = scalar_lea.vmem %s21, %s1241
        %v1243 = vld [vmem:[%s1242] sm:$0x1]
        %v1244 = vstv %s1239
        %v1245 = vmul.f32 %v1243, %v1244
        %1246 = vst.msk [vmem:[#allocation2 + $0x2] sm:$0x1] %vm1220, %v1245
        %s1247 = sadd.s32 %s1222, 3
        %s1248 = sld [smem:[#allocation4 + %s1247]]
        %p1249 = scmp.ge.s32.totalorder %s1248, 0
        %s1250 = scalar_select %p1249, 1, 0
        %s1251 = scvt.s32.f32 %s1250
        %p1252 = scmp.gt.s32.totalorder %s1248, 0
        %s1253 = scalar_select %p1252, %s1248, 0
        %s1254 = scalar_lea.vmem %s21, %s1253
        %v1255 = vld [vmem:[%s1254] sm:$0x1]
        %v1256 = vstv %s1251
        %v1257 = vmul.f32 %v1255, %v1256
        %1258 = vst.msk [vmem:[#allocation2 + $0x3] sm:$0x1] %vm1220, %v1257
        %s1259 = sadd.s32 %s1222, 4
        %s1260 = sld [smem:[#allocation4 + %s1259]]
        %p1261 = scmp.ge.s32.totalorder %s1260, 0
        %s1262 = scalar_select %p1261, 1, 0
        %s1263 = scvt.s32.f32 %s1262
        %p1264 = scmp.gt.s32.totalorder %s1260, 0
        %s1265 = scalar_select %p1264, %s1260, 0
        %s1266 = scalar_lea.vmem %s21, %s1265
        %v1267 = vld [vmem:[%s1266] sm:$0x1]
        %v1268 = vstv %s1263
        %v1269 = vmul.f32 %v1267, %v1268
        %1270 = vst.msk [vmem:[#allocation2 + $0x4] sm:$0x1] %vm1220, %v1269
        %s1271 = sadd.s32 %s1222, 5
        %s1272 = sld [smem:[#allocation4 + %s1271]]
        %p1273 = scmp.ge.s32.totalorder %s1272, 0
        %s1274 = scalar_select %p1273, 1, 0
        %s1275 = scvt.s32.f32 %s1274
        %p1276 = scmp.gt.s32.totalorder %s1272, 0
        %s1277 = scalar_select %p1276, %s1272, 0
        %s1278 = scalar_lea.vmem %s21, %s1277
        %v1279 = vld [vmem:[%s1278] sm:$0x1]
        %v1280 = vstv %s1275
        %v1281 = vmul.f32 %v1279, %v1280
        %1282 = vst.msk [vmem:[#allocation2 + $0x5] sm:$0x1] %vm1220, %v1281
        %s1283 = scalar_lea.vmem [#allocation2], 8
        %vm1284 = vcmask 254977
        %1285 = vst.msk [vmem:[%s1283 - $0x1] sm:$0x2] %vm1284, %v1219
        %s1286 = sadd.s32 %s933, 1
        %s1287 = smul.u32 %s1286, 128
        %s1288 = sadd.s32 %s1287, 1
        %s1289 = sld [smem:[#allocation4 + %s1288]]
        %p1290 = scmp.ge.s32.totalorder %s1289, 0
        %s1291 = scalar_select %p1290, 1, 0
        %s1292 = scvt.s32.f32 %s1291
        %p1293 = scmp.gt.s32.totalorder %s1289, 0
        %s1294 = scalar_select %p1293, %s1289, 0
        %s1295 = scalar_lea.vmem %s21, %s1294
        %v1296 = vld [vmem:[%s1295] sm:$0x1]
        %v1297 = vstv %s1292
        %v1298 = vmul.f32 %v1296, %v1297
        %1299 = vst.msk [vmem:[%s1283 + $0x1] sm:$0x1] %vm1220, %v1298
        %s1300 = sadd.s32 %s1287, 2
        %s1301 = sld [smem:[#allocation4 + %s1300]]
        %p1302 = scmp.ge.s32.totalorder %s1301, 0
        %s1303 = scalar_select %p1302, 1, 0
        %s1304 = scvt.s32.f32 %s1303
        %p1305 = scmp.gt.s32.totalorder %s1301, 0
        %s1306 = scalar_select %p1305, %s1301, 0
        %s1307 = scalar_lea.vmem %s21, %s1306
        %v1308 = vld [vmem:[%s1307] sm:$0x1]
        %v1309 = vstv %s1304
        %v1310 = vmul.f32 %v1308, %v1309
        %1311 = vst.msk [vmem:[%s1283 + $0x2] sm:$0x1] %vm1220, %v1310
        %s1312 = sadd.s32 %s1287, 3
        %s1313 = sld [smem:[#allocation4 + %s1312]]
        %p1314 = scmp.ge.s32.totalorder %s1313, 0
        %s1315 = scalar_select %p1314, 1, 0
        %s1316 = scvt.s32.f32 %s1315
        %p1317 = scmp.gt.s32.totalorder %s1313, 0
        %s1318 = scalar_select %p1317, %s1313, 0
        %s1319 = scalar_lea.vmem %s21, %s1318
        %v1320 = vld [vmem:[%s1319] sm:$0x1]
        %v1321 = vstv %s1316
        %v1322 = vmul.f32 %v1320, %v1321
        %1323 = vst.msk [vmem:[%s1283 + $0x3] sm:$0x1] %vm1220, %v1322
        %s1324 = sadd.s32 %s1287, 4
        %s1325 = sld [smem:[#allocation4 + %s1324]]
        %p1326 = scmp.ge.s32.totalorder %s1325, 0
        %s1327 = scalar_select %p1326, 1, 0
        %s1328 = scvt.s32.f32 %s1327
        %p1329 = scmp.gt.s32.totalorder %s1325, 0
        %s1330 = scalar_select %p1329, %s1325, 0
        %s1331 = scalar_lea.vmem %s21, %s1330
        %v1332 = vld [vmem:[%s1331] sm:$0x1]
        %v1333 = vstv %s1328
        %v1334 = vmul.f32 %v1332, %v1333
        %1335 = vst.msk [vmem:[%s1283 + $0x4] sm:$0x1] %vm1220, %v1334
        %s1336 = sadd.s32 %s1287, 5
        %s1337 = sld [smem:[#allocation4 + %s1336]]
        %p1338 = scmp.ge.s32.totalorder %s1337, 0
        %s1339 = scalar_select %p1338, 1, 0
        %s1340 = scvt.s32.f32 %s1339
        %p1341 = scmp.gt.s32.totalorder %s1337, 0
        %s1342 = scalar_select %p1341, %s1337, 0
        %s1343 = scalar_lea.vmem %s21, %s1342
        %v1344 = vld [vmem:[%s1343] sm:$0x1]
        %v1345 = vstv %s1340
        %v1346 = vmul.f32 %v1344, %v1345
        %1347 = vst.msk [vmem:[%s1283 + $0x5] sm:$0x1] %vm1220, %v1346
        %s1348 = scalar_lea.vmem [#allocation2], 16
        %vm1349 = vcmask 256002
        %1350 = vst.msk [vmem:[%s1348 - $0x2] sm:$0x4] %vm1349, %v1219
        %s1351 = sadd.s32 %s933, 2
        %s1352 = smul.u32 %s1351, 128
        %s1353 = sadd.s32 %s1352, 1
        %s1354 = sld [smem:[#allocation4 + %s1353]]
        %p1355 = scmp.ge.s32.totalorder %s1354, 0
        %s1356 = scalar_select %p1355, 1, 0
        %s1357 = scvt.s32.f32 %s1356
        %p1358 = scmp.gt.s32.totalorder %s1354, 0
        %s1359 = scalar_select %p1358, %s1354, 0
        %s1360 = scalar_lea.vmem %s21, %s1359
        %v1361 = vld [vmem:[%s1360] sm:$0x1]
        %v1362 = vstv %s1357
        %v1363 = vmul.f32 %v1361, %v1362
        %1364 = vst.msk [vmem:[%s1348 + $0x1] sm:$0x1] %vm1220, %v1363
        %s1365 = sadd.s32 %s1352, 2
        %s1366 = sld [smem:[#allocation4 + %s1365]]
        %p1367 = scmp.ge.s32.totalorder %s1366, 0
        %s1368 = scalar_select %p1367, 1, 0
        %s1369 = scvt.s32.f32 %s1368
        %p1370 = scmp.gt.s32.totalorder %s1366, 0
        %s1371 = scalar_select %p1370, %s1366, 0
        %s1372 = scalar_lea.vmem %s21, %s1371
        %v1373 = vld [vmem:[%s1372] sm:$0x1]
        %v1374 = vstv %s1369
        %v1375 = vmul.f32 %v1373, %v1374
        %1376 = vst.msk [vmem:[%s1348 + $0x2] sm:$0x1] %vm1220, %v1375
        %s1377 = sadd.s32 %s1352, 3
        %s1378 = sld [smem:[#allocation4 + %s1377]]
        %p1379 = scmp.ge.s32.totalorder %s1378, 0
        %s1380 = scalar_select %p1379, 1, 0
        %s1381 = scvt.s32.f32 %s1380
        %p1382 = scmp.gt.s32.totalorder %s1378, 0
        %s1383 = scalar_select %p1382, %s1378, 0
        %s1384 = scalar_lea.vmem %s21, %s1383
        %v1385 = vld [vmem:[%s1384] sm:$0x1]
        %v1386 = vstv %s1381
        %v1387 = vmul.f32 %v1385, %v1386
        %1388 = vst.msk [vmem:[%s1348 + $0x3] sm:$0x1] %vm1220, %v1387
        %s1389 = sadd.s32 %s1352, 4
        %s1390 = sld [smem:[#allocation4 + %s1389]]
        %p1391 = scmp.ge.s32.totalorder %s1390, 0
        %s1392 = scalar_select %p1391, 1, 0
        %s1393 = scvt.s32.f32 %s1392
        %p1394 = scmp.gt.s32.totalorder %s1390, 0
        %s1395 = scalar_select %p1394, %s1390, 0
        %s1396 = scalar_lea.vmem %s21, %s1395
        %v1397 = vld [vmem:[%s1396] sm:$0x1]
        %v1398 = vstv %s1393
        %v1399 = vmul.f32 %v1397, %v1398
        %1400 = vst.msk [vmem:[%s1348 + $0x4] sm:$0x1] %vm1220, %v1399
        %s1401 = sadd.s32 %s1352, 5
        %s1402 = sld [smem:[#allocation4 + %s1401]]
        %p1403 = scmp.ge.s32.totalorder %s1402, 0
        %s1404 = scalar_select %p1403, 1, 0
        %s1405 = scvt.s32.f32 %s1404
        %p1406 = scmp.gt.s32.totalorder %s1402, 0
        %s1407 = scalar_select %p1406, %s1402, 0
        %s1408 = scalar_lea.vmem %s21, %s1407
        %v1409 = vld [vmem:[%s1408] sm:$0x1]
        %v1410 = vstv %s1405
        %v1411 = vmul.f32 %v1409, %v1410
        %1412 = vst.msk [vmem:[%s1348 + $0x5] sm:$0x1] %vm1220, %v1411
        %s1413 = scalar_lea.vmem [#allocation2], 24
        %vm1414 = vcmask 257027
        %1415 = vst.msk [vmem:[%s1413 - $0x3] sm:$0x8] %vm1414, %v1219
        %s1416 = sadd.s32 %s933, 3
        %s1417 = smul.u32 %s1416, 128
        %s1418 = sadd.s32 %s1417, 1
        %s1419 = sld [smem:[#allocation4 + %s1418]]
        %p1420 = scmp.ge.s32.totalorder %s1419, 0
        %s1421 = scalar_select %p1420, 1, 0
        %s1422 = scvt.s32.f32 %s1421
        %p1423 = scmp.gt.s32.totalorder %s1419, 0
        %s1424 = scalar_select %p1423, %s1419, 0
        %s1425 = scalar_lea.vmem %s21, %s1424
        %v1426 = vld [vmem:[%s1425] sm:$0x1]
        %v1427 = vstv %s1422
        %v1428 = vmul.f32 %v1426, %v1427
        %1429 = vst.msk [vmem:[%s1413 + $0x1] sm:$0x1] %vm1220, %v1428
        %s1430 = sadd.s32 %s1417, 2
        %s1431 = sld [smem:[#allocation4 + %s1430]]
        %p1432 = scmp.ge.s32.totalorder %s1431, 0
        %s1433 = scalar_select %p1432, 1, 0
        %s1434 = scvt.s32.f32 %s1433
        %p1435 = scmp.gt.s32.totalorder %s1431, 0
        %s1436 = scalar_select %p1435, %s1431, 0
        %s1437 = scalar_lea.vmem %s21, %s1436
        %v1438 = vld [vmem:[%s1437] sm:$0x1]
        %v1439 = vstv %s1434
        %v1440 = vmul.f32 %v1438, %v1439
        %1441 = vst.msk [vmem:[%s1413 + $0x2] sm:$0x1] %vm1220, %v1440
        %s1442 = sadd.s32 %s1417, 3
        %s1443 = sld [smem:[#allocation4 + %s1442]]
        %p1444 = scmp.ge.s32.totalorder %s1443, 0
        %s1445 = scalar_select %p1444, 1, 0
        %s1446 = scvt.s32.f32 %s1445
        %p1447 = scmp.gt.s32.totalorder %s1443, 0
        %s1448 = scalar_select %p1447, %s1443, 0
        %s1449 = scalar_lea.vmem %s21, %s1448
        %v1450 = vld [vmem:[%s1449] sm:$0x1]
        %v1451 = vstv %s1446
        %v1452 = vmul.f32 %v1450, %v1451
        %1453 = vst.msk [vmem:[%s1413 + $0x3] sm:$0x1] %vm1220, %v1452
        %s1454 = sadd.s32 %s1417, 4
        %s1455 = sld [smem:[#allocation4 + %s1454]]
        %p1456 = scmp.ge.s32.totalorder %s1455, 0
        %s1457 = scalar_select %p1456, 1, 0
        %s1458 = scvt.s32.f32 %s1457
        %p1459 = scmp.gt.s32.totalorder %s1455, 0
        %s1460 = scalar_select %p1459, %s1455, 0
        %s1461 = scalar_lea.vmem %s21, %s1460
        %v1462 = vld [vmem:[%s1461] sm:$0x1]
        %v1463 = vstv %s1458
        %v1464 = vmul.f32 %v1462, %v1463
        %1465 = vst.msk [vmem:[%s1413 + $0x4] sm:$0x1] %vm1220, %v1464
        %s1466 = sadd.s32 %s1417, 5
        %s1467 = sld [smem:[#allocation4 + %s1466]]
        %p1468 = scmp.ge.s32.totalorder %s1467, 0
        %s1469 = scalar_select %p1468, 1, 0
        %s1470 = scvt.s32.f32 %s1469
        %p1471 = scmp.gt.s32.totalorder %s1467, 0
        %s1472 = scalar_select %p1471, %s1467, 0
        %s1473 = scalar_lea.vmem %s21, %s1472
        %v1474 = vld [vmem:[%s1473] sm:$0x1]
        %v1475 = vstv %s1470
        %v1476 = vmul.f32 %v1474, %v1475
        %1477 = vst.msk [vmem:[%s1413 + $0x5] sm:$0x1] %vm1220, %v1476
        %s1478 = scalar_lea.vmem [#allocation2], 32
        %vm1479 = vcmask 258052
        %1480 = vst.msk [vmem:[%s1478 - $0x4] sm:$0x10] %vm1479, %v1219
        %s1481 = sadd.s32 %s933, 4
        %s1482 = smul.u32 %s1481, 128
        %s1483 = sadd.s32 %s1482, 1
        %s1484 = sld [smem:[#allocation4 + %s1483]]
        %p1485 = scmp.ge.s32.totalorder %s1484, 0
        %s1486 = scalar_select %p1485, 1, 0
        %s1487 = scvt.s32.f32 %s1486
        %p1488 = scmp.gt.s32.totalorder %s1484, 0
        %s1489 = scalar_select %p1488, %s1484, 0
        %s1490 = scalar_lea.vmem %s21, %s1489
        %v1491 = vld [vmem:[%s1490] sm:$0x1]
        %v1492 = vstv %s1487
        %v1493 = vmul.f32 %v1491, %v1492
        %1494 = vst.msk [vmem:[%s1478 + $0x1] sm:$0x1] %vm1220, %v1493
        %s1495 = sadd.s32 %s1482, 2
        %s1496 = sld [smem:[#allocation4 + %s1495]]
        %p1497 = scmp.ge.s32.totalorder %s1496, 0
        %s1498 = scalar_select %p1497, 1, 0
        %s1499 = scvt.s32.f32 %s1498
        %p1500 = scmp.gt.s32.totalorder %s1496, 0
        %s1501 = scalar_select %p1500, %s1496, 0
        %s1502 = scalar_lea.vmem %s21, %s1501
        %v1503 = vld [vmem:[%s1502] sm:$0x1]
        %v1504 = vstv %s1499
        %v1505 = vmul.f32 %v1503, %v1504
        %1506 = vst.msk [vmem:[%s1478 + $0x2] sm:$0x1] %vm1220, %v1505
        %s1507 = sadd.s32 %s1482, 3
        %s1508 = sld [smem:[#allocation4 + %s1507]]
        %p1509 = scmp.ge.s32.totalorder %s1508, 0
        %s1510 = scalar_select %p1509, 1, 0
        %s1511 = scvt.s32.f32 %s1510
        %p1512 = scmp.gt.s32.totalorder %s1508, 0
        %s1513 = scalar_select %p1512, %s1508, 0
        %s1514 = scalar_lea.vmem %s21, %s1513
        %v1515 = vld [vmem:[%s1514] sm:$0x1]
        %v1516 = vstv %s1511
        %v1517 = vmul.f32 %v1515, %v1516
        %1518 = vst.msk [vmem:[%s1478 + $0x3] sm:$0x1] %vm1220, %v1517
        %s1519 = sadd.s32 %s1482, 4
        %s1520 = sld [smem:[#allocation4 + %s1519]]
        %p1521 = scmp.ge.s32.totalorder %s1520, 0
        %s1522 = scalar_select %p1521, 1, 0
        %s1523 = scvt.s32.f32 %s1522
        %p1524 = scmp.gt.s32.totalorder %s1520, 0
        %s1525 = scalar_select %p1524, %s1520, 0
        %s1526 = scalar_lea.vmem %s21, %s1525
        %v1527 = vld [vmem:[%s1526] sm:$0x1]
        %v1528 = vstv %s1523
        %v1529 = vmul.f32 %v1527, %v1528
        %1530 = vst.msk [vmem:[%s1478 + $0x4] sm:$0x1] %vm1220, %v1529
        %s1531 = sadd.s32 %s1482, 5
        %s1532 = sld [smem:[#allocation4 + %s1531]]
        %p1533 = scmp.ge.s32.totalorder %s1532, 0
        %s1534 = scalar_select %p1533, 1, 0
        %s1535 = scvt.s32.f32 %s1534
        %p1536 = scmp.gt.s32.totalorder %s1532, 0
        %s1537 = scalar_select %p1536, %s1532, 0
        %s1538 = scalar_lea.vmem %s21, %s1537
        %v1539 = vld [vmem:[%s1538] sm:$0x1]
        %v1540 = vstv %s1535
        %v1541 = vmul.f32 %v1539, %v1540
        %1542 = vst.msk [vmem:[%s1478 + $0x5] sm:$0x1] %vm1220, %v1541
        %s1543 = scalar_lea.vmem [#allocation2], 40
        %vm1544 = vcmask 259077
        %1545 = vst.msk [vmem:[%s1543 - $0x5] sm:$0x20] %vm1544, %v1219
        %s1546 = sadd.s32 %s933, 5
        %s1547 = smul.u32 %s1546, 128
        %s1548 = sadd.s32 %s1547, 1
        %s1549 = sld [smem:[#allocation4 + %s1548]]
        %p1550 = scmp.ge.s32.totalorder %s1549, 0
        %s1551 = scalar_select %p1550, 1, 0
        %s1552 = scvt.s32.f32 %s1551
        %p1553 = scmp.gt.s32.totalorder %s1549, 0
        %s1554 = scalar_select %p1553, %s1549, 0
        %s1555 = scalar_lea.vmem %s21, %s1554
        %v1556 = vld [vmem:[%s1555] sm:$0x1]
        %v1557 = vstv %s1552
        %v1558 = vmul.f32 %v1556, %v1557
        %1559 = vst.msk [vmem:[%s1543 + $0x1] sm:$0x1] %vm1220, %v1558
        %s1560 = sadd.s32 %s1547, 2
        %s1561 = sld [smem:[#allocation4 + %s1560]]
        %p1562 = scmp.ge.s32.totalorder %s1561, 0
        %s1563 = scalar_select %p1562, 1, 0
        %s1564 = scvt.s32.f32 %s1563
        %p1565 = scmp.gt.s32.totalorder %s1561, 0
        %s1566 = scalar_select %p1565, %s1561, 0
        %s1567 = scalar_lea.vmem %s21, %s1566
        %v1568 = vld [vmem:[%s1567] sm:$0x1]
        %v1569 = vstv %s1564
        %v1570 = vmul.f32 %v1568, %v1569
        %1571 = vst.msk [vmem:[%s1543 + $0x2] sm:$0x1] %vm1220, %v1570
        %s1572 = sadd.s32 %s1547, 3
        %s1573 = sld [smem:[#allocation4 + %s1572]]
        %p1574 = scmp.ge.s32.totalorder %s1573, 0
        %s1575 = scalar_select %p1574, 1, 0
        %s1576 = scvt.s32.f32 %s1575
        %p1577 = scmp.gt.s32.totalorder %s1573, 0
        %s1578 = scalar_select %p1577, %s1573, 0
        %s1579 = scalar_lea.vmem %s21, %s1578
        %v1580 = vld [vmem:[%s1579] sm:$0x1]
        %v1581 = vstv %s1576
        %v1582 = vmul.f32 %v1580, %v1581
        %1583 = vst.msk [vmem:[%s1543 + $0x3] sm:$0x1] %vm1220, %v1582
        %s1584 = sadd.s32 %s1547, 4
        %s1585 = sld [smem:[#allocation4 + %s1584]]
        %p1586 = scmp.ge.s32.totalorder %s1585, 0
        %s1587 = scalar_select %p1586, 1, 0
        %s1588 = scvt.s32.f32 %s1587
        %p1589 = scmp.gt.s32.totalorder %s1585, 0
        %s1590 = scalar_select %p1589, %s1585, 0
        %s1591 = scalar_lea.vmem %s21, %s1590
        %v1592 = vld [vmem:[%s1591] sm:$0x1]
        %v1593 = vstv %s1588
        %v1594 = vmul.f32 %v1592, %v1593
        %1595 = vst.msk [vmem:[%s1543 + $0x4] sm:$0x1] %vm1220, %v1594
        %s1596 = sadd.s32 %s1547, 5
        %s1597 = sld [smem:[#allocation4 + %s1596]]
        %p1598 = scmp.ge.s32.totalorder %s1597, 0
        %s1599 = scalar_select %p1598, 1, 0
        %s1600 = scvt.s32.f32 %s1599
        %p1601 = scmp.gt.s32.totalorder %s1597, 0
        %s1602 = scalar_select %p1601, %s1597, 0
        %s1603 = scalar_lea.vmem %s21, %s1602
        %v1604 = vld [vmem:[%s1603] sm:$0x1]
        %v1605 = vstv %s1600
        %v1606 = vmul.f32 %v1604, %v1605
        %1607 = vst.msk [vmem:[%s1543 + $0x5] sm:$0x1] %vm1220, %v1606
        %s1608 = scalar_lea.vmem [#allocation2], 48
        %vm1609 = vcmask 260102
        %1610 = vst.msk [vmem:[%s1608 - $0x6] sm:$0x40] %vm1609, %v1219
        %s1611 = sadd.s32 %s933, 6
        %s1612 = smul.u32 %s1611, 128
        %s1613 = sadd.s32 %s1612, 1
        %s1614 = sld [smem:[#allocation4 + %s1613]]
        %p1615 = scmp.ge.s32.totalorder %s1614, 0
        %s1616 = scalar_select %p1615, 1, 0
        %s1617 = scvt.s32.f32 %s1616
        %p1618 = scmp.gt.s32.totalorder %s1614, 0
        %s1619 = scalar_select %p1618, %s1614, 0
        %s1620 = scalar_lea.vmem %s21, %s1619
        %v1621 = vld [vmem:[%s1620] sm:$0x1]
        %v1622 = vstv %s1617
        %v1623 = vmul.f32 %v1621, %v1622
        %1624 = vst.msk [vmem:[%s1608 + $0x1] sm:$0x1] %vm1220, %v1623
        %s1625 = sadd.s32 %s1612, 2
        %s1626 = sld [smem:[#allocation4 + %s1625]]
        %p1627 = scmp.ge.s32.totalorder %s1626, 0
        %s1628 = scalar_select %p1627, 1, 0
        %s1629 = scvt.s32.f32 %s1628
        %p1630 = scmp.gt.s32.totalorder %s1626, 0
        %s1631 = scalar_select %p1630, %s1626, 0
        %s1632 = scalar_lea.vmem %s21, %s1631
        %v1633 = vld [vmem:[%s1632] sm:$0x1]
        %v1634 = vstv %s1629
        %v1635 = vmul.f32 %v1633, %v1634
        %1636 = vst.msk [vmem:[%s1608 + $0x2] sm:$0x1] %vm1220, %v1635
        %s1637 = sadd.s32 %s1612, 3
        %s1638 = sld [smem:[#allocation4 + %s1637]]
        %p1639 = scmp.ge.s32.totalorder %s1638, 0
        %s1640 = scalar_select %p1639, 1, 0
        %s1641 = scvt.s32.f32 %s1640
        %p1642 = scmp.gt.s32.totalorder %s1638, 0
        %s1643 = scalar_select %p1642, %s1638, 0
        %s1644 = scalar_lea.vmem %s21, %s1643
        %v1645 = vld [vmem:[%s1644] sm:$0x1]
        %v1646 = vstv %s1641
        %v1647 = vmul.f32 %v1645, %v1646
        %1648 = vst.msk [vmem:[%s1608 + $0x3] sm:$0x1] %vm1220, %v1647
        %s1649 = sadd.s32 %s1612, 4
        %s1650 = sld [smem:[#allocation4 + %s1649]]
        %p1651 = scmp.ge.s32.totalorder %s1650, 0
        %s1652 = scalar_select %p1651, 1, 0
        %s1653 = scvt.s32.f32 %s1652
        %p1654 = scmp.gt.s32.totalorder %s1650, 0
        %s1655 = scalar_select %p1654, %s1650, 0
        %s1656 = scalar_lea.vmem %s21, %s1655
        %v1657 = vld [vmem:[%s1656] sm:$0x1]
        %v1658 = vstv %s1653
        %v1659 = vmul.f32 %v1657, %v1658
        %1660 = vst.msk [vmem:[%s1608 + $0x4] sm:$0x1] %vm1220, %v1659
        %s1661 = sadd.s32 %s1612, 5
        %s1662 = sld [smem:[#allocation4 + %s1661]]
        %p1663 = scmp.ge.s32.totalorder %s1662, 0
        %s1664 = scalar_select %p1663, 1, 0
        %s1665 = scvt.s32.f32 %s1664
        %p1666 = scmp.gt.s32.totalorder %s1662, 0
        %s1667 = scalar_select %p1666, %s1662, 0
        %s1668 = scalar_lea.vmem %s21, %s1667
        %v1669 = vld [vmem:[%s1668] sm:$0x1]
        %v1670 = vstv %s1665
        %v1671 = vmul.f32 %v1669, %v1670
        %1672 = vst.msk [vmem:[%s1608 + $0x5] sm:$0x1] %vm1220, %v1671
        %s1673 = scalar_lea.vmem [#allocation2], 56
        %vm1674 = vcmask 261127
        %1675 = vst.msk [vmem:[%s1673 - $0x7] sm:$0x80] %vm1674, %v1219
        %s1676 = sadd.s32 %s933, 7
        %s1677 = smul.u32 %s1676, 128
        %s1678 = sadd.s32 %s1677, 1
        %s1679 = sld [smem:[#allocation4 + %s1678]]
        %p1680 = scmp.ge.s32.totalorder %s1679, 0
        %s1681 = scalar_select %p1680, 1, 0
        %s1682 = scvt.s32.f32 %s1681
        %p1683 = scmp.gt.s32.totalorder %s1679, 0
        %s1684 = scalar_select %p1683, %s1679, 0
        %s1685 = scalar_lea.vmem %s21, %s1684
        %v1686 = vld [vmem:[%s1685] sm:$0x1]
        %v1687 = vstv %s1682
        %v1688 = vmul.f32 %v1686, %v1687
        %1689 = vst.msk [vmem:[%s1673 + $0x1] sm:$0x1] %vm1220, %v1688
        %s1690 = sadd.s32 %s1677, 2
        %s1691 = sld [smem:[#allocation4 + %s1690]]
        %p1692 = scmp.ge.s32.totalorder %s1691, 0
        %s1693 = scalar_select %p1692, 1, 0
        %s1694 = scvt.s32.f32 %s1693
        %p1695 = scmp.gt.s32.totalorder %s1691, 0
        %s1696 = scalar_select %p1695, %s1691, 0
        %s1697 = scalar_lea.vmem %s21, %s1696
        %v1698 = vld [vmem:[%s1697] sm:$0x1]
        %v1699 = vstv %s1694
        %v1700 = vmul.f32 %v1698, %v1699
        %1701 = vst.msk [vmem:[%s1673 + $0x2] sm:$0x1] %vm1220, %v1700
        %s1702 = sadd.s32 %s1677, 3
        %s1703 = sld [smem:[#allocation4 + %s1702]]
        %p1704 = scmp.ge.s32.totalorder %s1703, 0
        %s1705 = scalar_select %p1704, 1, 0
        %s1706 = scvt.s32.f32 %s1705
        %p1707 = scmp.gt.s32.totalorder %s1703, 0
        %s1708 = scalar_select %p1707, %s1703, 0
        %s1709 = scalar_lea.vmem %s21, %s1708
        %v1710 = vld [vmem:[%s1709] sm:$0x1]
        %v1711 = vstv %s1706
        %v1712 = vmul.f32 %v1710, %v1711
        %1713 = vst.msk [vmem:[%s1673 + $0x3] sm:$0x1] %vm1220, %v1712
        %s1714 = sadd.s32 %s1677, 4
        %s1715 = sld [smem:[#allocation4 + %s1714]]
        %p1716 = scmp.ge.s32.totalorder %s1715, 0
        %s1717 = scalar_select %p1716, 1, 0
        %s1718 = scvt.s32.f32 %s1717
        %p1719 = scmp.gt.s32.totalorder %s1715, 0
        %s1720 = scalar_select %p1719, %s1715, 0
        %s1721 = scalar_lea.vmem %s21, %s1720
        %v1722 = vld [vmem:[%s1721] sm:$0x1]
        %v1723 = vstv %s1718
        %v1724 = vmul.f32 %v1722, %v1723
        %1725 = vst.msk [vmem:[%s1673 + $0x4] sm:$0x1] %vm1220, %v1724
        %s1726 = sadd.s32 %s1677, 5
        %s1727 = sld [smem:[#allocation4 + %s1726]]
        %p1728 = scmp.ge.s32.totalorder %s1727, 0
        %s1729 = scalar_select %p1728, 1, 0
        %s1730 = scvt.s32.f32 %s1729
        %p1731 = scmp.gt.s32.totalorder %s1727, 0
        %s1732 = scalar_select %p1731, %s1727, 0
        %s1733 = scalar_lea.vmem %s21, %s1732
        %v1734 = vld [vmem:[%s1733] sm:$0x1]
        %v1735 = vstv %s1730
        %v1736 = vmul.f32 %v1734, %v1735
        %1737 = vst.msk [vmem:[%s1673 + $0x5] sm:$0x1] %vm1220, %v1736
        %v1738 = vld [vmem:[#allocation2] sm:$0x3f]
        %v1739 = vld [vmem:[#allocation2 + $0x8] sm:$0x3f]
        %v1740 = vld [vmem:[#allocation2 + $0x10] sm:$0x3f]
        %v1741 = vld [vmem:[#allocation2 + $0x18] sm:$0x3f]
        %v1742 = vld [vmem:[#allocation2 + $0x20] sm:$0x3f]
        %v1743 = vld [vmem:[#allocation2 + $0x28] sm:$0x3f]
        %v1744 = vld [vmem:[#allocation2 + $0x30] sm:$0x3f]
        %v1745 = vld [vmem:[#allocation2 + $0x38] sm:$0x3f]
        %v1754 = vcombine.high %v1738, %v1738
        %v1756 = vunpack.c.l.s4 1983009808
        %v1757 = vunpack.c.0.s8 %v1756
        %v1758 = vlaneseq
        %v1759 = vshrl.u32 %v1758, 7
        %v1760 = vsub.s32 %v1757, %v1759
        %v1761 = vrot.slane %v1738, %v1760
        %v1763 = vunpack.c.l.s4 1983009808
        %v1764 = vunpack.c.0.s8 %v1763
        %v1765 = vlaneseq
        %v1766 = vshrl.u32 %v1765, 7
        %v1767 = vsub.s32 %v1764, %v1766
        %v1768 = vrot.slane %v1754, %v1767
        %v1769 = vcombine.high %v1761, %v1761
        %v1770 = vcombine.high %v1739, %v1739
        %v1772 = vunpack.c.l.s4 1983009808
        %v1773 = vunpack.c.0.s8 %v1772
        %v1774 = vlaneseq
        %v1775 = vshrl.u32 %v1774, 7
        %v1776 = vsub.s32 %v1773, %v1775
        %v1777 = vrot.slane %v1739, %v1776
        %v1779 = vunpack.c.l.s4 1983009808
        %v1780 = vunpack.c.0.s8 %v1779
        %v1781 = vlaneseq
        %v1782 = vshrl.u32 %v1781, 7
        %v1783 = vsub.s32 %v1780, %v1782
        %v1784 = vrot.slane %v1770, %v1783
        %v1785 = vcombine.high %v1777, %v1777
        %v1786 = vcombine.high %v1740, %v1740
        %v1788 = vunpack.c.l.s4 1983009808
        %v1789 = vunpack.c.0.s8 %v1788
        %v1790 = vlaneseq
        %v1791 = vshrl.u32 %v1790, 7
        %v1792 = vsub.s32 %v1789, %v1791
        %v1793 = vrot.slane %v1740, %v1792
        %v1795 = vunpack.c.l.s4 1983009808
        %v1796 = vunpack.c.0.s8 %v1795
        %v1797 = vlaneseq
        %v1798 = vshrl.u32 %v1797, 7
        %v1799 = vsub.s32 %v1796, %v1798
        %v1800 = vrot.slane %v1786, %v1799
        %v1801 = vcombine.high %v1793, %v1793
        %v1802 = vcombine.high %v1741, %v1741
        %v1804 = vunpack.c.l.s4 1983009808
        %v1805 = vunpack.c.0.s8 %v1804
        %v1806 = vlaneseq
        %v1807 = vshrl.u32 %v1806, 7
        %v1808 = vsub.s32 %v1805, %v1807
        %v1809 = vrot.slane %v1741, %v1808
        %v1811 = vunpack.c.l.s4 1983009808
        %v1812 = vunpack.c.0.s8 %v1811
        %v1813 = vlaneseq
        %v1814 = vshrl.u32 %v1813, 7
        %v1815 = vsub.s32 %v1812, %v1814
        %v1816 = vrot.slane %v1802, %v1815
        %v1817 = vcombine.high %v1809, %v1809
        %v1818 = vcombine.high %v1742, %v1742
        %v1820 = vunpack.c.l.s4 1983009808
        %v1821 = vunpack.c.0.s8 %v1820
        %v1822 = vlaneseq
        %v1823 = vshrl.u32 %v1822, 7
        %v1824 = vsub.s32 %v1821, %v1823
        %v1825 = vrot.slane %v1742, %v1824
        %v1827 = vunpack.c.l.s4 1983009808
        %v1828 = vunpack.c.0.s8 %v1827
        %v1829 = vlaneseq
        %v1830 = vshrl.u32 %v1829, 7
        %v1831 = vsub.s32 %v1828, %v1830
        %v1832 = vrot.slane %v1818, %v1831
        %v1833 = vcombine.high %v1825, %v1825
        %v1834 = vcombine.high %v1743, %v1743
        %v1836 = vunpack.c.l.s4 1983009808
        %v1837 = vunpack.c.0.s8 %v1836
        %v1838 = vlaneseq
        %v1839 = vshrl.u32 %v1838, 7
        %v1840 = vsub.s32 %v1837, %v1839
        %v1841 = vrot.slane %v1743, %v1840
        %v1843 = vunpack.c.l.s4 1983009808
        %v1844 = vunpack.c.0.s8 %v1843
        %v1845 = vlaneseq
        %v1846 = vshrl.u32 %v1845, 7
        %v1847 = vsub.s32 %v1844, %v1846
        %v1848 = vrot.slane %v1834, %v1847
        %v1849 = vcombine.high %v1841, %v1841
        %v1850 = vcombine.high %v1744, %v1744
        %v1852 = vunpack.c.l.s4 1983009808
        %v1853 = vunpack.c.0.s8 %v1852
        %v1854 = vlaneseq
        %v1855 = vshrl.u32 %v1854, 7
        %v1856 = vsub.s32 %v1853, %v1855
        %v1857 = vrot.slane %v1744, %v1856
        %v1859 = vunpack.c.l.s4 1983009808
        %v1860 = vunpack.c.0.s8 %v1859
        %v1861 = vlaneseq
        %v1862 = vshrl.u32 %v1861, 7
        %v1863 = vsub.s32 %v1860, %v1862
        %v1864 = vrot.slane %v1850, %v1863
        %v1865 = vcombine.high %v1857, %v1857
        %v1866 = vcombine.high %v1745, %v1745
        %v1868 = vunpack.c.l.s4 1983009808
        %v1869 = vunpack.c.0.s8 %v1868
        %v1870 = vlaneseq
        %v1871 = vshrl.u32 %v1870, 7
        %v1872 = vsub.s32 %v1869, %v1871
        %v1873 = vrot.slane %v1745, %v1872
        %v1875 = vunpack.c.l.s4 1983009808
        %v1876 = vunpack.c.0.s8 %v1875
        %v1877 = vlaneseq
        %v1878 = vshrl.u32 %v1877, 7
        %v1879 = vsub.s32 %v1876, %v1878
        %v1880 = vrot.slane %v1866, %v1879
        %v1881 = vcombine.high %v1873, %v1873
        %v1882 = vld [vmem:[%s931] sm:$0xff]
        %vm1883 = vcmp.ge.s32.totalorder %v1882, 0
        %v1884 = vsel %vm1883, 1, 0
        %v1885 = vcvt.s32.f32 %v1884
        %v1886 = vld [vmem:[%s27] sm:$0xf]
        %v1887 = vld [vmem:[%s27 + $0x4] sm:$0xf]
        %v1888 = vld [vmem:[%s27 + $0x8] sm:$0xf]
        %v1889 = vld [vmem:[%s27 + $0xc] sm:$0xf]
        %v1890 = vcombine.low %v1761, %v1769
        %v1891 = vcombine.low %v1768, %v1777
        %v1893 = vunpack.c.l.s4 1983009808
        %v1894 = vunpack.c.0.s8 %v1893
        %v1895 = vlaneseq
        %v1896 = vshrl.u32 %v1895, 7
        %v1897 = vsub.s32 %v1894, %v1896
        %v1898 = vrot.slane %v1890, %v1897
        %v1900 = vunpack.c.l.s4 1983009808
        %v1901 = vunpack.c.0.s8 %v1900
        %v1902 = vlaneseq
        %v1903 = vshrl.u32 %v1902, 7
        %v1904 = vsub.s32 %v1901, %v1903
        %v1905 = vrot.slane %v1891, %v1904
        %v1906 = vcombine.low %v1898, %v1905
        %v1907 = vcombine.low %v1785, %v1784
        %v1908 = vcombine.low %v1793, %v1801
        %v1910 = vunpack.c.l.s4 1983009808
        %v1911 = vunpack.c.0.s8 %v1910
        %v1912 = vlaneseq
        %v1913 = vshrl.u32 %v1912, 7
        %v1914 = vsub.s32 %v1911, %v1913
        %v1915 = vrot.slane %v1907, %v1914
        %v1917 = vunpack.c.l.s4 1983009808
        %v1918 = vunpack.c.0.s8 %v1917
        %v1919 = vlaneseq
        %v1920 = vshrl.u32 %v1919, 7
        %v1921 = vsub.s32 %v1918, %v1920
        %v1922 = vrot.slane %v1908, %v1921
        %v1923 = vcombine.low %v1915, %v1922
        %v1924 = vcombine.low %v1800, %v1809
        %v1925 = vcombine.low %v1817, %v1816
        %v1927 = vunpack.c.l.s4 1983009808
        %v1928 = vunpack.c.0.s8 %v1927
        %v1929 = vlaneseq
        %v1930 = vshrl.u32 %v1929, 7
        %v1931 = vsub.s32 %v1928, %v1930
        %v1932 = vrot.slane %v1924, %v1931
        %v1934 = vunpack.c.l.s4 1983009808
        %v1935 = vunpack.c.0.s8 %v1934
        %v1936 = vlaneseq
        %v1937 = vshrl.u32 %v1936, 7
        %v1938 = vsub.s32 %v1935, %v1937
        %v1939 = vrot.slane %v1925, %v1938
        %v1940 = vcombine.low %v1932, %v1939
        %v1941 = vcombine.low %v1825, %v1833
        %v1942 = vcombine.low %v1832, %v1841
        %v1944 = vunpack.c.l.s4 1983009808
        %v1945 = vunpack.c.0.s8 %v1944
        %v1946 = vlaneseq
        %v1947 = vshrl.u32 %v1946, 7
        %v1948 = vsub.s32 %v1945, %v1947
        %v1949 = vrot.slane %v1941, %v1948
        %v1951 = vunpack.c.l.s4 1983009808
        %v1952 = vunpack.c.0.s8 %v1951
        %v1953 = vlaneseq
        %v1954 = vshrl.u32 %v1953, 7
        %v1955 = vsub.s32 %v1952, %v1954
        %v1956 = vrot.slane %v1942, %v1955
        %v1957 = vcombine.low %v1949, %v1956
        %v1958 = vcombine.low %v1849, %v1848
        %v1959 = vcombine.low %v1857, %v1865
        %v1961 = vunpack.c.l.s4 1983009808
        %v1962 = vunpack.c.0.s8 %v1961
        %v1963 = vlaneseq
        %v1964 = vshrl.u32 %v1963, 7
        %v1965 = vsub.s32 %v1962, %v1964
        %v1966 = vrot.slane %v1958, %v1965
        %v1968 = vunpack.c.l.s4 1983009808
        %v1969 = vunpack.c.0.s8 %v1968
        %v1970 = vlaneseq
        %v1971 = vshrl.u32 %v1970, 7
        %v1972 = vsub.s32 %v1969, %v1971
        %v1973 = vrot.slane %v1959, %v1972
        %v1974 = vcombine.low %v1966, %v1973
        %v1975 = vcombine.low %v1864, %v1873
        %v1976 = vcombine.low %v1881, %v1880
        %v1978 = vunpack.c.l.s4 1983009808
        %v1979 = vunpack.c.0.s8 %v1978
        %v1980 = vlaneseq
        %v1981 = vshrl.u32 %v1980, 7
        %v1982 = vsub.s32 %v1979, %v1981
        %v1983 = vrot.slane %v1975, %v1982
        %v1985 = vunpack.c.l.s4 1983009808
        %v1986 = vunpack.c.0.s8 %v1985
        %v1987 = vlaneseq
        %v1988 = vshrl.u32 %v1987, 7
        %v1989 = vsub.s32 %v1986, %v1988
        %v1990 = vrot.slane %v1976, %v1989
        %v1991 = vcombine.low %v1983, %v1990
        %v1998 = vpack.c.bf16 %v1923, %v1906
        %v1999 = vpack.c.bf16 %v1957, %v1940
        %v2000 = vpack.c.bf16 %v1991, %v1974
        %v2001 = vld [vmem:[%s29] sm:$0x1]
        %v2003 = vlaneseq
        %v2004 = vshrl.u32 %v2003, 7
        %v2005 = vsub.s32 0, %v2004
        %v2006 = vrot.slane %v2001, %v2005
        %v2012 = vunpack.c.l.b16 %v1886
        %v2013 = vunpack.c.l.b16 %v1887
        %v2014 = vunpack.c.l.b16 %v1888
        %v2015 = vunpack.c.l.b16 %v1889
        %v2016 = vpack.c.b16 %v2013, %v2012
        %v2017 = vpack.c.b16 %v2015, %v2014
        %v2021 = vsel %vm1082, %v1998, 0
        %v2024 = vsel %vm1082, %v1999, 0
        %v2027 = vsel %vm1082, %v2000, 0
        %2029 = vmatprep.subr.bf16.mxu0 0
        %2030 = vmatpush1.bf16.msra.mxu0 %v2016
        %2031 = vmatprep.subr.bf16.mxu0 0
        %2032 = vmatpush1.bf16.msra.mxu0 %v2017
        %2033 = vmatprep.subr.bf16.mxu0 0
        %2034 = vmatpush1.bf16.msra.mxu0 0
        %2035 = vmatprep.subr.bf16.mxu0 0
        %2036 = vmatpush1.bf16.msra.mxu0 0
        %2037 = vmatprep.subr.bf16.mxu0 0
        %2038 = vmatpush1.bf16.msra.mxu0 0
        %2039 = vmatprep.subr.bf16.mxu0 0
        %2040 = vmatpush1.bf16.msra.mxu0 0
        %2041 = vmatprep.subr.bf16.mxu0 0
        %2042 = vmatpush1.bf16.msra.mxu0 0
        %2043 = vmatprep.subr.bf16.mxu0 0
        %2044 = vmatpush1.bf16.msra.mxu0 0
        %2045 = vmatprep.subr.bf16.mxu0 0
        %2046 = vmatpush1.bf16.msra.mxu0 0
        %2047 = vmatprep.subr.bf16.mxu0 0
        %2048 = vmatpush1.bf16.msra.mxu0 0
        %2049 = vmatprep.subr.bf16.mxu0 0
        %2050 = vmatpush1.bf16.msra.mxu0 0
        %2051 = vmatprep.subr.bf16.mxu0 0
        %2052 = vmatpush1.bf16.msra.mxu0 0
        %2053 = vmatprep.subr.bf16.mxu0 0
        %2054 = vmatpush1.bf16.msra.mxu0 0
        %2055 = vmatprep.subr.bf16.mxu0 0
        %2056 = vmatpush1.bf16.msra.mxu0 0
        %2057 = vmatprep.subr.bf16.mxu0 0
        %2058 = vmatpush1.bf16.msra.mxu0 0
        %2059 = vmatprep.subr.bf16.mxu0 0
        %2060 = vmatpush1.bf16.msra.mxu0 0
        %2061 = vmatprep.mubr.bf16.mxu0 0
        %2062 = vmatmul.mubr.bf16.gmra.mrb[0].mxu0 %v2021
        %v2063 = vpop.f32.mrb[0].mxu0
        %v2064 = vadd.f32 %v2006, %v2063
        %v2065 = vpop.f32.mrb[0].mxu0
        %v2066 = vpop.f32.mrb[0].mxu0
        %v2067 = vadd.f32 %v2006, %v2066
        %v2068 = vpop.f32.mrb[0].mxu0
        %2069 = vmatprep.mubr.bf16.mxu0 0
        %2070 = vmatmul.mubr.bf16.gmra.mrb[0].mxu0 %v2024
        %v2071 = vpop.f32.mrb[0].mxu0
        %v2072 = vadd.f32 %v2006, %v2071
        %v2073 = vpop.f32.mrb[0].mxu0
        %v2074 = vpop.f32.mrb[0].mxu0
        %v2075 = vadd.f32 %v2006, %v2074
        %v2076 = vpop.f32.mrb[0].mxu0
        %2077 = vmatprep.mubr.bf16.mxu0 0
        %2078 = vmatmul.mubr.bf16.gmra.mrb[0].mxu0 %v2027
        %v2079 = vpop.f32.mrb[0].mxu0
        %v2080 = vadd.f32 %v2006, %v2079
        %v2081 = vpop.f32.mrb[0].mxu0
        %v2082 = vpop.f32.mrb[0].mxu0
        %v2083 = vadd.f32 %v2006, %v2082
        %v2084 = vpop.f32.mrb[0].mxu0
        %2085 = vdwg.mxu0
        %v2086 = vld [vmem:[%s31] sm:$0xf]
        %v2087 = vld [vmem:[%s31 + $0x4] sm:$0xf]
        %v2088 = vld [vmem:[%s31 + $0x8] sm:$0xf]
        %v2089 = vld [vmem:[%s31 + $0xc] sm:$0xf]
        %v2090 = vld [vmem:[%s33] sm:$0x1]
        %v2092 = vlaneseq
        %v2093 = vshrl.u32 %v2092, 7
        %v2094 = vsub.s32 0, %v2093
        %v2095 = vrot.slane %v2090, %v2094
        %v2101 = vunpack.c.l.b16 %v2086
        %v2102 = vunpack.c.l.b16 %v2087
        %v2103 = vunpack.c.l.b16 %v2088
        %v2104 = vunpack.c.l.b16 %v2089
        %v2105 = vpack.c.b16 %v2102, %v2101
        %v2106 = vpack.c.b16 %v2104, %v2103
        %2109 = vmatprep.subr.bf16.mxu0 0
        %2110 = vmatpush1.bf16.msra.mxu0 %v2105
        %2111 = vmatprep.subr.bf16.mxu0 0
        %2112 = vmatpush1.bf16.msra.mxu0 %v2106
        %2113 = vmatprep.subr.bf16.mxu0 0
        %2114 = vmatpush1.bf16.msra.mxu0 0
        %2115 = vmatprep.subr.bf16.mxu0 0
        %2116 = vmatpush1.bf16.msra.mxu0 0
        %2117 = vmatprep.subr.bf16.mxu0 0
        %2118 = vmatpush1.bf16.msra.mxu0 0
        %2119 = vmatprep.subr.bf16.mxu0 0
        %2120 = vmatpush1.bf16.msra.mxu0 0
        %2121 = vmatprep.subr.bf16.mxu0 0
        %2122 = vmatpush1.bf16.msra.mxu0 0
        %2123 = vmatprep.subr.bf16.mxu0 0
        %2124 = vmatpush1.bf16.msra.mxu0 0
        %2125 = vmatprep.subr.bf16.mxu0 0
        %2126 = vmatpush1.bf16.msra.mxu0 0
        %2127 = vmatprep.subr.bf16.mxu0 0
        %2128 = vmatpush1.bf16.msra.mxu0 0
        %2129 = vmatprep.subr.bf16.mxu0 0
        %2130 = vmatpush1.bf16.msra.mxu0 0
        %2131 = vmatprep.subr.bf16.mxu0 0
        %2132 = vmatpush1.bf16.msra.mxu0 0
        %2133 = vmatprep.subr.bf16.mxu0 0
        %2134 = vmatpush1.bf16.msra.mxu0 0
        %2135 = vmatprep.subr.bf16.mxu0 0
        %2136 = vmatpush1.bf16.msra.mxu0 0
        %2137 = vmatprep.subr.bf16.mxu0 0
        %2138 = vmatpush1.bf16.msra.mxu0 0
        %2139 = vmatprep.subr.bf16.mxu0 0
        %2140 = vmatpush1.bf16.msra.mxu0 0
        %2141 = vmatprep.mubr.bf16.mxu0 0
        %2142 = vmatmul.mubr.bf16.gmra.mrb[0].mxu0 %v2021
        %v2143 = vpop.f32.mrb[0].mxu0
        %v2144 = vadd.f32 %v2095, %v2143
        %v2145 = vpop.f32.mrb[0].mxu0
        %v2146 = vpop.f32.mrb[0].mxu0
        %v2147 = vadd.f32 %v2095, %v2146
        %v2148 = vpop.f32.mrb[0].mxu0
        %2149 = vmatprep.mubr.bf16.mxu0 0
        %2150 = vmatmul.mubr.bf16.gmra.mrb[0].mxu0 %v2024
        %v2151 = vpop.f32.mrb[0].mxu0
        %v2152 = vadd.f32 %v2095, %v2151
        %v2153 = vpop.f32.mrb[0].mxu0
        %v2154 = vpop.f32.mrb[0].mxu0
        %v2155 = vadd.f32 %v2095, %v2154
        %v2156 = vpop.f32.mrb[0].mxu0
        %2157 = vmatprep.mubr.bf16.mxu0 0
        %2158 = vmatmul.mubr.bf16.gmra.mrb[0].mxu0 %v2027
        %v2159 = vpop.f32.mrb[0].mxu0
        %v2160 = vadd.f32 %v2095, %v2159
        %v2161 = vpop.f32.mrb[0].mxu0
        %v2162 = vpop.f32.mrb[0].mxu0
        %v2163 = vadd.f32 %v2095, %v2162
        %v2164 = vpop.f32.mrb[0].mxu0
        %2165 = vdwg.mxu0
        %v2166 = vld [vmem:[%s35] sm:$0xf]
        %v2167 = vld [vmem:[%s35 + $0x4] sm:$0xf]
        %v2168 = vld [vmem:[%s35 + $0x8] sm:$0xf]
        %v2169 = vld [vmem:[%s35 + $0xc] sm:$0xf]
        %v2170 = vld [vmem:[%s37] sm:$0x1]
        %v2172 = vlaneseq
        %v2173 = vshrl.u32 %v2172, 7
        %v2174 = vsub.s32 0, %v2173
        %v2175 = vrot.slane %v2170, %v2174
        %v2181 = vunpack.c.l.b16 %v2166
        %v2182 = vunpack.c.l.b16 %v2167
        %v2183 = vunpack.c.l.b16 %v2168
        %v2184 = vunpack.c.l.b16 %v2169
        %v2185 = vpack.c.b16 %v2182, %v2181
        %v2186 = vpack.c.b16 %v2184, %v2183
        %2189 = vmatprep.subr.bf16.mxu0 0
        %2190 = vmatpush1.bf16.msra.mxu0 %v2185
        %2191 = vmatprep.subr.bf16.mxu0 0
        %2192 = vmatpush1.bf16.msra.mxu0 %v2186
        %2193 = vmatprep.subr.bf16.mxu0 0
        %2194 = vmatpush1.bf16.msra.mxu0 0
        %2195 = vmatprep.subr.bf16.mxu0 0
        %2196 = vmatpush1.bf16.msra.mxu0 0
        %2197 = vmatprep.subr.bf16.mxu0 0
        %2198 = vmatpush1.bf16.msra.mxu0 0
        %2199 = vmatprep.subr.bf16.mxu0 0
        %2200 = vmatpush1.bf16.msra.mxu0 0
        %2201 = vmatprep.subr.bf16.mxu0 0
        %2202 = vmatpush1.bf16.msra.mxu0 0
        %2203 = vmatprep.subr.bf16.mxu0 0
        %2204 = vmatpush1.bf16.msra.mxu0 0
        %2205 = vmatprep.subr.bf16.mxu0 0
        %2206 = vmatpush1.bf16.msra.mxu0 0
        %2207 = vmatprep.subr.bf16.mxu0 0
        %2208 = vmatpush1.bf16.msra.mxu0 0
        %2209 = vmatprep.subr.bf16.mxu0 0
        %2210 = vmatpush1.bf16.msra.mxu0 0
        %2211 = vmatprep.subr.bf16.mxu0 0
        %2212 = vmatpush1.bf16.msra.mxu0 0
        %2213 = vmatprep.subr.bf16.mxu0 0
        %2214 = vmatpush1.bf16.msra.mxu0 0
        %2215 = vmatprep.subr.bf16.mxu0 0
        %2216 = vmatpush1.bf16.msra.mxu0 0
        %2217 = vmatprep.subr.bf16.mxu0 0
        %2218 = vmatpush1.bf16.msra.mxu0 0
        %2219 = vmatprep.subr.bf16.mxu0 0
        %2220 = vmatpush1.bf16.msra.mxu0 0
        %2221 = vmatprep.mubr.bf16.mxu0 0
        %2222 = vmatmul.mubr.bf16.gmra.mrb[0].mxu0 %v2021
        %v2223 = vpop.f32.mrb[0].mxu0
        %v2224 = vadd.f32 %v2175, %v2223
        %v2225 = vpop.f32.mrb[0].mxu0
        %v2226 = vpop.f32.mrb[0].mxu0
        %v2227 = vadd.f32 %v2175, %v2226
        %v2228 = vpop.f32.mrb[0].mxu0
        %2229 = vmatprep.mubr.bf16.mxu0 0
        %2230 = vmatmul.mubr.bf16.gmra.mrb[0].mxu0 %v2024
        %v2231 = vpop.f32.mrb[0].mxu0
        %v2232 = vadd.f32 %v2175, %v2231
        %v2233 = vpop.f32.mrb[0].mxu0
        %v2234 = vpop.f32.mrb[0].mxu0
        %v2235 = vadd.f32 %v2175, %v2234
        %v2236 = vpop.f32.mrb[0].mxu0
        %2237 = vmatprep.mubr.bf16.mxu0 0
        %2238 = vmatmul.mubr.bf16.gmra.mrb[0].mxu0 %v2027
        %v2239 = vpop.f32.mrb[0].mxu0
        %v2240 = vadd.f32 %v2175, %v2239
        %v2241 = vpop.f32.mrb[0].mxu0
        %v2242 = vpop.f32.mrb[0].mxu0
        %v2243 = vadd.f32 %v2175, %v2242
        %v2244 = vpop.f32.mrb[0].mxu0
        %2245 = vdwg.mxu0
        %v2252 = vcombine.high %v2064, %v2064
        %v2254 = vunpack.c.l.s4 1983009808
        %v2255 = vunpack.c.0.s8 %v2254
        %v2256 = vlaneseq
        %v2257 = vshrl.u32 %v2256, 7
        %v2258 = vsub.s32 %v2255, %v2257
        %v2259 = vrot.slane %v2064, %v2258
        %v2261 = vunpack.c.l.s4 1983009808
        %v2262 = vunpack.c.0.s8 %v2261
        %v2263 = vlaneseq
        %v2264 = vshrl.u32 %v2263, 7
        %v2265 = vsub.s32 %v2262, %v2264
        %v2266 = vrot.slane %v2252, %v2265
        %v2267 = vcombine.high %v2259, %v2259
        %v2268 = vcombine.high %v2266, %v2266
        %v2269 = vcombine.high %v2067, %v2067
        %v2271 = vunpack.c.l.s4 1983009808
        %v2272 = vunpack.c.0.s8 %v2271
        %v2273 = vlaneseq
        %v2274 = vshrl.u32 %v2273, 7
        %v2275 = vsub.s32 %v2272, %v2274
        %v2276 = vrot.slane %v2067, %v2275
        %v2278 = vunpack.c.l.s4 1983009808
        %v2279 = vunpack.c.0.s8 %v2278
        %v2280 = vlaneseq
        %v2281 = vshrl.u32 %v2280, 7
        %v2282 = vsub.s32 %v2279, %v2281
        %v2283 = vrot.slane %v2269, %v2282
        %v2284 = vcombine.high %v2276, %v2276
        %v2285 = vcombine.high %v2283, %v2283
        %v2286 = vcombine.high %v2072, %v2072
        %v2288 = vunpack.c.l.s4 1983009808
        %v2289 = vunpack.c.0.s8 %v2288
        %v2290 = vlaneseq
        %v2291 = vshrl.u32 %v2290, 7
        %v2292 = vsub.s32 %v2289, %v2291
        %v2293 = vrot.slane %v2072, %v2292
        %v2295 = vunpack.c.l.s4 1983009808
        %v2296 = vunpack.c.0.s8 %v2295
        %v2297 = vlaneseq
        %v2298 = vshrl.u32 %v2297, 7
        %v2299 = vsub.s32 %v2296, %v2298
        %v2300 = vrot.slane %v2286, %v2299
        %v2301 = vcombine.high %v2293, %v2293
        %v2302 = vcombine.high %v2300, %v2300
        %v2303 = vcombine.high %v2075, %v2075
        %v2305 = vunpack.c.l.s4 1983009808
        %v2306 = vunpack.c.0.s8 %v2305
        %v2307 = vlaneseq
        %v2308 = vshrl.u32 %v2307, 7
        %v2309 = vsub.s32 %v2306, %v2308
        %v2310 = vrot.slane %v2075, %v2309
        %v2312 = vunpack.c.l.s4 1983009808
        %v2313 = vunpack.c.0.s8 %v2312
        %v2314 = vlaneseq
        %v2315 = vshrl.u32 %v2314, 7
        %v2316 = vsub.s32 %v2313, %v2315
        %v2317 = vrot.slane %v2303, %v2316
        %v2318 = vcombine.high %v2310, %v2310
        %v2319 = vcombine.high %v2317, %v2317
        %v2320 = vcombine.high %v2080, %v2080
        %v2322 = vunpack.c.l.s4 1983009808
        %v2323 = vunpack.c.0.s8 %v2322
        %v2324 = vlaneseq
        %v2325 = vshrl.u32 %v2324, 7
        %v2326 = vsub.s32 %v2323, %v2325
        %v2327 = vrot.slane %v2080, %v2326
        %v2329 = vunpack.c.l.s4 1983009808
        %v2330 = vunpack.c.0.s8 %v2329
        %v2331 = vlaneseq
        %v2332 = vshrl.u32 %v2331, 7
        %v2333 = vsub.s32 %v2330, %v2332
        %v2334 = vrot.slane %v2320, %v2333
        %v2335 = vcombine.high %v2327, %v2327
        %v2336 = vcombine.high %v2334, %v2334
        %v2337 = vcombine.high %v2083, %v2083
        %v2339 = vunpack.c.l.s4 1983009808
        %v2340 = vunpack.c.0.s8 %v2339
        %v2341 = vlaneseq
        %v2342 = vshrl.u32 %v2341, 7
        %v2343 = vsub.s32 %v2340, %v2342
        %v2344 = vrot.slane %v2083, %v2343
        %v2346 = vunpack.c.l.s4 1983009808
        %v2347 = vunpack.c.0.s8 %v2346
        %v2348 = vlaneseq
        %v2349 = vshrl.u32 %v2348, 7
        %v2350 = vsub.s32 %v2347, %v2349
        %v2351 = vrot.slane %v2337, %v2350
        %v2352 = vcombine.high %v2344, %v2344
        %v2353 = vcombine.high %v2351, %v2351
        %v2384 = vcombine.high %v2144, %v2144
        %v2386 = vunpack.c.l.s4 1983009808
        %v2387 = vunpack.c.0.s8 %v2386
        %v2388 = vlaneseq
        %v2389 = vshrl.u32 %v2388, 7
        %v2390 = vsub.s32 %v2387, %v2389
        %v2391 = vrot.slane %v2144, %v2390
        %v2393 = vunpack.c.l.s4 1983009808
        %v2394 = vunpack.c.0.s8 %v2393
        %v2395 = vlaneseq
        %v2396 = vshrl.u32 %v2395, 7
        %v2397 = vsub.s32 %v2394, %v2396
        %v2398 = vrot.slane %v2384, %v2397
        %v2399 = vcombine.high %v2391, %v2391
        %v2400 = vcombine.high %v2398, %v2398
        %v2401 = vcombine.high %v2147, %v2147
        %v2403 = vunpack.c.l.s4 1983009808
        %v2404 = vunpack.c.0.s8 %v2403
        %v2405 = vlaneseq
        %v2406 = vshrl.u32 %v2405, 7
        %v2407 = vsub.s32 %v2404, %v2406
        %v2408 = vrot.slane %v2147, %v2407
        %v2410 = vunpack.c.l.s4 1983009808
        %v2411 = vunpack.c.0.s8 %v2410
        %v2412 = vlaneseq
        %v2413 = vshrl.u32 %v2412, 7
        %v2414 = vsub.s32 %v2411, %v2413
        %v2415 = vrot.slane %v2401, %v2414
        %v2416 = vcombine.high %v2408, %v2408
        %v2417 = vcombine.high %v2415, %v2415
        %v2418 = vcombine.high %v2152, %v2152
        %v2420 = vunpack.c.l.s4 1983009808
        %v2421 = vunpack.c.0.s8 %v2420
        %v2422 = vlaneseq
        %v2423 = vshrl.u32 %v2422, 7
        %v2424 = vsub.s32 %v2421, %v2423
        %v2425 = vrot.slane %v2152, %v2424
        %v2427 = vunpack.c.l.s4 1983009808
        %v2428 = vunpack.c.0.s8 %v2427
        %v2429 = vlaneseq
        %v2430 = vshrl.u32 %v2429, 7
        %v2431 = vsub.s32 %v2428, %v2430
        %v2432 = vrot.slane %v2418, %v2431
        %v2433 = vcombine.high %v2425, %v2425
        %v2434 = vcombine.high %v2432, %v2432
        %v2435 = vcombine.high %v2155, %v2155
        %v2437 = vunpack.c.l.s4 1983009808
        %v2438 = vunpack.c.0.s8 %v2437
        %v2439 = vlaneseq
        %v2440 = vshrl.u32 %v2439, 7
        %v2441 = vsub.s32 %v2438, %v2440
        %v2442 = vrot.slane %v2155, %v2441
        %v2444 = vunpack.c.l.s4 1983009808
        %v2445 = vunpack.c.0.s8 %v2444
        %v2446 = vlaneseq
        %v2447 = vshrl.u32 %v2446, 7
        %v2448 = vsub.s32 %v2445, %v2447
        %v2449 = vrot.slane %v2435, %v2448
        %v2450 = vcombine.high %v2442, %v2442
        %v2451 = vcombine.high %v2449, %v2449
        %v2452 = vcombine.high %v2160, %v2160
        %v2454 = vunpack.c.l.s4 1983009808
        %v2455 = vunpack.c.0.s8 %v2454
        %v2456 = vlaneseq
        %v2457 = vshrl.u32 %v2456, 7
        %v2458 = vsub.s32 %v2455, %v2457
        %v2459 = vrot.slane %v2160, %v2458
        %v2461 = vunpack.c.l.s4 1983009808
        %v2462 = vunpack.c.0.s8 %v2461
        %v2463 = vlaneseq
        %v2464 = vshrl.u32 %v2463, 7
        %v2465 = vsub.s32 %v2462, %v2464
        %v2466 = vrot.slane %v2452, %v2465
        %v2467 = vcombine.high %v2459, %v2459
        %v2468 = vcombine.high %v2466, %v2466
        %v2469 = vcombine.high %v2163, %v2163
        %v2471 = vunpack.c.l.s4 1983009808
        %v2472 = vunpack.c.0.s8 %v2471
        %v2473 = vlaneseq
        %v2474 = vshrl.u32 %v2473, 7
        %v2475 = vsub.s32 %v2472, %v2474
        %v2476 = vrot.slane %v2163, %v2475
        %v2478 = vunpack.c.l.s4 1983009808
        %v2479 = vunpack.c.0.s8 %v2478
        %v2480 = vlaneseq
        %v2481 = vshrl.u32 %v2480, 7
        %v2482 = vsub.s32 %v2479, %v2481
        %v2483 = vrot.slane %v2469, %v2482
        %v2484 = vcombine.high %v2476, %v2476
        %v2485 = vcombine.high %v2483, %v2483
        %v2486 = vcombine.low %v2391, %v2399
        %v2488 = vunpack.c.l.s4 1983009808
        %v2489 = vunpack.c.0.s8 %v2488
        %v2490 = vlaneseq
        %v2491 = vshrl.u32 %v2490, 7
        %v2492 = vsub.s32 %v2489, %v2491
        %v2493 = vrot.slane %v2486, %v2492
        %v2495 = vunpack.c.l.s4 1983009808
        %v2496 = vunpack.c.0.s8 %v2495
        %v2497 = vlaneseq
        %v2498 = vshrl.u32 %v2497, 7
        %v2499 = vsub.s32 %v2496, %v2498
        %v2500 = vrot.slane %v2398, %v2499
        %v2501 = vcombine.low %v2493, %v2500
        %v2502 = vcombine.low %v2400, %v2408
        %v2504 = vunpack.c.l.s4 1983009808
        %v2505 = vunpack.c.0.s8 %v2504
        %v2506 = vlaneseq
        %v2507 = vshrl.u32 %v2506, 7
        %v2508 = vsub.s32 %v2505, %v2507
        %v2509 = vrot.slane %v2502, %v2508
        %v2511 = vunpack.c.l.s4 1983009808
        %v2512 = vunpack.c.0.s8 %v2511
        %v2513 = vlaneseq
        %v2514 = vshrl.u32 %v2513, 7
        %v2515 = vsub.s32 %v2512, %v2514
        %v2516 = vrot.slane %v2416, %v2515
        %v2517 = vcombine.low %v2509, %v2516
        %v2518 = vcombine.low %v2415, %v2417
        %v2520 = vunpack.c.l.s4 1983009808
        %v2521 = vunpack.c.0.s8 %v2520
        %v2522 = vlaneseq
        %v2523 = vshrl.u32 %v2522, 7
        %v2524 = vsub.s32 %v2521, %v2523
        %v2525 = vrot.slane %v2518, %v2524
        %v2527 = vunpack.c.l.s4 1983009808
        %v2528 = vunpack.c.0.s8 %v2527
        %v2529 = vlaneseq
        %v2530 = vshrl.u32 %v2529, 7
        %v2531 = vsub.s32 %v2528, %v2530
        %v2532 = vrot.slane %v2425, %v2531
        %v2533 = vcombine.low %v2525, %v2532
        %v2534 = vcombine.low %v2433, %v2432
        %v2536 = vunpack.c.l.s4 1983009808
        %v2537 = vunpack.c.0.s8 %v2536
        %v2538 = vlaneseq
        %v2539 = vshrl.u32 %v2538, 7
        %v2540 = vsub.s32 %v2537, %v2539
        %v2541 = vrot.slane %v2534, %v2540
        %v2543 = vunpack.c.l.s4 1983009808
        %v2544 = vunpack.c.0.s8 %v2543
        %v2545 = vlaneseq
        %v2546 = vshrl.u32 %v2545, 7
        %v2547 = vsub.s32 %v2544, %v2546
        %v2548 = vrot.slane %v2434, %v2547
        %v2549 = vcombine.low %v2541, %v2548
        %v2550 = vcombine.low %v2442, %v2450
        %v2552 = vunpack.c.l.s4 1983009808
        %v2553 = vunpack.c.0.s8 %v2552
        %v2554 = vlaneseq
        %v2555 = vshrl.u32 %v2554, 7
        %v2556 = vsub.s32 %v2553, %v2555
        %v2557 = vrot.slane %v2550, %v2556
        %v2559 = vunpack.c.l.s4 1983009808
        %v2560 = vunpack.c.0.s8 %v2559
        %v2561 = vlaneseq
        %v2562 = vshrl.u32 %v2561, 7
        %v2563 = vsub.s32 %v2560, %v2562
        %v2564 = vrot.slane %v2449, %v2563
        %v2565 = vcombine.low %v2557, %v2564
        %v2566 = vcombine.low %v2451, %v2459
        %v2568 = vunpack.c.l.s4 1983009808
        %v2569 = vunpack.c.0.s8 %v2568
        %v2570 = vlaneseq
        %v2571 = vshrl.u32 %v2570, 7
        %v2572 = vsub.s32 %v2569, %v2571
        %v2573 = vrot.slane %v2566, %v2572
        %v2575 = vunpack.c.l.s4 1983009808
        %v2576 = vunpack.c.0.s8 %v2575
        %v2577 = vlaneseq
        %v2578 = vshrl.u32 %v2577, 7
        %v2579 = vsub.s32 %v2576, %v2578
        %v2580 = vrot.slane %v2467, %v2579
        %v2581 = vcombine.low %v2573, %v2580
        %v2582 = vcombine.low %v2466, %v2468
        %v2584 = vunpack.c.l.s4 1983009808
        %v2585 = vunpack.c.0.s8 %v2584
        %v2586 = vlaneseq
        %v2587 = vshrl.u32 %v2586, 7
        %v2588 = vsub.s32 %v2585, %v2587
        %v2589 = vrot.slane %v2582, %v2588
        %v2591 = vunpack.c.l.s4 1983009808
        %v2592 = vunpack.c.0.s8 %v2591
        %v2593 = vlaneseq
        %v2594 = vshrl.u32 %v2593, 7
        %v2595 = vsub.s32 %v2592, %v2594
        %v2596 = vrot.slane %v2476, %v2595
        %v2597 = vcombine.low %v2589, %v2596
        %v2598 = vcombine.low %v2484, %v2483
        %v2600 = vunpack.c.l.s4 1983009808
        %v2601 = vunpack.c.0.s8 %v2600
        %v2602 = vlaneseq
        %v2603 = vshrl.u32 %v2602, 7
        %v2604 = vsub.s32 %v2601, %v2603
        %v2605 = vrot.slane %v2598, %v2604
        %v2607 = vunpack.c.l.s4 1983009808
        %v2608 = vunpack.c.0.s8 %v2607
        %v2609 = vlaneseq
        %v2610 = vshrl.u32 %v2609, 7
        %v2611 = vsub.s32 %v2608, %v2610
        %v2612 = vrot.slane %v2485, %v2611
        %v2613 = vcombine.low %v2605, %v2612
        %v2622 = vpack.c.bf16 %v2501, %v2501
        %v2623 = vpack.c.bf16 %v2517, %v2517
        %v2624 = vpack.c.bf16 %v2533, %v2533
        %v2625 = vpack.c.bf16 %v2549, %v2549
        %v2626 = vpack.c.bf16 %v2565, %v2565
        %v2627 = vpack.c.bf16 %v2581, %v2581
        %v2628 = vpack.c.bf16 %v2597, %v2597
        %v2629 = vpack.c.bf16 %v2613, %v2613
        %v2636 = vcombine.high %v2224, %v2224
        %v2638 = vunpack.c.l.s4 1983009808
        %v2639 = vunpack.c.0.s8 %v2638
        %v2640 = vlaneseq
        %v2641 = vshrl.u32 %v2640, 7
        %v2642 = vsub.s32 %v2639, %v2641
        %v2643 = vrot.slane %v2224, %v2642
        %v2645 = vunpack.c.l.s4 1983009808
        %v2646 = vunpack.c.0.s8 %v2645
        %v2647 = vlaneseq
        %v2648 = vshrl.u32 %v2647, 7
        %v2649 = vsub.s32 %v2646, %v2648
        %v2650 = vrot.slane %v2636, %v2649
        %v2651 = vcombine.high %v2643, %v2643
        %v2652 = vcombine.high %v2650, %v2650
        %v2653 = vcombine.high %v2227, %v2227
        %v2655 = vunpack.c.l.s4 1983009808
        %v2656 = vunpack.c.0.s8 %v2655
        %v2657 = vlaneseq
        %v2658 = vshrl.u32 %v2657, 7
        %v2659 = vsub.s32 %v2656, %v2658
        %v2660 = vrot.slane %v2227, %v2659
        %v2662 = vunpack.c.l.s4 1983009808
        %v2663 = vunpack.c.0.s8 %v2662
        %v2664 = vlaneseq
        %v2665 = vshrl.u32 %v2664, 7
        %v2666 = vsub.s32 %v2663, %v2665
        %v2667 = vrot.slane %v2653, %v2666
        %v2668 = vcombine.high %v2660, %v2660
        %v2669 = vcombine.high %v2667, %v2667
        %v2670 = vcombine.high %v2232, %v2232
        %v2672 = vunpack.c.l.s4 1983009808
        %v2673 = vunpack.c.0.s8 %v2672
        %v2674 = vlaneseq
        %v2675 = vshrl.u32 %v2674, 7
        %v2676 = vsub.s32 %v2673, %v2675
        %v2677 = vrot.slane %v2232, %v2676
        %v2679 = vunpack.c.l.s4 1983009808
        %v2680 = vunpack.c.0.s8 %v2679
        %v2681 = vlaneseq
        %v2682 = vshrl.u32 %v2681, 7
        %v2683 = vsub.s32 %v2680, %v2682
        %v2684 = vrot.slane %v2670, %v2683
        %v2685 = vcombine.high %v2677, %v2677
        %v2686 = vcombine.high %v2684, %v2684
        %v2687 = vcombine.high %v2235, %v2235
        %v2689 = vunpack.c.l.s4 1983009808
        %v2690 = vunpack.c.0.s8 %v2689
        %v2691 = vlaneseq
        %v2692 = vshrl.u32 %v2691, 7
        %v2693 = vsub.s32 %v2690, %v2692
        %v2694 = vrot.slane %v2235, %v2693
        %v2696 = vunpack.c.l.s4 1983009808
        %v2697 = vunpack.c.0.s8 %v2696
        %v2698 = vlaneseq
        %v2699 = vshrl.u32 %v2698, 7
        %v2700 = vsub.s32 %v2697, %v2699
        %v2701 = vrot.slane %v2687, %v2700
        %v2702 = vcombine.high %v2694, %v2694
        %v2703 = vcombine.high %v2701, %v2701
        %v2704 = vcombine.high %v2240, %v2240
        %v2706 = vunpack.c.l.s4 1983009808
        %v2707 = vunpack.c.0.s8 %v2706
        %v2708 = vlaneseq
        %v2709 = vshrl.u32 %v2708, 7
        %v2710 = vsub.s32 %v2707, %v2709
        %v2711 = vrot.slane %v2240, %v2710
        %v2713 = vunpack.c.l.s4 1983009808
        %v2714 = vunpack.c.0.s8 %v2713
        %v2715 = vlaneseq
        %v2716 = vshrl.u32 %v2715, 7
        %v2717 = vsub.s32 %v2714, %v2716
        %v2718 = vrot.slane %v2704, %v2717
        %v2719 = vcombine.high %v2711, %v2711
        %v2720 = vcombine.high %v2718, %v2718
        %v2721 = vcombine.high %v2243, %v2243
        %v2723 = vunpack.c.l.s4 1983009808
        %v2724 = vunpack.c.0.s8 %v2723
        %v2725 = vlaneseq
        %v2726 = vshrl.u32 %v2725, 7
        %v2727 = vsub.s32 %v2724, %v2726
        %v2728 = vrot.slane %v2243, %v2727
        %v2730 = vunpack.c.l.s4 1983009808
        %v2731 = vunpack.c.0.s8 %v2730
        %v2732 = vlaneseq
        %v2733 = vshrl.u32 %v2732, 7
        %v2734 = vsub.s32 %v2731, %v2733
        %v2735 = vrot.slane %v2721, %v2734
        %v2736 = vcombine.high %v2728, %v2728
        %v2737 = vcombine.high %v2735, %v2735
        %v2762 = vlaneseq
        %v2763 = vand.u32 %v2762, 127
        %vm2764 = vcmp.ge.s32.totalorder %v2763, 0
        %vm2765 = vcmp.lt.s32.totalorder %v2763, 16
        %vm2766 = vmand %vm2764, %vm2765
        %v2767 = vsel %vm2766, 1, 0
        %v2768 = vcvt.s32.f32 %v2767
        %v2770 = vcombine.high %v2768, %v2768
        %v2772 = vunpack.c.l.s4 1983009808
        %v2773 = vunpack.c.0.s8 %v2772
        %v2774 = vlaneseq
        %v2775 = vshrl.u32 %v2774, 7
        %v2776 = vsub.s32 %v2773, %v2775
        %v2777 = vrot.slane %v2768, %v2776
        %v2779 = vunpack.c.l.s4 1983009808
        %v2780 = vunpack.c.0.s8 %v2779
        %v2781 = vlaneseq
        %v2782 = vshrl.u32 %v2781, 7
        %v2783 = vsub.s32 %v2780, %v2782
        %v2784 = vrot.slane %v2770, %v2783
        %v2785 = vcombine.high %v2777, %v2777
        %v2789 = vmul.f32 %v2259, %v2777
        %v2790 = vmul.f32 %v2267, %v2785
        %v2791 = vmul.f32 %v2266, %v2784
        %v2792 = vmul.f32 %v2268, %v2777
        %v2793 = vmul.f32 %v2276, %v2785
        %v2794 = vmul.f32 %v2284, %v2784
        %v2795 = vmul.f32 %v2283, %v2777
        %v2796 = vmul.f32 %v2285, %v2785
        %v2797 = vmul.f32 %v2293, %v2784
        %v2798 = vmul.f32 %v2301, %v2777
        %v2799 = vmul.f32 %v2300, %v2785
        %v2800 = vmul.f32 %v2302, %v2784
        %v2801 = vmul.f32 %v2310, %v2777
        %v2802 = vmul.f32 %v2318, %v2785
        %v2803 = vmul.f32 %v2317, %v2784
        %v2804 = vmul.f32 %v2319, %v2777
        %v2805 = vmul.f32 %v2327, %v2785
        %v2806 = vmul.f32 %v2335, %v2784
        %v2807 = vmul.f32 %v2334, %v2777
        %v2808 = vmul.f32 %v2336, %v2785
        %v2809 = vmul.f32 %v2344, %v2784
        %v2810 = vmul.f32 %v2352, %v2777
        %v2811 = vmul.f32 %v2351, %v2785
        %v2812 = vmul.f32 %v2353, %v2784
        %v2837 = vcombine.low %v2789, %v2790
        %v2839 = vunpack.c.l.s4 1983009808
        %v2840 = vunpack.c.0.s8 %v2839
        %v2841 = vlaneseq
        %v2842 = vshrl.u32 %v2841, 7
        %v2843 = vsub.s32 %v2840, %v2842
        %v2844 = vrot.slane %v2837, %v2843
        %v2846 = vunpack.c.l.s4 1983009808
        %v2847 = vunpack.c.0.s8 %v2846
        %v2848 = vlaneseq
        %v2849 = vshrl.u32 %v2848, 7
        %v2850 = vsub.s32 %v2847, %v2849
        %v2851 = vrot.slane %v2791, %v2850
        %v2852 = vcombine.low %v2844, %v2851
        %v2853 = vcombine.low %v2792, %v2793
        %v2855 = vunpack.c.l.s4 1983009808
        %v2856 = vunpack.c.0.s8 %v2855
        %v2857 = vlaneseq
        %v2858 = vshrl.u32 %v2857, 7
        %v2859 = vsub.s32 %v2856, %v2858
        %v2860 = vrot.slane %v2853, %v2859
        %v2862 = vunpack.c.l.s4 1983009808
        %v2863 = vunpack.c.0.s8 %v2862
        %v2864 = vlaneseq
        %v2865 = vshrl.u32 %v2864, 7
        %v2866 = vsub.s32 %v2863, %v2865
        %v2867 = vrot.slane %v2794, %v2866
        %v2868 = vcombine.low %v2860, %v2867
        %v2869 = vcombine.low %v2795, %v2796
        %v2871 = vunpack.c.l.s4 1983009808
        %v2872 = vunpack.c.0.s8 %v2871
        %v2873 = vlaneseq
        %v2874 = vshrl.u32 %v2873, 7
        %v2875 = vsub.s32 %v2872, %v2874
        %v2876 = vrot.slane %v2869, %v2875
        %v2878 = vunpack.c.l.s4 1983009808
        %v2879 = vunpack.c.0.s8 %v2878
        %v2880 = vlaneseq
        %v2881 = vshrl.u32 %v2880, 7
        %v2882 = vsub.s32 %v2879, %v2881
        %v2883 = vrot.slane %v2797, %v2882
        %v2884 = vcombine.low %v2876, %v2883
        %v2885 = vcombine.low %v2798, %v2799
        %v2887 = vunpack.c.l.s4 1983009808
        %v2888 = vunpack.c.0.s8 %v2887
        %v2889 = vlaneseq
        %v2890 = vshrl.u32 %v2889, 7
        %v2891 = vsub.s32 %v2888, %v2890
        %v2892 = vrot.slane %v2885, %v2891
        %v2894 = vunpack.c.l.s4 1983009808
        %v2895 = vunpack.c.0.s8 %v2894
        %v2896 = vlaneseq
        %v2897 = vshrl.u32 %v2896, 7
        %v2898 = vsub.s32 %v2895, %v2897
        %v2899 = vrot.slane %v2800, %v2898
        %v2900 = vcombine.low %v2892, %v2899
        %v2901 = vcombine.low %v2801, %v2802
        %v2903 = vunpack.c.l.s4 1983009808
        %v2904 = vunpack.c.0.s8 %v2903
        %v2905 = vlaneseq
        %v2906 = vshrl.u32 %v2905, 7
        %v2907 = vsub.s32 %v2904, %v2906
        %v2908 = vrot.slane %v2901, %v2907
        %v2910 = vunpack.c.l.s4 1983009808
        %v2911 = vunpack.c.0.s8 %v2910
        %v2912 = vlaneseq
        %v2913 = vshrl.u32 %v2912, 7
        %v2914 = vsub.s32 %v2911, %v2913
        %v2915 = vrot.slane %v2803, %v2914
        %v2916 = vcombine.low %v2908, %v2915
        %v2917 = vcombine.low %v2804, %v2805
        %v2919 = vunpack.c.l.s4 1983009808
        %v2920 = vunpack.c.0.s8 %v2919
        %v2921 = vlaneseq
        %v2922 = vshrl.u32 %v2921, 7
        %v2923 = vsub.s32 %v2920, %v2922
        %v2924 = vrot.slane %v2917, %v2923
        %v2926 = vunpack.c.l.s4 1983009808
        %v2927 = vunpack.c.0.s8 %v2926
        %v2928 = vlaneseq
        %v2929 = vshrl.u32 %v2928, 7
        %v2930 = vsub.s32 %v2927, %v2929
        %v2931 = vrot.slane %v2806, %v2930
        %v2932 = vcombine.low %v2924, %v2931
        %v2933 = vcombine.low %v2807, %v2808
        %v2935 = vunpack.c.l.s4 1983009808
        %v2936 = vunpack.c.0.s8 %v2935
        %v2937 = vlaneseq
        %v2938 = vshrl.u32 %v2937, 7
        %v2939 = vsub.s32 %v2936, %v2938
        %v2940 = vrot.slane %v2933, %v2939
        %v2942 = vunpack.c.l.s4 1983009808
        %v2943 = vunpack.c.0.s8 %v2942
        %v2944 = vlaneseq
        %v2945 = vshrl.u32 %v2944, 7
        %v2946 = vsub.s32 %v2943, %v2945
        %v2947 = vrot.slane %v2809, %v2946
        %v2948 = vcombine.low %v2940, %v2947
        %v2949 = vcombine.low %v2810, %v2811
        %v2951 = vunpack.c.l.s4 1983009808
        %v2952 = vunpack.c.0.s8 %v2951
        %v2953 = vlaneseq
        %v2954 = vshrl.u32 %v2953, 7
        %v2955 = vsub.s32 %v2952, %v2954
        %v2956 = vrot.slane %v2949, %v2955
        %v2958 = vunpack.c.l.s4 1983009808
        %v2959 = vunpack.c.0.s8 %v2958
        %v2960 = vlaneseq
        %v2961 = vshrl.u32 %v2960, 7
        %v2962 = vsub.s32 %v2959, %v2961
        %v2963 = vrot.slane %v2812, %v2962
        %v2964 = vcombine.low %v2956, %v2963
        %v2973 = vpack.c.bf16 %v2852, %v2852
        %v2974 = vpack.c.bf16 %v2868, %v2868
        %v2975 = vpack.c.bf16 %v2884, %v2884
        %v2976 = vpack.c.bf16 %v2900, %v2900
        %v2977 = vpack.c.bf16 %v2916, %v2916
        %v2978 = vpack.c.bf16 %v2932, %v2932
        %v2979 = vpack.c.bf16 %v2948, %v2948
        %v2980 = vpack.c.bf16 %v2964, %v2964
        %v2981 = vmul.f32 %v2643, %v2777
        %v2982 = vmul.f32 %v2651, %v2785
        %v2983 = vmul.f32 %v2650, %v2784
        %v2984 = vmul.f32 %v2652, %v2777
        %v2985 = vmul.f32 %v2660, %v2785
        %v2986 = vmul.f32 %v2668, %v2784
        %v2987 = vmul.f32 %v2667, %v2777
        %v2988 = vmul.f32 %v2669, %v2785
        %v2989 = vmul.f32 %v2677, %v2784
        %v2990 = vmul.f32 %v2685, %v2777
        %v2991 = vmul.f32 %v2684, %v2785
        %v2992 = vmul.f32 %v2686, %v2784
        %v2993 = vmul.f32 %v2694, %v2777
        %v2994 = vmul.f32 %v2702, %v2785
        %v2995 = vmul.f32 %v2701, %v2784
        %v2996 = vmul.f32 %v2703, %v2777
        %v2997 = vmul.f32 %v2711, %v2785
        %v2998 = vmul.f32 %v2719, %v2784
        %v2999 = vmul.f32 %v2718, %v2777
        %v3000 = vmul.f32 %v2720, %v2785
        %v3001 = vmul.f32 %v2728, %v2784
        %v3002 = vmul.f32 %v2736, %v2777
        %v3003 = vmul.f32 %v2735, %v2785
        %v3004 = vmul.f32 %v2737, %v2784
        %v3029 = vcombine.low %v2981, %v2982
        %v3031 = vunpack.c.l.s4 1983009808
        %v3032 = vunpack.c.0.s8 %v3031
        %v3033 = vlaneseq
        %v3034 = vshrl.u32 %v3033, 7
        %v3035 = vsub.s32 %v3032, %v3034
        %v3036 = vrot.slane %v3029, %v3035
        %v3038 = vunpack.c.l.s4 1983009808
        %v3039 = vunpack.c.0.s8 %v3038
        %v3040 = vlaneseq
        %v3041 = vshrl.u32 %v3040, 7
        %v3042 = vsub.s32 %v3039, %v3041
        %v3043 = vrot.slane %v2983, %v3042
        %v3044 = vcombine.low %v3036, %v3043
        %v3045 = vcombine.low %v2984, %v2985
        %v3047 = vunpack.c.l.s4 1983009808
        %v3048 = vunpack.c.0.s8 %v3047
        %v3049 = vlaneseq
        %v3050 = vshrl.u32 %v3049, 7
        %v3051 = vsub.s32 %v3048, %v3050
        %v3052 = vrot.slane %v3045, %v3051
        %v3054 = vunpack.c.l.s4 1983009808
        %v3055 = vunpack.c.0.s8 %v3054
        %v3056 = vlaneseq
        %v3057 = vshrl.u32 %v3056, 7
        %v3058 = vsub.s32 %v3055, %v3057
        %v3059 = vrot.slane %v2986, %v3058
        %v3060 = vcombine.low %v3052, %v3059
        %v3061 = vcombine.low %v2987, %v2988
        %v3063 = vunpack.c.l.s4 1983009808
        %v3064 = vunpack.c.0.s8 %v3063
        %v3065 = vlaneseq
        %v3066 = vshrl.u32 %v3065, 7
        %v3067 = vsub.s32 %v3064, %v3066
        %v3068 = vrot.slane %v3061, %v3067
        %v3070 = vunpack.c.l.s4 1983009808
        %v3071 = vunpack.c.0.s8 %v3070
        %v3072 = vlaneseq
        %v3073 = vshrl.u32 %v3072, 7
        %v3074 = vsub.s32 %v3071, %v3073
        %v3075 = vrot.slane %v2989, %v3074
        %v3076 = vcombine.low %v3068, %v3075
        %v3077 = vcombine.low %v2990, %v2991
        %v3079 = vunpack.c.l.s4 1983009808
        %v3080 = vunpack.c.0.s8 %v3079
        %v3081 = vlaneseq
        %v3082 = vshrl.u32 %v3081, 7
        %v3083 = vsub.s32 %v3080, %v3082
        %v3084 = vrot.slane %v3077, %v3083
        %v3086 = vunpack.c.l.s4 1983009808
        %v3087 = vunpack.c.0.s8 %v3086
        %v3088 = vlaneseq
        %v3089 = vshrl.u32 %v3088, 7
        %v3090 = vsub.s32 %v3087, %v3089
        %v3091 = vrot.slane %v2992, %v3090
        %v3092 = vcombine.low %v3084, %v3091
        %v3093 = vcombine.low %v2993, %v2994
        %v3095 = vunpack.c.l.s4 1983009808
        %v3096 = vunpack.c.0.s8 %v3095
        %v3097 = vlaneseq
        %v3098 = vshrl.u32 %v3097, 7
        %v3099 = vsub.s32 %v3096, %v3098
        %v3100 = vrot.slane %v3093, %v3099
        %v3102 = vunpack.c.l.s4 1983009808
        %v3103 = vunpack.c.0.s8 %v3102
        %v3104 = vlaneseq
        %v3105 = vshrl.u32 %v3104, 7
        %v3106 = vsub.s32 %v3103, %v3105
        %v3107 = vrot.slane %v2995, %v3106
        %v3108 = vcombine.low %v3100, %v3107
        %v3109 = vcombine.low %v2996, %v2997
        %v3111 = vunpack.c.l.s4 1983009808
        %v3112 = vunpack.c.0.s8 %v3111
        %v3113 = vlaneseq
        %v3114 = vshrl.u32 %v3113, 7
        %v3115 = vsub.s32 %v3112, %v3114
        %v3116 = vrot.slane %v3109, %v3115
        %v3118 = vunpack.c.l.s4 1983009808
        %v3119 = vunpack.c.0.s8 %v3118
        %v3120 = vlaneseq
        %v3121 = vshrl.u32 %v3120, 7
        %v3122 = vsub.s32 %v3119, %v3121
        %v3123 = vrot.slane %v2998, %v3122
        %v3124 = vcombine.low %v3116, %v3123
        %v3125 = vcombine.low %v2999, %v3000
        %v3127 = vunpack.c.l.s4 1983009808
        %v3128 = vunpack.c.0.s8 %v3127
        %v3129 = vlaneseq
        %v3130 = vshrl.u32 %v3129, 7
        %v3131 = vsub.s32 %v3128, %v3130
        %v3132 = vrot.slane %v3125, %v3131
        %v3134 = vunpack.c.l.s4 1983009808
        %v3135 = vunpack.c.0.s8 %v3134
        %v3136 = vlaneseq
        %v3137 = vshrl.u32 %v3136, 7
        %v3138 = vsub.s32 %v3135, %v3137
        %v3139 = vrot.slane %v3001, %v3138
        %v3140 = vcombine.low %v3132, %v3139
        %v3141 = vcombine.low %v3002, %v3003
        %v3143 = vunpack.c.l.s4 1983009808
        %v3144 = vunpack.c.0.s8 %v3143
        %v3145 = vlaneseq
        %v3146 = vshrl.u32 %v3145, 7
        %v3147 = vsub.s32 %v3144, %v3146
        %v3148 = vrot.slane %v3141, %v3147
        %v3150 = vunpack.c.l.s4 1983009808
        %v3151 = vunpack.c.0.s8 %v3150
        %v3152 = vlaneseq
        %v3153 = vshrl.u32 %v3152, 7
        %v3154 = vsub.s32 %v3151, %v3153
        %v3155 = vrot.slane %v3004, %v3154
        %v3156 = vcombine.low %v3148, %v3155
        %v3165 = vpack.c.bf16 %v3044, %v3044
        %v3166 = vpack.c.bf16 %v3060, %v3060
        %v3167 = vpack.c.bf16 %v3076, %v3076
        %v3168 = vpack.c.bf16 %v3092, %v3092
        %v3169 = vpack.c.bf16 %v3108, %v3108
        %v3170 = vpack.c.bf16 %v3124, %v3124
        %v3171 = vpack.c.bf16 %v3140, %v3140
        %v3172 = vpack.c.bf16 %v3156, %v3156
        %v3174 = vsel %vm1082, %v2973, 0
        %v3177 = vsel %vm1082, %v2622, 0
        %3179 = vmatprep.subr.bf16.mxu0 0
        %3180 = vmatpush1.bf16.xpose.msra.mxu0 %v3177
        %3181 = vmatprep.subr.bf16.mxu0 0
        %3182 = vmatpush1.bf16.xpose.msra.mxu0 0
        %3183 = vmatprep.subr.bf16.mxu0 0
        %3184 = vmatpush1.bf16.xpose.msra.mxu0 0
        %3185 = vmatprep.subr.bf16.mxu0 0
        %3186 = vmatpush1.bf16.xpose.msra.mxu0 0
        %3187 = vmatprep.subr.bf16.mxu0 0
        %3188 = vmatpush1.bf16.xpose.msra.mxu0 0
        %3189 = vmatprep.subr.bf16.mxu0 0
        %3190 = vmatpush1.bf16.xpose.msra.mxu0 0
        %3191 = vmatprep.subr.bf16.mxu0 0
        %3192 = vmatpush1.bf16.xpose.msra.mxu0 0
        %3193 = vmatprep.subr.bf16.mxu0 0
        %3194 = vmatpush1.bf16.xpose.msra.mxu0 0
        %3195 = vmatprep.subr.bf16.mxu0 0
        %3196 = vmatpush1.bf16.xpose.msra.mxu0 0
        %3197 = vmatprep.subr.bf16.mxu0 0
        %3198 = vmatpush1.bf16.xpose.msra.mxu0 0
        %3199 = vmatprep.subr.bf16.mxu0 0
        %3200 = vmatpush1.bf16.xpose.msra.mxu0 0
        %3201 = vmatprep.subr.bf16.mxu0 0
        %3202 = vmatpush1.bf16.xpose.msra.mxu0 0
        %3203 = vmatprep.subr.bf16.mxu0 0
        %3204 = vmatpush1.bf16.xpose.msra.mxu0 0
        %3205 = vmatprep.subr.bf16.mxu0 0
        %3206 = vmatpush1.bf16.xpose.msra.mxu0 0
        %3207 = vmatprep.subr.bf16.mxu0 0
        %3208 = vmatpush1.bf16.xpose.msra.mxu0 0
        %3209 = vmatprep.subr.bf16.mxu0 0
        %3210 = vmatpush1.bf16.xpose.msra.mxu0 0
        %3211 = vmatprep.mubr.bf16.mxu0 0
        %3212 = vmatmul.mubr.bf16.gmra.mrb[0].mxu0 %v3174
        %v3213 = vpop.f32.mrb[0].mxu0
        %v3214 = vadd.f32 0.0, %v3213
        %v3215 = vpop.f32.mrb[0].mxu0
        %v3216 = vpop.f32.mrb[0].mxu0
        %v3217 = vpop.f32.mrb[0].mxu0
        %3218 = vdwg.mxu0
        %v3220 = vsel %vm1082, %v2974, 0
        %v3223 = vsel %vm1082, %v2623, 0
        %3225 = vmatprep.subr.bf16.mxu0 0
        %3226 = vmatpush1.bf16.xpose.msra.mxu0 %v3223
        %3227 = vmatprep.subr.bf16.mxu0 0
        %3228 = vmatpush1.bf16.xpose.msra.mxu0 0
        %3229 = vmatprep.subr.bf16.mxu0 0
        %3230 = vmatpush1.bf16.xpose.msra.mxu0 0
        %3231 = vmatprep.subr.bf16.mxu0 0
        %3232 = vmatpush1.bf16.xpose.msra.mxu0 0
        %3233 = vmatprep.subr.bf16.mxu0 0
        %3234 = vmatpush1.bf16.xpose.msra.mxu0 0
        %3235 = vmatprep.subr.bf16.mxu0 0
        %3236 = vmatpush1.bf16.xpose.msra.mxu0 0
        %3237 = vmatprep.subr.bf16.mxu0 0
        %3238 = vmatpush1.bf16.xpose.msra.mxu0 0
        %3239 = vmatprep.subr.bf16.mxu0 0
        %3240 = vmatpush1.bf16.xpose.msra.mxu0 0
        %3241 = vmatprep.subr.bf16.mxu0 0
        %3242 = vmatpush1.bf16.xpose.msra.mxu0 0
        %3243 = vmatprep.subr.bf16.mxu0 0
        %3244 = vmatpush1.bf16.xpose.msra.mxu0 0
        %3245 = vmatprep.subr.bf16.mxu0 0
        %3246 = vmatpush1.bf16.xpose.msra.mxu0 0
        %3247 = vmatprep.subr.bf16.mxu0 0
        %3248 = vmatpush1.bf16.xpose.msra.mxu0 0
        %3249 = vmatprep.subr.bf16.mxu0 0
        %3250 = vmatpush1.bf16.xpose.msra.mxu0 0
        %3251 = vmatprep.subr.bf16.mxu0 0
        %3252 = vmatpush1.bf16.xpose.msra.mxu0 0
        %3253 = vmatprep.subr.bf16.mxu0 0
        %3254 = vmatpush1.bf16.xpose.msra.mxu0 0
        %3255 = vmatprep.subr.bf16.mxu0 0
        %3256 = vmatpush1.bf16.xpose.msra.mxu0 0
        %3257 = vmatprep.mubr.bf16.mxu0 0
        %3258 = vmatmul.mubr.bf16.gmra.mrb[0].mxu0 %v3220
        %v3259 = vpop.f32.mrb[0].mxu0
        %v3260 = vadd.f32 0.0, %v3259
        %v3261 = vpop.f32.mrb[0].mxu0
        %v3262 = vpop.f32.mrb[0].mxu0
        %v3263 = vpop.f32.mrb[0].mxu0
        %3264 = vdwg.mxu0
        %v3266 = vsel %vm1082, %v2975, 0
        %v3269 = vsel %vm1082, %v2624, 0
        %3271 = vmatprep.subr.bf16.mxu0 0
        %3272 = vmatpush1.bf16.xpose.msra.mxu0 %v3269
        %3273 = vmatprep.subr.bf16.mxu0 0
        %3274 = vmatpush1.bf16.xpose.msra.mxu0 0
        %3275 = vmatprep.subr.bf16.mxu0 0
        %3276 = vmatpush1.bf16.xpose.msra.mxu0 0
        %3277 = vmatprep.subr.bf16.mxu0 0
        %3278 = vmatpush1.bf16.xpose.msra.mxu0 0
        %3279 = vmatprep.subr.bf16.mxu0 0
        %3280 = vmatpush1.bf16.xpose.msra.mxu0 0
        %3281 = vmatprep.subr.bf16.mxu0 0
        %3282 = vmatpush1.bf16.xpose.msra.mxu0 0
        %3283 = vmatprep.subr.bf16.mxu0 0
        %3284 = vmatpush1.bf16.xpose.msra.mxu0 0
        %3285 = vmatprep.subr.bf16.mxu0 0
        %3286 = vmatpush1.bf16.xpose.msra.mxu0 0
        %3287 = vmatprep.subr.bf16.mxu0 0
        %3288 = vmatpush1.bf16.xpose.msra.mxu0 0
        %3289 = vmatprep.subr.bf16.mxu0 0
        %3290 = vmatpush1.bf16.xpose.msra.mxu0 0
        %3291 = vmatprep.subr.bf16.mxu0 0
        %3292 = vmatpush1.bf16.xpose.msra.mxu0 0
        %3293 = vmatprep.subr.bf16.mxu0 0
        %3294 = vmatpush1.bf16.xpose.msra.mxu0 0
        %3295 = vmatprep.subr.bf16.mxu0 0
        %3296 = vmatpush1.bf16.xpose.msra.mxu0 0
        %3297 = vmatprep.subr.bf16.mxu0 0
        %3298 = vmatpush1.bf16.xpose.msra.mxu0 0
        %3299 = vmatprep.subr.bf16.mxu0 0
        %3300 = vmatpush1.bf16.xpose.msra.mxu0 0
        %3301 = vmatprep.subr.bf16.mxu0 0
        %3302 = vmatpush1.bf16.xpose.msra.mxu0 0
        %3303 = vmatprep.mubr.bf16.mxu0 0
        %3304 = vmatmul.mubr.bf16.gmra.mrb[0].mxu0 %v3266
        %v3305 = vpop.f32.mrb[0].mxu0
        %v3306 = vadd.f32 0.0, %v3305
        %v3307 = vpop.f32.mrb[0].mxu0
        %v3308 = vpop.f32.mrb[0].mxu0
        %v3309 = vpop.f32.mrb[0].mxu0
        %3310 = vdwg.mxu0
        %v3312 = vsel %vm1082, %v2976, 0
        %v3315 = vsel %vm1082, %v2625, 0
        %3317 = vmatprep.subr.bf16.mxu0 0
        %3318 = vmatpush1.bf16.xpose.msra.mxu0 %v3315
        %3319 = vmatprep.subr.bf16.mxu0 0
        %3320 = vmatpush1.bf16.xpose.msra.mxu0 0
        %3321 = vmatprep.subr.bf16.mxu0 0
        %3322 = vmatpush1.bf16.xpose.msra.mxu0 0
        %3323 = vmatprep.subr.bf16.mxu0 0
        %3324 = vmatpush1.bf16.xpose.msra.mxu0 0
        %3325 = vmatprep.subr.bf16.mxu0 0
        %3326 = vmatpush1.bf16.xpose.msra.mxu0 0
        %3327 = vmatprep.subr.bf16.mxu0 0
        %3328 = vmatpush1.bf16.xpose.msra.mxu0 0
        %3329 = vmatprep.subr.bf16.mxu0 0
        %3330 = vmatpush1.bf16.xpose.msra.mxu0 0
        %3331 = vmatprep.subr.bf16.mxu0 0
        %3332 = vmatpush1.bf16.xpose.msra.mxu0 0
        %3333 = vmatprep.subr.bf16.mxu0 0
        %3334 = vmatpush1.bf16.xpose.msra.mxu0 0
        %3335 = vmatprep.subr.bf16.mxu0 0
        %3336 = vmatpush1.bf16.xpose.msra.mxu0 0
        %3337 = vmatprep.subr.bf16.mxu0 0
        %3338 = vmatpush1.bf16.xpose.msra.mxu0 0
        %3339 = vmatprep.subr.bf16.mxu0 0
        %3340 = vmatpush1.bf16.xpose.msra.mxu0 0
        %3341 = vmatprep.subr.bf16.mxu0 0
        %3342 = vmatpush1.bf16.xpose.msra.mxu0 0
        %3343 = vmatprep.subr.bf16.mxu0 0
        %3344 = vmatpush1.bf16.xpose.msra.mxu0 0
        %3345 = vmatprep.subr.bf16.mxu0 0
        %3346 = vmatpush1.bf16.xpose.msra.mxu0 0
        %3347 = vmatprep.subr.bf16.mxu0 0
        %3348 = vmatpush1.bf16.xpose.msra.mxu0 0
        %3349 = vmatprep.mubr.bf16.mxu0 0
        %3350 = vmatmul.mubr.bf16.gmra.mrb[0].mxu0 %v3312
        %v3351 = vpop.f32.mrb[0].mxu0
        %v3352 = vadd.f32 0.0, %v3351
        %v3353 = vpop.f32.mrb[0].mxu0
        %v3354 = vpop.f32.mrb[0].mxu0
        %v3355 = vpop.f32.mrb[0].mxu0
        %3356 = vdwg.mxu0
        %v3358 = vsel %vm1082, %v2977, 0
        %v3361 = vsel %vm1082, %v2626, 0
        %3363 = vmatprep.subr.bf16.mxu0 0
        %3364 = vmatpush1.bf16.xpose.msra.mxu0 %v3361
        %3365 = vmatprep.subr.bf16.mxu0 0
        %3366 = vmatpush1.bf16.xpose.msra.mxu0 0
        %3367 = vmatprep.subr.bf16.mxu0 0
        %3368 = vmatpush1.bf16.xpose.msra.mxu0 0
        %3369 = vmatprep.subr.bf16.mxu0 0
        %3370 = vmatpush1.bf16.xpose.msra.mxu0 0
        %3371 = vmatprep.subr.bf16.mxu0 0
        %3372 = vmatpush1.bf16.xpose.msra.mxu0 0
        %3373 = vmatprep.subr.bf16.mxu0 0
        %3374 = vmatpush1.bf16.xpose.msra.mxu0 0
        %3375 = vmatprep.subr.bf16.mxu0 0
        %3376 = vmatpush1.bf16.xpose.msra.mxu0 0
        %3377 = vmatprep.subr.bf16.mxu0 0
        %3378 = vmatpush1.bf16.xpose.msra.mxu0 0
        %3379 = vmatprep.subr.bf16.mxu0 0
        %3380 = vmatpush1.bf16.xpose.msra.mxu0 0
        %3381 = vmatprep.subr.bf16.mxu0 0
        %3382 = vmatpush1.bf16.xpose.msra.mxu0 0
        %3383 = vmatprep.subr.bf16.mxu0 0
        %3384 = vmatpush1.bf16.xpose.msra.mxu0 0
        %3385 = vmatprep.subr.bf16.mxu0 0
        %3386 = vmatpush1.bf16.xpose.msra.mxu0 0
        %3387 = vmatprep.subr.bf16.mxu0 0
        %3388 = vmatpush1.bf16.xpose.msra.mxu0 0
        %3389 = vmatprep.subr.bf16.mxu0 0
        %3390 = vmatpush1.bf16.xpose.msra.mxu0 0
        %3391 = vmatprep.subr.bf16.mxu0 0
        %3392 = vmatpush1.bf16.xpose.msra.mxu0 0
        %3393 = vmatprep.subr.bf16.mxu0 0
        %3394 = vmatpush1.bf16.xpose.msra.mxu0 0
        %3395 = vmatprep.mubr.bf16.mxu0 0
        %3396 = vmatmul.mubr.bf16.gmra.mrb[0].mxu0 %v3358
        %v3397 = vpop.f32.mrb[0].mxu0
        %v3398 = vadd.f32 0.0, %v3397
        %v3399 = vpop.f32.mrb[0].mxu0
        %v3400 = vpop.f32.mrb[0].mxu0
        %v3401 = vpop.f32.mrb[0].mxu0
        %3402 = vdwg.mxu0
        %v3404 = vsel %vm1082, %v2978, 0
        %v3407 = vsel %vm1082, %v2627, 0
        %3409 = vmatprep.subr.bf16.mxu0 0
        %3410 = vmatpush1.bf16.xpose.msra.mxu0 %v3407
        %3411 = vmatprep.subr.bf16.mxu0 0
        %3412 = vmatpush1.bf16.xpose.msra.mxu0 0
        %3413 = vmatprep.subr.bf16.mxu0 0
        %3414 = vmatpush1.bf16.xpose.msra.mxu0 0
        %3415 = vmatprep.subr.bf16.mxu0 0
        %3416 = vmatpush1.bf16.xpose.msra.mxu0 0
        %3417 = vmatprep.subr.bf16.mxu0 0
        %3418 = vmatpush1.bf16.xpose.msra.mxu0 0
        %3419 = vmatprep.subr.bf16.mxu0 0
        %3420 = vmatpush1.bf16.xpose.msra.mxu0 0
        %3421 = vmatprep.subr.bf16.mxu0 0
        %3422 = vmatpush1.bf16.xpose.msra.mxu0 0
        %3423 = vmatprep.subr.bf16.mxu0 0
        %3424 = vmatpush1.bf16.xpose.msra.mxu0 0
        %3425 = vmatprep.subr.bf16.mxu0 0
        %3426 = vmatpush1.bf16.xpose.msra.mxu0 0
        %3427 = vmatprep.subr.bf16.mxu0 0
        %3428 = vmatpush1.bf16.xpose.msra.mxu0 0
        %3429 = vmatprep.subr.bf16.mxu0 0
        %3430 = vmatpush1.bf16.xpose.msra.mxu0 0
        %3431 = vmatprep.subr.bf16.mxu0 0
        %3432 = vmatpush1.bf16.xpose.msra.mxu0 0
        %3433 = vmatprep.subr.bf16.mxu0 0
        %3434 = vmatpush1.bf16.xpose.msra.mxu0 0
        %3435 = vmatprep.subr.bf16.mxu0 0
        %3436 = vmatpush1.bf16.xpose.msra.mxu0 0
        %3437 = vmatprep.subr.bf16.mxu0 0
        %3438 = vmatpush1.bf16.xpose.msra.mxu0 0
        %3439 = vmatprep.subr.bf16.mxu0 0
        %3440 = vmatpush1.bf16.xpose.msra.mxu0 0
        %3441 = vmatprep.mubr.bf16.mxu0 0
        %3442 = vmatmul.mubr.bf16.gmra.mrb[0].mxu0 %v3404
        %v3443 = vpop.f32.mrb[0].mxu0
        %v3444 = vadd.f32 0.0, %v3443
        %v3445 = vpop.f32.mrb[0].mxu0
        %v3446 = vpop.f32.mrb[0].mxu0
        %v3447 = vpop.f32.mrb[0].mxu0
        %3448 = vdwg.mxu0
        %v3450 = vsel %vm1082, %v2979, 0
        %v3453 = vsel %vm1082, %v2628, 0
        %3455 = vmatprep.subr.bf16.mxu0 0
        %3456 = vmatpush1.bf16.xpose.msra.mxu0 %v3453
        %3457 = vmatprep.subr.bf16.mxu0 0
        %3458 = vmatpush1.bf16.xpose.msra.mxu0 0
        %3459 = vmatprep.subr.bf16.mxu0 0
        %3460 = vmatpush1.bf16.xpose.msra.mxu0 0
        %3461 = vmatprep.subr.bf16.mxu0 0
        %3462 = vmatpush1.bf16.xpose.msra.mxu0 0
        %3463 = vmatprep.subr.bf16.mxu0 0
        %3464 = vmatpush1.bf16.xpose.msra.mxu0 0
        %3465 = vmatprep.subr.bf16.mxu0 0
        %3466 = vmatpush1.bf16.xpose.msra.mxu0 0
        %3467 = vmatprep.subr.bf16.mxu0 0
        %3468 = vmatpush1.bf16.xpose.msra.mxu0 0
        %3469 = vmatprep.subr.bf16.mxu0 0
        %3470 = vmatpush1.bf16.xpose.msra.mxu0 0
        %3471 = vmatprep.subr.bf16.mxu0 0
        %3472 = vmatpush1.bf16.xpose.msra.mxu0 0
        %3473 = vmatprep.subr.bf16.mxu0 0
        %3474 = vmatpush1.bf16.xpose.msra.mxu0 0
        %3475 = vmatprep.subr.bf16.mxu0 0
        %3476 = vmatpush1.bf16.xpose.msra.mxu0 0
        %3477 = vmatprep.subr.bf16.mxu0 0
        %3478 = vmatpush1.bf16.xpose.msra.mxu0 0
        %3479 = vmatprep.subr.bf16.mxu0 0
        %3480 = vmatpush1.bf16.xpose.msra.mxu0 0
        %3481 = vmatprep.subr.bf16.mxu0 0
        %3482 = vmatpush1.bf16.xpose.msra.mxu0 0
        %3483 = vmatprep.subr.bf16.mxu0 0
        %3484 = vmatpush1.bf16.xpose.msra.mxu0 0
        %3485 = vmatprep.subr.bf16.mxu0 0
        %3486 = vmatpush1.bf16.xpose.msra.mxu0 0
        %3487 = vmatprep.mubr.bf16.mxu0 0
        %3488 = vmatmul.mubr.bf16.gmra.mrb[0].mxu0 %v3450
        %v3489 = vpop.f32.mrb[0].mxu0
        %v3490 = vadd.f32 0.0, %v3489
        %v3491 = vpop.f32.mrb[0].mxu0
        %v3492 = vpop.f32.mrb[0].mxu0
        %v3493 = vpop.f32.mrb[0].mxu0
        %3494 = vdwg.mxu0
        %v3496 = vsel %vm1082, %v2980, 0
        %v3499 = vsel %vm1082, %v2629, 0
        %3501 = vmatprep.subr.bf16.mxu0 0
        %3502 = vmatpush1.bf16.xpose.msra.mxu0 %v3499
        %3503 = vmatprep.subr.bf16.mxu0 0
        %3504 = vmatpush1.bf16.xpose.msra.mxu0 0
        %3505 = vmatprep.subr.bf16.mxu0 0
        %3506 = vmatpush1.bf16.xpose.msra.mxu0 0
        %3507 = vmatprep.subr.bf16.mxu0 0
        %3508 = vmatpush1.bf16.xpose.msra.mxu0 0
        %3509 = vmatprep.subr.bf16.mxu0 0
        %3510 = vmatpush1.bf16.xpose.msra.mxu0 0
        %3511 = vmatprep.subr.bf16.mxu0 0
        %3512 = vmatpush1.bf16.xpose.msra.mxu0 0
        %3513 = vmatprep.subr.bf16.mxu0 0
        %3514 = vmatpush1.bf16.xpose.msra.mxu0 0
        %3515 = vmatprep.subr.bf16.mxu0 0
        %3516 = vmatpush1.bf16.xpose.msra.mxu0 0
        %3517 = vmatprep.subr.bf16.mxu0 0
        %3518 = vmatpush1.bf16.xpose.msra.mxu0 0
        %3519 = vmatprep.subr.bf16.mxu0 0
        %3520 = vmatpush1.bf16.xpose.msra.mxu0 0
        %3521 = vmatprep.subr.bf16.mxu0 0
        %3522 = vmatpush1.bf16.xpose.msra.mxu0 0
        %3523 = vmatprep.subr.bf16.mxu0 0
        %3524 = vmatpush1.bf16.xpose.msra.mxu0 0
        %3525 = vmatprep.subr.bf16.mxu0 0
        %3526 = vmatpush1.bf16.xpose.msra.mxu0 0
        %3527 = vmatprep.subr.bf16.mxu0 0
        %3528 = vmatpush1.bf16.xpose.msra.mxu0 0
        %3529 = vmatprep.subr.bf16.mxu0 0
        %3530 = vmatpush1.bf16.xpose.msra.mxu0 0
        %3531 = vmatprep.subr.bf16.mxu0 0
        %3532 = vmatpush1.bf16.xpose.msra.mxu0 0
        %3533 = vmatprep.mubr.bf16.mxu0 0
        %3534 = vmatmul.mubr.bf16.gmra.mrb[0].mxu0 %v3496
        %v3535 = vpop.f32.mrb[0].mxu0
        %v3536 = vadd.f32 0.0, %v3535
        %v3537 = vpop.f32.mrb[0].mxu0
        %v3538 = vpop.f32.mrb[0].mxu0
        %v3539 = vpop.f32.mrb[0].mxu0
        %3540 = vdwg.mxu0
        %v3541 = vmul.f32 %v3214, 0.25
        %v3542 = vmul.f32 %v3260, 0.25
        %v3543 = vmul.f32 %v3306, 0.25
        %v3544 = vmul.f32 %v3352, 0.25
        %v3545 = vmul.f32 %v3398, 0.25
        %v3546 = vmul.f32 %v3444, 0.25
        %v3547 = vmul.f32 %v3490, 0.25
        %v3548 = vmul.f32 %v3536, 0.25
        %v3550 = vcombine.high %v1885, %v1885
        %v3552 = vunpack.c.l.s4 1966171168
        %v3553 = vunpack.c.0.s8 %v3552
        %v3554 = vlaneseq
        %v3555 = vshrl.u32 %v3554, 7
        %v3556 = vsub.s32 %v3553, %v3555
        %v3557 = vrot.slane %v1885, %v3556
        %v3559 = vunpack.c.l.s4 1966171168
        %v3560 = vunpack.c.0.s8 %v3559
        %v3561 = vlaneseq
        %v3562 = vshrl.u32 %v3561, 7
        %v3563 = vsub.s32 %v3560, %v3562
        %v3564 = vrot.slane %v3550, %v3563
        %v3565 = vcombine.high %v3557, %v3557
        %v3566 = vcombine.high %v3564, %v3564
        %v3568 = vunpack.c.l.s4 1966171168
        %v3569 = vunpack.c.0.s8 %v3568
        %v3570 = vlaneseq
        %v3571 = vshrl.u32 %v3570, 7
        %v3572 = vsub.s32 %v3569, %v3571
        %v3573 = vrot.slane %v3557, %v3572
        %v3575 = vunpack.c.l.s4 1966171168
        %v3576 = vunpack.c.0.s8 %v3575
        %v3577 = vlaneseq
        %v3578 = vshrl.u32 %v3577, 7
        %v3579 = vsub.s32 %v3576, %v3578
        %v3580 = vrot.slane %v3564, %v3579
        %v3582 = vunpack.c.l.s4 1966171168
        %v3583 = vunpack.c.0.s8 %v3582
        %v3584 = vlaneseq
        %v3585 = vshrl.u32 %v3584, 7
        %v3586 = vsub.s32 %v3583, %v3585
        %v3587 = vrot.slane %v3565, %v3586
        %v3589 = vunpack.c.l.s4 1966171168
        %v3590 = vunpack.c.0.s8 %v3589
        %v3591 = vlaneseq
        %v3592 = vshrl.u32 %v3591, 7
        %v3593 = vsub.s32 %v3590, %v3592
        %v3594 = vrot.slane %v3566, %v3593
        %v3595 = vcombine.high %v3573, %v3573
        %v3596 = vcombine.high %v3580, %v3580
        %v3597 = vcombine.high %v3587, %v3587
        %v3598 = vcombine.high %v3594, %v3594
        %v3599 = vlaneseq
        %v3600 = vshrl.u32 %v3599, 7
        %v3601 = vsub.s32 0, %v3600
        %v3602 = vrot.slane %v3573, %v3601
        %v3603 = vlaneseq
        %v3604 = vshrl.u32 %v3603, 7
        %v3605 = vsub.s32 0, %v3604
        %v3606 = vrot.slane %v3587, %v3605
        %v3607 = vlaneseq
        %v3608 = vshrl.u32 %v3607, 7
        %v3609 = vsub.s32 0, %v3608
        %v3610 = vrot.slane %v3595, %v3609
        %v3611 = vlaneseq
        %v3612 = vshrl.u32 %v3611, 7
        %v3613 = vsub.s32 0, %v3612
        %v3614 = vrot.slane %v3597, %v3613
        %v3615 = vlaneseq
        %v3616 = vshrl.u32 %v3615, 7
        %v3617 = vsub.s32 0, %v3616
        %v3618 = vrot.slane %v3580, %v3617
        %v3619 = vlaneseq
        %v3620 = vshrl.u32 %v3619, 7
        %v3621 = vsub.s32 0, %v3620
        %v3622 = vrot.slane %v3594, %v3621
        %v3623 = vlaneseq
        %v3624 = vshrl.u32 %v3623, 7
        %v3625 = vsub.s32 0, %v3624
        %v3626 = vrot.slane %v3596, %v3625
        %v3627 = vlaneseq
        %v3628 = vshrl.u32 %v3627, 7
        %v3629 = vsub.s32 0, %v3628
        %v3630 = vrot.slane %v3598, %v3629
        %v3639 = vadd.f32 %v3541, %v3602
        %v3640 = vadd.f32 %v3542, %v3606
        %v3641 = vadd.f32 %v3543, %v3610
        %v3642 = vadd.f32 %v3544, %v3614
        %v3643 = vadd.f32 %v3545, %v3618
        %v3644 = vadd.f32 %v3546, %v3622
        %v3645 = vadd.f32 %v3547, %v3626
        %v3646 = vadd.f32 %v3548, %v3630
        %vm3647 = vcmask 46080
        %v3648 = vsel %vm3647, %v3639, -inf
        %3649 = vmax.xlane.f32.xlu0 %v3648
        %v3650 = vpop.xlane.xlu0 %3649
        %v3651 = vsel %vm3647, %v3640, -inf
        %3652 = vmax.xlane.f32.xlu0 %v3651
        %v3653 = vpop.xlane.xlu0 %3652
        %v3654 = vsel %vm3647, %v3641, -inf
        %3655 = vmax.xlane.f32.xlu0 %v3654
        %v3656 = vpop.xlane.xlu0 %3655
        %v3657 = vsel %vm3647, %v3642, -inf
        %3658 = vmax.xlane.f32.xlu0 %v3657
        %v3659 = vpop.xlane.xlu0 %3658
        %v3660 = vsel %vm3647, %v3643, -inf
        %3661 = vmax.xlane.f32.xlu0 %v3660
        %v3662 = vpop.xlane.xlu0 %3661
        %v3663 = vsel %vm3647, %v3644, -inf
        %3664 = vmax.xlane.f32.xlu0 %v3663
        %v3665 = vpop.xlane.xlu0 %3664
        %v3666 = vsel %vm3647, %v3645, -inf
        %3667 = vmax.xlane.f32.xlu0 %v3666
        %v3668 = vpop.xlane.xlu0 %3667
        %v3669 = vsel %vm3647, %v3646, -inf
        %3670 = vmax.xlane.f32.xlu0 %v3669
        %v3671 = vpop.xlane.xlu0 %3670
        %v3672 = vsub.f32 %v3639, %v3650
        %v3673 = vsub.f32 %v3640, %v3653
        %v3674 = vsub.f32 %v3641, %v3656
        %v3675 = vsub.f32 %v3642, %v3659
        %v3676 = vsub.f32 %v3643, %v3662
        %v3677 = vsub.f32 %v3644, %v3665
        %v3678 = vsub.f32 %v3645, %v3668
        %v3679 = vsub.f32 %v3646, %v3671
        %v3680 = vmul.f32 %v3672, 1.442695
        %v3681 = vpow.pop %v3680
        %v3682 = vmul.f32 %v3673, 1.442695
        %v3683 = vpow.pop %v3682
        %v3684 = vmul.f32 %v3674, 1.442695
        %v3685 = vpow.pop %v3684
        %v3686 = vmul.f32 %v3675, 1.442695
        %v3687 = vpow.pop %v3686
        %v3688 = vmul.f32 %v3676, 1.442695
        %v3689 = vpow.pop %v3688
        %v3690 = vmul.f32 %v3677, 1.442695
        %v3691 = vpow.pop %v3690
        %v3692 = vmul.f32 %v3678, 1.442695
        %v3693 = vpow.pop %v3692
        %v3694 = vmul.f32 %v3679, 1.442695
        %v3695 = vpow.pop %v3694
        %v3696 = vsel %vm3647, %v3681, 0.0
        %3697 = vadd.xlane.f32.xlu0 %v3696
        %v3698 = vpop.xlane.xlu0 %3697
        %v3699 = vsel %vm3647, %v3683, 0.0
        %3700 = vadd.xlane.f32.xlu0 %v3699
        %v3701 = vpop.xlane.xlu0 %3700
        %v3702 = vsel %vm3647, %v3685, 0.0
        %3703 = vadd.xlane.f32.xlu0 %v3702
        %v3704 = vpop.xlane.xlu0 %3703
        %v3705 = vsel %vm3647, %v3687, 0.0
        %3706 = vadd.xlane.f32.xlu0 %v3705
        %v3707 = vpop.xlane.xlu0 %3706
        %v3708 = vsel %vm3647, %v3689, 0.0
        %3709 = vadd.xlane.f32.xlu0 %v3708
        %v3710 = vpop.xlane.xlu0 %3709
        %v3711 = vsel %vm3647, %v3691, 0.0
        %3712 = vadd.xlane.f32.xlu0 %v3711
        %v3713 = vpop.xlane.xlu0 %3712
        %v3714 = vsel %vm3647, %v3693, 0.0
        %3715 = vadd.xlane.f32.xlu0 %v3714
        %v3716 = vpop.xlane.xlu0 %3715
        %v3717 = vsel %vm3647, %v3695, 0.0
        %3718 = vadd.xlane.f32.xlu0 %v3717
        %v3719 = vpop.xlane.xlu0 %3718
        %v3720 = vrcp.pop %v3698
        %v3721 = vrcp.pop %v3701
        %v3722 = vrcp.pop %v3704
        %v3723 = vrcp.pop %v3707
        %v3724 = vrcp.pop %v3710
        %v3725 = vrcp.pop %v3713
        %v3726 = vrcp.pop %v3716
        %v3727 = vrcp.pop %v3719
        %v3728 = vmul.f32 %v3681, %v3720
        %v3729 = vmul.f32 %v3683, %v3721
        %v3730 = vmul.f32 %v3685, %v3722
        %v3731 = vmul.f32 %v3687, %v3723
        %v3732 = vmul.f32 %v3689, %v3724
        %v3733 = vmul.f32 %v3691, %v3725
        %v3734 = vmul.f32 %v3693, %v3726
        %v3735 = vmul.f32 %v3695, %v3727
        %v3736 = vpack.c.bf16 %v3728, %v3728
        %v3737 = vpack.c.bf16 %v3729, %v3729
        %v3738 = vpack.c.bf16 %v3730, %v3730
        %v3739 = vpack.c.bf16 %v3731, %v3731
        %v3740 = vpack.c.bf16 %v3732, %v3732
        %v3741 = vpack.c.bf16 %v3733, %v3733
        %v3742 = vpack.c.bf16 %v3734, %v3734
        %v3743 = vpack.c.bf16 %v3735, %v3735
        %vm3744 = vcmp.ge.s32.totalorder %v2763, 16
        %vm3745 = vcmp.lt.s32.totalorder %v2763, 32
        %vm3746 = vmand %vm3744, %vm3745
        %v3747 = vsel %vm3746, 1, 0
        %v3748 = vcvt.s32.f32 %v3747
        %v3750 = vcombine.high %v3748, %v3748
        %v3752 = vunpack.c.l.s4 1983009808
        %v3753 = vunpack.c.0.s8 %v3752
        %v3754 = vlaneseq
        %v3755 = vshrl.u32 %v3754, 7
        %v3756 = vsub.s32 %v3753, %v3755
        %v3757 = vrot.slane %v3748, %v3756
        %v3759 = vunpack.c.l.s4 1983009808
        %v3760 = vunpack.c.0.s8 %v3759
        %v3761 = vlaneseq
        %v3762 = vshrl.u32 %v3761, 7
        %v3763 = vsub.s32 %v3760, %v3762
        %v3764 = vrot.slane %v3750, %v3763
        %v3765 = vcombine.high %v3757, %v3757
        %v3769 = vmul.f32 %v2259, %v3757
        %v3770 = vmul.f32 %v2267, %v3765
        %v3771 = vmul.f32 %v2266, %v3764
        %v3772 = vmul.f32 %v2268, %v3757
        %v3773 = vmul.f32 %v2276, %v3765
        %v3774 = vmul.f32 %v2284, %v3764
        %v3775 = vmul.f32 %v2283, %v3757
        %v3776 = vmul.f32 %v2285, %v3765
        %v3777 = vmul.f32 %v2293, %v3764
        %v3778 = vmul.f32 %v2301, %v3757
        %v3779 = vmul.f32 %v2300, %v3765
        %v3780 = vmul.f32 %v2302, %v3764
        %v3781 = vmul.f32 %v2310, %v3757
        %v3782 = vmul.f32 %v2318, %v3765
        %v3783 = vmul.f32 %v2317, %v3764
        %v3784 = vmul.f32 %v2319, %v3757
        %v3785 = vmul.f32 %v2327, %v3765
        %v3786 = vmul.f32 %v2335, %v3764
        %v3787 = vmul.f32 %v2334, %v3757
        %v3788 = vmul.f32 %v2336, %v3765
        %v3789 = vmul.f32 %v2344, %v3764
        %v3790 = vmul.f32 %v2352, %v3757
        %v3791 = vmul.f32 %v2351, %v3765
        %v3792 = vmul.f32 %v2353, %v3764
        %v3817 = vcombine.low %v3769, %v3770
        %v3819 = vunpack.c.l.s4 1983009808
        %v3820 = vunpack.c.0.s8 %v3819
        %v3821 = vlaneseq
        %v3822 = vshrl.u32 %v3821, 7
        %v3823 = vsub.s32 %v3820, %v3822
        %v3824 = vrot.slane %v3817, %v3823
        %v3826 = vunpack.c.l.s4 1983009808
        %v3827 = vunpack.c.0.s8 %v3826
        %v3828 = vlaneseq
        %v3829 = vshrl.u32 %v3828, 7
        %v3830 = vsub.s32 %v3827, %v3829
        %v3831 = vrot.slane %v3771, %v3830
        %v3832 = vcombine.low %v3824, %v3831
        %v3833 = vcombine.low %v3772, %v3773
        %v3835 = vunpack.c.l.s4 1983009808
        %v3836 = vunpack.c.0.s8 %v3835
        %v3837 = vlaneseq
        %v3838 = vshrl.u32 %v3837, 7
        %v3839 = vsub.s32 %v3836, %v3838
        %v3840 = vrot.slane %v3833, %v3839
        %v3842 = vunpack.c.l.s4 1983009808
        %v3843 = vunpack.c.0.s8 %v3842
        %v3844 = vlaneseq
        %v3845 = vshrl.u32 %v3844, 7
        %v3846 = vsub.s32 %v3843, %v3845
        %v3847 = vrot.slane %v3774, %v3846
        %v3848 = vcombine.low %v3840, %v3847
        %v3849 = vcombine.low %v3775, %v3776
        %v3851 = vunpack.c.l.s4 1983009808
        %v3852 = vunpack.c.0.s8 %v3851
        %v3853 = vlaneseq
        %v3854 = vshrl.u32 %v3853, 7
        %v3855 = vsub.s32 %v3852, %v3854
        %v3856 = vrot.slane %v3849, %v3855
        %v3858 = vunpack.c.l.s4 1983009808
        %v3859 = vunpack.c.0.s8 %v3858
        %v3860 = vlaneseq
        %v3861 = vshrl.u32 %v3860, 7
        %v3862 = vsub.s32 %v3859, %v3861
        %v3863 = vrot.slane %v3777, %v3862
        %v3864 = vcombine.low %v3856, %v3863
        %v3865 = vcombine.low %v3778, %v3779
        %v3867 = vunpack.c.l.s4 1983009808
        %v3868 = vunpack.c.0.s8 %v3867
        %v3869 = vlaneseq
        %v3870 = vshrl.u32 %v3869, 7
        %v3871 = vsub.s32 %v3868, %v3870
        %v3872 = vrot.slane %v3865, %v3871
        %v3874 = vunpack.c.l.s4 1983009808
        %v3875 = vunpack.c.0.s8 %v3874
        %v3876 = vlaneseq
        %v3877 = vshrl.u32 %v3876, 7
        %v3878 = vsub.s32 %v3875, %v3877
        %v3879 = vrot.slane %v3780, %v3878
        %v3880 = vcombine.low %v3872, %v3879
        %v3881 = vcombine.low %v3781, %v3782
        %v3883 = vunpack.c.l.s4 1983009808
        %v3884 = vunpack.c.0.s8 %v3883
        %v3885 = vlaneseq
        %v3886 = vshrl.u32 %v3885, 7
        %v3887 = vsub.s32 %v3884, %v3886
        %v3888 = vrot.slane %v3881, %v3887
        %v3890 = vunpack.c.l.s4 1983009808
        %v3891 = vunpack.c.0.s8 %v3890
        %v3892 = vlaneseq
        %v3893 = vshrl.u32 %v3892, 7
        %v3894 = vsub.s32 %v3891, %v3893
        %v3895 = vrot.slane %v3783, %v3894
        %v3896 = vcombine.low %v3888, %v3895
        %v3897 = vcombine.low %v3784, %v3785
        %v3899 = vunpack.c.l.s4 1983009808
        %v3900 = vunpack.c.0.s8 %v3899
        %v3901 = vlaneseq
        %v3902 = vshrl.u32 %v3901, 7
        %v3903 = vsub.s32 %v3900, %v3902
        %v3904 = vrot.slane %v3897, %v3903
        %v3906 = vunpack.c.l.s4 1983009808
        %v3907 = vunpack.c.0.s8 %v3906
        %v3908 = vlaneseq
        %v3909 = vshrl.u32 %v3908, 7
        %v3910 = vsub.s32 %v3907, %v3909
        %v3911 = vrot.slane %v3786, %v3910
        %v3912 = vcombine.low %v3904, %v3911
        %v3913 = vcombine.low %v3787, %v3788
        %v3915 = vunpack.c.l.s4 1983009808
        %v3916 = vunpack.c.0.s8 %v3915
        %v3917 = vlaneseq
        %v3918 = vshrl.u32 %v3917, 7
        %v3919 = vsub.s32 %v3916, %v3918
        %v3920 = vrot.slane %v3913, %v3919
        %v3922 = vunpack.c.l.s4 1983009808
        %v3923 = vunpack.c.0.s8 %v3922
        %v3924 = vlaneseq
        %v3925 = vshrl.u32 %v3924, 7
        %v3926 = vsub.s32 %v3923, %v3925
        %v3927 = vrot.slane %v3789, %v3926
        %v3928 = vcombine.low %v3920, %v3927
        %v3929 = vcombine.low %v3790, %v3791
        %v3931 = vunpack.c.l.s4 1983009808
        %v3932 = vunpack.c.0.s8 %v3931
        %v3933 = vlaneseq
        %v3934 = vshrl.u32 %v3933, 7
        %v3935 = vsub.s32 %v3932, %v3934
        %v3936 = vrot.slane %v3929, %v3935
        %v3938 = vunpack.c.l.s4 1983009808
        %v3939 = vunpack.c.0.s8 %v3938
        %v3940 = vlaneseq
        %v3941 = vshrl.u32 %v3940, 7
        %v3942 = vsub.s32 %v3939, %v3941
        %v3943 = vrot.slane %v3792, %v3942
        %v3944 = vcombine.low %v3936, %v3943
        %v3953 = vpack.c.bf16 %v3832, %v3832
        %v3954 = vpack.c.bf16 %v3848, %v3848
        %v3955 = vpack.c.bf16 %v3864, %v3864
        %v3956 = vpack.c.bf16 %v3880, %v3880
        %v3957 = vpack.c.bf16 %v3896, %v3896
        %v3958 = vpack.c.bf16 %v3912, %v3912
        %v3959 = vpack.c.bf16 %v3928, %v3928
        %v3960 = vpack.c.bf16 %v3944, %v3944
        %v3961 = vmul.f32 %v2643, %v3757
        %v3962 = vmul.f32 %v2651, %v3765
        %v3963 = vmul.f32 %v2650, %v3764
        %v3964 = vmul.f32 %v2652, %v3757
        %v3965 = vmul.f32 %v2660, %v3765
        %v3966 = vmul.f32 %v2668, %v3764
        %v3967 = vmul.f32 %v2667, %v3757
        %v3968 = vmul.f32 %v2669, %v3765
        %v3969 = vmul.f32 %v2677, %v3764
        %v3970 = vmul.f32 %v2685, %v3757
        %v3971 = vmul.f32 %v2684, %v3765
        %v3972 = vmul.f32 %v2686, %v3764
        %v3973 = vmul.f32 %v2694, %v3757
        %v3974 = vmul.f32 %v2702, %v3765
        %v3975 = vmul.f32 %v2701, %v3764
        %v3976 = vmul.f32 %v2703, %v3757
        %v3977 = vmul.f32 %v2711, %v3765
        %v3978 = vmul.f32 %v2719, %v3764
        %v3979 = vmul.f32 %v2718, %v3757
        %v3980 = vmul.f32 %v2720, %v3765
        %v3981 = vmul.f32 %v2728, %v3764
        %v3982 = vmul.f32 %v2736, %v3757
        %v3983 = vmul.f32 %v2735, %v3765
        %v3984 = vmul.f32 %v2737, %v3764
        %v4009 = vcombine.low %v3961, %v3962
        %v4011 = vunpack.c.l.s4 1983009808
        %v4012 = vunpack.c.0.s8 %v4011
        %v4013 = vlaneseq
        %v4014 = vshrl.u32 %v4013, 7
        %v4015 = vsub.s32 %v4012, %v4014
        %v4016 = vrot.slane %v4009, %v4015
        %v4018 = vunpack.c.l.s4 1983009808
        %v4019 = vunpack.c.0.s8 %v4018
        %v4020 = vlaneseq
        %v4021 = vshrl.u32 %v4020, 7
        %v4022 = vsub.s32 %v4019, %v4021
        %v4023 = vrot.slane %v3963, %v4022
        %v4024 = vcombine.low %v4016, %v4023
        %v4025 = vcombine.low %v3964, %v3965
        %v4027 = vunpack.c.l.s4 1983009808
        %v4028 = vunpack.c.0.s8 %v4027
        %v4029 = vlaneseq
        %v4030 = vshrl.u32 %v4029, 7
        %v4031 = vsub.s32 %v4028, %v4030
        %v4032 = vrot.slane %v4025, %v4031
        %v4034 = vunpack.c.l.s4 1983009808
        %v4035 = vunpack.c.0.s8 %v4034
        %v4036 = vlaneseq
        %v4037 = vshrl.u32 %v4036, 7
        %v4038 = vsub.s32 %v4035, %v4037
        %v4039 = vrot.slane %v3966, %v4038
        %v4040 = vcombine.low %v4032, %v4039
        %v4041 = vcombine.low %v3967, %v3968
        %v4043 = vunpack.c.l.s4 1983009808
        %v4044 = vunpack.c.0.s8 %v4043
        %v4045 = vlaneseq
        %v4046 = vshrl.u32 %v4045, 7
        %v4047 = vsub.s32 %v4044, %v4046
        %v4048 = vrot.slane %v4041, %v4047
        %v4050 = vunpack.c.l.s4 1983009808
        %v4051 = vunpack.c.0.s8 %v4050
        %v4052 = vlaneseq
        %v4053 = vshrl.u32 %v4052, 7
        %v4054 = vsub.s32 %v4051, %v4053
        %v4055 = vrot.slane %v3969, %v4054
        %v4056 = vcombine.low %v4048, %v4055
        %v4057 = vcombine.low %v3970, %v3971
        %v4059 = vunpack.c.l.s4 1983009808
        %v4060 = vunpack.c.0.s8 %v4059
        %v4061 = vlaneseq
        %v4062 = vshrl.u32 %v4061, 7
        %v4063 = vsub.s32 %v4060, %v4062
        %v4064 = vrot.slane %v4057, %v4063
        %v4066 = vunpack.c.l.s4 1983009808
        %v4067 = vunpack.c.0.s8 %v4066
        %v4068 = vlaneseq
        %v4069 = vshrl.u32 %v4068, 7
        %v4070 = vsub.s32 %v4067, %v4069
        %v4071 = vrot.slane %v3972, %v4070
        %v4072 = vcombine.low %v4064, %v4071
        %v4073 = vcombine.low %v3973, %v3974
        %v4075 = vunpack.c.l.s4 1983009808
        %v4076 = vunpack.c.0.s8 %v4075
        %v4077 = vlaneseq
        %v4078 = vshrl.u32 %v4077, 7
        %v4079 = vsub.s32 %v4076, %v4078
        %v4080 = vrot.slane %v4073, %v4079
        %v4082 = vunpack.c.l.s4 1983009808
        %v4083 = vunpack.c.0.s8 %v4082
        %v4084 = vlaneseq
        %v4085 = vshrl.u32 %v4084, 7
        %v4086 = vsub.s32 %v4083, %v4085
        %v4087 = vrot.slane %v3975, %v4086
        %v4088 = vcombine.low %v4080, %v4087
        %v4089 = vcombine.low %v3976, %v3977
        %v4091 = vunpack.c.l.s4 1983009808
        %v4092 = vunpack.c.0.s8 %v4091
        %v4093 = vlaneseq
        %v4094 = vshrl.u32 %v4093, 7
        %v4095 = vsub.s32 %v4092, %v4094
        %v4096 = vrot.slane %v4089, %v4095
        %v4098 = vunpack.c.l.s4 1983009808
        %v4099 = vunpack.c.0.s8 %v4098
        %v4100 = vlaneseq
        %v4101 = vshrl.u32 %v4100, 7
        %v4102 = vsub.s32 %v4099, %v4101
        %v4103 = vrot.slane %v3978, %v4102
        %v4104 = vcombine.low %v4096, %v4103
        %v4105 = vcombine.low %v3979, %v3980
        %v4107 = vunpack.c.l.s4 1983009808
        %v4108 = vunpack.c.0.s8 %v4107
        %v4109 = vlaneseq
        %v4110 = vshrl.u32 %v4109, 7
        %v4111 = vsub.s32 %v4108, %v4110
        %v4112 = vrot.slane %v4105, %v4111
        %v4114 = vunpack.c.l.s4 1983009808
        %v4115 = vunpack.c.0.s8 %v4114
        %v4116 = vlaneseq
        %v4117 = vshrl.u32 %v4116, 7
        %v4118 = vsub.s32 %v4115, %v4117
        %v4119 = vrot.slane %v3981, %v4118
        %v4120 = vcombine.low %v4112, %v4119
        %v4121 = vcombine.low %v3982, %v3983
        %v4123 = vunpack.c.l.s4 1983009808
        %v4124 = vunpack.c.0.s8 %v4123
        %v4125 = vlaneseq
        %v4126 = vshrl.u32 %v4125, 7
        %v4127 = vsub.s32 %v4124, %v4126
        %v4128 = vrot.slane %v4121, %v4127
        %v4130 = vunpack.c.l.s4 1983009808
        %v4131 = vunpack.c.0.s8 %v4130
        %v4132 = vlaneseq
        %v4133 = vshrl.u32 %v4132, 7
        %v4134 = vsub.s32 %v4131, %v4133
        %v4135 = vrot.slane %v3984, %v4134
        %v4136 = vcombine.low %v4128, %v4135
        %v4145 = vpack.c.bf16 %v4024, %v4024
        %v4146 = vpack.c.bf16 %v4040, %v4040
        %v4147 = vpack.c.bf16 %v4056, %v4056
        %v4148 = vpack.c.bf16 %v4072, %v4072
        %v4149 = vpack.c.bf16 %v4088, %v4088
        %v4150 = vpack.c.bf16 %v4104, %v4104
        %v4151 = vpack.c.bf16 %v4120, %v4120
        %v4152 = vpack.c.bf16 %v4136, %v4136
        %v4154 = vsel %vm1082, %v3953, 0
        %4156 = vmatprep.subr.bf16.mxu0 0
        %4157 = vmatpush1.bf16.xpose.msra.mxu0 %v3177
        %4158 = vmatprep.subr.bf16.mxu0 0
        %4159 = vmatpush1.bf16.xpose.msra.mxu0 0
        %4160 = vmatprep.subr.bf16.mxu0 0
        %4161 = vmatpush1.bf16.xpose.msra.mxu0 0
        %4162 = vmatprep.subr.bf16.mxu0 0
        %4163 = vmatpush1.bf16.xpose.msra.mxu0 0
        %4164 = vmatprep.subr.bf16.mxu0 0
        %4165 = vmatpush1.bf16.xpose.msra.mxu0 0
        %4166 = vmatprep.subr.bf16.mxu0 0
        %4167 = vmatpush1.bf16.xpose.msra.mxu0 0
        %4168 = vmatprep.subr.bf16.mxu0 0
        %4169 = vmatpush1.bf16.xpose.msra.mxu0 0
        %4170 = vmatprep.subr.bf16.mxu0 0
        %4171 = vmatpush1.bf16.xpose.msra.mxu0 0
        %4172 = vmatprep.subr.bf16.mxu0 0
        %4173 = vmatpush1.bf16.xpose.msra.mxu0 0
        %4174 = vmatprep.subr.bf16.mxu0 0
        %4175 = vmatpush1.bf16.xpose.msra.mxu0 0
        %4176 = vmatprep.subr.bf16.mxu0 0
        %4177 = vmatpush1.bf16.xpose.msra.mxu0 0
        %4178 = vmatprep.subr.bf16.mxu0 0
        %4179 = vmatpush1.bf16.xpose.msra.mxu0 0
        %4180 = vmatprep.subr.bf16.mxu0 0
        %4181 = vmatpush1.bf16.xpose.msra.mxu0 0
        %4182 = vmatprep.subr.bf16.mxu0 0
        %4183 = vmatpush1.bf16.xpose.msra.mxu0 0
        %4184 = vmatprep.subr.bf16.mxu0 0
        %4185 = vmatpush1.bf16.xpose.msra.mxu0 0
        %4186 = vmatprep.subr.bf16.mxu0 0
        %4187 = vmatpush1.bf16.xpose.msra.mxu0 0
        %4188 = vmatprep.mubr.bf16.mxu0 0
        %4189 = vmatmul.mubr.bf16.gmra.mrb[0].mxu0 %v4154
        %v4190 = vpop.f32.mrb[0].mxu0
        %v4191 = vadd.f32 0.0, %v4190
        %v4192 = vpop.f32.mrb[0].mxu0
        %v4193 = vpop.f32.mrb[0].mxu0
        %v4194 = vpop.f32.mrb[0].mxu0
        %4195 = vdwg.mxu0
        %v4197 = vsel %vm1082, %v3954, 0
        %4199 = vmatprep.subr.bf16.mxu0 0
        %4200 = vmatpush1.bf16.xpose.msra.mxu0 %v3223
        %4201 = vmatprep.subr.bf16.mxu0 0
        %4202 = vmatpush1.bf16.xpose.msra.mxu0 0
        %4203 = vmatprep.subr.bf16.mxu0 0
        %4204 = vmatpush1.bf16.xpose.msra.mxu0 0
        %4205 = vmatprep.subr.bf16.mxu0 0
        %4206 = vmatpush1.bf16.xpose.msra.mxu0 0
        %4207 = vmatprep.subr.bf16.mxu0 0
        %4208 = vmatpush1.bf16.xpose.msra.mxu0 0
        %4209 = vmatprep.subr.bf16.mxu0 0
        %4210 = vmatpush1.bf16.xpose.msra.mxu0 0
        %4211 = vmatprep.subr.bf16.mxu0 0
        %4212 = vmatpush1.bf16.xpose.msra.mxu0 0
        %4213 = vmatprep.subr.bf16.mxu0 0
        %4214 = vmatpush1.bf16.xpose.msra.mxu0 0
        %4215 = vmatprep.subr.bf16.mxu0 0
        %4216 = vmatpush1.bf16.xpose.msra.mxu0 0
        %4217 = vmatprep.subr.bf16.mxu0 0
        %4218 = vmatpush1.bf16.xpose.msra.mxu0 0
        %4219 = vmatprep.subr.bf16.mxu0 0
        %4220 = vmatpush1.bf16.xpose.msra.mxu0 0
        %4221 = vmatprep.subr.bf16.mxu0 0
        %4222 = vmatpush1.bf16.xpose.msra.mxu0 0
        %4223 = vmatprep.subr.bf16.mxu0 0
        %4224 = vmatpush1.bf16.xpose.msra.mxu0 0
        %4225 = vmatprep.subr.bf16.mxu0 0
        %4226 = vmatpush1.bf16.xpose.msra.mxu0 0
        %4227 = vmatprep.subr.bf16.mxu0 0
        %4228 = vmatpush1.bf16.xpose.msra.mxu0 0
        %4229 = vmatprep.subr.bf16.mxu0 0
        %4230 = vmatpush1.bf16.xpose.msra.mxu0 0
        %4231 = vmatprep.mubr.bf16.mxu0 0
        %4232 = vmatmul.mubr.bf16.gmra.mrb[0].mxu0 %v4197
        %v4233 = vpop.f32.mrb[0].mxu0
        %v4234 = vadd.f32 0.0, %v4233
        %v4235 = vpop.f32.mrb[0].mxu0
        %v4236 = vpop.f32.mrb[0].mxu0
        %v4237 = vpop.f32.mrb[0].mxu0
        %4238 = vdwg.mxu0
        %v4240 = vsel %vm1082, %v3955, 0
        %4242 = vmatprep.subr.bf16.mxu0 0
        %4243 = vmatpush1.bf16.xpose.msra.mxu0 %v3269
        %4244 = vmatprep.subr.bf16.mxu0 0
        %4245 = vmatpush1.bf16.xpose.msra.mxu0 0
        %4246 = vmatprep.subr.bf16.mxu0 0
        %4247 = vmatpush1.bf16.xpose.msra.mxu0 0
        %4248 = vmatprep.subr.bf16.mxu0 0
        %4249 = vmatpush1.bf16.xpose.msra.mxu0 0
        %4250 = vmatprep.subr.bf16.mxu0 0
        %4251 = vmatpush1.bf16.xpose.msra.mxu0 0
        %4252 = vmatprep.subr.bf16.mxu0 0
        %4253 = vmatpush1.bf16.xpose.msra.mxu0 0
        %4254 = vmatprep.subr.bf16.mxu0 0
        %4255 = vmatpush1.bf16.xpose.msra.mxu0 0
        %4256 = vmatprep.subr.bf16.mxu0 0
        %4257 = vmatpush1.bf16.xpose.msra.mxu0 0
        %4258 = vmatprep.subr.bf16.mxu0 0
        %4259 = vmatpush1.bf16.xpose.msra.mxu0 0
        %4260 = vmatprep.subr.bf16.mxu0 0
        %4261 = vmatpush1.bf16.xpose.msra.mxu0 0
        %4262 = vmatprep.subr.bf16.mxu0 0
        %4263 = vmatpush1.bf16.xpose.msra.mxu0 0
        %4264 = vmatprep.subr.bf16.mxu0 0
        %4265 = vmatpush1.bf16.xpose.msra.mxu0 0
        %4266 = vmatprep.subr.bf16.mxu0 0
        %4267 = vmatpush1.bf16.xpose.msra.mxu0 0
        %4268 = vmatprep.subr.bf16.mxu0 0
        %4269 = vmatpush1.bf16.xpose.msra.mxu0 0
        %4270 = vmatprep.subr.bf16.mxu0 0
        %4271 = vmatpush1.bf16.xpose.msra.mxu0 0
        %4272 = vmatprep.subr.bf16.mxu0 0
        %4273 = vmatpush1.bf16.xpose.msra.mxu0 0
        %4274 = vmatprep.mubr.bf16.mxu0 0
        %4275 = vmatmul.mubr.bf16.gmra.mrb[0].mxu0 %v4240
        %v4276 = vpop.f32.mrb[0].mxu0
        %v4277 = vadd.f32 0.0, %v4276
        %v4278 = vpop.f32.mrb[0].mxu0
        %v4279 = vpop.f32.mrb[0].mxu0
        %v4280 = vpop.f32.mrb[0].mxu0
        %4281 = vdwg.mxu0
        %v4283 = vsel %vm1082, %v3956, 0
        %4285 = vmatprep.subr.bf16.mxu0 0
        %4286 = vmatpush1.bf16.xpose.msra.mxu0 %v3315
        %4287 = vmatprep.subr.bf16.mxu0 0
        %4288 = vmatpush1.bf16.xpose.msra.mxu0 0
        %4289 = vmatprep.subr.bf16.mxu0 0
        %4290 = vmatpush1.bf16.xpose.msra.mxu0 0
        %4291 = vmatprep.subr.bf16.mxu0 0
        %4292 = vmatpush1.bf16.xpose.msra.mxu0 0
        %4293 = vmatprep.subr.bf16.mxu0 0
        %4294 = vmatpush1.bf16.xpose.msra.mxu0 0
        %4295 = vmatprep.subr.bf16.mxu0 0
        %4296 = vmatpush1.bf16.xpose.msra.mxu0 0
        %4297 = vmatprep.subr.bf16.mxu0 0
        %4298 = vmatpush1.bf16.xpose.msra.mxu0 0
        %4299 = vmatprep.subr.bf16.mxu0 0
        %4300 = vmatpush1.bf16.xpose.msra.mxu0 0
        %4301 = vmatprep.subr.bf16.mxu0 0
        %4302 = vmatpush1.bf16.xpose.msra.mxu0 0
        %4303 = vmatprep.subr.bf16.mxu0 0
        %4304 = vmatpush1.bf16.xpose.msra.mxu0 0
        %4305 = vmatprep.subr.bf16.mxu0 0
        %4306 = vmatpush1.bf16.xpose.msra.mxu0 0
        %4307 = vmatprep.subr.bf16.mxu0 0
        %4308 = vmatpush1.bf16.xpose.msra.mxu0 0
        %4309 = vmatprep.subr.bf16.mxu0 0
        %4310 = vmatpush1.bf16.xpose.msra.mxu0 0
        %4311 = vmatprep.subr.bf16.mxu0 0
        %4312 = vmatpush1.bf16.xpose.msra.mxu0 0
        %4313 = vmatprep.subr.bf16.mxu0 0
        %4314 = vmatpush1.bf16.xpose.msra.mxu0 0
        %4315 = vmatprep.subr.bf16.mxu0 0
        %4316 = vmatpush1.bf16.xpose.msra.mxu0 0
        %4317 = vmatprep.mubr.bf16.mxu0 0
        %4318 = vmatmul.mubr.bf16.gmra.mrb[0].mxu0 %v4283
        %v4319 = vpop.f32.mrb[0].mxu0
        %v4320 = vadd.f32 0.0, %v4319
        %v4321 = vpop.f32.mrb[0].mxu0
        %v4322 = vpop.f32.mrb[0].mxu0
        %v4323 = vpop.f32.mrb[0].mxu0
        %4324 = vdwg.mxu0
        %v4326 = vsel %vm1082, %v3957, 0
        %4328 = vmatprep.subr.bf16.mxu0 0
        %4329 = vmatpush1.bf16.xpose.msra.mxu0 %v3361
        %4330 = vmatprep.subr.bf16.mxu0 0
        %4331 = vmatpush1.bf16.xpose.msra.mxu0 0
        %4332 = vmatprep.subr.bf16.mxu0 0
        %4333 = vmatpush1.bf16.xpose.msra.mxu0 0
        %4334 = vmatprep.subr.bf16.mxu0 0
        %4335 = vmatpush1.bf16.xpose.msra.mxu0 0
        %4336 = vmatprep.subr.bf16.mxu0 0
        %4337 = vmatpush1.bf16.xpose.msra.mxu0 0
        %4338 = vmatprep.subr.bf16.mxu0 0
        %4339 = vmatpush1.bf16.xpose.msra.mxu0 0
        %4340 = vmatprep.subr.bf16.mxu0 0
        %4341 = vmatpush1.bf16.xpose.msra.mxu0 0
        %4342 = vmatprep.subr.bf16.mxu0 0
        %4343 = vmatpush1.bf16.xpose.msra.mxu0 0
        %4344 = vmatprep.subr.bf16.mxu0 0
        %4345 = vmatpush1.bf16.xpose.msra.mxu0 0
        %4346 = vmatprep.subr.bf16.mxu0 0
        %4347 = vmatpush1.bf16.xpose.msra.mxu0 0
        %4348 = vmatprep.subr.bf16.mxu0 0
        %4349 = vmatpush1.bf16.xpose.msra.mxu0 0
        %4350 = vmatprep.subr.bf16.mxu0 0
        %4351 = vmatpush1.bf16.xpose.msra.mxu0 0
        %4352 = vmatprep.subr.bf16.mxu0 0
        %4353 = vmatpush1.bf16.xpose.msra.mxu0 0
        %4354 = vmatprep.subr.bf16.mxu0 0
        %4355 = vmatpush1.bf16.xpose.msra.mxu0 0
        %4356 = vmatprep.subr.bf16.mxu0 0
        %4357 = vmatpush1.bf16.xpose.msra.mxu0 0
        %4358 = vmatprep.subr.bf16.mxu0 0
        %4359 = vmatpush1.bf16.xpose.msra.mxu0 0
        %4360 = vmatprep.mubr.bf16.mxu0 0
        %4361 = vmatmul.mubr.bf16.gmra.mrb[0].mxu0 %v4326
        %v4362 = vpop.f32.mrb[0].mxu0
        %v4363 = vadd.f32 0.0, %v4362
        %v4364 = vpop.f32.mrb[0].mxu0
        %v4365 = vpop.f32.mrb[0].mxu0
        %v4366 = vpop.f32.mrb[0].mxu0
        %4367 = vdwg.mxu0
        %v4369 = vsel %vm1082, %v3958, 0
        %4371 = vmatprep.subr.bf16.mxu0 0
        %4372 = vmatpush1.bf16.xpose.msra.mxu0 %v3407
        %4373 = vmatprep.subr.bf16.mxu0 0
        %4374 = vmatpush1.bf16.xpose.msra.mxu0 0
        %4375 = vmatprep.subr.bf16.mxu0 0
        %4376 = vmatpush1.bf16.xpose.msra.mxu0 0
        %4377 = vmatprep.subr.bf16.mxu0 0
        %4378 = vmatpush1.bf16.xpose.msra.mxu0 0
        %4379 = vmatprep.subr.bf16.mxu0 0
        %4380 = vmatpush1.bf16.xpose.msra.mxu0 0
        %4381 = vmatprep.subr.bf16.mxu0 0
        %4382 = vmatpush1.bf16.xpose.msra.mxu0 0
        %4383 = vmatprep.subr.bf16.mxu0 0
        %4384 = vmatpush1.bf16.xpose.msra.mxu0 0
        %4385 = vmatprep.subr.bf16.mxu0 0
        %4386 = vmatpush1.bf16.xpose.msra.mxu0 0
        %4387 = vmatprep.subr.bf16.mxu0 0
        %4388 = vmatpush1.bf16.xpose.msra.mxu0 0
        %4389 = vmatprep.subr.bf16.mxu0 0
        %4390 = vmatpush1.bf16.xpose.msra.mxu0 0
        %4391 = vmatprep.subr.bf16.mxu0 0
        %4392 = vmatpush1.bf16.xpose.msra.mxu0 0
        %4393 = vmatprep.subr.bf16.mxu0 0
        %4394 = vmatpush1.bf16.xpose.msra.mxu0 0
        %4395 = vmatprep.subr.bf16.mxu0 0
        %4396 = vmatpush1.bf16.xpose.msra.mxu0 0
        %4397 = vmatprep.subr.bf16.mxu0 0
        %4398 = vmatpush1.bf16.xpose.msra.mxu0 0
        %4399 = vmatprep.subr.bf16.mxu0 0
        %4400 = vmatpush1.bf16.xpose.msra.mxu0 0
        %4401 = vmatprep.subr.bf16.mxu0 0
        %4402 = vmatpush1.bf16.xpose.msra.mxu0 0
        %4403 = vmatprep.mubr.bf16.mxu0 0
        %4404 = vmatmul.mubr.bf16.gmra.mrb[0].mxu0 %v4369
        %v4405 = vpop.f32.mrb[0].mxu0
        %v4406 = vadd.f32 0.0, %v4405
        %v4407 = vpop.f32.mrb[0].mxu0
        %v4408 = vpop.f32.mrb[0].mxu0
        %v4409 = vpop.f32.mrb[0].mxu0
        %4410 = vdwg.mxu0
        %v4412 = vsel %vm1082, %v3959, 0
        %4414 = vmatprep.subr.bf16.mxu0 0
        %4415 = vmatpush1.bf16.xpose.msra.mxu0 %v3453
        %4416 = vmatprep.subr.bf16.mxu0 0
        %4417 = vmatpush1.bf16.xpose.msra.mxu0 0
        %4418 = vmatprep.subr.bf16.mxu0 0
        %4419 = vmatpush1.bf16.xpose.msra.mxu0 0
        %4420 = vmatprep.subr.bf16.mxu0 0
        %4421 = vmatpush1.bf16.xpose.msra.mxu0 0
        %4422 = vmatprep.subr.bf16.mxu0 0
        %4423 = vmatpush1.bf16.xpose.msra.mxu0 0
        %4424 = vmatprep.subr.bf16.mxu0 0
        %4425 = vmatpush1.bf16.xpose.msra.mxu0 0
        %4426 = vmatprep.subr.bf16.mxu0 0
        %4427 = vmatpush1.bf16.xpose.msra.mxu0 0
        %4428 = vmatprep.subr.bf16.mxu0 0
        %4429 = vmatpush1.bf16.xpose.msra.mxu0 0
        %4430 = vmatprep.subr.bf16.mxu0 0
        %4431 = vmatpush1.bf16.xpose.msra.mxu0 0
        %4432 = vmatprep.subr.bf16.mxu0 0
        %4433 = vmatpush1.bf16.xpose.msra.mxu0 0
        %4434 = vmatprep.subr.bf16.mxu0 0
        %4435 = vmatpush1.bf16.xpose.msra.mxu0 0
        %4436 = vmatprep.subr.bf16.mxu0 0
        %4437 = vmatpush1.bf16.xpose.msra.mxu0 0
        %4438 = vmatprep.subr.bf16.mxu0 0
        %4439 = vmatpush1.bf16.xpose.msra.mxu0 0
        %4440 = vmatprep.subr.bf16.mxu0 0
        %4441 = vmatpush1.bf16.xpose.msra.mxu0 0
        %4442 = vmatprep.subr.bf16.mxu0 0
        %4443 = vmatpush1.bf16.xpose.msra.mxu0 0
        %4444 = vmatprep.subr.bf16.mxu0 0
        %4445 = vmatpush1.bf16.xpose.msra.mxu0 0
        %4446 = vmatprep.mubr.bf16.mxu0 0
        %4447 = vmatmul.mubr.bf16.gmra.mrb[0].mxu0 %v4412
        %v4448 = vpop.f32.mrb[0].mxu0
        %v4449 = vadd.f32 0.0, %v4448
        %v4450 = vpop.f32.mrb[0].mxu0
        %v4451 = vpop.f32.mrb[0].mxu0
        %v4452 = vpop.f32.mrb[0].mxu0
        %4453 = vdwg.mxu0
        %v4455 = vsel %vm1082, %v3960, 0
        %4457 = vmatprep.subr.bf16.mxu0 0
        %4458 = vmatpush1.bf16.xpose.msra.mxu0 %v3499
        %4459 = vmatprep.subr.bf16.mxu0 0
        %4460 = vmatpush1.bf16.xpose.msra.mxu0 0
        %4461 = vmatprep.subr.bf16.mxu0 0
        %4462 = vmatpush1.bf16.xpose.msra.mxu0 0
        %4463 = vmatprep.subr.bf16.mxu0 0
        %4464 = vmatpush1.bf16.xpose.msra.mxu0 0
        %4465 = vmatprep.subr.bf16.mxu0 0
        %4466 = vmatpush1.bf16.xpose.msra.mxu0 0
        %4467 = vmatprep.subr.bf16.mxu0 0
        %4468 = vmatpush1.bf16.xpose.msra.mxu0 0
        %4469 = vmatprep.subr.bf16.mxu0 0
        %4470 = vmatpush1.bf16.xpose.msra.mxu0 0
        %4471 = vmatprep.subr.bf16.mxu0 0
        %4472 = vmatpush1.bf16.xpose.msra.mxu0 0
        %4473 = vmatprep.subr.bf16.mxu0 0
        %4474 = vmatpush1.bf16.xpose.msra.mxu0 0
        %4475 = vmatprep.subr.bf16.mxu0 0
        %4476 = vmatpush1.bf16.xpose.msra.mxu0 0
        %4477 = vmatprep.subr.bf16.mxu0 0
        %4478 = vmatpush1.bf16.xpose.msra.mxu0 0
        %4479 = vmatprep.subr.bf16.mxu0 0
        %4480 = vmatpush1.bf16.xpose.msra.mxu0 0
        %4481 = vmatprep.subr.bf16.mxu0 0
        %4482 = vmatpush1.bf16.xpose.msra.mxu0 0
        %4483 = vmatprep.subr.bf16.mxu0 0
        %4484 = vmatpush1.bf16.xpose.msra.mxu0 0
        %4485 = vmatprep.subr.bf16.mxu0 0
        %4486 = vmatpush1.bf16.xpose.msra.mxu0 0
        %4487 = vmatprep.subr.bf16.mxu0 0
        %4488 = vmatpush1.bf16.xpose.msra.mxu0 0
        %4489 = vmatprep.mubr.bf16.mxu0 0
        %4490 = vmatmul.mubr.bf16.gmra.mrb[0].mxu0 %v4455
        %v4491 = vpop.f32.mrb[0].mxu0
        %v4492 = vadd.f32 0.0, %v4491
        %v4493 = vpop.f32.mrb[0].mxu0
        %v4494 = vpop.f32.mrb[0].mxu0
        %v4495 = vpop.f32.mrb[0].mxu0
        %4496 = vdwg.mxu0
        %v4497 = vmul.f32 %v4191, 0.25
        %v4498 = vmul.f32 %v4234, 0.25
        %v4499 = vmul.f32 %v4277, 0.25
        %v4500 = vmul.f32 %v4320, 0.25
        %v4501 = vmul.f32 %v4363, 0.25
        %v4502 = vmul.f32 %v4406, 0.25
        %v4503 = vmul.f32 %v4449, 0.25
        %v4504 = vmul.f32 %v4492, 0.25
        %v4505 = vadd.f32 %v4497, %v3602
        %v4506 = vadd.f32 %v4498, %v3606
        %v4507 = vadd.f32 %v4499, %v3610
        %v4508 = vadd.f32 %v4500, %v3614
        %v4509 = vadd.f32 %v4501, %v3618
        %v4510 = vadd.f32 %v4502, %v3622
        %v4511 = vadd.f32 %v4503, %v3626
        %v4512 = vadd.f32 %v4504, %v3630
        %v4513 = vsel %vm3647, %v4505, -inf
        %4514 = vmax.xlane.f32.xlu0 %v4513
        %v4515 = vpop.xlane.xlu0 %4514
        %v4516 = vsel %vm3647, %v4506, -inf
        %4517 = vmax.xlane.f32.xlu0 %v4516
        %v4518 = vpop.xlane.xlu0 %4517
        %v4519 = vsel %vm3647, %v4507, -inf
        %4520 = vmax.xlane.f32.xlu0 %v4519
        %v4521 = vpop.xlane.xlu0 %4520
        %v4522 = vsel %vm3647, %v4508, -inf
        %4523 = vmax.xlane.f32.xlu0 %v4522
        %v4524 = vpop.xlane.xlu0 %4523
        %v4525 = vsel %vm3647, %v4509, -inf
        %4526 = vmax.xlane.f32.xlu0 %v4525
        %v4527 = vpop.xlane.xlu0 %4526
        %v4528 = vsel %vm3647, %v4510, -inf
        %4529 = vmax.xlane.f32.xlu0 %v4528
        %v4530 = vpop.xlane.xlu0 %4529
        %v4531 = vsel %vm3647, %v4511, -inf
        %4532 = vmax.xlane.f32.xlu0 %v4531
        %v4533 = vpop.xlane.xlu0 %4532
        %v4534 = vsel %vm3647, %v4512, -inf
        %4535 = vmax.xlane.f32.xlu0 %v4534
        %v4536 = vpop.xlane.xlu0 %4535
        %v4537 = vsub.f32 %v4505, %v4515
        %v4538 = vsub.f32 %v4506, %v4518
        %v4539 = vsub.f32 %v4507, %v4521
        %v4540 = vsub.f32 %v4508, %v4524
        %v4541 = vsub.f32 %v4509, %v4527
        %v4542 = vsub.f32 %v4510, %v4530
        %v4543 = vsub.f32 %v4511, %v4533
        %v4544 = vsub.f32 %v4512, %v4536
        %v4545 = vmul.f32 %v4537, 1.442695
        %v4546 = vpow.pop %v4545
        %v4547 = vmul.f32 %v4538, 1.442695
        %v4548 = vpow.pop %v4547
        %v4549 = vmul.f32 %v4539, 1.442695
        %v4550 = vpow.pop %v4549
        %v4551 = vmul.f32 %v4540, 1.442695
        %v4552 = vpow.pop %v4551
        %v4553 = vmul.f32 %v4541, 1.442695
        %v4554 = vpow.pop %v4553
        %v4555 = vmul.f32 %v4542, 1.442695
        %v4556 = vpow.pop %v4555
        %v4557 = vmul.f32 %v4543, 1.442695
        %v4558 = vpow.pop %v4557
        %v4559 = vmul.f32 %v4544, 1.442695
        %v4560 = vpow.pop %v4559
        %v4561 = vsel %vm3647, %v4546, 0.0
        %4562 = vadd.xlane.f32.xlu0 %v4561
        %v4563 = vpop.xlane.xlu0 %4562
        %v4564 = vsel %vm3647, %v4548, 0.0
        %4565 = vadd.xlane.f32.xlu0 %v4564
        %v4566 = vpop.xlane.xlu0 %4565
        %v4567 = vsel %vm3647, %v4550, 0.0
        %4568 = vadd.xlane.f32.xlu0 %v4567
        %v4569 = vpop.xlane.xlu0 %4568
        %v4570 = vsel %vm3647, %v4552, 0.0
        %4571 = vadd.xlane.f32.xlu0 %v4570
        %v4572 = vpop.xlane.xlu0 %4571
        %v4573 = vsel %vm3647, %v4554, 0.0
        %4574 = vadd.xlane.f32.xlu0 %v4573
        %v4575 = vpop.xlane.xlu0 %4574
        %v4576 = vsel %vm3647, %v4556, 0.0
        %4577 = vadd.xlane.f32.xlu0 %v4576
        %v4578 = vpop.xlane.xlu0 %4577
        %v4579 = vsel %vm3647, %v4558, 0.0
        %4580 = vadd.xlane.f32.xlu0 %v4579
        %v4581 = vpop.xlane.xlu0 %4580
        %v4582 = vsel %vm3647, %v4560, 0.0
        %4583 = vadd.xlane.f32.xlu0 %v4582
        %v4584 = vpop.xlane.xlu0 %4583
        %v4585 = vrcp.pop %v4563
        %v4586 = vrcp.pop %v4566
        %v4587 = vrcp.pop %v4569
        %v4588 = vrcp.pop %v4572
        %v4589 = vrcp.pop %v4575
        %v4590 = vrcp.pop %v4578
        %v4591 = vrcp.pop %v4581
        %v4592 = vrcp.pop %v4584
        %v4593 = vmul.f32 %v4546, %v4585
        %v4594 = vmul.f32 %v4548, %v4586
        %v4595 = vmul.f32 %v4550, %v4587
        %v4596 = vmul.f32 %v4552, %v4588
        %v4597 = vmul.f32 %v4554, %v4589
        %v4598 = vmul.f32 %v4556, %v4590
        %v4599 = vmul.f32 %v4558, %v4591
        %v4600 = vmul.f32 %v4560, %v4592
        %v4601 = vpack.c.bf16 %v4593, %v4593
        %v4602 = vpack.c.bf16 %v4594, %v4594
        %v4603 = vpack.c.bf16 %v4595, %v4595
        %v4604 = vpack.c.bf16 %v4596, %v4596
        %v4605 = vpack.c.bf16 %v4597, %v4597
        %v4606 = vpack.c.bf16 %v4598, %v4598
        %v4607 = vpack.c.bf16 %v4599, %v4599
        %v4608 = vpack.c.bf16 %v4600, %v4600
        %vm4609 = vcmask 48128
        %v4611 = vsel %vm4609, %v4601, 0
        %vm4613 = vcmask 1042432
        %v4615 = vsel %vm4613, %v4145, 0
        %4617 = vmatprep.subr.bf16.mxu0 0
        %4618 = vmatpush1.bf16.msra.mxu0 %v4615
        %4619 = vmatprep.subr.bf16.mxu0 0
        %4620 = vmatpush1.bf16.msra.mxu0 0
        %4621 = vmatprep.subr.bf16.mxu0 0
        %4622 = vmatpush1.bf16.msra.mxu0 0
        %4623 = vmatprep.subr.bf16.mxu0 0
        %4624 = vmatpush1.bf16.msra.mxu0 0
        %4625 = vmatprep.subr.bf16.mxu0 0
        %4626 = vmatpush1.bf16.msra.mxu0 0
        %4627 = vmatprep.subr.bf16.mxu0 0
        %4628 = vmatpush1.bf16.msra.mxu0 0
        %4629 = vmatprep.subr.bf16.mxu0 0
        %4630 = vmatpush1.bf16.msra.mxu0 0
        %4631 = vmatprep.subr.bf16.mxu0 0
        %4632 = vmatpush1.bf16.msra.mxu0 0
        %4633 = vmatprep.subr.bf16.mxu0 0
        %4634 = vmatpush1.bf16.msra.mxu0 0
        %4635 = vmatprep.subr.bf16.mxu0 0
        %4636 = vmatpush1.bf16.msra.mxu0 0
        %4637 = vmatprep.subr.bf16.mxu0 0
        %4638 = vmatpush1.bf16.msra.mxu0 0
        %4639 = vmatprep.subr.bf16.mxu0 0
        %4640 = vmatpush1.bf16.msra.mxu0 0
        %4641 = vmatprep.subr.bf16.mxu0 0
        %4642 = vmatpush1.bf16.msra.mxu0 0
        %4643 = vmatprep.subr.bf16.mxu0 0
        %4644 = vmatpush1.bf16.msra.mxu0 0
        %4645 = vmatprep.subr.bf16.mxu0 0
        %4646 = vmatpush1.bf16.msra.mxu0 0
        %4647 = vmatprep.subr.bf16.mxu0 0
        %4648 = vmatpush1.bf16.msra.mxu0 0
        %4649 = vmatprep.mubr.bf16.mxu0 0
        %4650 = vmatmul.mubr.bf16.gmra.mrb[0].mxu0 %v4611
        %v4651 = vpop.f32.mrb[0].mxu0
        %v4652 = vadd.f32 0.0, %v4651
        %v4653 = vpop.f32.mrb[0].mxu0
        %v4654 = vpop.f32.mrb[0].mxu0
        %v4655 = vpop.f32.mrb[0].mxu0
        %4656 = vdwg.mxu0
        %v4658 = vsel %vm4609, %v4602, 0
        %v4661 = vsel %vm4613, %v4146, 0
        %4663 = vmatprep.subr.bf16.mxu0 0
        %4664 = vmatpush1.bf16.msra.mxu0 %v4661
        %4665 = vmatprep.subr.bf16.mxu0 0
        %4666 = vmatpush1.bf16.msra.mxu0 0
        %4667 = vmatprep.subr.bf16.mxu0 0
        %4668 = vmatpush1.bf16.msra.mxu0 0
        %4669 = vmatprep.subr.bf16.mxu0 0
        %4670 = vmatpush1.bf16.msra.mxu0 0
        %4671 = vmatprep.subr.bf16.mxu0 0
        %4672 = vmatpush1.bf16.msra.mxu0 0
        %4673 = vmatprep.subr.bf16.mxu0 0
        %4674 = vmatpush1.bf16.msra.mxu0 0
        %4675 = vmatprep.subr.bf16.mxu0 0
        %4676 = vmatpush1.bf16.msra.mxu0 0
        %4677 = vmatprep.subr.bf16.mxu0 0
        %4678 = vmatpush1.bf16.msra.mxu0 0
        %4679 = vmatprep.subr.bf16.mxu0 0
        %4680 = vmatpush1.bf16.msra.mxu0 0
        %4681 = vmatprep.subr.bf16.mxu0 0
        %4682 = vmatpush1.bf16.msra.mxu0 0
        %4683 = vmatprep.subr.bf16.mxu0 0
        %4684 = vmatpush1.bf16.msra.mxu0 0
        %4685 = vmatprep.subr.bf16.mxu0 0
        %4686 = vmatpush1.bf16.msra.mxu0 0
        %4687 = vmatprep.subr.bf16.mxu0 0
        %4688 = vmatpush1.bf16.msra.mxu0 0
        %4689 = vmatprep.subr.bf16.mxu0 0
        %4690 = vmatpush1.bf16.msra.mxu0 0
        %4691 = vmatprep.subr.bf16.mxu0 0
        %4692 = vmatpush1.bf16.msra.mxu0 0
        %4693 = vmatprep.subr.bf16.mxu0 0
        %4694 = vmatpush1.bf16.msra.mxu0 0
        %4695 = vmatprep.mubr.bf16.mxu0 0
        %4696 = vmatmul.mubr.bf16.gmra.mrb[0].mxu0 %v4658
        %v4697 = vpop.f32.mrb[0].mxu0
        %v4698 = vadd.f32 0.0, %v4697
        %v4699 = vpop.f32.mrb[0].mxu0
        %v4700 = vpop.f32.mrb[0].mxu0
        %v4701 = vpop.f32.mrb[0].mxu0
        %4702 = vdwg.mxu0
        %v4704 = vsel %vm4609, %v4603, 0
        %v4707 = vsel %vm4613, %v4147, 0
        %4709 = vmatprep.subr.bf16.mxu0 0
        %4710 = vmatpush1.bf16.msra.mxu0 %v4707
        %4711 = vmatprep.subr.bf16.mxu0 0
        %4712 = vmatpush1.bf16.msra.mxu0 0
        %4713 = vmatprep.subr.bf16.mxu0 0
        %4714 = vmatpush1.bf16.msra.mxu0 0
        %4715 = vmatprep.subr.bf16.mxu0 0
        %4716 = vmatpush1.bf16.msra.mxu0 0
        %4717 = vmatprep.subr.bf16.mxu0 0
        %4718 = vmatpush1.bf16.msra.mxu0 0
        %4719 = vmatprep.subr.bf16.mxu0 0
        %4720 = vmatpush1.bf16.msra.mxu0 0
        %4721 = vmatprep.subr.bf16.mxu0 0
        %4722 = vmatpush1.bf16.msra.mxu0 0
        %4723 = vmatprep.subr.bf16.mxu0 0
        %4724 = vmatpush1.bf16.msra.mxu0 0
        %4725 = vmatprep.subr.bf16.mxu0 0
        %4726 = vmatpush1.bf16.msra.mxu0 0
        %4727 = vmatprep.subr.bf16.mxu0 0
        %4728 = vmatpush1.bf16.msra.mxu0 0
        %4729 = vmatprep.subr.bf16.mxu0 0
        %4730 = vmatpush1.bf16.msra.mxu0 0
        %4731 = vmatprep.subr.bf16.mxu0 0
        %4732 = vmatpush1.bf16.msra.mxu0 0
        %4733 = vmatprep.subr.bf16.mxu0 0
        %4734 = vmatpush1.bf16.msra.mxu0 0
        %4735 = vmatprep.subr.bf16.mxu0 0
        %4736 = vmatpush1.bf16.msra.mxu0 0
        %4737 = vmatprep.subr.bf16.mxu0 0
        %4738 = vmatpush1.bf16.msra.mxu0 0
        %4739 = vmatprep.subr.bf16.mxu0 0
        %4740 = vmatpush1.bf16.msra.mxu0 0
        %4741 = vmatprep.mubr.bf16.mxu0 0
        %4742 = vmatmul.mubr.bf16.gmra.mrb[0].mxu0 %v4704
        %v4743 = vpop.f32.mrb[0].mxu0
        %v4744 = vadd.f32 0.0, %v4743
        %v4745 = vpop.f32.mrb[0].mxu0
        %v4746 = vpop.f32.mrb[0].mxu0
        %v4747 = vpop.f32.mrb[0].mxu0
        %4748 = vdwg.mxu0
        %v4750 = vsel %vm4609, %v4604, 0
        %v4753 = vsel %vm4613, %v4148, 0
        %4755 = vmatprep.subr.bf16.mxu0 0
        %4756 = vmatpush1.bf16.msra.mxu0 %v4753
        %4757 = vmatprep.subr.bf16.mxu0 0
        %4758 = vmatpush1.bf16.msra.mxu0 0
        %4759 = vmatprep.subr.bf16.mxu0 0
        %4760 = vmatpush1.bf16.msra.mxu0 0
        %4761 = vmatprep.subr.bf16.mxu0 0
        %4762 = vmatpush1.bf16.msra.mxu0 0
        %4763 = vmatprep.subr.bf16.mxu0 0
        %4764 = vmatpush1.bf16.msra.mxu0 0
        %4765 = vmatprep.subr.bf16.mxu0 0
        %4766 = vmatpush1.bf16.msra.mxu0 0
        %4767 = vmatprep.subr.bf16.mxu0 0
        %4768 = vmatpush1.bf16.msra.mxu0 0
        %4769 = vmatprep.subr.bf16.mxu0 0
        %4770 = vmatpush1.bf16.msra.mxu0 0
        %4771 = vmatprep.subr.bf16.mxu0 0
        %4772 = vmatpush1.bf16.msra.mxu0 0
        %4773 = vmatprep.subr.bf16.mxu0 0
        %4774 = vmatpush1.bf16.msra.mxu0 0
        %4775 = vmatprep.subr.bf16.mxu0 0
        %4776 = vmatpush1.bf16.msra.mxu0 0
        %4777 = vmatprep.subr.bf16.mxu0 0
        %4778 = vmatpush1.bf16.msra.mxu0 0
        %4779 = vmatprep.subr.bf16.mxu0 0
        %4780 = vmatpush1.bf16.msra.mxu0 0
        %4781 = vmatprep.subr.bf16.mxu0 0
        %4782 = vmatpush1.bf16.msra.mxu0 0
        %4783 = vmatprep.subr.bf16.mxu0 0
        %4784 = vmatpush1.bf16.msra.mxu0 0
        %4785 = vmatprep.subr.bf16.mxu0 0
        %4786 = vmatpush1.bf16.msra.mxu0 0
        %4787 = vmatprep.mubr.bf16.mxu0 0
        %4788 = vmatmul.mubr.bf16.gmra.mrb[0].mxu0 %v4750
        %v4789 = vpop.f32.mrb[0].mxu0
        %v4790 = vadd.f32 0.0, %v4789
        %v4791 = vpop.f32.mrb[0].mxu0
        %v4792 = vpop.f32.mrb[0].mxu0
        %v4793 = vpop.f32.mrb[0].mxu0
        %4794 = vdwg.mxu0
        %v4796 = vsel %vm4609, %v4605, 0
        %v4799 = vsel %vm4613, %v4149, 0
        %4801 = vmatprep.subr.bf16.mxu0 0
        %4802 = vmatpush1.bf16.msra.mxu0 %v4799
        %4803 = vmatprep.subr.bf16.mxu0 0
        %4804 = vmatpush1.bf16.msra.mxu0 0
        %4805 = vmatprep.subr.bf16.mxu0 0
        %4806 = vmatpush1.bf16.msra.mxu0 0
        %4807 = vmatprep.subr.bf16.mxu0 0
        %4808 = vmatpush1.bf16.msra.mxu0 0
        %4809 = vmatprep.subr.bf16.mxu0 0
        %4810 = vmatpush1.bf16.msra.mxu0 0
        %4811 = vmatprep.subr.bf16.mxu0 0
        %4812 = vmatpush1.bf16.msra.mxu0 0
        %4813 = vmatprep.subr.bf16.mxu0 0
        %4814 = vmatpush1.bf16.msra.mxu0 0
        %4815 = vmatprep.subr.bf16.mxu0 0
        %4816 = vmatpush1.bf16.msra.mxu0 0
        %4817 = vmatprep.subr.bf16.mxu0 0
        %4818 = vmatpush1.bf16.msra.mxu0 0
        %4819 = vmatprep.subr.bf16.mxu0 0
        %4820 = vmatpush1.bf16.msra.mxu0 0
        %4821 = vmatprep.subr.bf16.mxu0 0
        %4822 = vmatpush1.bf16.msra.mxu0 0
        %4823 = vmatprep.subr.bf16.mxu0 0
        %4824 = vmatpush1.bf16.msra.mxu0 0
        %4825 = vmatprep.subr.bf16.mxu0 0
        %4826 = vmatpush1.bf16.msra.mxu0 0
        %4827 = vmatprep.subr.bf16.mxu0 0
        %4828 = vmatpush1.bf16.msra.mxu0 0
        %4829 = vmatprep.subr.bf16.mxu0 0
        %4830 = vmatpush1.bf16.msra.mxu0 0
        %4831 = vmatprep.subr.bf16.mxu0 0
        %4832 = vmatpush1.bf16.msra.mxu0 0
        %4833 = vmatprep.mubr.bf16.mxu0 0
        %4834 = vmatmul.mubr.bf16.gmra.mrb[0].mxu0 %v4796
        %v4835 = vpop.f32.mrb[0].mxu0
        %v4836 = vadd.f32 0.0, %v4835
        %v4837 = vpop.f32.mrb[0].mxu0
        %v4838 = vpop.f32.mrb[0].mxu0
        %v4839 = vpop.f32.mrb[0].mxu0
        %4840 = vdwg.mxu0
        %v4842 = vsel %vm4609, %v4606, 0
        %v4845 = vsel %vm4613, %v4150, 0
        %4847 = vmatprep.subr.bf16.mxu0 0
        %4848 = vmatpush1.bf16.msra.mxu0 %v4845
        %4849 = vmatprep.subr.bf16.mxu0 0
        %4850 = vmatpush1.bf16.msra.mxu0 0
        %4851 = vmatprep.subr.bf16.mxu0 0
        %4852 = vmatpush1.bf16.msra.mxu0 0
        %4853 = vmatprep.subr.bf16.mxu0 0
        %4854 = vmatpush1.bf16.msra.mxu0 0
        %4855 = vmatprep.subr.bf16.mxu0 0
        %4856 = vmatpush1.bf16.msra.mxu0 0
        %4857 = vmatprep.subr.bf16.mxu0 0
        %4858 = vmatpush1.bf16.msra.mxu0 0
        %4859 = vmatprep.subr.bf16.mxu0 0
        %4860 = vmatpush1.bf16.msra.mxu0 0
        %4861 = vmatprep.subr.bf16.mxu0 0
        %4862 = vmatpush1.bf16.msra.mxu0 0
        %4863 = vmatprep.subr.bf16.mxu0 0
        %4864 = vmatpush1.bf16.msra.mxu0 0
        %4865 = vmatprep.subr.bf16.mxu0 0
        %4866 = vmatpush1.bf16.msra.mxu0 0
        %4867 = vmatprep.subr.bf16.mxu0 0
        %4868 = vmatpush1.bf16.msra.mxu0 0
        %4869 = vmatprep.subr.bf16.mxu0 0
        %4870 = vmatpush1.bf16.msra.mxu0 0
        %4871 = vmatprep.subr.bf16.mxu0 0
        %4872 = vmatpush1.bf16.msra.mxu0 0
        %4873 = vmatprep.subr.bf16.mxu0 0
        %4874 = vmatpush1.bf16.msra.mxu0 0
        %4875 = vmatprep.subr.bf16.mxu0 0
        %4876 = vmatpush1.bf16.msra.mxu0 0
        %4877 = vmatprep.subr.bf16.mxu0 0
        %4878 = vmatpush1.bf16.msra.mxu0 0
        %4879 = vmatprep.mubr.bf16.mxu0 0
        %4880 = vmatmul.mubr.bf16.gmra.mrb[0].mxu0 %v4842
        %v4881 = vpop.f32.mrb[0].mxu0
        %v4882 = vadd.f32 0.0, %v4881
        %v4883 = vpop.f32.mrb[0].mxu0
        %v4884 = vpop.f32.mrb[0].mxu0
        %v4885 = vpop.f32.mrb[0].mxu0
        %4886 = vdwg.mxu0
        %v4888 = vsel %vm4609, %v4607, 0
        %v4891 = vsel %vm4613, %v4151, 0
        %4893 = vmatprep.subr.bf16.mxu0 0
        %4894 = vmatpush1.bf16.msra.mxu0 %v4891
        %4895 = vmatprep.subr.bf16.mxu0 0
        %4896 = vmatpush1.bf16.msra.mxu0 0
        %4897 = vmatprep.subr.bf16.mxu0 0
        %4898 = vmatpush1.bf16.msra.mxu0 0
        %4899 = vmatprep.subr.bf16.mxu0 0
        %4900 = vmatpush1.bf16.msra.mxu0 0
        %4901 = vmatprep.subr.bf16.mxu0 0
        %4902 = vmatpush1.bf16.msra.mxu0 0
        %4903 = vmatprep.subr.bf16.mxu0 0
        %4904 = vmatpush1.bf16.msra.mxu0 0
        %4905 = vmatprep.subr.bf16.mxu0 0
        %4906 = vmatpush1.bf16.msra.mxu0 0
        %4907 = vmatprep.subr.bf16.mxu0 0
        %4908 = vmatpush1.bf16.msra.mxu0 0
        %4909 = vmatprep.subr.bf16.mxu0 0
        %4910 = vmatpush1.bf16.msra.mxu0 0
        %4911 = vmatprep.subr.bf16.mxu0 0
        %4912 = vmatpush1.bf16.msra.mxu0 0
        %4913 = vmatprep.subr.bf16.mxu0 0
        %4914 = vmatpush1.bf16.msra.mxu0 0
        %4915 = vmatprep.subr.bf16.mxu0 0
        %4916 = vmatpush1.bf16.msra.mxu0 0
        %4917 = vmatprep.subr.bf16.mxu0 0
        %4918 = vmatpush1.bf16.msra.mxu0 0
        %4919 = vmatprep.subr.bf16.mxu0 0
        %4920 = vmatpush1.bf16.msra.mxu0 0
        %4921 = vmatprep.subr.bf16.mxu0 0
        %4922 = vmatpush1.bf16.msra.mxu0 0
        %4923 = vmatprep.subr.bf16.mxu0 0
        %4924 = vmatpush1.bf16.msra.mxu0 0
        %4925 = vmatprep.mubr.bf16.mxu0 0
        %4926 = vmatmul.mubr.bf16.gmra.mrb[0].mxu0 %v4888
        %v4927 = vpop.f32.mrb[0].mxu0
        %v4928 = vadd.f32 0.0, %v4927
        %v4929 = vpop.f32.mrb[0].mxu0
        %v4930 = vpop.f32.mrb[0].mxu0
        %v4931 = vpop.f32.mrb[0].mxu0
        %4932 = vdwg.mxu0
        %v4934 = vsel %vm4609, %v4608, 0
        %v4937 = vsel %vm4613, %v4152, 0
        %4939 = vmatprep.subr.bf16.mxu0 0
        %4940 = vmatpush1.bf16.msra.mxu0 %v4937
        %4941 = vmatprep.subr.bf16.mxu0 0
        %4942 = vmatpush1.bf16.msra.mxu0 0
        %4943 = vmatprep.subr.bf16.mxu0 0
        %4944 = vmatpush1.bf16.msra.mxu0 0
        %4945 = vmatprep.subr.bf16.mxu0 0
        %4946 = vmatpush1.bf16.msra.mxu0 0
        %4947 = vmatprep.subr.bf16.mxu0 0
        %4948 = vmatpush1.bf16.msra.mxu0 0
        %4949 = vmatprep.subr.bf16.mxu0 0
        %4950 = vmatpush1.bf16.msra.mxu0 0
        %4951 = vmatprep.subr.bf16.mxu0 0
        %4952 = vmatpush1.bf16.msra.mxu0 0
        %4953 = vmatprep.subr.bf16.mxu0 0
        %4954 = vmatpush1.bf16.msra.mxu0 0
        %4955 = vmatprep.subr.bf16.mxu0 0
        %4956 = vmatpush1.bf16.msra.mxu0 0
        %4957 = vmatprep.subr.bf16.mxu0 0
        %4958 = vmatpush1.bf16.msra.mxu0 0
        %4959 = vmatprep.subr.bf16.mxu0 0
        %4960 = vmatpush1.bf16.msra.mxu0 0
        %4961 = vmatprep.subr.bf16.mxu0 0
        %4962 = vmatpush1.bf16.msra.mxu0 0
        %4963 = vmatprep.subr.bf16.mxu0 0
        %4964 = vmatpush1.bf16.msra.mxu0 0
        %4965 = vmatprep.subr.bf16.mxu0 0
        %4966 = vmatpush1.bf16.msra.mxu0 0
        %4967 = vmatprep.subr.bf16.mxu0 0
        %4968 = vmatpush1.bf16.msra.mxu0 0
        %4969 = vmatprep.subr.bf16.mxu0 0
        %4970 = vmatpush1.bf16.msra.mxu0 0
        %4971 = vmatprep.mubr.bf16.mxu0 0
        %4972 = vmatmul.mubr.bf16.gmra.mrb[0].mxu0 %v4934
        %v4973 = vpop.f32.mrb[0].mxu0
        %v4974 = vadd.f32 0.0, %v4973
        %v4975 = vpop.f32.mrb[0].mxu0
        %v4976 = vpop.f32.mrb[0].mxu0
        %v4977 = vpop.f32.mrb[0].mxu0
        %4978 = vdwg.mxu0
        %v4980 = vsel %vm4609, %v3736, 0
        %v4983 = vsel %vm4613, %v3165, 0
        %4985 = vmatprep.subr.bf16.mxu0 0
        %4986 = vmatpush1.bf16.msra.mxu0 %v4983
        %4987 = vmatprep.subr.bf16.mxu0 0
        %4988 = vmatpush1.bf16.msra.mxu0 0
        %4989 = vmatprep.subr.bf16.mxu0 0
        %4990 = vmatpush1.bf16.msra.mxu0 0
        %4991 = vmatprep.subr.bf16.mxu0 0
        %4992 = vmatpush1.bf16.msra.mxu0 0
        %4993 = vmatprep.subr.bf16.mxu0 0
        %4994 = vmatpush1.bf16.msra.mxu0 0
        %4995 = vmatprep.subr.bf16.mxu0 0
        %4996 = vmatpush1.bf16.msra.mxu0 0
        %4997 = vmatprep.subr.bf16.mxu0 0
        %4998 = vmatpush1.bf16.msra.mxu0 0
        %4999 = vmatprep.subr.bf16.mxu0 0
        %5000 = vmatpush1.bf16.msra.mxu0 0
        %5001 = vmatprep.subr.bf16.mxu0 0
        %5002 = vmatpush1.bf16.msra.mxu0 0
        %5003 = vmatprep.subr.bf16.mxu0 0
        %5004 = vmatpush1.bf16.msra.mxu0 0
        %5005 = vmatprep.subr.bf16.mxu0 0
        %5006 = vmatpush1.bf16.msra.mxu0 0
        %5007 = vmatprep.subr.bf16.mxu0 0
        %5008 = vmatpush1.bf16.msra.mxu0 0
        %5009 = vmatprep.subr.bf16.mxu0 0
        %5010 = vmatpush1.bf16.msra.mxu0 0
        %5011 = vmatprep.subr.bf16.mxu0 0
        %5012 = vmatpush1.bf16.msra.mxu0 0
        %5013 = vmatprep.subr.bf16.mxu0 0
        %5014 = vmatpush1.bf16.msra.mxu0 0
        %5015 = vmatprep.subr.bf16.mxu0 0
        %5016 = vmatpush1.bf16.msra.mxu0 0
        %5017 = vmatprep.mubr.bf16.mxu0 0
        %5018 = vmatmul.mubr.bf16.gmra.mrb[0].mxu0 %v4980
        %v5019 = vpop.f32.mrb[0].mxu0
        %v5020 = vadd.f32 %v4652, %v5019
        %v5021 = vpop.f32.mrb[0].mxu0
        %v5022 = vpop.f32.mrb[0].mxu0
        %v5023 = vpop.f32.mrb[0].mxu0
        %5024 = vdwg.mxu0
        %v5026 = vsel %vm4609, %v3737, 0
        %v5029 = vsel %vm4613, %v3166, 0
        %5031 = vmatprep.subr.bf16.mxu0 0
        %5032 = vmatpush1.bf16.msra.mxu0 %v5029
        %5033 = vmatprep.subr.bf16.mxu0 0
        %5034 = vmatpush1.bf16.msra.mxu0 0
        %5035 = vmatprep.subr.bf16.mxu0 0
        %5036 = vmatpush1.bf16.msra.mxu0 0
        %5037 = vmatprep.subr.bf16.mxu0 0
        %5038 = vmatpush1.bf16.msra.mxu0 0
        %5039 = vmatprep.subr.bf16.mxu0 0
        %5040 = vmatpush1.bf16.msra.mxu0 0
        %5041 = vmatprep.subr.bf16.mxu0 0
        %5042 = vmatpush1.bf16.msra.mxu0 0
        %5043 = vmatprep.subr.bf16.mxu0 0
        %5044 = vmatpush1.bf16.msra.mxu0 0
        %5045 = vmatprep.subr.bf16.mxu0 0
        %5046 = vmatpush1.bf16.msra.mxu0 0
        %5047 = vmatprep.subr.bf16.mxu0 0
        %5048 = vmatpush1.bf16.msra.mxu0 0
        %5049 = vmatprep.subr.bf16.mxu0 0
        %5050 = vmatpush1.bf16.msra.mxu0 0
        %5051 = vmatprep.subr.bf16.mxu0 0
        %5052 = vmatpush1.bf16.msra.mxu0 0
        %5053 = vmatprep.subr.bf16.mxu0 0
        %5054 = vmatpush1.bf16.msra.mxu0 0
        %5055 = vmatprep.subr.bf16.mxu0 0
        %5056 = vmatpush1.bf16.msra.mxu0 0
        %5057 = vmatprep.subr.bf16.mxu0 0
        %5058 = vmatpush1.bf16.msra.mxu0 0
        %5059 = vmatprep.subr.bf16.mxu0 0
        %5060 = vmatpush1.bf16.msra.mxu0 0
        %5061 = vmatprep.subr.bf16.mxu0 0
        %5062 = vmatpush1.bf16.msra.mxu0 0
        %5063 = vmatprep.mubr.bf16.mxu0 0
        %5064 = vmatmul.mubr.bf16.gmra.mrb[0].mxu0 %v5026
        %v5065 = vpop.f32.mrb[0].mxu0
        %v5066 = vadd.f32 %v4698, %v5065
        %v5067 = vpop.f32.mrb[0].mxu0
        %v5068 = vpop.f32.mrb[0].mxu0
        %v5069 = vpop.f32.mrb[0].mxu0
        %5070 = vdwg.mxu0
        %v5072 = vsel %vm4609, %v3738, 0
        %v5075 = vsel %vm4613, %v3167, 0
        %5077 = vmatprep.subr.bf16.mxu0 0
        %5078 = vmatpush1.bf16.msra.mxu0 %v5075
        %5079 = vmatprep.subr.bf16.mxu0 0
        %5080 = vmatpush1.bf16.msra.mxu0 0
        %5081 = vmatprep.subr.bf16.mxu0 0
        %5082 = vmatpush1.bf16.msra.mxu0 0
        %5083 = vmatprep.subr.bf16.mxu0 0
        %5084 = vmatpush1.bf16.msra.mxu0 0
        %5085 = vmatprep.subr.bf16.mxu0 0
        %5086 = vmatpush1.bf16.msra.mxu0 0
        %5087 = vmatprep.subr.bf16.mxu0 0
        %5088 = vmatpush1.bf16.msra.mxu0 0
        %5089 = vmatprep.subr.bf16.mxu0 0
        %5090 = vmatpush1.bf16.msra.mxu0 0
        %5091 = vmatprep.subr.bf16.mxu0 0
        %5092 = vmatpush1.bf16.msra.mxu0 0
        %5093 = vmatprep.subr.bf16.mxu0 0
        %5094 = vmatpush1.bf16.msra.mxu0 0
        %5095 = vmatprep.subr.bf16.mxu0 0
        %5096 = vmatpush1.bf16.msra.mxu0 0
        %5097 = vmatprep.subr.bf16.mxu0 0
        %5098 = vmatpush1.bf16.msra.mxu0 0
        %5099 = vmatprep.subr.bf16.mxu0 0
        %5100 = vmatpush1.bf16.msra.mxu0 0
        %5101 = vmatprep.subr.bf16.mxu0 0
        %5102 = vmatpush1.bf16.msra.mxu0 0
        %5103 = vmatprep.subr.bf16.mxu0 0
        %5104 = vmatpush1.bf16.msra.mxu0 0
        %5105 = vmatprep.subr.bf16.mxu0 0
        %5106 = vmatpush1.bf16.msra.mxu0 0
        %5107 = vmatprep.subr.bf16.mxu0 0
        %5108 = vmatpush1.bf16.msra.mxu0 0
        %5109 = vmatprep.mubr.bf16.mxu0 0
        %5110 = vmatmul.mubr.bf16.gmra.mrb[0].mxu0 %v5072
        %v5111 = vpop.f32.mrb[0].mxu0
        %v5112 = vadd.f32 %v4744, %v5111
        %v5113 = vpop.f32.mrb[0].mxu0
        %v5114 = vpop.f32.mrb[0].mxu0
        %v5115 = vpop.f32.mrb[0].mxu0
        %5116 = vdwg.mxu0
        %v5118 = vsel %vm4609, %v3739, 0
        %v5121 = vsel %vm4613, %v3168, 0
        %5123 = vmatprep.subr.bf16.mxu0 0
        %5124 = vmatpush1.bf16.msra.mxu0 %v5121
        %5125 = vmatprep.subr.bf16.mxu0 0
        %5126 = vmatpush1.bf16.msra.mxu0 0
        %5127 = vmatprep.subr.bf16.mxu0 0
        %5128 = vmatpush1.bf16.msra.mxu0 0
        %5129 = vmatprep.subr.bf16.mxu0 0
        %5130 = vmatpush1.bf16.msra.mxu0 0
        %5131 = vmatprep.subr.bf16.mxu0 0
        %5132 = vmatpush1.bf16.msra.mxu0 0
        %5133 = vmatprep.subr.bf16.mxu0 0
        %5134 = vmatpush1.bf16.msra.mxu0 0
        %5135 = vmatprep.subr.bf16.mxu0 0
        %5136 = vmatpush1.bf16.msra.mxu0 0
        %5137 = vmatprep.subr.bf16.mxu0 0
        %5138 = vmatpush1.bf16.msra.mxu0 0
        %5139 = vmatprep.subr.bf16.mxu0 0
        %5140 = vmatpush1.bf16.msra.mxu0 0
        %5141 = vmatprep.subr.bf16.mxu0 0
        %5142 = vmatpush1.bf16.msra.mxu0 0
        %5143 = vmatprep.subr.bf16.mxu0 0
        %5144 = vmatpush1.bf16.msra.mxu0 0
        %5145 = vmatprep.subr.bf16.mxu0 0
        %5146 = vmatpush1.bf16.msra.mxu0 0
        %5147 = vmatprep.subr.bf16.mxu0 0
        %5148 = vmatpush1.bf16.msra.mxu0 0
        %5149 = vmatprep.subr.bf16.mxu0 0
        %5150 = vmatpush1.bf16.msra.mxu0 0
        %5151 = vmatprep.subr.bf16.mxu0 0
        %5152 = vmatpush1.bf16.msra.mxu0 0
        %5153 = vmatprep.subr.bf16.mxu0 0
        %5154 = vmatpush1.bf16.msra.mxu0 0
        %5155 = vmatprep.mubr.bf16.mxu0 0
        %5156 = vmatmul.mubr.bf16.gmra.mrb[0].mxu0 %v5118
        %v5157 = vpop.f32.mrb[0].mxu0
        %v5158 = vadd.f32 %v4790, %v5157
        %v5159 = vpop.f32.mrb[0].mxu0
        %v5160 = vpop.f32.mrb[0].mxu0
        %v5161 = vpop.f32.mrb[0].mxu0
        %5162 = vdwg.mxu0
        %v5164 = vsel %vm4609, %v3740, 0
        %v5167 = vsel %vm4613, %v3169, 0
        %5169 = vmatprep.subr.bf16.mxu0 0
        %5170 = vmatpush1.bf16.msra.mxu0 %v5167
        %5171 = vmatprep.subr.bf16.mxu0 0
        %5172 = vmatpush1.bf16.msra.mxu0 0
        %5173 = vmatprep.subr.bf16.mxu0 0
        %5174 = vmatpush1.bf16.msra.mxu0 0
        %5175 = vmatprep.subr.bf16.mxu0 0
        %5176 = vmatpush1.bf16.msra.mxu0 0
        %5177 = vmatprep.subr.bf16.mxu0 0
        %5178 = vmatpush1.bf16.msra.mxu0 0
        %5179 = vmatprep.subr.bf16.mxu0 0
        %5180 = vmatpush1.bf16.msra.mxu0 0
        %5181 = vmatprep.subr.bf16.mxu0 0
        %5182 = vmatpush1.bf16.msra.mxu0 0
        %5183 = vmatprep.subr.bf16.mxu0 0
        %5184 = vmatpush1.bf16.msra.mxu0 0
        %5185 = vmatprep.subr.bf16.mxu0 0
        %5186 = vmatpush1.bf16.msra.mxu0 0
        %5187 = vmatprep.subr.bf16.mxu0 0
        %5188 = vmatpush1.bf16.msra.mxu0 0
        %5189 = vmatprep.subr.bf16.mxu0 0
        %5190 = vmatpush1.bf16.msra.mxu0 0
        %5191 = vmatprep.subr.bf16.mxu0 0
        %5192 = vmatpush1.bf16.msra.mxu0 0
        %5193 = vmatprep.subr.bf16.mxu0 0
        %5194 = vmatpush1.bf16.msra.mxu0 0
        %5195 = vmatprep.subr.bf16.mxu0 0
        %5196 = vmatpush1.bf16.msra.mxu0 0
        %5197 = vmatprep.subr.bf16.mxu0 0
        %5198 = vmatpush1.bf16.msra.mxu0 0
        %5199 = vmatprep.subr.bf16.mxu0 0
        %5200 = vmatpush1.bf16.msra.mxu0 0
        %5201 = vmatprep.mubr.bf16.mxu0 0
        %5202 = vmatmul.mubr.bf16.gmra.mrb[0].mxu0 %v5164
        %v5203 = vpop.f32.mrb[0].mxu0
        %v5204 = vadd.f32 %v4836, %v5203
        %v5205 = vpop.f32.mrb[0].mxu0
        %v5206 = vpop.f32.mrb[0].mxu0
        %v5207 = vpop.f32.mrb[0].mxu0
        %5208 = vdwg.mxu0
        %v5210 = vsel %vm4609, %v3741, 0
        %v5213 = vsel %vm4613, %v3170, 0
        %5215 = vmatprep.subr.bf16.mxu0 0
        %5216 = vmatpush1.bf16.msra.mxu0 %v5213
        %5217 = vmatprep.subr.bf16.mxu0 0
        %5218 = vmatpush1.bf16.msra.mxu0 0
        %5219 = vmatprep.subr.bf16.mxu0 0
        %5220 = vmatpush1.bf16.msra.mxu0 0
        %5221 = vmatprep.subr.bf16.mxu0 0
        %5222 = vmatpush1.bf16.msra.mxu0 0
        %5223 = vmatprep.subr.bf16.mxu0 0
        %5224 = vmatpush1.bf16.msra.mxu0 0
        %5225 = vmatprep.subr.bf16.mxu0 0
        %5226 = vmatpush1.bf16.msra.mxu0 0
        %5227 = vmatprep.subr.bf16.mxu0 0
        %5228 = vmatpush1.bf16.msra.mxu0 0
        %5229 = vmatprep.subr.bf16.mxu0 0
        %5230 = vmatpush1.bf16.msra.mxu0 0
        %5231 = vmatprep.subr.bf16.mxu0 0
        %5232 = vmatpush1.bf16.msra.mxu0 0
        %5233 = vmatprep.subr.bf16.mxu0 0
        %5234 = vmatpush1.bf16.msra.mxu0 0
        %5235 = vmatprep.subr.bf16.mxu0 0
        %5236 = vmatpush1.bf16.msra.mxu0 0
        %5237 = vmatprep.subr.bf16.mxu0 0
        %5238 = vmatpush1.bf16.msra.mxu0 0
        %5239 = vmatprep.subr.bf16.mxu0 0
        %5240 = vmatpush1.bf16.msra.mxu0 0
        %5241 = vmatprep.subr.bf16.mxu0 0
        %5242 = vmatpush1.bf16.msra.mxu0 0
        %5243 = vmatprep.subr.bf16.mxu0 0
        %5244 = vmatpush1.bf16.msra.mxu0 0
        %5245 = vmatprep.subr.bf16.mxu0 0
        %5246 = vmatpush1.bf16.msra.mxu0 0
        %5247 = vmatprep.mubr.bf16.mxu0 0
        %5248 = vmatmul.mubr.bf16.gmra.mrb[0].mxu0 %v5210
        %v5249 = vpop.f32.mrb[0].mxu0
        %v5250 = vadd.f32 %v4882, %v5249
        %v5251 = vpop.f32.mrb[0].mxu0
        %v5252 = vpop.f32.mrb[0].mxu0
        %v5253 = vpop.f32.mrb[0].mxu0
        %5254 = vdwg.mxu0
        %v5256 = vsel %vm4609, %v3742, 0
        %v5259 = vsel %vm4613, %v3171, 0
        %5261 = vmatprep.subr.bf16.mxu0 0
        %5262 = vmatpush1.bf16.msra.mxu0 %v5259
        %5263 = vmatprep.subr.bf16.mxu0 0
        %5264 = vmatpush1.bf16.msra.mxu0 0
        %5265 = vmatprep.subr.bf16.mxu0 0
        %5266 = vmatpush1.bf16.msra.mxu0 0
        %5267 = vmatprep.subr.bf16.mxu0 0
        %5268 = vmatpush1.bf16.msra.mxu0 0
        %5269 = vmatprep.subr.bf16.mxu0 0
        %5270 = vmatpush1.bf16.msra.mxu0 0
        %5271 = vmatprep.subr.bf16.mxu0 0
        %5272 = vmatpush1.bf16.msra.mxu0 0
        %5273 = vmatprep.subr.bf16.mxu0 0
        %5274 = vmatpush1.bf16.msra.mxu0 0
        %5275 = vmatprep.subr.bf16.mxu0 0
        %5276 = vmatpush1.bf16.msra.mxu0 0
        %5277 = vmatprep.subr.bf16.mxu0 0
        %5278 = vmatpush1.bf16.msra.mxu0 0
        %5279 = vmatprep.subr.bf16.mxu0 0
        %5280 = vmatpush1.bf16.msra.mxu0 0
        %5281 = vmatprep.subr.bf16.mxu0 0
        %5282 = vmatpush1.bf16.msra.mxu0 0
        %5283 = vmatprep.subr.bf16.mxu0 0
        %5284 = vmatpush1.bf16.msra.mxu0 0
        %5285 = vmatprep.subr.bf16.mxu0 0
        %5286 = vmatpush1.bf16.msra.mxu0 0
        %5287 = vmatprep.subr.bf16.mxu0 0
        %5288 = vmatpush1.bf16.msra.mxu0 0
        %5289 = vmatprep.subr.bf16.mxu0 0
        %5290 = vmatpush1.bf16.msra.mxu0 0
        %5291 = vmatprep.subr.bf16.mxu0 0
        %5292 = vmatpush1.bf16.msra.mxu0 0
        %5293 = vmatprep.mubr.bf16.mxu0 0
        %5294 = vmatmul.mubr.bf16.gmra.mrb[0].mxu0 %v5256
        %v5295 = vpop.f32.mrb[0].mxu0
        %v5296 = vadd.f32 %v4928, %v5295
        %v5297 = vpop.f32.mrb[0].mxu0
        %v5298 = vpop.f32.mrb[0].mxu0
        %v5299 = vpop.f32.mrb[0].mxu0
        %5300 = vdwg.mxu0
        %v5302 = vsel %vm4609, %v3743, 0
        %v5305 = vsel %vm4613, %v3172, 0
        %5307 = vmatprep.subr.bf16.mxu0 0
        %5308 = vmatpush1.bf16.msra.mxu0 %v5305
        %5309 = vmatprep.subr.bf16.mxu0 0
        %5310 = vmatpush1.bf16.msra.mxu0 0
        %5311 = vmatprep.subr.bf16.mxu0 0
        %5312 = vmatpush1.bf16.msra.mxu0 0
        %5313 = vmatprep.subr.bf16.mxu0 0
        %5314 = vmatpush1.bf16.msra.mxu0 0
        %5315 = vmatprep.subr.bf16.mxu0 0
        %5316 = vmatpush1.bf16.msra.mxu0 0
        %5317 = vmatprep.subr.bf16.mxu0 0
        %5318 = vmatpush1.bf16.msra.mxu0 0
        %5319 = vmatprep.subr.bf16.mxu0 0
        %5320 = vmatpush1.bf16.msra.mxu0 0
        %5321 = vmatprep.subr.bf16.mxu0 0
        %5322 = vmatpush1.bf16.msra.mxu0 0
        %5323 = vmatprep.subr.bf16.mxu0 0
        %5324 = vmatpush1.bf16.msra.mxu0 0
        %5325 = vmatprep.subr.bf16.mxu0 0
        %5326 = vmatpush1.bf16.msra.mxu0 0
        %5327 = vmatprep.subr.bf16.mxu0 0
        %5328 = vmatpush1.bf16.msra.mxu0 0
        %5329 = vmatprep.subr.bf16.mxu0 0
        %5330 = vmatpush1.bf16.msra.mxu0 0
        %5331 = vmatprep.subr.bf16.mxu0 0
        %5332 = vmatpush1.bf16.msra.mxu0 0
        %5333 = vmatprep.subr.bf16.mxu0 0
        %5334 = vmatpush1.bf16.msra.mxu0 0
        %5335 = vmatprep.subr.bf16.mxu0 0
        %5336 = vmatpush1.bf16.msra.mxu0 0
        %5337 = vmatprep.subr.bf16.mxu0 0
        %5338 = vmatpush1.bf16.msra.mxu0 0
        %5339 = vmatprep.mubr.bf16.mxu0 0
        %5340 = vmatmul.mubr.bf16.gmra.mrb[0].mxu0 %v5302
        %v5341 = vpop.f32.mrb[0].mxu0
        %v5342 = vadd.f32 %v4974, %v5341
        %v5343 = vpop.f32.mrb[0].mxu0
        %v5344 = vpop.f32.mrb[0].mxu0
        %v5345 = vpop.f32.mrb[0].mxu0
        %5346 = vdwg.mxu0
        %v5355 = vcombine.high %v5020, %v5020
        %v5357 = vunpack.c.l.s4 1983009808
        %v5358 = vunpack.c.0.s8 %v5357
        %v5359 = vlaneseq
        %v5360 = vshrl.u32 %v5359, 7
        %v5361 = vsub.s32 %v5358, %v5360
        %v5362 = vrot.slane %v5020, %v5361
        %v5364 = vunpack.c.l.s4 1983009808
        %v5365 = vunpack.c.0.s8 %v5364
        %v5366 = vlaneseq
        %v5367 = vshrl.u32 %v5366, 7
        %v5368 = vsub.s32 %v5365, %v5367
        %v5369 = vrot.slane %v5355, %v5368
        %v5370 = vcombine.high %v5362, %v5362
        %v5371 = vcombine.high %v5066, %v5066
        %v5373 = vunpack.c.l.s4 1983009808
        %v5374 = vunpack.c.0.s8 %v5373
        %v5375 = vlaneseq
        %v5376 = vshrl.u32 %v5375, 7
        %v5377 = vsub.s32 %v5374, %v5376
        %v5378 = vrot.slane %v5066, %v5377
        %v5380 = vunpack.c.l.s4 1983009808
        %v5381 = vunpack.c.0.s8 %v5380
        %v5382 = vlaneseq
        %v5383 = vshrl.u32 %v5382, 7
        %v5384 = vsub.s32 %v5381, %v5383
        %v5385 = vrot.slane %v5371, %v5384
        %v5386 = vcombine.high %v5378, %v5378
        %v5387 = vcombine.high %v5112, %v5112
        %v5389 = vunpack.c.l.s4 1983009808
        %v5390 = vunpack.c.0.s8 %v5389
        %v5391 = vlaneseq
        %v5392 = vshrl.u32 %v5391, 7
        %v5393 = vsub.s32 %v5390, %v5392
        %v5394 = vrot.slane %v5112, %v5393
        %v5396 = vunpack.c.l.s4 1983009808
        %v5397 = vunpack.c.0.s8 %v5396
        %v5398 = vlaneseq
        %v5399 = vshrl.u32 %v5398, 7
        %v5400 = vsub.s32 %v5397, %v5399
        %v5401 = vrot.slane %v5387, %v5400
        %v5402 = vcombine.high %v5394, %v5394
        %v5403 = vcombine.high %v5158, %v5158
        %v5405 = vunpack.c.l.s4 1983009808
        %v5406 = vunpack.c.0.s8 %v5405
        %v5407 = vlaneseq
        %v5408 = vshrl.u32 %v5407, 7
        %v5409 = vsub.s32 %v5406, %v5408
        %v5410 = vrot.slane %v5158, %v5409
        %v5412 = vunpack.c.l.s4 1983009808
        %v5413 = vunpack.c.0.s8 %v5412
        %v5414 = vlaneseq
        %v5415 = vshrl.u32 %v5414, 7
        %v5416 = vsub.s32 %v5413, %v5415
        %v5417 = vrot.slane %v5403, %v5416
        %v5418 = vcombine.high %v5410, %v5410
        %v5419 = vcombine.high %v5204, %v5204
        %v5421 = vunpack.c.l.s4 1983009808
        %v5422 = vunpack.c.0.s8 %v5421
        %v5423 = vlaneseq
        %v5424 = vshrl.u32 %v5423, 7
        %v5425 = vsub.s32 %v5422, %v5424
        %v5426 = vrot.slane %v5204, %v5425
        %v5428 = vunpack.c.l.s4 1983009808
        %v5429 = vunpack.c.0.s8 %v5428
        %v5430 = vlaneseq
        %v5431 = vshrl.u32 %v5430, 7
        %v5432 = vsub.s32 %v5429, %v5431
        %v5433 = vrot.slane %v5419, %v5432
        %v5434 = vcombine.high %v5426, %v5426
        %v5435 = vcombine.high %v5250, %v5250
        %v5437 = vunpack.c.l.s4 1983009808
        %v5438 = vunpack.c.0.s8 %v5437
        %v5439 = vlaneseq
        %v5440 = vshrl.u32 %v5439, 7
        %v5441 = vsub.s32 %v5438, %v5440
        %v5442 = vrot.slane %v5250, %v5441
        %v5444 = vunpack.c.l.s4 1983009808
        %v5445 = vunpack.c.0.s8 %v5444
        %v5446 = vlaneseq
        %v5447 = vshrl.u32 %v5446, 7
        %v5448 = vsub.s32 %v5445, %v5447
        %v5449 = vrot.slane %v5435, %v5448
        %v5450 = vcombine.high %v5442, %v5442
        %v5451 = vcombine.high %v5296, %v5296
        %v5453 = vunpack.c.l.s4 1983009808
        %v5454 = vunpack.c.0.s8 %v5453
        %v5455 = vlaneseq
        %v5456 = vshrl.u32 %v5455, 7
        %v5457 = vsub.s32 %v5454, %v5456
        %v5458 = vrot.slane %v5296, %v5457
        %v5460 = vunpack.c.l.s4 1983009808
        %v5461 = vunpack.c.0.s8 %v5460
        %v5462 = vlaneseq
        %v5463 = vshrl.u32 %v5462, 7
        %v5464 = vsub.s32 %v5461, %v5463
        %v5465 = vrot.slane %v5451, %v5464
        %v5466 = vcombine.high %v5458, %v5458
        %v5467 = vcombine.high %v5342, %v5342
        %v5469 = vunpack.c.l.s4 1983009808
        %v5470 = vunpack.c.0.s8 %v5469
        %v5471 = vlaneseq
        %v5472 = vshrl.u32 %v5471, 7
        %v5473 = vsub.s32 %v5470, %v5472
        %v5474 = vrot.slane %v5342, %v5473
        %v5476 = vunpack.c.l.s4 1983009808
        %v5477 = vunpack.c.0.s8 %v5476
        %v5478 = vlaneseq
        %v5479 = vshrl.u32 %v5478, 7
        %v5480 = vsub.s32 %v5477, %v5479
        %v5481 = vrot.slane %v5467, %v5480
        %v5482 = vcombine.high %v5474, %v5474
        %v5483 = vld [vmem:[%s39] sm:$0xf]
        %v5484 = vld [vmem:[%s39 + $0x4] sm:$0xf]
        %v5485 = vld [vmem:[%s39 + $0x8] sm:$0xf]
        %v5486 = vld [vmem:[%s39 + $0xc] sm:$0xf]
        %v5487 = vcombine.low %v5362, %v5370
        %v5488 = vcombine.low %v5369, %v5378
        %v5490 = vunpack.c.l.s4 1983009808
        %v5491 = vunpack.c.0.s8 %v5490
        %v5492 = vlaneseq
        %v5493 = vshrl.u32 %v5492, 7
        %v5494 = vsub.s32 %v5491, %v5493
        %v5495 = vrot.slane %v5487, %v5494
        %v5497 = vunpack.c.l.s4 1983009808
        %v5498 = vunpack.c.0.s8 %v5497
        %v5499 = vlaneseq
        %v5500 = vshrl.u32 %v5499, 7
        %v5501 = vsub.s32 %v5498, %v5500
        %v5502 = vrot.slane %v5488, %v5501
        %v5503 = vcombine.low %v5495, %v5502
        %v5504 = vcombine.low %v5386, %v5385
        %v5505 = vcombine.low %v5394, %v5402
        %v5507 = vunpack.c.l.s4 1983009808
        %v5508 = vunpack.c.0.s8 %v5507
        %v5509 = vlaneseq
        %v5510 = vshrl.u32 %v5509, 7
        %v5511 = vsub.s32 %v5508, %v5510
        %v5512 = vrot.slane %v5504, %v5511
        %v5514 = vunpack.c.l.s4 1983009808
        %v5515 = vunpack.c.0.s8 %v5514
        %v5516 = vlaneseq
        %v5517 = vshrl.u32 %v5516, 7
        %v5518 = vsub.s32 %v5515, %v5517
        %v5519 = vrot.slane %v5505, %v5518
        %v5520 = vcombine.low %v5512, %v5519
        %v5521 = vcombine.low %v5401, %v5410
        %v5522 = vcombine.low %v5418, %v5417
        %v5524 = vunpack.c.l.s4 1983009808
        %v5525 = vunpack.c.0.s8 %v5524
        %v5526 = vlaneseq
        %v5527 = vshrl.u32 %v5526, 7
        %v5528 = vsub.s32 %v5525, %v5527
        %v5529 = vrot.slane %v5521, %v5528
        %v5531 = vunpack.c.l.s4 1983009808
        %v5532 = vunpack.c.0.s8 %v5531
        %v5533 = vlaneseq
        %v5534 = vshrl.u32 %v5533, 7
        %v5535 = vsub.s32 %v5532, %v5534
        %v5536 = vrot.slane %v5522, %v5535
        %v5537 = vcombine.low %v5529, %v5536
        %v5538 = vcombine.low %v5426, %v5434
        %v5539 = vcombine.low %v5433, %v5442
        %v5541 = vunpack.c.l.s4 1983009808
        %v5542 = vunpack.c.0.s8 %v5541
        %v5543 = vlaneseq
        %v5544 = vshrl.u32 %v5543, 7
        %v5545 = vsub.s32 %v5542, %v5544
        %v5546 = vrot.slane %v5538, %v5545
        %v5548 = vunpack.c.l.s4 1983009808
        %v5549 = vunpack.c.0.s8 %v5548
        %v5550 = vlaneseq
        %v5551 = vshrl.u32 %v5550, 7
        %v5552 = vsub.s32 %v5549, %v5551
        %v5553 = vrot.slane %v5539, %v5552
        %v5554 = vcombine.low %v5546, %v5553
        %v5555 = vcombine.low %v5450, %v5449
        %v5556 = vcombine.low %v5458, %v5466
        %v5558 = vunpack.c.l.s4 1983009808
        %v5559 = vunpack.c.0.s8 %v5558
        %v5560 = vlaneseq
        %v5561 = vshrl.u32 %v5560, 7
        %v5562 = vsub.s32 %v5559, %v5561
        %v5563 = vrot.slane %v5555, %v5562
        %v5565 = vunpack.c.l.s4 1983009808
        %v5566 = vunpack.c.0.s8 %v5565
        %v5567 = vlaneseq
        %v5568 = vshrl.u32 %v5567, 7
        %v5569 = vsub.s32 %v5566, %v5568
        %v5570 = vrot.slane %v5556, %v5569
        %v5571 = vcombine.low %v5563, %v5570
        %v5572 = vcombine.low %v5465, %v5474
        %v5573 = vcombine.low %v5482, %v5481
        %v5575 = vunpack.c.l.s4 1983009808
        %v5576 = vunpack.c.0.s8 %v5575
        %v5577 = vlaneseq
        %v5578 = vshrl.u32 %v5577, 7
        %v5579 = vsub.s32 %v5576, %v5578
        %v5580 = vrot.slane %v5572, %v5579
        %v5582 = vunpack.c.l.s4 1983009808
        %v5583 = vunpack.c.0.s8 %v5582
        %v5584 = vlaneseq
        %v5585 = vshrl.u32 %v5584, 7
        %v5586 = vsub.s32 %v5583, %v5585
        %v5587 = vrot.slane %v5573, %v5586
        %v5588 = vcombine.low %v5580, %v5587
        %v5595 = vpack.c.bf16 %v5520, %v5503
        %v5596 = vpack.c.bf16 %v5554, %v5537
        %v5597 = vpack.c.bf16 %v5588, %v5571
        %v5598 = vld [vmem:[%s41] sm:$0x1]
        %v5600 = vlaneseq
        %v5601 = vshrl.u32 %v5600, 7
        %v5602 = vsub.s32 0, %v5601
        %v5603 = vrot.slane %v5598, %v5602
        %v5609 = vunpack.c.l.b16 %v5483
        %v5610 = vunpack.c.l.b16 %v5484
        %v5611 = vunpack.c.l.b16 %v5485
        %v5612 = vunpack.c.l.b16 %v5486
        %v5613 = vpack.c.b16 %v5610, %v5609
        %v5614 = vpack.c.b16 %v5612, %v5611
        %v5618 = vsel %vm1082, %v5595, 0
        %v5621 = vsel %vm1082, %v5596, 0
        %v5624 = vsel %vm1082, %v5597, 0
        %5626 = vmatprep.subr.bf16.mxu0 0
        %5627 = vmatpush1.bf16.msra.mxu0 %v5613
        %5628 = vmatprep.subr.bf16.mxu0 0
        %5629 = vmatpush1.bf16.msra.mxu0 %v5614
        %5630 = vmatprep.subr.bf16.mxu0 0
        %5631 = vmatpush1.bf16.msra.mxu0 0
        %5632 = vmatprep.subr.bf16.mxu0 0
        %5633 = vmatpush1.bf16.msra.mxu0 0
        %5634 = vmatprep.subr.bf16.mxu0 0
        %5635 = vmatpush1.bf16.msra.mxu0 0
        %5636 = vmatprep.subr.bf16.mxu0 0
        %5637 = vmatpush1.bf16.msra.mxu0 0
        %5638 = vmatprep.subr.bf16.mxu0 0
        %5639 = vmatpush1.bf16.msra.mxu0 0
        %5640 = vmatprep.subr.bf16.mxu0 0
        %5641 = vmatpush1.bf16.msra.mxu0 0
        %5642 = vmatprep.subr.bf16.mxu0 0
        %5643 = vmatpush1.bf16.msra.mxu0 0
        %5644 = vmatprep.subr.bf16.mxu0 0
        %5645 = vmatpush1.bf16.msra.mxu0 0
        %5646 = vmatprep.subr.bf16.mxu0 0
        %5647 = vmatpush1.bf16.msra.mxu0 0
        %5648 = vmatprep.subr.bf16.mxu0 0
        %5649 = vmatpush1.bf16.msra.mxu0 0
        %5650 = vmatprep.subr.bf16.mxu0 0
        %5651 = vmatpush1.bf16.msra.mxu0 0
        %5652 = vmatprep.subr.bf16.mxu0 0
        %5653 = vmatpush1.bf16.msra.mxu0 0
        %5654 = vmatprep.subr.bf16.mxu0 0
        %5655 = vmatpush1.bf16.msra.mxu0 0
        %5656 = vmatprep.subr.bf16.mxu0 0
        %5657 = vmatpush1.bf16.msra.mxu0 0
        %5658 = vmatprep.mubr.bf16.mxu0 0
        %5659 = vmatmul.mubr.bf16.gmra.mrb[0].mxu0 %v5618
        %v5660 = vpop.f32.mrb[0].mxu0
        %v5661 = vadd.f32 %v5603, %v5660
        %v5662 = vpop.f32.mrb[0].mxu0
        %v5663 = vpop.f32.mrb[0].mxu0
        %v5664 = vadd.f32 %v5603, %v5663
        %v5665 = vpop.f32.mrb[0].mxu0
        %5666 = vmatprep.mubr.bf16.mxu0 0
        %5667 = vmatmul.mubr.bf16.gmra.mrb[0].mxu0 %v5621
        %v5668 = vpop.f32.mrb[0].mxu0
        %v5669 = vadd.f32 %v5603, %v5668
        %v5670 = vpop.f32.mrb[0].mxu0
        %v5671 = vpop.f32.mrb[0].mxu0
        %v5672 = vadd.f32 %v5603, %v5671
        %v5673 = vpop.f32.mrb[0].mxu0
        %5674 = vmatprep.mubr.bf16.mxu0 0
        %5675 = vmatmul.mubr.bf16.gmra.mrb[0].mxu0 %v5624
        %v5676 = vpop.f32.mrb[0].mxu0
        %v5677 = vadd.f32 %v5603, %v5676
        %v5678 = vpop.f32.mrb[0].mxu0
        %v5679 = vpop.f32.mrb[0].mxu0
        %v5680 = vadd.f32 %v5603, %v5679
        %v5681 = vpop.f32.mrb[0].mxu0
        %5682 = vdwg.mxu0
        %v5683 = vadd.f32 %v5661, %v1906
        %v5684 = vadd.f32 %v5664, %v1923
        %v5685 = vadd.f32 %v5669, %v1940
        %v5686 = vadd.f32 %v5672, %v1957
        %v5687 = vadd.f32 %v5677, %v1974
        %v5688 = vadd.f32 %v5680, %v1991
        %v5689 = vld [vmem:[%s43] sm:$0x1]
        %v5690 = vld [vmem:[%s45] sm:$0x1]
        %v5691 = vsel %vm1082, %v5683, 0.0
        %5692 = vadd.xlane.f32.xlu0 %v5691
        %v5693 = vpop.xlane.xlu0 %5692
        %v5694 = vsel %vm1082, %v5684, 0.0
        %5695 = vadd.xlane.f32.xlu0 %v5694
        %v5696 = vpop.xlane.xlu0 %5695
        %v5697 = vsel %vm1082, %v5685, 0.0
        %5698 = vadd.xlane.f32.xlu0 %v5697
        %v5699 = vpop.xlane.xlu0 %5698
        %v5700 = vsel %vm1082, %v5686, 0.0
        %5701 = vadd.xlane.f32.xlu0 %v5700
        %v5702 = vpop.xlane.xlu0 %5701
        %v5703 = vsel %vm1082, %v5687, 0.0
        %5704 = vadd.xlane.f32.xlu0 %v5703
        %v5705 = vpop.xlane.xlu0 %5704
        %v5706 = vsel %vm1082, %v5688, 0.0
        %5707 = vadd.xlane.f32.xlu0 %v5706
        %v5708 = vpop.xlane.xlu0 %5707
        %v5709 = vrcp.pop 32.0
        %v5710 = vmul.f32 %v5693, %v5709
        %v5711 = vmul.f32 %v5696, %v5709
        %v5712 = vmul.f32 %v5699, %v5709
        %v5713 = vmul.f32 %v5702, %v5709
        %v5714 = vmul.f32 %v5705, %v5709
        %v5715 = vmul.f32 %v5708, %v5709
        %v5716 = vsub.f32 %v5683, %v5710
        %v5717 = vsub.f32 %v5684, %v5711
        %v5718 = vsub.f32 %v5685, %v5712
        %v5719 = vsub.f32 %v5686, %v5713
        %v5720 = vsub.f32 %v5687, %v5714
        %v5721 = vsub.f32 %v5688, %v5715
        %v5722 = vmul.f32 %v5716, %v5716
        %v5723 = vmul.f32 %v5717, %v5717
        %v5724 = vmul.f32 %v5718, %v5718
        %v5725 = vmul.f32 %v5719, %v5719
        %v5726 = vmul.f32 %v5720, %v5720
        %v5727 = vmul.f32 %v5721, %v5721
        %v5728 = vsel %vm1082, %v5722, 0.0
        %5729 = vadd.xlane.f32.xlu0 %v5728
        %v5730 = vpop.xlane.xlu0 %5729
        %v5731 = vsel %vm1082, %v5723, 0.0
        %5732 = vadd.xlane.f32.xlu0 %v5731
        %v5733 = vpop.xlane.xlu0 %5732
        %v5734 = vsel %vm1082, %v5724, 0.0
        %5735 = vadd.xlane.f32.xlu0 %v5734
        %v5736 = vpop.xlane.xlu0 %5735
        %v5737 = vsel %vm1082, %v5725, 0.0
        %5738 = vadd.xlane.f32.xlu0 %v5737
        %v5739 = vpop.xlane.xlu0 %5738
        %v5740 = vsel %vm1082, %v5726, 0.0
        %5741 = vadd.xlane.f32.xlu0 %v5740
        %v5742 = vpop.xlane.xlu0 %5741
        %v5743 = vsel %vm1082, %v5727, 0.0
        %5744 = vadd.xlane.f32.xlu0 %v5743
        %v5745 = vpop.xlane.xlu0 %5744
        %v5746 = vmul.f32 %v5730, %v5709
        %v5747 = vmul.f32 %v5733, %v5709
        %v5748 = vmul.f32 %v5736, %v5709
        %v5749 = vmul.f32 %v5739, %v5709
        %v5750 = vmul.f32 %v5742, %v5709
        %v5751 = vmul.f32 %v5745, %v5709
        %v5752 = vadd.f32 %v5746, 1e-12
        %v5753 = vadd.f32 %v5747, 1e-12
        %v5754 = vadd.f32 %v5748, 1e-12
        %v5755 = vadd.f32 %v5749, 1e-12
        %v5756 = vadd.f32 %v5750, 1e-12
        %v5757 = vadd.f32 %v5751, 1e-12
        %v5758 = vrsqrt.pop %v5752
        %v5759 = vrsqrt.pop %v5753
        %v5760 = vrsqrt.pop %v5754
        %v5761 = vrsqrt.pop %v5755
        %v5762 = vrsqrt.pop %v5756
        %v5763 = vrsqrt.pop %v5757
        %v5764 = vmul.f32 %v5716, %v5758
        %v5765 = vmul.f32 %v5717, %v5759
        %v5766 = vmul.f32 %v5718, %v5760
        %v5767 = vmul.f32 %v5719, %v5761
        %v5768 = vmul.f32 %v5720, %v5762
        %v5769 = vmul.f32 %v5721, %v5763
        %v5771 = vlaneseq
        %v5772 = vshrl.u32 %v5771, 7
        %v5773 = vsub.s32 0, %v5772
        %v5774 = vrot.slane %v5689, %v5773
        %v5776 = vmul.f32 %v5764, %v5774
        %v5777 = vmul.f32 %v5765, %v5774
        %v5778 = vmul.f32 %v5766, %v5774
        %v5779 = vmul.f32 %v5767, %v5774
        %v5780 = vmul.f32 %v5768, %v5774
        %v5781 = vmul.f32 %v5769, %v5774
        %v5783 = vlaneseq
        %v5784 = vshrl.u32 %v5783, 7
        %v5785 = vsub.s32 0, %v5784
        %v5786 = vrot.slane %v5690, %v5785
        %v5788 = vadd.f32 %v5776, %v5786
        %v5789 = vadd.f32 %v5777, %v5786
        %v5790 = vadd.f32 %v5778, %v5786
        %v5791 = vadd.f32 %v5779, %v5786
        %v5792 = vadd.f32 %v5780, %v5786
        %v5793 = vadd.f32 %v5781, %v5786
        %v5794 = vld [vmem:[%s47] sm:$0xf]
        %v5795 = vld [vmem:[%s47 + $0x4] sm:$0xf]
        %v5796 = vld [vmem:[%s47 + $0x8] sm:$0xf]
        %v5797 = vld [vmem:[%s47 + $0xc] sm:$0xf]
        %v5798 = vpack.c.bf16 %v5789, %v5788
        %v5799 = vpack.c.bf16 %v5791, %v5790
        %v5800 = vpack.c.bf16 %v5793, %v5792
        %v5801 = vld [vmem:[%s49] sm:$0x1]
        %v5803 = vlaneseq
        %v5804 = vshrl.u32 %v5803, 7
        %v5805 = vsub.s32 0, %v5804
        %v5806 = vrot.slane %v5801, %v5805
        %v5812 = vunpack.c.l.b16 %v5794
        %v5813 = vunpack.c.l.b16 %v5795
        %v5814 = vunpack.c.l.b16 %v5796
        %v5815 = vunpack.c.l.b16 %v5797
        %v5816 = vpack.c.b16 %v5813, %v5812
        %v5817 = vpack.c.b16 %v5815, %v5814
        %v5821 = vsel %vm1082, %v5798, 0
        %v5824 = vsel %vm1082, %v5799, 0
        %v5827 = vsel %vm1082, %v5800, 0
        %5829 = vmatprep.subr.bf16.mxu0 0
        %5830 = vmatpush1.bf16.msra.mxu0 %v5816
        %5831 = vmatprep.subr.bf16.mxu0 0
        %5832 = vmatpush1.bf16.msra.mxu0 %v5817
        %5833 = vmatprep.subr.bf16.mxu0 0
        %5834 = vmatpush1.bf16.msra.mxu0 0
        %5835 = vmatprep.subr.bf16.mxu0 0
        %5836 = vmatpush1.bf16.msra.mxu0 0
        %5837 = vmatprep.subr.bf16.mxu0 0
        %5838 = vmatpush1.bf16.msra.mxu0 0
        %5839 = vmatprep.subr.bf16.mxu0 0
        %5840 = vmatpush1.bf16.msra.mxu0 0
        %5841 = vmatprep.subr.bf16.mxu0 0
        %5842 = vmatpush1.bf16.msra.mxu0 0
        %5843 = vmatprep.subr.bf16.mxu0 0
        %5844 = vmatpush1.bf16.msra.mxu0 0
        %5845 = vmatprep.subr.bf16.mxu0 0
        %5846 = vmatpush1.bf16.msra.mxu0 0
        %5847 = vmatprep.subr.bf16.mxu0 0
        %5848 = vmatpush1.bf16.msra.mxu0 0
        %5849 = vmatprep.subr.bf16.mxu0 0
        %5850 = vmatpush1.bf16.msra.mxu0 0
        %5851 = vmatprep.subr.bf16.mxu0 0
        %5852 = vmatpush1.bf16.msra.mxu0 0
        %5853 = vmatprep.subr.bf16.mxu0 0
        %5854 = vmatpush1.bf16.msra.mxu0 0
        %5855 = vmatprep.subr.bf16.mxu0 0
        %5856 = vmatpush1.bf16.msra.mxu0 0
        %5857 = vmatprep.subr.bf16.mxu0 0
        %5858 = vmatpush1.bf16.msra.mxu0 0
        %5859 = vmatprep.subr.bf16.mxu0 0
        %5860 = vmatpush1.bf16.msra.mxu0 0
        %5861 = vmatprep.mubr.bf16.mxu0 0
        %5862 = vmatmul.mubr.bf16.gmra.mrb[0].mxu0 %v5821
        %v5863 = vpop.f32.mrb[0].mxu0
        %v5864 = vadd.f32 %v5806, %v5863
        %v5865 = vpop.f32.mrb[0].mxu0
        %v5866 = vpop.f32.mrb[0].mxu0
        %v5867 = vadd.f32 %v5806, %v5866
        %v5868 = vpop.f32.mrb[0].mxu0
        %5869 = vmatprep.mubr.bf16.mxu0 0
        %5870 = vmatmul.mubr.bf16.gmra.mrb[0].mxu0 %v5824
        %v5871 = vpop.f32.mrb[0].mxu0
        %v5872 = vadd.f32 %v5806, %v5871
        %v5873 = vpop.f32.mrb[0].mxu0
        %v5874 = vpop.f32.mrb[0].mxu0
        %v5875 = vadd.f32 %v5806, %v5874
        %v5876 = vpop.f32.mrb[0].mxu0
        %5877 = vmatprep.mubr.bf16.mxu0 0
        %5878 = vmatmul.mubr.bf16.gmra.mrb[0].mxu0 %v5827
        %v5879 = vpop.f32.mrb[0].mxu0
        %v5880 = vadd.f32 %v5806, %v5879
        %v5881 = vpop.f32.mrb[0].mxu0
        %v5882 = vpop.f32.mrb[0].mxu0
        %v5883 = vadd.f32 %v5806, %v5882
        %v5884 = vpop.f32.mrb[0].mxu0
        %5885 = vdwg.mxu0
        %v5886 = vmul.f32 %v5864, 0.5
        %v5887 = vmul.f32 %v5867, 0.5
        %v5888 = vmul.f32 %v5872, 0.5
        %v5889 = vmul.f32 %v5875, 0.5
        %v5890 = vmul.f32 %v5880, 0.5
        %v5891 = vmul.f32 %v5883, 0.5
        %v5892 = vmul.f32 %v5864, %v5864
        %v5893 = vmul.f32 %v5867, %v5867
        %v5894 = vmul.f32 %v5872, %v5872
        %v5895 = vmul.f32 %v5875, %v5875
        %v5896 = vmul.f32 %v5880, %v5880
        %v5897 = vmul.f32 %v5883, %v5883
        %v5898 = vmul.f32 %v5892, %v5864
        %v5899 = vmul.f32 %v5893, %v5867
        %v5900 = vmul.f32 %v5894, %v5872
        %v5901 = vmul.f32 %v5895, %v5875
        %v5902 = vmul.f32 %v5896, %v5880
        %v5903 = vmul.f32 %v5897, %v5883
        %v5904 = vmul.f32 %v5898, 0.044715
        %v5905 = vmul.f32 %v5899, 0.044715
        %v5906 = vmul.f32 %v5900, 0.044715
        %v5907 = vmul.f32 %v5901, 0.044715
        %v5908 = vmul.f32 %v5902, 0.044715
        %v5909 = vmul.f32 %v5903, 0.044715
        %v5910 = vadd.f32 %v5864, %v5904
        %v5911 = vadd.f32 %v5867, %v5905
        %v5912 = vadd.f32 %v5872, %v5906
        %v5913 = vadd.f32 %v5875, %v5907
        %v5914 = vadd.f32 %v5880, %v5908
        %v5915 = vadd.f32 %v5883, %v5909
        %v5916 = vmul.f32 %v5910, 0.7978846
        %v5917 = vmul.f32 %v5911, 0.7978846
        %v5918 = vmul.f32 %v5912, 0.7978846
        %v5919 = vmul.f32 %v5913, 0.7978846
        %v5920 = vmul.f32 %v5914, 0.7978846
        %v5921 = vmul.f32 %v5915, 0.7978846
        %v5922 = vtanh.pop %v5916
        %v5923 = vtanh.pop %v5917
        %v5924 = vtanh.pop %v5918
        %v5925 = vtanh.pop %v5919
        %v5926 = vtanh.pop %v5920
        %v5927 = vtanh.pop %v5921
        %v5928 = vadd.f32 %v5922, 1.0
        %v5929 = vadd.f32 %v5923, 1.0
        %v5930 = vadd.f32 %v5924, 1.0
        %v5931 = vadd.f32 %v5925, 1.0
        %v5932 = vadd.f32 %v5926, 1.0
        %v5933 = vadd.f32 %v5927, 1.0
        %v5934 = vmul.f32 %v5886, %v5928
        %v5935 = vmul.f32 %v5887, %v5929
        %v5936 = vmul.f32 %v5888, %v5930
        %v5937 = vmul.f32 %v5889, %v5931
        %v5938 = vmul.f32 %v5890, %v5932
        %v5939 = vmul.f32 %v5891, %v5933
        %v5940 = vld [vmem:[%s51] sm:$0xf]
        %v5941 = vld [vmem:[%s51 + $0x4] sm:$0xf]
        %v5942 = vld [vmem:[%s51 + $0x8] sm:$0xf]
        %v5943 = vld [vmem:[%s51 + $0xc] sm:$0xf]
        %v5944 = vpack.c.bf16 %v5935, %v5934
        %v5945 = vpack.c.bf16 %v5937, %v5936
        %v5946 = vpack.c.bf16 %v5939, %v5938
        %v5947 = vld [vmem:[%s53] sm:$0x1]
        %v5949 = vlaneseq
        %v5950 = vshrl.u32 %v5949, 7
        %v5951 = vsub.s32 0, %v5950
        %v5952 = vrot.slane %v5947, %v5951
        %v5958 = vunpack.c.l.b16 %v5940
        %v5959 = vunpack.c.l.b16 %v5941
        %v5960 = vunpack.c.l.b16 %v5942
        %v5961 = vunpack.c.l.b16 %v5943
        %v5962 = vpack.c.b16 %v5959, %v5958
        %v5963 = vpack.c.b16 %v5961, %v5960
        %v5967 = vsel %vm1082, %v5944, 0
        %v5970 = vsel %vm1082, %v5945, 0
        %v5973 = vsel %vm1082, %v5946, 0
        %5975 = vmatprep.subr.bf16.mxu0 0
        %5976 = vmatpush1.bf16.msra.mxu0 %v5962
        %5977 = vmatprep.subr.bf16.mxu0 0
        %5978 = vmatpush1.bf16.msra.mxu0 %v5963
        %5979 = vmatprep.subr.bf16.mxu0 0
        %5980 = vmatpush1.bf16.msra.mxu0 0
        %5981 = vmatprep.subr.bf16.mxu0 0
        %5982 = vmatpush1.bf16.msra.mxu0 0
        %5983 = vmatprep.subr.bf16.mxu0 0
        %5984 = vmatpush1.bf16.msra.mxu0 0
        %5985 = vmatprep.subr.bf16.mxu0 0
        %5986 = vmatpush1.bf16.msra.mxu0 0
        %5987 = vmatprep.subr.bf16.mxu0 0
        %5988 = vmatpush1.bf16.msra.mxu0 0
        %5989 = vmatprep.subr.bf16.mxu0 0
        %5990 = vmatpush1.bf16.msra.mxu0 0
        %5991 = vmatprep.subr.bf16.mxu0 0
        %5992 = vmatpush1.bf16.msra.mxu0 0
        %5993 = vmatprep.subr.bf16.mxu0 0
        %5994 = vmatpush1.bf16.msra.mxu0 0
        %5995 = vmatprep.subr.bf16.mxu0 0
        %5996 = vmatpush1.bf16.msra.mxu0 0
        %5997 = vmatprep.subr.bf16.mxu0 0
        %5998 = vmatpush1.bf16.msra.mxu0 0
        %5999 = vmatprep.subr.bf16.mxu0 0
        %6000 = vmatpush1.bf16.msra.mxu0 0
        %6001 = vmatprep.subr.bf16.mxu0 0
        %6002 = vmatpush1.bf16.msra.mxu0 0
        %6003 = vmatprep.subr.bf16.mxu0 0
        %6004 = vmatpush1.bf16.msra.mxu0 0
        %6005 = vmatprep.subr.bf16.mxu0 0
        %6006 = vmatpush1.bf16.msra.mxu0 0
        %6007 = vmatprep.mubr.bf16.mxu0 0
        %6008 = vmatmul.mubr.bf16.gmra.mrb[0].mxu0 %v5967
        %v6009 = vpop.f32.mrb[0].mxu0
        %v6010 = vadd.f32 %v5952, %v6009
        %v6011 = vpop.f32.mrb[0].mxu0
        %v6012 = vpop.f32.mrb[0].mxu0
        %v6013 = vadd.f32 %v5952, %v6012
        %v6014 = vpop.f32.mrb[0].mxu0
        %6015 = vmatprep.mubr.bf16.mxu0 0
        %6016 = vmatmul.mubr.bf16.gmra.mrb[0].mxu0 %v5970
        %v6017 = vpop.f32.mrb[0].mxu0
        %v6018 = vadd.f32 %v5952, %v6017
        %v6019 = vpop.f32.mrb[0].mxu0
        %v6020 = vpop.f32.mrb[0].mxu0
        %v6021 = vadd.f32 %v5952, %v6020
        %v6022 = vpop.f32.mrb[0].mxu0
        %6023 = vmatprep.mubr.bf16.mxu0 0
        %6024 = vmatmul.mubr.bf16.gmra.mrb[0].mxu0 %v5973
        %v6025 = vpop.f32.mrb[0].mxu0
        %v6026 = vadd.f32 %v5952, %v6025
        %v6027 = vpop.f32.mrb[0].mxu0
        %v6028 = vpop.f32.mrb[0].mxu0
        %v6029 = vadd.f32 %v5952, %v6028
        %v6030 = vpop.f32.mrb[0].mxu0
        %6031 = vdwg.mxu0
        %v6032 = vadd.f32 %v6010, %v5788
        %v6033 = vadd.f32 %v6013, %v5789
        %v6034 = vadd.f32 %v6018, %v5790
        %v6035 = vadd.f32 %v6021, %v5791
        %v6036 = vadd.f32 %v6026, %v5792
        %v6037 = vadd.f32 %v6029, %v5793
        %v6038 = vld [vmem:[%s55] sm:$0x1]
        %v6039 = vld [vmem:[%s57] sm:$0x1]
        %v6040 = vsel %vm1082, %v6032, 0.0
        %6041 = vadd.xlane.f32.xlu0 %v6040
        %v6042 = vpop.xlane.xlu0 %6041
        %v6043 = vsel %vm1082, %v6033, 0.0
        %6044 = vadd.xlane.f32.xlu0 %v6043
        %v6045 = vpop.xlane.xlu0 %6044
        %v6046 = vsel %vm1082, %v6034, 0.0
        %6047 = vadd.xlane.f32.xlu0 %v6046
        %v6048 = vpop.xlane.xlu0 %6047
        %v6049 = vsel %vm1082, %v6035, 0.0
        %6050 = vadd.xlane.f32.xlu0 %v6049
        %v6051 = vpop.xlane.xlu0 %6050
        %v6052 = vsel %vm1082, %v6036, 0.0
        %6053 = vadd.xlane.f32.xlu0 %v6052
        %v6054 = vpop.xlane.xlu0 %6053
        %v6055 = vsel %vm1082, %v6037, 0.0
        %6056 = vadd.xlane.f32.xlu0 %v6055
        %v6057 = vpop.xlane.xlu0 %6056
        %v6058 = vmul.f32 %v6042, %v5709
        %v6059 = vmul.f32 %v6045, %v5709
        %v6060 = vmul.f32 %v6048, %v5709
        %v6061 = vmul.f32 %v6051, %v5709
        %v6062 = vmul.f32 %v6054, %v5709
        %v6063 = vmul.f32 %v6057, %v5709
        %v6064 = vsub.f32 %v6032, %v6058
        %v6065 = vsub.f32 %v6033, %v6059
        %v6066 = vsub.f32 %v6034, %v6060
        %v6067 = vsub.f32 %v6035, %v6061
        %v6068 = vsub.f32 %v6036, %v6062
        %v6069 = vsub.f32 %v6037, %v6063
        %v6070 = vmul.f32 %v6064, %v6064
        %v6071 = vmul.f32 %v6065, %v6065
        %v6072 = vmul.f32 %v6066, %v6066
        %v6073 = vmul.f32 %v6067, %v6067
        %v6074 = vmul.f32 %v6068, %v6068
        %v6075 = vmul.f32 %v6069, %v6069
        %v6076 = vsel %vm1082, %v6070, 0.0
        %6077 = vadd.xlane.f32.xlu0 %v6076
        %v6078 = vpop.xlane.xlu0 %6077
        %v6079 = vsel %vm1082, %v6071, 0.0
        %6080 = vadd.xlane.f32.xlu0 %v6079
        %v6081 = vpop.xlane.xlu0 %6080
        %v6082 = vsel %vm1082, %v6072, 0.0
        %6083 = vadd.xlane.f32.xlu0 %v6082
        %v6084 = vpop.xlane.xlu0 %6083
        %v6085 = vsel %vm1082, %v6073, 0.0
        %6086 = vadd.xlane.f32.xlu0 %v6085
        %v6087 = vpop.xlane.xlu0 %6086
        %v6088 = vsel %vm1082, %v6074, 0.0
        %6089 = vadd.xlane.f32.xlu0 %v6088
        %v6090 = vpop.xlane.xlu0 %6089
        %v6091 = vsel %vm1082, %v6075, 0.0
        %6092 = vadd.xlane.f32.xlu0 %v6091
        %v6093 = vpop.xlane.xlu0 %6092
        %v6094 = vmul.f32 %v6078, %v5709
        %v6095 = vmul.f32 %v6081, %v5709
        %v6096 = vmul.f32 %v6084, %v5709
        %v6097 = vmul.f32 %v6087, %v5709
        %v6098 = vmul.f32 %v6090, %v5709
        %v6099 = vmul.f32 %v6093, %v5709
        %v6100 = vadd.f32 %v6094, 1e-12
        %v6101 = vadd.f32 %v6095, 1e-12
        %v6102 = vadd.f32 %v6096, 1e-12
        %v6103 = vadd.f32 %v6097, 1e-12
        %v6104 = vadd.f32 %v6098, 1e-12
        %v6105 = vadd.f32 %v6099, 1e-12
        %v6106 = vrsqrt.pop %v6100
        %v6107 = vrsqrt.pop %v6101
        %v6108 = vrsqrt.pop %v6102
        %v6109 = vrsqrt.pop %v6103
        %v6110 = vrsqrt.pop %v6104
        %v6111 = vrsqrt.pop %v6105
        %v6112 = vmul.f32 %v6064, %v6106
        %v6113 = vmul.f32 %v6065, %v6107
        %v6114 = vmul.f32 %v6066, %v6108
        %v6115 = vmul.f32 %v6067, %v6109
        %v6116 = vmul.f32 %v6068, %v6110
        %v6117 = vmul.f32 %v6069, %v6111
        %v6119 = vlaneseq
        %v6120 = vshrl.u32 %v6119, 7
        %v6121 = vsub.s32 0, %v6120
        %v6122 = vrot.slane %v6038, %v6121
        %v6124 = vmul.f32 %v6112, %v6122
        %v6125 = vmul.f32 %v6113, %v6122
        %v6126 = vmul.f32 %v6114, %v6122
        %v6127 = vmul.f32 %v6115, %v6122
        %v6128 = vmul.f32 %v6116, %v6122
        %v6129 = vmul.f32 %v6117, %v6122
        %v6131 = vlaneseq
        %v6132 = vshrl.u32 %v6131, 7
        %v6133 = vsub.s32 0, %v6132
        %v6134 = vrot.slane %v6039, %v6133
        %v6136 = vadd.f32 %v6124, %v6134
        %v6137 = vadd.f32 %v6125, %v6134
        %v6138 = vadd.f32 %v6126, %v6134
        %v6139 = vadd.f32 %v6127, %v6134
        %v6140 = vadd.f32 %v6128, %v6134
        %v6141 = vadd.f32 %v6129, %v6134
        %v6148 = vcombine.high %v6136, %v6136
        %v6150 = vunpack.c.l.s4 1983009808
        %v6151 = vunpack.c.0.s8 %v6150
        %v6152 = vlaneseq
        %v6153 = vshrl.u32 %v6152, 7
        %v6154 = vsub.s32 %v6151, %v6153
        %v6155 = vrot.slane %v6136, %v6154
        %v6157 = vunpack.c.l.s4 1983009808
        %v6158 = vunpack.c.0.s8 %v6157
        %v6159 = vlaneseq
        %v6160 = vshrl.u32 %v6159, 7
        %v6161 = vsub.s32 %v6158, %v6160
        %v6162 = vrot.slane %v6148, %v6161
        %v6163 = vcombine.high %v6162, %v6162
        %v6164 = vcombine.high %v6137, %v6137
        %v6166 = vunpack.c.l.s4 1983009808
        %v6167 = vunpack.c.0.s8 %v6166
        %v6168 = vlaneseq
        %v6169 = vshrl.u32 %v6168, 7
        %v6170 = vsub.s32 %v6167, %v6169
        %v6171 = vrot.slane %v6164, %v6170
        %v6173 = vunpack.c.l.s4 1983009808
        %v6174 = vunpack.c.0.s8 %v6173
        %v6175 = vlaneseq
        %v6176 = vshrl.u32 %v6175, 7
        %v6177 = vsub.s32 %v6174, %v6176
        %v6178 = vrot.slane %v6138, %v6177
        %v6179 = vcombine.high %v6178, %v6178
        %v6180 = vcombine.high %v6139, %v6139
        %v6182 = vunpack.c.l.s4 1983009808
        %v6183 = vunpack.c.0.s8 %v6182
        %v6184 = vlaneseq
        %v6185 = vshrl.u32 %v6184, 7
        %v6186 = vsub.s32 %v6183, %v6185
        %v6187 = vrot.slane %v6139, %v6186
        %v6189 = vunpack.c.l.s4 1983009808
        %v6190 = vunpack.c.0.s8 %v6189
        %v6191 = vlaneseq
        %v6192 = vshrl.u32 %v6191, 7
        %v6193 = vsub.s32 %v6190, %v6192
        %v6194 = vrot.slane %v6180, %v6193
        %v6195 = vcombine.high %v6194, %v6194
        %v6196 = vcombine.high %v6140, %v6140
        %v6198 = vunpack.c.l.s4 1983009808
        %v6199 = vunpack.c.0.s8 %v6198
        %v6200 = vlaneseq
        %v6201 = vshrl.u32 %v6200, 7
        %v6202 = vsub.s32 %v6199, %v6201
        %v6203 = vrot.slane %v6196, %v6202
        %v6205 = vunpack.c.l.s4 1983009808
        %v6206 = vunpack.c.0.s8 %v6205
        %v6207 = vlaneseq
        %v6208 = vshrl.u32 %v6207, 7
        %v6209 = vsub.s32 %v6206, %v6208
        %v6210 = vrot.slane %v6141, %v6209
        %v6211 = vcombine.high %v6210, %v6210
        %v6220 = vld [vmem:[%s23] sm:$0xf]
        %v6221 = vld [vmem:[%s23 + $0x4] sm:$0xf]
        %v6222 = vld [vmem:[%s23 + $0x8] sm:$0xf]
        %v6223 = vld [vmem:[%s23 + $0xc] sm:$0xf]
        %v6224 = vpack.c.bf16 %v6155, %v6155
        %v6225 = vpack.c.bf16 %v6163, %v6163
        %v6226 = vpack.c.bf16 %v6171, %v6171
        %v6227 = vpack.c.bf16 %v6179, %v6179
        %v6228 = vpack.c.bf16 %v6187, %v6187
        %v6229 = vpack.c.bf16 %v6195, %v6195
        %v6230 = vpack.c.bf16 %v6203, %v6203
        %v6231 = vpack.c.bf16 %v6211, %v6211
        %v6232 = vld [vmem:[%s25] sm:$0x1]
        %v6234 = vlaneseq
        %v6235 = vshrl.u32 %v6234, 7
        %v6236 = vsub.s32 0, %v6235
        %v6237 = vrot.slane %v6232, %v6236
        %v6247 = vunpack.c.l.b16 %v6224
        %v6248 = vunpack.c.l.b16 %v6225
        %v6249 = vunpack.c.l.b16 %v6226
        %v6250 = vunpack.c.l.b16 %v6227
        %v6251 = vunpack.c.l.b16 %v6228
        %v6252 = vunpack.c.l.b16 %v6229
        %v6253 = vunpack.c.l.b16 %v6230
        %v6254 = vunpack.c.l.b16 %v6231
        %v6255 = vrot.slane %v6248, 7
        %vm6256 = vcmask 1041409
        %v6257 = vsel %vm6256, %v6255, %v6247
        %v6258 = vrot.slane %v6249, 6
        %vm6259 = vcmask 1042434
        %v6260 = vsel %vm6259, %v6258, %v6257
        %v6261 = vrot.slane %v6250, 5
        %vm6262 = vcmask 1043459
        %v6263 = vsel %vm6262, %v6261, %v6260
        %v6264 = vrot.slane %v6251, 4
        %vm6265 = vcmask 1044484
        %v6266 = vsel %vm6265, %v6264, %v6263
        %v6267 = vrot.slane %v6252, 3
        %vm6268 = vcmask 1045509
        %v6269 = vsel %vm6268, %v6267, %v6266
        %v6270 = vrot.slane %v6253, 2
        %vm6271 = vcmask 1046534
        %v6272 = vsel %vm6271, %v6270, %v6269
        %v6273 = vrot.slane %v6254, 1
        %vm6274 = vcmask 1047559
        %v6275 = vsel %vm6274, %v6273, %v6272
        %v6276 = vpack.c.b16 %v6275, %v6275
        %v6281 = vunpack.c.l.b16 %v6220
        %v6282 = vunpack.c.l.b16 %v6221
        %v6283 = vunpack.c.l.b16 %v6222
        %v6284 = vunpack.c.l.b16 %v6223
        %v6285 = vpack.c.b16 %v6282, %v6281
        %v6286 = vpack.c.b16 %v6284, %v6283
        %v6290 = vsel %vm1082, %v6276, 0
        %6292 = vmatprep.subr.bf16.mxu0 0
        %6293 = vmatpush1.bf16.msra.mxu0 %v6285
        %6294 = vmatprep.subr.bf16.mxu0 0
        %6295 = vmatpush1.bf16.msra.mxu0 %v6286
        %6296 = vmatprep.subr.bf16.mxu0 0
        %6297 = vmatpush1.bf16.msra.mxu0 0
        %6298 = vmatprep.subr.bf16.mxu0 0
        %6299 = vmatpush1.bf16.msra.mxu0 0
        %6300 = vmatprep.subr.bf16.mxu0 0
        %6301 = vmatpush1.bf16.msra.mxu0 0
        %6302 = vmatprep.subr.bf16.mxu0 0
        %6303 = vmatpush1.bf16.msra.mxu0 0
        %6304 = vmatprep.subr.bf16.mxu0 0
        %6305 = vmatpush1.bf16.msra.mxu0 0
        %6306 = vmatprep.subr.bf16.mxu0 0
        %6307 = vmatpush1.bf16.msra.mxu0 0
        %6308 = vmatprep.subr.bf16.mxu0 0
        %6309 = vmatpush1.bf16.msra.mxu0 0
        %6310 = vmatprep.subr.bf16.mxu0 0
        %6311 = vmatpush1.bf16.msra.mxu0 0
        %6312 = vmatprep.subr.bf16.mxu0 0
        %6313 = vmatpush1.bf16.msra.mxu0 0
        %6314 = vmatprep.subr.bf16.mxu0 0
        %6315 = vmatpush1.bf16.msra.mxu0 0
        %6316 = vmatprep.subr.bf16.mxu0 0
        %6317 = vmatpush1.bf16.msra.mxu0 0
        %6318 = vmatprep.subr.bf16.mxu0 0
        %6319 = vmatpush1.bf16.msra.mxu0 0
        %6320 = vmatprep.subr.bf16.mxu0 0
        %6321 = vmatpush1.bf16.msra.mxu0 0
        %6322 = vmatprep.subr.bf16.mxu0 0
        %6323 = vmatpush1.bf16.msra.mxu0 0
        %6324 = vmatprep.mubr.bf16.mxu0 0
        %6325 = vmatmul.mubr.bf16.gmra.mrb[0].mxu0 %v6290
        %v6326 = vpop.f32.mrb[0].mxu0
        %v6327 = vadd.f32 %v6237, %v6326
        %v6328 = vpop.f32.mrb[0].mxu0
        %v6329 = vpop.f32.mrb[0].mxu0
        %v6330 = vpop.f32.mrb[0].mxu0
        %6331 = vdwg.mxu0
        %v6332 = vmax.f32 %v6327, -10.0
        %v6333 = vmin.f32 %v6332, 10.0
        %v6334 = vxor.u32 %v6333, 2147483648
        %v6335 = vmul.f32 %v6334, 1.442695
        %v6336 = vpow.pop %v6335
        %v6337 = vadd.f32 %v6336, 1.0
        %v6338 = vrcp.pop %v6337
        %v6339 = vmul.f32 1.0, %v6338
        %6340 = vst [vmem:[%s923] sm:$0xff] %v6339
        %s6341 = sand.u32 %s702, 1
        %s6342 = scalar_lea.sflag [#allocation5], %s6341
        %s6343 = sand.u32 %s702, 1
        %s6344 = smul.addr %s6343, 8
        %s6345 = scalar_lea.vmem [#allocation7], %s6344
        // Predicated region
        $region141: #{tpu_custom_call.1} parent=135 // pred_check
          %p6346 = pneg %p712
        $region142: #{tpu_custom_call.1} parent=135 // pred_check_branch
          %6348 = sbr.rel (%p6346) target = $region144
        $region143: #{tpu_custom_call.1} parent=135 // pred_region
          %s6350 = ssub.s32 128, 128
          %6351 = vsyncadd %s6342, %s6350
          %s6352 = smul.addr %s75, 128
          %s6353 = scalar_lea.hbm %s59, %s6352
          %s6355 = sshll.u32 %s6345, 4
          %s6356 = int_to_ptr.vmem [resolvable:$true] %s6355
          %6358 = dma.vmem_to_hbm [thread:$0]  %s6356, 128, %s6353, %s6342
        $region144: #{tpu_custom_call.1} parent=135 // pred_fallthru
          _
      $region136: #{tpu_custom_call.1} parent=5 // pred_fallthru
        _
      %p6359 = scmp.le.s32.totalorder 2, %s70
      // Predicated region
      $region145: #{tpu_custom_call.1} parent=5 // pred_check
        %p6360 = pneg %p6359
      $region146: #{tpu_custom_call.1} parent=5 // pred_check_branch
        %6362 = sbr.rel (%p6360) target = $region148
      $region147: #{tpu_custom_call.1} parent=5 // pred_region
        %s6363 = ssub.s32 %s70, 2
        // Predicated region
        $region149: #{tpu_custom_call.1} parent=147 // pred_check
          %p6364 = pneg %p718
        $region150: #{tpu_custom_call.1} parent=147 // pred_check_branch
          %6366 = sbr.rel (%p6364) target = $region152
        $region151: #{tpu_custom_call.1} parent=147 // pred_region
          %s6367 = sand.u32 %s703, 1
          %s6368 = scalar_lea.sflag [#allocation5], %s6367
          %s6369 = sand.u32 %s703, 1
          %s6370 = smul.addr %s6369, 8
          %s6371 = scalar_lea.vmem [#allocation7], %s6370
          %6372 = dma.done %s6368, 128
        $region152: #{tpu_custom_call.1} parent=147 // pred_fallthru
          _
      $region148: #{tpu_custom_call.1} parent=5 // pred_fallthru
        _
    $region6: #{tpu_custom_call.1} parent=1 // loop_footer
      %s74 = sadd.s32 1, %s70
    $region7: #{tpu_custom_call.1} parent=1 // loop_footer_branch
      %69 = sbr.rel target = $region3
    $region8: #{tpu_custom_call.1} parent=1 // loop_exit
      _
    %6373 = vsyncpa [#allocation5], 1
    %s6374 = scalar_lea.sflag [#allocation5], 1
    %6375 = vsyncpa %s6374, 1
    %6376 = vsyncpa [#allocation6], 1
    %s6377 = scalar_lea.sflag [#allocation6], 1
    %6378 = vsyncpa %s6377, 1

</llo_original>
